<compile_context>
chip_gen: v7x
topology: tpu7x:2x2x1
jax: 0.10.0
libtpu: 0.0.40
codegen_flags: <defaults>
</compile_context>

<pallas_src>
import functools
import math

import jax
import jax.numpy as jnp
from jax.experimental import pallas as pl
from jax.experimental.pallas import tpu as pltpu


# Set to jnp.bfloat16 to feed the bf16-native MXU on v6e/v7x (accumulation stays f32).
_COMPUTE_DTYPE = jnp.float32

_LAYER_PARAM_ORDER = ("in_proj_w", "in_proj_b", "out_proj_w", "out_proj_b",
                      "ln1_g", "ln1_b", "ff1_w", "ff1_b",
                      "ff2_w", "ff2_b", "ln2_g", "ln2_b")


# ---------------- in-kernel math (operates on VMEM-resident values) ----------------

def _mm(a, b):
    """Matmul with optional bf16 operands and f32 accumulation."""
    return jnp.dot(a.astype(_COMPUTE_DTYPE), b.astype(_COMPUTE_DTYPE),
                   preferred_element_type=jnp.float32)


def _layernorm(x, gamma, beta, eps=1e-5):
    mean = jnp.mean(x, axis=-1, keepdims=True)
    cen = x - mean
    var = jnp.mean(cen * cen, axis=-1, keepdims=True)
    return cen * jax.lax.rsqrt(var + eps) * gamma + beta


def _encoder_layer_math(x, wqkv, bqkv, wo, bo, g1, b1, w1, bf1, w2, bf2, g2, b2, *, nhead):
    """One nn.TransformerEncoderLayer (post-norm, relu, eval) on an (S, D) slab."""
    S, D = x.shape
    dh = D // nhead
    scale = 1.0 / math.sqrt(dh)

    qkv = _mm(x, wqkv) + bqkv                                  # (S, 3D)
    q, k, v = qkv[:, :D], qkv[:, D:2 * D], qkv[:, 2 * D:]

    # out_proj folded into the head loop: concat(heads) @ wo == sum_h oh @ wo[h*dh:(h+1)*dh]
    attn = jnp.zeros((S, D), jnp.float32) + bo                 # start from out_proj bias
    for h in range(nhead):                                     # static unroll, all on-chip
        lo = h * dh
        qh = q[:, lo:lo + dh] * scale
        kh = k[:, lo:lo + dh]
        vh = v[:, lo:lo + dh]
        # contract dh of both operands directly -> no explicit .T / XLU transpose
        s = jax.lax.dot_general(qh.astype(_COMPUTE_DTYPE), kh.astype(_COMPUTE_DTYPE),
                                (((1,), (1,)), ((), ())),
                                preferred_element_type=jnp.float32)   # (S, S)
        s = s - jnp.max(s, axis=-1, keepdims=True)
        p = jnp.exp(s)
        p = p / jnp.sum(p, axis=-1, keepdims=True)             # exact softmax (torch parity)
        oh = _mm(p, vh)                                        # (S, dh)
        attn = attn + _mm(oh, wo[lo:lo + dh, :])               # partial out_proj, no concat
    h1 = _layernorm(x + attn, g1, b1)

    ff = jnp.maximum(_mm(h1, w1) + bf1, 0.0)
    ff = _mm(ff, w2) + bf2
    return _layernorm(h1 + ff, g2, b2)


# ---------------- the one fused kernel: whole forward for one batch element ----------------

def _fused_forward_kernel(num_layers, nhead,
                          x_ref, img_ref, clip_w, clip_b, cond_w, cond_b, zc_in,
                          wqkv, bqkv, wo, bo, g1, b1, w1, bf1, w2, bf2, g2, b2,
                          zconv, o_ref):
    L = num_layers
    xb = x_ref[0]                                              # (S, D) for this batch elem

    # --- conditioning front-end, fully in VMEM ---
    # CLIP stand-in: Linear(K -> 512) on the 3 conditioning images of this batch element.
    emb = _mm(img_ref[0], clip_w[...]) + clip_b[...]           # (3, 512)
    # conditioning_process: Linear(3*512 -> D) expressed as 3 row-block matmuls
    # (equivalent to concatenating the 3 embeddings) -> no in-kernel lane reshape.
    c = cond_b[...]                                            # (1, D)
    for j in range(3):
        c = c + _mm(emb[j:j + 1, :], cond_w[j * 512:(j + 1) * 512, :])
    c = _mm(c, zc_in[...])                                     # input ZeroConv (zero at init)

    trainable = xb + c                                         # broadcast (1,D) over S
    original = xb

    stacked = (wqkv, bqkv, wo, bo, g1, b1, w1, bf1, w2, bf2, g2, b2)
    for i in range(L):                                         # static layer loop, in VMEM
        orig_p = [r[i] for r in stacked]                       # frozen-branch layer i
        train_p = [r[L + i] for r in stacked]                  # trainable-branch layer i
        orig_inter = _encoder_layer_math(original, *orig_p, nhead=nhead)
        trainable = _encoder_layer_math(trainable, *train_p, nhead=nhead)
        # per-layer ZeroConv (Conv1d k=1, no bias == per-token matmul) + residual join
        original = orig_inter + _mm(trainable, zconv[i])
    o_ref[0] = original


# ---------------- wrapper: a single pallas_call for the whole forward ----------------

def _forward_cost(B, S, D, F, K, L, nhead):
    per_layer = 2 * (2 * S * D * 3 * D + 4 * S * S * D + 2 * S * D * D + 4 * S * D * F) \
                + 2 * S * D * D
    per_b = 2 * 3 * K * 512 + 2 * 3 * 512 * D + 2 * D * D + L * per_layer
    w_elems = (K * 512 + 512) + (3 * 512 * D + D) + D * D + L * D * D \
              + 2 * L * (D * 3 * D + 3 * D + D * D + D + 4 * D + 2 * D * F + F + D)
    io_elems = B * (2 * S * D + 3 * K)
    return pl.CostEstimate(flops=B * per_b,
                           transcendentals=B * 2 * L * nhead * S * S,
                           bytes_accessed=4 * (w_elems + io_elems))


def modified_transformer_encoder(x, img_condition, params, nhead):
    """Forward of ModifiedTransformerEncoder.

    x:             (S, B, D) float32, seq-first (batch_first=False, like PyTorch)
    img_condition: (B, 3, C, Hc, Wc)  (== torch.stack(img_condition))
    """
    S, B, D = x.shape
    assert D % nhead == 0
    L = params["zero_conv_w"].shape[0]
    K = img_condition.shape[2] * img_condition.shape[3] * img_condition.shape[4]
    F = params["layers"]["ff1_w"].shape[-1]

    imgs = img_condition.reshape(B, 3, K).astype(jnp.float32)      # (B, 3, C*H*W)
    x_bsd = jnp.transpose(x, (1, 0, 2))                            # (B, S, D), tiny, XLA-fused

    front = [params["clip_w"], params["clip_b"], params["cond_w"],
             params["cond_b"], params["input_conv_w"]]
    stacked = [params["layers"][name] for name in _LAYER_PARAM_ORDER]

    x_spec = pl.BlockSpec((1, S, D), lambda b: (b, 0, 0))
    img_spec = pl.BlockSpec((1, 3, K), lambda b: (b, 0, 0))

    def const_spec(a):
        n = a.ndim
        return pl.BlockSpec(a.shape, lambda b, n=n: (0,) * n)      # DMA'd once, never refetched

    kernel = functools.partial(_fused_forward_kernel, L, nhead)

    out_bsd = pl.pallas_call(
        kernel,
        out_shape=jax.ShapeDtypeStruct((B, S, D), jnp.float32),
        grid=(B,),                                                 # batch -> both TCs on v7x
        in_specs=[x_spec, img_spec]
                 + [const_spec(a) for a in front]
                 + [const_spec(a) for a in stacked]
                 + [const_spec(params["zero_conv_w"])],
        out_specs=x_spec,
        compiler_params=pltpu.CompilerParams(dimension_semantics=("parallel",)),
        cost_estimate=_forward_cost(B, S, D, F, K, L, nhead),
    )(x_bsd, imgs, *front, *stacked, params["zero_conv_w"])

    return jnp.transpose(out_bsd, (1, 0, 2))                       # back to (S, B, D)


# ---------------- deterministic parameter init ----------------
# Weight-porting notes:
#   * layers[name][i]       = original (frozen) layer i,  layers[name][L + i] = trainable layer i
#   * in_proj_w  = PyTorch in_proj_weight.T  (columns blocked q|k|v)
#   * out_proj_w = PyTorch out_proj.weight.T
#   * input_conv_w / zero_conv_w = Conv1d weight[:, :, 0].T  (zero at init per ZeroConvBlock)

def init_params(key, num_layers, d_model, nhead, dff, img_feat):
    keys = iter(jax.random.split(key, 8 + num_layers * 2 * 8))

    def dense(shape, scale=0.02):
        return scale * jax.random.normal(next(keys), shape, jnp.float32)

    params = {
        # TODO(synk): real module uses pretrained CLIP ViT-B/32 (get_image_features);
        # replaced with a deterministic linear projection (no pretrained weights in-script).
        "clip_w": dense((img_feat, 512)),
        "clip_b": dense((1, 512)),
        "cond_w": dense((512 * 3, d_model)),
        "cond_b": dense((1, d_model)),
        "input_conv_w": jnp.zeros((d_model, d_model), jnp.float32),
        "zero_conv_w": jnp.zeros((num_layers, d_model, d_model), jnp.float32),
    }

    def one_layer():
        return {
            "in_proj_w": dense((d_model, 3 * d_model)),
            "in_proj_b": dense((1, 3 * d_model)),
            "out_proj_w": dense((d_model, d_model)),
            "out_proj_b": dense((1, d_model)),
            "ln1_g": jnp.ones((1, d_model), jnp.float32),
            "ln1_b": jnp.zeros((1, d_model), jnp.float32),
            "ff1_w": dense((d_model, dff)),
            "ff1_b": dense((1, dff)),
            "ff2_w": dense((dff, d_model)),
            "ff2_b": dense((1, d_model)),
            "ln2_g": jnp.ones((1, d_model), jnp.float32),
            "ln2_b": jnp.zeros((1, d_model), jnp.float32),
        }

    # rows 0..L-1: original (frozen) layers; rows L..2L-1: trainable layers.
    per_layer = [one_layer() for _ in range(2 * num_layers)]
    params["layers"] = {name: jnp.stack([per_layer[j][name] for j in range(2 * num_layers)])
                        for name in _LAYER_PARAM_ORDER}
    return params


# ---------------- demo ----------------

if __name__ == "__main__":
    S, B, D = 8, 2, 32               # seq, batch, d_model
    nhead, dff, num_layers = 4, 64, 2
    C, Hc, Wc = 3, 16, 16            # small stand-in conditioning images (NCHW)

    key = jax.random.PRNGKey(0)
    kx, kc, kp = jax.random.split(key, 3)
    x = jax.random.normal(kx, (S, B, D), jnp.float32)
    img_condition = jax.random.normal(kc, (B, 3, C, Hc, Wc), jnp.float32)

    params = init_params(kp, num_layers, D, nhead, dff, C * Hc * Wc)

    fwd = jax.jit(functools.partial(modified_transformer_encoder, nhead=nhead))
    out = jax.block_until_ready(fwd(x, img_condition, params))
    assert out.shape == (S, B, D) and out.dtype == jnp.float32
    assert bool(jnp.all(jnp.isfinite(out)))
    print("KERNEL_OK")
</pallas_src>

<mosaic_0001>
module attributes {stable_mosaic.version = 11 : i64} {
  func.func @_fused_forward_kernel(%arg0: i32, %arg1: memref<1x8x32xf32, #tpu.memory_space<vmem>>, %arg2: memref<1x3x768xf32, #tpu.memory_space<vmem>>, %arg3: memref<768x512xf32, #tpu.memory_space<vmem>>, %arg4: memref<1x512xf32, #tpu.memory_space<vmem>>, %arg5: memref<1536x32xf32, #tpu.memory_space<vmem>>, %arg6: memref<1x32xf32, #tpu.memory_space<vmem>>, %arg7: memref<32x32xf32, #tpu.memory_space<vmem>>, %arg8: memref<4x32x96xf32, #tpu.memory_space<vmem>>, %arg9: memref<4x1x96xf32, #tpu.memory_space<vmem>>, %arg10: memref<4x32x32xf32, #tpu.memory_space<vmem>>, %arg11: memref<4x1x32xf32, #tpu.memory_space<vmem>>, %arg12: memref<4x1x32xf32, #tpu.memory_space<vmem>>, %arg13: memref<4x1x32xf32, #tpu.memory_space<vmem>>, %arg14: memref<4x32x64xf32, #tpu.memory_space<vmem>>, %arg15: memref<4x1x64xf32, #tpu.memory_space<vmem>>, %arg16: memref<4x64x32xf32, #tpu.memory_space<vmem>>, %arg17: memref<4x1x32xf32, #tpu.memory_space<vmem>>, %arg18: memref<4x1x32xf32, #tpu.memory_space<vmem>>, %arg19: memref<4x1x32xf32, #tpu.memory_space<vmem>>, %arg20: memref<2x32x32xf32, #tpu.memory_space<vmem>>, %arg21: memref<1x8x32xf32, #tpu.memory_space<vmem>>) attributes {dimension_semantics = [#tpu.dimension_semantics<parallel>], iteration_bounds = array<i64: 2>, scalar_prefetch = 0 : i64, scratch_operands = 0 : i64, tpu.core_type = #tpu.core_type<tc>, window_params = [{transform_indices = @transform_0, window_bounds = array<i64: 1, 8, 32>}, {transform_indices = @transform_1, window_bounds = array<i64: 1, 3, 768>}, {pipeline_mode = #tpu.pipeline_mode<synchronous>, transform_indices = @transform_2, window_bounds = array<i64: 768, 512>}, {pipeline_mode = #tpu.pipeline_mode<synchronous>, transform_indices = @transform_3, window_bounds = array<i64: 1, 512>}, {pipeline_mode = #tpu.pipeline_mode<synchronous>, transform_indices = @transform_4, window_bounds = array<i64: 1536, 32>}, {pipeline_mode = #tpu.pipeline_mode<synchronous>, transform_indices = @transform_5, window_bounds = array<i64: 1, 32>}, {pipeline_mode = #tpu.pipeline_mode<synchronous>, transform_indices = @transform_6, window_bounds = array<i64: 32, 32>}, {pipeline_mode = #tpu.pipeline_mode<synchronous>, transform_indices = @transform_7, window_bounds = array<i64: 4, 32, 96>}, {pipeline_mode = #tpu.pipeline_mode<synchronous>, transform_indices = @transform_8, window_bounds = array<i64: 4, 1, 96>}, {pipeline_mode = #tpu.pipeline_mode<synchronous>, transform_indices = @transform_9, window_bounds = array<i64: 4, 32, 32>}, {pipeline_mode = #tpu.pipeline_mode<synchronous>, transform_indices = @transform_10, window_bounds = array<i64: 4, 1, 32>}, {pipeline_mode = #tpu.pipeline_mode<synchronous>, transform_indices = @transform_11, window_bounds = array<i64: 4, 1, 32>}, {pipeline_mode = #tpu.pipeline_mode<synchronous>, transform_indices = @transform_12, window_bounds = array<i64: 4, 1, 32>}, {pipeline_mode = #tpu.pipeline_mode<synchronous>, transform_indices = @transform_13, window_bounds = array<i64: 4, 32, 64>}, {pipeline_mode = #tpu.pipeline_mode<synchronous>, transform_indices = @transform_14, window_bounds = array<i64: 4, 1, 64>}, {pipeline_mode = #tpu.pipeline_mode<synchronous>, transform_indices = @transform_15, window_bounds = array<i64: 4, 64, 32>}, {pipeline_mode = #tpu.pipeline_mode<synchronous>, transform_indices = @transform_16, window_bounds = array<i64: 4, 1, 32>}, {pipeline_mode = #tpu.pipeline_mode<synchronous>, transform_indices = @transform_17, window_bounds = array<i64: 4, 1, 32>}, {pipeline_mode = #tpu.pipeline_mode<synchronous>, transform_indices = @transform_18, window_bounds = array<i64: 4, 1, 32>}, {pipeline_mode = #tpu.pipeline_mode<synchronous>, transform_indices = @transform_19, window_bounds = array<i64: 2, 32, 32>}, {transform_indices = @transform_20, window_bounds = array<i64: 1, 8, 32>}]} {
    %c0 = arith.constant 0 : index
    %c0_0 = arith.constant 0 : index
    %c0_1 = arith.constant 0 : index
    %0 = vector.load %arg1[%c0, %c0_0, %c0_1] : memref<1x8x32xf32, #tpu.memory_space<vmem>>, vector<1x8x32xf32>
    %1 = vector.shape_cast %0 : vector<1x8x32xf32> to vector<8x32xf32>
    %c0_2 = arith.constant 0 : index
    %c0_3 = arith.constant 0 : index
    %c0_4 = arith.constant 0 : index
    %2 = vector.load %arg2[%c0_2, %c0_3, %c0_4] : memref<1x3x768xf32, #tpu.memory_space<vmem>>, vector<1x3x768xf32>
    %3 = vector.shape_cast %2 : vector<1x3x768xf32> to vector<3x768xf32>
    %c0_5 = arith.constant 0 : index
    %c0_6 = arith.constant 0 : index
    %4 = vector.load %arg3[%c0_5, %c0_6] : memref<768x512xf32, #tpu.memory_space<vmem>>, vector<768x512xf32>
    %cst = arith.constant dense<0.000000e+00> : vector<3x512xf32>
    %5 = tpu.matmul %3, %4, %cst {dimension_numbers = #tpu.dot_dimension_numbers<[1], [0], [0], [1], [0, 0, 1, 1], [], []>} : vector<3x768xf32>, vector<768x512xf32>, vector<3x512xf32> -> vector<3x512xf32>
    %c0_7 = arith.constant 0 : index
    %c0_8 = arith.constant 0 : index
    %6 = vector.load %arg4[%c0_7, %c0_8] : memref<1x512xf32, #tpu.memory_space<vmem>>, vector<1x512xf32>
    %7 = vector.broadcast %6 : vector<1x512xf32> to vector<3x512xf32>
    %8 = arith.addf %5, %7 : vector<3x512xf32>
    %c0_9 = arith.constant 0 : index
    %c0_10 = arith.constant 0 : index
    %9 = vector.load %arg6[%c0_9, %c0_10] : memref<1x32xf32, #tpu.memory_space<vmem>>, vector<1x32xf32>
    %10 = vector.extract_strided_slice %8 {offsets = [0, 0], sizes = [1, 512], strides = [1, 1]} : vector<3x512xf32> to vector<1x512xf32>
    %c0_11 = arith.constant 0 : index
    %c0_12 = arith.constant 0 : index
    %11 = vector.load %arg5[%c0_11, %c0_12] : memref<1536x32xf32, #tpu.memory_space<vmem>>, vector<512x32xf32>
    %cst_13 = arith.constant dense<0.000000e+00> : vector<1x32xf32>
    %12 = tpu.matmul %10, %11, %cst_13 {dimension_numbers = #tpu.dot_dimension_numbers<[1], [0], [0], [1], [0, 0, 1, 1], [], []>} : vector<1x512xf32>, vector<512x32xf32>, vector<1x32xf32> -> vector<1x32xf32>
    %13 = arith.addf %9, %12 : vector<1x32xf32>
    %14 = vector.extract_strided_slice %8 {offsets = [1, 0], sizes = [1, 512], strides = [1, 1]} : vector<3x512xf32> to vector<1x512xf32>
    %c512 = arith.constant 512 : index
    %c0_14 = arith.constant 0 : index
    %15 = vector.load %arg5[%c512, %c0_14] : memref<1536x32xf32, #tpu.memory_space<vmem>>, vector<512x32xf32>
    %cst_15 = arith.constant dense<0.000000e+00> : vector<1x32xf32>
    %16 = tpu.matmul %14, %15, %cst_15 {dimension_numbers = #tpu.dot_dimension_numbers<[1], [0], [0], [1], [0, 0, 1, 1], [], []>} : vector<1x512xf32>, vector<512x32xf32>, vector<1x32xf32> -> vector<1x32xf32>
    %17 = arith.addf %13, %16 : vector<1x32xf32>
    %18 = vector.extract_strided_slice %8 {offsets = [2, 0], sizes = [1, 512], strides = [1, 1]} : vector<3x512xf32> to vector<1x512xf32>
    %c1024 = arith.constant 1024 : index
    %c0_16 = arith.constant 0 : index
    %19 = vector.load %arg5[%c1024, %c0_16] : memref<1536x32xf32, #tpu.memory_space<vmem>>, vector<512x32xf32>
    %cst_17 = arith.constant dense<0.000000e+00> : vector<1x32xf32>
    %20 = tpu.matmul %18, %19, %cst_17 {dimension_numbers = #tpu.dot_dimension_numbers<[1], [0], [0], [1], [0, 0, 1, 1], [], []>} : vector<1x512xf32>, vector<512x32xf32>, vector<1x32xf32> -> vector<1x32xf32>
    %21 = arith.addf %17, %20 : vector<1x32xf32>
    %c0_18 = arith.constant 0 : index
    %c0_19 = arith.constant 0 : index
    %22 = vector.load %arg7[%c0_18, %c0_19] : memref<32x32xf32, #tpu.memory_space<vmem>>, vector<32x32xf32>
    %cst_20 = arith.constant dense<0.000000e+00> : vector<1x32xf32>
    %23 = tpu.matmul %21, %22, %cst_20 {dimension_numbers = #tpu.dot_dimension_numbers<[1], [0], [0], [1], [0, 0, 1, 1], [], []>} : vector<1x32xf32>, vector<32x32xf32>, vector<1x32xf32> -> vector<1x32xf32>
    %24 = vector.broadcast %23 : vector<1x32xf32> to vector<8x32xf32>
    %25 = arith.addf %1, %24 : vector<8x32xf32>
    %c0_21 = arith.constant 0 : index
    %c0_22 = arith.constant 0 : index
    %c0_23 = arith.constant 0 : index
    %26 = vector.load %arg8[%c0_21, %c0_22, %c0_23] : memref<4x32x96xf32, #tpu.memory_space<vmem>>, vector<1x32x96xf32>
    %27 = vector.shape_cast %26 : vector<1x32x96xf32> to vector<32x96xf32>
    %c0_24 = arith.constant 0 : index
    %c0_25 = arith.constant 0 : index
    %c0_26 = arith.constant 0 : index
    %28 = vector.load %arg9[%c0_24, %c0_25, %c0_26] : memref<4x1x96xf32, #tpu.memory_space<vmem>>, vector<1x1x96xf32>
    %29 = vector.shape_cast %28 : vector<1x1x96xf32> to vector<1x96xf32>
    %c0_27 = arith.constant 0 : index
    %c0_28 = arith.constant 0 : index
    %c0_29 = arith.constant 0 : index
    %30 = vector.load %arg10[%c0_27, %c0_28, %c0_29] : memref<4x32x32xf32, #tpu.memory_space<vmem>>, vector<1x32x32xf32>
    %31 = vector.shape_cast %30 : vector<1x32x32xf32> to vector<32x32xf32>
    %c0_30 = arith.constant 0 : index
    %c0_31 = arith.constant 0 : index
    %c0_32 = arith.constant 0 : index
    %32 = vector.load %arg11[%c0_30, %c0_31, %c0_32] : memref<4x1x32xf32, #tpu.memory_space<vmem>>, vector<1x1x32xf32>
    %33 = vector.shape_cast %32 : vector<1x1x32xf32> to vector<1x32xf32>
    %c0_33 = arith.constant 0 : index
    %c0_34 = arith.constant 0 : index
    %c0_35 = arith.constant 0 : index
    %34 = vector.load %arg12[%c0_33, %c0_34, %c0_35] : memref<4x1x32xf32, #tpu.memory_space<vmem>>, vector<1x1x32xf32>
    %35 = vector.shape_cast %34 : vector<1x1x32xf32> to vector<1x32xf32>
    %c0_36 = arith.constant 0 : index
    %c0_37 = arith.constant 0 : index
    %c0_38 = arith.constant 0 : index
    %36 = vector.load %arg13[%c0_36, %c0_37, %c0_38] : memref<4x1x32xf32, #tpu.memory_space<vmem>>, vector<1x1x32xf32>
    %37 = vector.shape_cast %36 : vector<1x1x32xf32> to vector<1x32xf32>
    %c0_39 = arith.constant 0 : index
    %c0_40 = arith.constant 0 : index
    %c0_41 = arith.constant 0 : index
    %38 = vector.load %arg14[%c0_39, %c0_40, %c0_41] : memref<4x32x64xf32, #tpu.memory_space<vmem>>, vector<1x32x64xf32>
    %39 = vector.shape_cast %38 : vector<1x32x64xf32> to vector<32x64xf32>
    %c0_42 = arith.constant 0 : index
    %c0_43 = arith.constant 0 : index
    %c0_44 = arith.constant 0 : index
    %40 = vector.load %arg15[%c0_42, %c0_43, %c0_44] : memref<4x1x64xf32, #tpu.memory_space<vmem>>, vector<1x1x64xf32>
    %41 = vector.shape_cast %40 : vector<1x1x64xf32> to vector<1x64xf32>
    %c0_45 = arith.constant 0 : index
    %c0_46 = arith.constant 0 : index
    %c0_47 = arith.constant 0 : index
    %42 = vector.load %arg16[%c0_45, %c0_46, %c0_47] : memref<4x64x32xf32, #tpu.memory_space<vmem>>, vector<1x64x32xf32>
    %43 = vector.shape_cast %42 : vector<1x64x32xf32> to vector<64x32xf32>
    %c0_48 = arith.constant 0 : index
    %c0_49 = arith.constant 0 : index
    %c0_50 = arith.constant 0 : index
    %44 = vector.load %arg17[%c0_48, %c0_49, %c0_50] : memref<4x1x32xf32, #tpu.memory_space<vmem>>, vector<1x1x32xf32>
    %45 = vector.shape_cast %44 : vector<1x1x32xf32> to vector<1x32xf32>
    %c0_51 = arith.constant 0 : index
    %c0_52 = arith.constant 0 : index
    %c0_53 = arith.constant 0 : index
    %46 = vector.load %arg18[%c0_51, %c0_52, %c0_53] : memref<4x1x32xf32, #tpu.memory_space<vmem>>, vector<1x1x32xf32>
    %47 = vector.shape_cast %46 : vector<1x1x32xf32> to vector<1x32xf32>
    %c0_54 = arith.constant 0 : index
    %c0_55 = arith.constant 0 : index
    %c0_56 = arith.constant 0 : index
    %48 = vector.load %arg19[%c0_54, %c0_55, %c0_56] : memref<4x1x32xf32, #tpu.memory_space<vmem>>, vector<1x1x32xf32>
    %49 = vector.shape_cast %48 : vector<1x1x32xf32> to vector<1x32xf32>
    %c2 = arith.constant 2 : index
    %c0_57 = arith.constant 0 : index
    %c0_58 = arith.constant 0 : index
    %50 = vector.load %arg8[%c2, %c0_57, %c0_58] : memref<4x32x96xf32, #tpu.memory_space<vmem>>, vector<1x32x96xf32>
    %51 = vector.shape_cast %50 : vector<1x32x96xf32> to vector<32x96xf32>
    %c2_59 = arith.constant 2 : index
    %c0_60 = arith.constant 0 : index
    %c0_61 = arith.constant 0 : index
    %52 = vector.load %arg9[%c2_59, %c0_60, %c0_61] : memref<4x1x96xf32, #tpu.memory_space<vmem>>, vector<1x1x96xf32>
    %53 = vector.shape_cast %52 : vector<1x1x96xf32> to vector<1x96xf32>
    %c2_62 = arith.constant 2 : index
    %c0_63 = arith.constant 0 : index
    %c0_64 = arith.constant 0 : index
    %54 = vector.load %arg10[%c2_62, %c0_63, %c0_64] : memref<4x32x32xf32, #tpu.memory_space<vmem>>, vector<1x32x32xf32>
    %55 = vector.shape_cast %54 : vector<1x32x32xf32> to vector<32x32xf32>
    %c2_65 = arith.constant 2 : index
    %c0_66 = arith.constant 0 : index
    %c0_67 = arith.constant 0 : index
    %56 = vector.load %arg11[%c2_65, %c0_66, %c0_67] : memref<4x1x32xf32, #tpu.memory_space<vmem>>, vector<1x1x32xf32>
    %57 = vector.shape_cast %56 : vector<1x1x32xf32> to vector<1x32xf32>
    %c2_68 = arith.constant 2 : index
    %c0_69 = arith.constant 0 : index
    %c0_70 = arith.constant 0 : index
    %58 = vector.load %arg12[%c2_68, %c0_69, %c0_70] : memref<4x1x32xf32, #tpu.memory_space<vmem>>, vector<1x1x32xf32>
    %59 = vector.shape_cast %58 : vector<1x1x32xf32> to vector<1x32xf32>
    %c2_71 = arith.constant 2 : index
    %c0_72 = arith.constant 0 : index
    %c0_73 = arith.constant 0 : index
    %60 = vector.load %arg13[%c2_71, %c0_72, %c0_73] : memref<4x1x32xf32, #tpu.memory_space<vmem>>, vector<1x1x32xf32>
    %61 = vector.shape_cast %60 : vector<1x1x32xf32> to vector<1x32xf32>
    %c2_74 = arith.constant 2 : index
    %c0_75 = arith.constant 0 : index
    %c0_76 = arith.constant 0 : index
    %62 = vector.load %arg14[%c2_74, %c0_75, %c0_76] : memref<4x32x64xf32, #tpu.memory_space<vmem>>, vector<1x32x64xf32>
    %63 = vector.shape_cast %62 : vector<1x32x64xf32> to vector<32x64xf32>
    %c2_77 = arith.constant 2 : index
    %c0_78 = arith.constant 0 : index
    %c0_79 = arith.constant 0 : index
    %64 = vector.load %arg15[%c2_77, %c0_78, %c0_79] : memref<4x1x64xf32, #tpu.memory_space<vmem>>, vector<1x1x64xf32>
    %65 = vector.shape_cast %64 : vector<1x1x64xf32> to vector<1x64xf32>
    %c2_80 = arith.constant 2 : index
    %c0_81 = arith.constant 0 : index
    %c0_82 = arith.constant 0 : index
    %66 = vector.load %arg16[%c2_80, %c0_81, %c0_82] : memref<4x64x32xf32, #tpu.memory_space<vmem>>, vector<1x64x32xf32>
    %67 = vector.shape_cast %66 : vector<1x64x32xf32> to vector<64x32xf32>
    %c2_83 = arith.constant 2 : index
    %c0_84 = arith.constant 0 : index
    %c0_85 = arith.constant 0 : index
    %68 = vector.load %arg17[%c2_83, %c0_84, %c0_85] : memref<4x1x32xf32, #tpu.memory_space<vmem>>, vector<1x1x32xf32>
    %69 = vector.shape_cast %68 : vector<1x1x32xf32> to vector<1x32xf32>
    %c2_86 = arith.constant 2 : index
    %c0_87 = arith.constant 0 : index
    %c0_88 = arith.constant 0 : index
    %70 = vector.load %arg18[%c2_86, %c0_87, %c0_88] : memref<4x1x32xf32, #tpu.memory_space<vmem>>, vector<1x1x32xf32>
    %71 = vector.shape_cast %70 : vector<1x1x32xf32> to vector<1x32xf32>
    %c2_89 = arith.constant 2 : index
    %c0_90 = arith.constant 0 : index
    %c0_91 = arith.constant 0 : index
    %72 = vector.load %arg19[%c2_89, %c0_90, %c0_91] : memref<4x1x32xf32, #tpu.memory_space<vmem>>, vector<1x1x32xf32>
    %73 = vector.shape_cast %72 : vector<1x1x32xf32> to vector<1x32xf32>
    %cst_92 = arith.constant dense<0.000000e+00> : vector<8x96xf32>
    %74 = tpu.matmul %1, %27, %cst_92 {dimension_numbers = #tpu.dot_dimension_numbers<[1], [0], [0], [1], [0, 0, 1, 1], [], []>} : vector<8x32xf32>, vector<32x96xf32>, vector<8x96xf32> -> vector<8x96xf32>
    %75 = vector.broadcast %29 : vector<1x96xf32> to vector<8x96xf32>
    %76 = arith.addf %74, %75 : vector<8x96xf32>
    %77 = vector.extract_strided_slice %76 {offsets = [0, 0], sizes = [8, 32], strides = [1, 1]} : vector<8x96xf32> to vector<8x32xf32>
    %78 = vector.extract_strided_slice %76 {offsets = [0, 32], sizes = [8, 32], strides = [1, 1]} : vector<8x96xf32> to vector<8x32xf32>
    %79 = vector.extract_strided_slice %76 {offsets = [0, 64], sizes = [8, 32], strides = [1, 1]} : vector<8x96xf32> to vector<8x32xf32>
    %cst_93 = arith.constant 0.000000e+00 : f32
    %80 = vector.broadcast %cst_93 : f32 to vector<8x32xf32>
    %81 = vector.broadcast %33 : vector<1x32xf32> to vector<8x32xf32>
    %82 = arith.addf %80, %81 : vector<8x32xf32>
    %83 = vector.extract_strided_slice %77 {offsets = [0, 0], sizes = [8, 8], strides = [1, 1]} : vector<8x32xf32> to vector<8x8xf32>
    %cst_94 = arith.constant 0.353553385 : f32
    %84 = vector.broadcast %cst_94 : f32 to vector<8x8xf32>
    %85 = arith.mulf %83, %84 : vector<8x8xf32>
    %86 = vector.extract_strided_slice %78 {offsets = [0, 0], sizes = [8, 8], strides = [1, 1]} : vector<8x32xf32> to vector<8x8xf32>
    %87 = vector.extract_strided_slice %79 {offsets = [0, 0], sizes = [8, 8], strides = [1, 1]} : vector<8x32xf32> to vector<8x8xf32>
    %cst_95 = arith.constant dense<0.000000e+00> : vector<8x8xf32>
    %88 = tpu.matmul %85, %86, %cst_95 {dimension_numbers = #tpu.dot_dimension_numbers<[1], [1], [0], [0], [0, 0, 1, 0], [], []>} : vector<8x8xf32>, vector<8x8xf32>, vector<8x8xf32> -> vector<8x8xf32>
    %cst_96 = arith.constant dense<0xFF800000> : vector<8xf32>
    %89 = vector.multi_reduction <maximumf>, %88, %cst_96 [1] : vector<8x8xf32> to vector<8xf32>
    %90 = vector.shape_cast %89 : vector<8xf32> to vector<8x1xf32>
    %91 = vector.broadcast %90 : vector<8x1xf32> to vector<8x8xf32>
    %92 = arith.subf %88, %91 : vector<8x8xf32>
    %93 = math.exp %92 : vector<8x8xf32>
    %cst_97 = arith.constant dense<0.000000e+00> : vector<8xf32>
    %94 = vector.multi_reduction <add>, %93, %cst_97 [1] : vector<8x8xf32> to vector<8xf32>
    %95 = vector.shape_cast %94 : vector<8xf32> to vector<8x1xf32>
    %96 = vector.broadcast %95 : vector<8x1xf32> to vector<8x8xf32>
    %97 = arith.divf %93, %96 : vector<8x8xf32>
    %cst_98 = arith.constant dense<0.000000e+00> : vector<8x8xf32>
    %98 = tpu.matmul %97, %87, %cst_98 {dimension_numbers = #tpu.dot_dimension_numbers<[1], [0], [0], [1], [0, 0, 1, 1], [], []>} : vector<8x8xf32>, vector<8x8xf32>, vector<8x8xf32> -> vector<8x8xf32>
    %99 = vector.extract_strided_slice %31 {offsets = [0, 0], sizes = [8, 32], strides = [1, 1]} : vector<32x32xf32> to vector<8x32xf32>
    %cst_99 = arith.constant dense<0.000000e+00> : vector<8x32xf32>
    %100 = tpu.matmul %98, %99, %cst_99 {dimension_numbers = #tpu.dot_dimension_numbers<[1], [0], [0], [1], [0, 0, 1, 1], [], []>} : vector<8x8xf32>, vector<8x32xf32>, vector<8x32xf32> -> vector<8x32xf32>
    %101 = arith.addf %82, %100 : vector<8x32xf32>
    %102 = vector.extract_strided_slice %77 {offsets = [0, 8], sizes = [8, 8], strides = [1, 1]} : vector<8x32xf32> to vector<8x8xf32>
    %cst_100 = arith.constant 0.353553385 : f32
    %103 = vector.broadcast %cst_100 : f32 to vector<8x8xf32>
    %104 = arith.mulf %102, %103 : vector<8x8xf32>
    %105 = vector.extract_strided_slice %78 {offsets = [0, 8], sizes = [8, 8], strides = [1, 1]} : vector<8x32xf32> to vector<8x8xf32>
    %106 = vector.extract_strided_slice %79 {offsets = [0, 8], sizes = [8, 8], strides = [1, 1]} : vector<8x32xf32> to vector<8x8xf32>
    %cst_101 = arith.constant dense<0.000000e+00> : vector<8x8xf32>
    %107 = tpu.matmul %104, %105, %cst_101 {dimension_numbers = #tpu.dot_dimension_numbers<[1], [1], [0], [0], [0, 0, 1, 0], [], []>} : vector<8x8xf32>, vector<8x8xf32>, vector<8x8xf32> -> vector<8x8xf32>
    %cst_102 = arith.constant dense<0xFF800000> : vector<8xf32>
    %108 = vector.multi_reduction <maximumf>, %107, %cst_102 [1] : vector<8x8xf32> to vector<8xf32>
    %109 = vector.shape_cast %108 : vector<8xf32> to vector<8x1xf32>
    %110 = vector.broadcast %109 : vector<8x1xf32> to vector<8x8xf32>
    %111 = arith.subf %107, %110 : vector<8x8xf32>
    %112 = math.exp %111 : vector<8x8xf32>
    %cst_103 = arith.constant dense<0.000000e+00> : vector<8xf32>
    %113 = vector.multi_reduction <add>, %112, %cst_103 [1] : vector<8x8xf32> to vector<8xf32>
    %114 = vector.shape_cast %113 : vector<8xf32> to vector<8x1xf32>
    %115 = vector.broadcast %114 : vector<8x1xf32> to vector<8x8xf32>
    %116 = arith.divf %112, %115 : vector<8x8xf32>
    %cst_104 = arith.constant dense<0.000000e+00> : vector<8x8xf32>
    %117 = tpu.matmul %116, %106, %cst_104 {dimension_numbers = #tpu.dot_dimension_numbers<[1], [0], [0], [1], [0, 0, 1, 1], [], []>} : vector<8x8xf32>, vector<8x8xf32>, vector<8x8xf32> -> vector<8x8xf32>
    %118 = vector.extract_strided_slice %31 {offsets = [8, 0], sizes = [8, 32], strides = [1, 1]} : vector<32x32xf32> to vector<8x32xf32>
    %cst_105 = arith.constant dense<0.000000e+00> : vector<8x32xf32>
    %119 = tpu.matmul %117, %118, %cst_105 {dimension_numbers = #tpu.dot_dimension_numbers<[1], [0], [0], [1], [0, 0, 1, 1], [], []>} : vector<8x8xf32>, vector<8x32xf32>, vector<8x32xf32> -> vector<8x32xf32>
    %120 = arith.addf %101, %119 : vector<8x32xf32>
    %121 = vector.extract_strided_slice %77 {offsets = [0, 16], sizes = [8, 8], strides = [1, 1]} : vector<8x32xf32> to vector<8x8xf32>
    %cst_106 = arith.constant 0.353553385 : f32
    %122 = vector.broadcast %cst_106 : f32 to vector<8x8xf32>
    %123 = arith.mulf %121, %122 : vector<8x8xf32>
    %124 = vector.extract_strided_slice %78 {offsets = [0, 16], sizes = [8, 8], strides = [1, 1]} : vector<8x32xf32> to vector<8x8xf32>
    %125 = vector.extract_strided_slice %79 {offsets = [0, 16], sizes = [8, 8], strides = [1, 1]} : vector<8x32xf32> to vector<8x8xf32>
    %cst_107 = arith.constant dense<0.000000e+00> : vector<8x8xf32>
    %126 = tpu.matmul %123, %124, %cst_107 {dimension_numbers = #tpu.dot_dimension_numbers<[1], [1], [0], [0], [0, 0, 1, 0], [], []>} : vector<8x8xf32>, vector<8x8xf32>, vector<8x8xf32> -> vector<8x8xf32>
    %cst_108 = arith.constant dense<0xFF800000> : vector<8xf32>
    %127 = vector.multi_reduction <maximumf>, %126, %cst_108 [1] : vector<8x8xf32> to vector<8xf32>
    %128 = vector.shape_cast %127 : vector<8xf32> to vector<8x1xf32>
    %129 = vector.broadcast %128 : vector<8x1xf32> to vector<8x8xf32>
    %130 = arith.subf %126, %129 : vector<8x8xf32>
    %131 = math.exp %130 : vector<8x8xf32>
    %cst_109 = arith.constant dense<0.000000e+00> : vector<8xf32>
    %132 = vector.multi_reduction <add>, %131, %cst_109 [1] : vector<8x8xf32> to vector<8xf32>
    %133 = vector.shape_cast %132 : vector<8xf32> to vector<8x1xf32>
    %134 = vector.broadcast %133 : vector<8x1xf32> to vector<8x8xf32>
    %135 = arith.divf %131, %134 : vector<8x8xf32>
    %cst_110 = arith.constant dense<0.000000e+00> : vector<8x8xf32>
    %136 = tpu.matmul %135, %125, %cst_110 {dimension_numbers = #tpu.dot_dimension_numbers<[1], [0], [0], [1], [0, 0, 1, 1], [], []>} : vector<8x8xf32>, vector<8x8xf32>, vector<8x8xf32> -> vector<8x8xf32>
    %137 = vector.extract_strided_slice %31 {offsets = [16, 0], sizes = [8, 32], strides = [1, 1]} : vector<32x32xf32> to vector<8x32xf32>
    %cst_111 = arith.constant dense<0.000000e+00> : vector<8x32xf32>
    %138 = tpu.matmul %136, %137, %cst_111 {dimension_numbers = #tpu.dot_dimension_numbers<[1], [0], [0], [1], [0, 0, 1, 1], [], []>} : vector<8x8xf32>, vector<8x32xf32>, vector<8x32xf32> -> vector<8x32xf32>
    %139 = arith.addf %120, %138 : vector<8x32xf32>
    %140 = vector.extract_strided_slice %77 {offsets = [0, 24], sizes = [8, 8], strides = [1, 1]} : vector<8x32xf32> to vector<8x8xf32>
    %cst_112 = arith.constant 0.353553385 : f32
    %141 = vector.broadcast %cst_112 : f32 to vector<8x8xf32>
    %142 = arith.mulf %140, %141 : vector<8x8xf32>
    %143 = vector.extract_strided_slice %78 {offsets = [0, 24], sizes = [8, 8], strides = [1, 1]} : vector<8x32xf32> to vector<8x8xf32>
    %144 = vector.extract_strided_slice %79 {offsets = [0, 24], sizes = [8, 8], strides = [1, 1]} : vector<8x32xf32> to vector<8x8xf32>
    %cst_113 = arith.constant dense<0.000000e+00> : vector<8x8xf32>
    %145 = tpu.matmul %142, %143, %cst_113 {dimension_numbers = #tpu.dot_dimension_numbers<[1], [1], [0], [0], [0, 0, 1, 0], [], []>} : vector<8x8xf32>, vector<8x8xf32>, vector<8x8xf32> -> vector<8x8xf32>
    %cst_114 = arith.constant dense<0xFF800000> : vector<8xf32>
    %146 = vector.multi_reduction <maximumf>, %145, %cst_114 [1] : vector<8x8xf32> to vector<8xf32>
    %147 = vector.shape_cast %146 : vector<8xf32> to vector<8x1xf32>
    %148 = vector.broadcast %147 : vector<8x1xf32> to vector<8x8xf32>
    %149 = arith.subf %145, %148 : vector<8x8xf32>
    %150 = math.exp %149 : vector<8x8xf32>
    %cst_115 = arith.constant dense<0.000000e+00> : vector<8xf32>
    %151 = vector.multi_reduction <add>, %150, %cst_115 [1] : vector<8x8xf32> to vector<8xf32>
    %152 = vector.shape_cast %151 : vector<8xf32> to vector<8x1xf32>
    %153 = vector.broadcast %152 : vector<8x1xf32> to vector<8x8xf32>
    %154 = arith.divf %150, %153 : vector<8x8xf32>
    %cst_116 = arith.constant dense<0.000000e+00> : vector<8x8xf32>
    %155 = tpu.matmul %154, %144, %cst_116 {dimension_numbers = #tpu.dot_dimension_numbers<[1], [0], [0], [1], [0, 0, 1, 1], [], []>} : vector<8x8xf32>, vector<8x8xf32>, vector<8x8xf32> -> vector<8x8xf32>
    %156 = vector.extract_strided_slice %31 {offsets = [24, 0], sizes = [8, 32], strides = [1, 1]} : vector<32x32xf32> to vector<8x32xf32>
    %cst_117 = arith.constant dense<0.000000e+00> : vector<8x32xf32>
    %157 = tpu.matmul %155, %156, %cst_117 {dimension_numbers = #tpu.dot_dimension_numbers<[1], [0], [0], [1], [0, 0, 1, 1], [], []>} : vector<8x8xf32>, vector<8x32xf32>, vector<8x32xf32> -> vector<8x32xf32>
    %158 = arith.addf %139, %157 : vector<8x32xf32>
    %159 = arith.addf %1, %158 : vector<8x32xf32>
    %cst_118 = arith.constant dense<0.000000e+00> : vector<8xf32>
    %160 = vector.multi_reduction <add>, %159, %cst_118 [1] : vector<8x32xf32> to vector<8xf32>
    %161 = vector.shape_cast %160 : vector<8xf32> to vector<8x1xf32>
    %cst_119 = arith.constant 3.200000e+01 : f32
    %162 = vector.broadcast %cst_119 : f32 to vector<8x1xf32>
    %163 = arith.divf %161, %162 : vector<8x1xf32>
    %164 = vector.broadcast %163 : vector<8x1xf32> to vector<8x32xf32>
    %165 = arith.subf %159, %164 : vector<8x32xf32>
    %166 = arith.mulf %165, %165 : vector<8x32xf32>
    %cst_120 = arith.constant dense<0.000000e+00> : vector<8xf32>
    %167 = vector.multi_reduction <add>, %166, %cst_120 [1] : vector<8x32xf32> to vector<8xf32>
    %168 = vector.shape_cast %167 : vector<8xf32> to vector<8x1xf32>
    %cst_121 = arith.constant 3.200000e+01 : f32
    %169 = vector.broadcast %cst_121 : f32 to vector<8x1xf32>
    %170 = arith.divf %168, %169 : vector<8x1xf32>
    %cst_122 = arith.constant 9.99999974E-6 : f32
    %171 = vector.broadcast %cst_122 : f32 to vector<8x1xf32>
    %172 = arith.addf %170, %171 : vector<8x1xf32>
    %173 = math.rsqrt %172 : vector<8x1xf32>
    %174 = vector.broadcast %173 : vector<8x1xf32> to vector<8x32xf32>
    %175 = arith.mulf %165, %174 : vector<8x32xf32>
    %176 = vector.broadcast %35 : vector<1x32xf32> to vector<8x32xf32>
    %177 = arith.mulf %175, %176 : vector<8x32xf32>
    %178 = vector.broadcast %37 : vector<1x32xf32> to vector<8x32xf32>
    %179 = arith.addf %177, %178 : vector<8x32xf32>
    %cst_123 = arith.constant dense<0.000000e+00> : vector<8x64xf32>
    %180 = tpu.matmul %179, %39, %cst_123 {dimension_numbers = #tpu.dot_dimension_numbers<[1], [0], [0], [1], [0, 0, 1, 1], [], []>} : vector<8x32xf32>, vector<32x64xf32>, vector<8x64xf32> -> vector<8x64xf32>
    %181 = vector.broadcast %41 : vector<1x64xf32> to vector<8x64xf32>
    %182 = arith.addf %180, %181 : vector<8x64xf32>
    %cst_124 = arith.constant 0.000000e+00 : f32
    %183 = vector.broadcast %cst_124 : f32 to vector<8x64xf32>
    %184 = arith.maximumf %182, %183 : vector<8x64xf32>
    %cst_125 = arith.constant dense<0.000000e+00> : vector<8x32xf32>
    %185 = tpu.matmul %184, %43, %cst_125 {dimension_numbers = #tpu.dot_dimension_numbers<[1], [0], [0], [1], [0, 0, 1, 1], [], []>} : vector<8x64xf32>, vector<64x32xf32>, vector<8x32xf32> -> vector<8x32xf32>
    %186 = vector.broadcast %45 : vector<1x32xf32> to vector<8x32xf32>
    %187 = arith.addf %185, %186 : vector<8x32xf32>
    %188 = arith.addf %179, %187 : vector<8x32xf32>
    %cst_126 = arith.constant dense<0.000000e+00> : vector<8xf32>
    %189 = vector.multi_reduction <add>, %188, %cst_126 [1] : vector<8x32xf32> to vector<8xf32>
    %190 = vector.shape_cast %189 : vector<8xf32> to vector<8x1xf32>
    %cst_127 = arith.constant 3.200000e+01 : f32
    %191 = vector.broadcast %cst_127 : f32 to vector<8x1xf32>
    %192 = arith.divf %190, %191 : vector<8x1xf32>
    %193 = vector.broadcast %192 : vector<8x1xf32> to vector<8x32xf32>
    %194 = arith.subf %188, %193 : vector<8x32xf32>
    %195 = arith.mulf %194, %194 : vector<8x32xf32>
    %cst_128 = arith.constant dense<0.000000e+00> : vector<8xf32>
    %196 = vector.multi_reduction <add>, %195, %cst_128 [1] : vector<8x32xf32> to vector<8xf32>
    %197 = vector.shape_cast %196 : vector<8xf32> to vector<8x1xf32>
    %cst_129 = arith.constant 3.200000e+01 : f32
    %198 = vector.broadcast %cst_129 : f32 to vector<8x1xf32>
    %199 = arith.divf %197, %198 : vector<8x1xf32>
    %cst_130 = arith.constant 9.99999974E-6 : f32
    %200 = vector.broadcast %cst_130 : f32 to vector<8x1xf32>
    %201 = arith.addf %199, %200 : vector<8x1xf32>
    %202 = math.rsqrt %201 : vector<8x1xf32>
    %203 = vector.broadcast %202 : vector<8x1xf32> to vector<8x32xf32>
    %204 = arith.mulf %194, %203 : vector<8x32xf32>
    %205 = vector.broadcast %47 : vector<1x32xf32> to vector<8x32xf32>
    %206 = arith.mulf %204, %205 : vector<8x32xf32>
    %207 = vector.broadcast %49 : vector<1x32xf32> to vector<8x32xf32>
    %208 = arith.addf %206, %207 : vector<8x32xf32>
    %cst_131 = arith.constant dense<0.000000e+00> : vector<8x96xf32>
    %209 = tpu.matmul %25, %51, %cst_131 {dimension_numbers = #tpu.dot_dimension_numbers<[1], [0], [0], [1], [0, 0, 1, 1], [], []>} : vector<8x32xf32>, vector<32x96xf32>, vector<8x96xf32> -> vector<8x96xf32>
    %210 = vector.broadcast %53 : vector<1x96xf32> to vector<8x96xf32>
    %211 = arith.addf %209, %210 : vector<8x96xf32>
    %212 = vector.extract_strided_slice %211 {offsets = [0, 0], sizes = [8, 32], strides = [1, 1]} : vector<8x96xf32> to vector<8x32xf32>
    %213 = vector.extract_strided_slice %211 {offsets = [0, 32], sizes = [8, 32], strides = [1, 1]} : vector<8x96xf32> to vector<8x32xf32>
    %214 = vector.extract_strided_slice %211 {offsets = [0, 64], sizes = [8, 32], strides = [1, 1]} : vector<8x96xf32> to vector<8x32xf32>
    %cst_132 = arith.constant 0.000000e+00 : f32
    %215 = vector.broadcast %cst_132 : f32 to vector<8x32xf32>
    %216 = vector.broadcast %57 : vector<1x32xf32> to vector<8x32xf32>
    %217 = arith.addf %215, %216 : vector<8x32xf32>
    %218 = vector.extract_strided_slice %212 {offsets = [0, 0], sizes = [8, 8], strides = [1, 1]} : vector<8x32xf32> to vector<8x8xf32>
    %cst_133 = arith.constant 0.353553385 : f32
    %219 = vector.broadcast %cst_133 : f32 to vector<8x8xf32>
    %220 = arith.mulf %218, %219 : vector<8x8xf32>
    %221 = vector.extract_strided_slice %213 {offsets = [0, 0], sizes = [8, 8], strides = [1, 1]} : vector<8x32xf32> to vector<8x8xf32>
    %222 = vector.extract_strided_slice %214 {offsets = [0, 0], sizes = [8, 8], strides = [1, 1]} : vector<8x32xf32> to vector<8x8xf32>
    %cst_134 = arith.constant dense<0.000000e+00> : vector<8x8xf32>
    %223 = tpu.matmul %220, %221, %cst_134 {dimension_numbers = #tpu.dot_dimension_numbers<[1], [1], [0], [0], [0, 0, 1, 0], [], []>} : vector<8x8xf32>, vector<8x8xf32>, vector<8x8xf32> -> vector<8x8xf32>
    %cst_135 = arith.constant dense<0xFF800000> : vector<8xf32>
    %224 = vector.multi_reduction <maximumf>, %223, %cst_135 [1] : vector<8x8xf32> to vector<8xf32>
    %225 = vector.shape_cast %224 : vector<8xf32> to vector<8x1xf32>
    %226 = vector.broadcast %225 : vector<8x1xf32> to vector<8x8xf32>
    %227 = arith.subf %223, %226 : vector<8x8xf32>
    %228 = math.exp %227 : vector<8x8xf32>
    %cst_136 = arith.constant dense<0.000000e+00> : vector<8xf32>
    %229 = vector.multi_reduction <add>, %228, %cst_136 [1] : vector<8x8xf32> to vector<8xf32>
    %230 = vector.shape_cast %229 : vector<8xf32> to vector<8x1xf32>
    %231 = vector.broadcast %230 : vector<8x1xf32> to vector<8x8xf32>
    %232 = arith.divf %228, %231 : vector<8x8xf32>
    %cst_137 = arith.constant dense<0.000000e+00> : vector<8x8xf32>
    %233 = tpu.matmul %232, %222, %cst_137 {dimension_numbers = #tpu.dot_dimension_numbers<[1], [0], [0], [1], [0, 0, 1, 1], [], []>} : vector<8x8xf32>, vector<8x8xf32>, vector<8x8xf32> -> vector<8x8xf32>
    %234 = vector.extract_strided_slice %55 {offsets = [0, 0], sizes = [8, 32], strides = [1, 1]} : vector<32x32xf32> to vector<8x32xf32>
    %cst_138 = arith.constant dense<0.000000e+00> : vector<8x32xf32>
    %235 = tpu.matmul %233, %234, %cst_138 {dimension_numbers = #tpu.dot_dimension_numbers<[1], [0], [0], [1], [0, 0, 1, 1], [], []>} : vector<8x8xf32>, vector<8x32xf32>, vector<8x32xf32> -> vector<8x32xf32>
    %236 = arith.addf %217, %235 : vector<8x32xf32>
    %237 = vector.extract_strided_slice %212 {offsets = [0, 8], sizes = [8, 8], strides = [1, 1]} : vector<8x32xf32> to vector<8x8xf32>
    %cst_139 = arith.constant 0.353553385 : f32
    %238 = vector.broadcast %cst_139 : f32 to vector<8x8xf32>
    %239 = arith.mulf %237, %238 : vector<8x8xf32>
    %240 = vector.extract_strided_slice %213 {offsets = [0, 8], sizes = [8, 8], strides = [1, 1]} : vector<8x32xf32> to vector<8x8xf32>
    %241 = vector.extract_strided_slice %214 {offsets = [0, 8], sizes = [8, 8], strides = [1, 1]} : vector<8x32xf32> to vector<8x8xf32>
    %cst_140 = arith.constant dense<0.000000e+00> : vector<8x8xf32>
    %242 = tpu.matmul %239, %240, %cst_140 {dimension_numbers = #tpu.dot_dimension_numbers<[1], [1], [0], [0], [0, 0, 1, 0], [], []>} : vector<8x8xf32>, vector<8x8xf32>, vector<8x8xf32> -> vector<8x8xf32>
    %cst_141 = arith.constant dense<0xFF800000> : vector<8xf32>
    %243 = vector.multi_reduction <maximumf>, %242, %cst_141 [1] : vector<8x8xf32> to vector<8xf32>
    %244 = vector.shape_cast %243 : vector<8xf32> to vector<8x1xf32>
    %245 = vector.broadcast %244 : vector<8x1xf32> to vector<8x8xf32>
    %246 = arith.subf %242, %245 : vector<8x8xf32>
    %247 = math.exp %246 : vector<8x8xf32>
    %cst_142 = arith.constant dense<0.000000e+00> : vector<8xf32>
    %248 = vector.multi_reduction <add>, %247, %cst_142 [1] : vector<8x8xf32> to vector<8xf32>
    %249 = vector.shape_cast %248 : vector<8xf32> to vector<8x1xf32>
    %250 = vector.broadcast %249 : vector<8x1xf32> to vector<8x8xf32>
    %251 = arith.divf %247, %250 : vector<8x8xf32>
    %cst_143 = arith.constant dense<0.000000e+00> : vector<8x8xf32>
    %252 = tpu.matmul %251, %241, %cst_143 {dimension_numbers = #tpu.dot_dimension_numbers<[1], [0], [0], [1], [0, 0, 1, 1], [], []>} : vector<8x8xf32>, vector<8x8xf32>, vector<8x8xf32> -> vector<8x8xf32>
    %253 = vector.extract_strided_slice %55 {offsets = [8, 0], sizes = [8, 32], strides = [1, 1]} : vector<32x32xf32> to vector<8x32xf32>
    %cst_144 = arith.constant dense<0.000000e+00> : vector<8x32xf32>
    %254 = tpu.matmul %252, %253, %cst_144 {dimension_numbers = #tpu.dot_dimension_numbers<[1], [0], [0], [1], [0, 0, 1, 1], [], []>} : vector<8x8xf32>, vector<8x32xf32>, vector<8x32xf32> -> vector<8x32xf32>
    %255 = arith.addf %236, %254 : vector<8x32xf32>
    %256 = vector.extract_strided_slice %212 {offsets = [0, 16], sizes = [8, 8], strides = [1, 1]} : vector<8x32xf32> to vector<8x8xf32>
    %cst_145 = arith.constant 0.353553385 : f32
    %257 = vector.broadcast %cst_145 : f32 to vector<8x8xf32>
    %258 = arith.mulf %256, %257 : vector<8x8xf32>
    %259 = vector.extract_strided_slice %213 {offsets = [0, 16], sizes = [8, 8], strides = [1, 1]} : vector<8x32xf32> to vector<8x8xf32>
    %260 = vector.extract_strided_slice %214 {offsets = [0, 16], sizes = [8, 8], strides = [1, 1]} : vector<8x32xf32> to vector<8x8xf32>
    %cst_146 = arith.constant dense<0.000000e+00> : vector<8x8xf32>
    %261 = tpu.matmul %258, %259, %cst_146 {dimension_numbers = #tpu.dot_dimension_numbers<[1], [1], [0], [0], [0, 0, 1, 0], [], []>} : vector<8x8xf32>, vector<8x8xf32>, vector<8x8xf32> -> vector<8x8xf32>
    %cst_147 = arith.constant dense<0xFF800000> : vector<8xf32>
    %262 = vector.multi_reduction <maximumf>, %261, %cst_147 [1] : vector<8x8xf32> to vector<8xf32>
    %263 = vector.shape_cast %262 : vector<8xf32> to vector<8x1xf32>
    %264 = vector.broadcast %263 : vector<8x1xf32> to vector<8x8xf32>
    %265 = arith.subf %261, %264 : vector<8x8xf32>
    %266 = math.exp %265 : vector<8x8xf32>
    %cst_148 = arith.constant dense<0.000000e+00> : vector<8xf32>
    %267 = vector.multi_reduction <add>, %266, %cst_148 [1] : vector<8x8xf32> to vector<8xf32>
    %268 = vector.shape_cast %267 : vector<8xf32> to vector<8x1xf32>
    %269 = vector.broadcast %268 : vector<8x1xf32> to vector<8x8xf32>
    %270 = arith.divf %266, %269 : vector<8x8xf32>
    %cst_149 = arith.constant dense<0.000000e+00> : vector<8x8xf32>
    %271 = tpu.matmul %270, %260, %cst_149 {dimension_numbers = #tpu.dot_dimension_numbers<[1], [0], [0], [1], [0, 0, 1, 1], [], []>} : vector<8x8xf32>, vector<8x8xf32>, vector<8x8xf32> -> vector<8x8xf32>
    %272 = vector.extract_strided_slice %55 {offsets = [16, 0], sizes = [8, 32], strides = [1, 1]} : vector<32x32xf32> to vector<8x32xf32>
    %cst_150 = arith.constant dense<0.000000e+00> : vector<8x32xf32>
    %273 = tpu.matmul %271, %272, %cst_150 {dimension_numbers = #tpu.dot_dimension_numbers<[1], [0], [0], [1], [0, 0, 1, 1], [], []>} : vector<8x8xf32>, vector<8x32xf32>, vector<8x32xf32> -> vector<8x32xf32>
    %274 = arith.addf %255, %273 : vector<8x32xf32>
    %275 = vector.extract_strided_slice %212 {offsets = [0, 24], sizes = [8, 8], strides = [1, 1]} : vector<8x32xf32> to vector<8x8xf32>
    %cst_151 = arith.constant 0.353553385 : f32
    %276 = vector.broadcast %cst_151 : f32 to vector<8x8xf32>
    %277 = arith.mulf %275, %276 : vector<8x8xf32>
    %278 = vector.extract_strided_slice %213 {offsets = [0, 24], sizes = [8, 8], strides = [1, 1]} : vector<8x32xf32> to vector<8x8xf32>
    %279 = vector.extract_strided_slice %214 {offsets = [0, 24], sizes = [8, 8], strides = [1, 1]} : vector<8x32xf32> to vector<8x8xf32>
    %cst_152 = arith.constant dense<0.000000e+00> : vector<8x8xf32>
    %280 = tpu.matmul %277, %278, %cst_152 {dimension_numbers = #tpu.dot_dimension_numbers<[1], [1], [0], [0], [0, 0, 1, 0], [], []>} : vector<8x8xf32>, vector<8x8xf32>, vector<8x8xf32> -> vector<8x8xf32>
    %cst_153 = arith.constant dense<0xFF800000> : vector<8xf32>
    %281 = vector.multi_reduction <maximumf>, %280, %cst_153 [1] : vector<8x8xf32> to vector<8xf32>
    %282 = vector.shape_cast %281 : vector<8xf32> to vector<8x1xf32>
    %283 = vector.broadcast %282 : vector<8x1xf32> to vector<8x8xf32>
    %284 = arith.subf %280, %283 : vector<8x8xf32>
    %285 = math.exp %284 : vector<8x8xf32>
    %cst_154 = arith.constant dense<0.000000e+00> : vector<8xf32>
    %286 = vector.multi_reduction <add>, %285, %cst_154 [1] : vector<8x8xf32> to vector<8xf32>
    %287 = vector.shape_cast %286 : vector<8xf32> to vector<8x1xf32>
    %288 = vector.broadcast %287 : vector<8x1xf32> to vector<8x8xf32>
    %289 = arith.divf %285, %288 : vector<8x8xf32>
    %cst_155 = arith.constant dense<0.000000e+00> : vector<8x8xf32>
    %290 = tpu.matmul %289, %279, %cst_155 {dimension_numbers = #tpu.dot_dimension_numbers<[1], [0], [0], [1], [0, 0, 1, 1], [], []>} : vector<8x8xf32>, vector<8x8xf32>, vector<8x8xf32> -> vector<8x8xf32>
    %291 = vector.extract_strided_slice %55 {offsets = [24, 0], sizes = [8, 32], strides = [1, 1]} : vector<32x32xf32> to vector<8x32xf32>
    %cst_156 = arith.constant dense<0.000000e+00> : vector<8x32xf32>
    %292 = tpu.matmul %290, %291, %cst_156 {dimension_numbers = #tpu.dot_dimension_numbers<[1], [0], [0], [1], [0, 0, 1, 1], [], []>} : vector<8x8xf32>, vector<8x32xf32>, vector<8x32xf32> -> vector<8x32xf32>
    %293 = arith.addf %274, %292 : vector<8x32xf32>
    %294 = arith.addf %25, %293 : vector<8x32xf32>
    %cst_157 = arith.constant dense<0.000000e+00> : vector<8xf32>
    %295 = vector.multi_reduction <add>, %294, %cst_157 [1] : vector<8x32xf32> to vector<8xf32>
    %296 = vector.shape_cast %295 : vector<8xf32> to vector<8x1xf32>
    %cst_158 = arith.constant 3.200000e+01 : f32
    %297 = vector.broadcast %cst_158 : f32 to vector<8x1xf32>
    %298 = arith.divf %296, %297 : vector<8x1xf32>
    %299 = vector.broadcast %298 : vector<8x1xf32> to vector<8x32xf32>
    %300 = arith.subf %294, %299 : vector<8x32xf32>
    %301 = arith.mulf %300, %300 : vector<8x32xf32>
    %cst_159 = arith.constant dense<0.000000e+00> : vector<8xf32>
    %302 = vector.multi_reduction <add>, %301, %cst_159 [1] : vector<8x32xf32> to vector<8xf32>
    %303 = vector.shape_cast %302 : vector<8xf32> to vector<8x1xf32>
    %cst_160 = arith.constant 3.200000e+01 : f32
    %304 = vector.broadcast %cst_160 : f32 to vector<8x1xf32>
    %305 = arith.divf %303, %304 : vector<8x1xf32>
    %cst_161 = arith.constant 9.99999974E-6 : f32
    %306 = vector.broadcast %cst_161 : f32 to vector<8x1xf32>
    %307 = arith.addf %305, %306 : vector<8x1xf32>
    %308 = math.rsqrt %307 : vector<8x1xf32>
    %309 = vector.broadcast %308 : vector<8x1xf32> to vector<8x32xf32>
    %310 = arith.mulf %300, %309 : vector<8x32xf32>
    %311 = vector.broadcast %59 : vector<1x32xf32> to vector<8x32xf32>
    %312 = arith.mulf %310, %311 : vector<8x32xf32>
    %313 = vector.broadcast %61 : vector<1x32xf32> to vector<8x32xf32>
    %314 = arith.addf %312, %313 : vector<8x32xf32>
    %cst_162 = arith.constant dense<0.000000e+00> : vector<8x64xf32>
    %315 = tpu.matmul %314, %63, %cst_162 {dimension_numbers = #tpu.dot_dimension_numbers<[1], [0], [0], [1], [0, 0, 1, 1], [], []>} : vector<8x32xf32>, vector<32x64xf32>, vector<8x64xf32> -> vector<8x64xf32>
    %316 = vector.broadcast %65 : vector<1x64xf32> to vector<8x64xf32>
    %317 = arith.addf %315, %316 : vector<8x64xf32>
    %cst_163 = arith.constant 0.000000e+00 : f32
    %318 = vector.broadcast %cst_163 : f32 to vector<8x64xf32>
    %319 = arith.maximumf %317, %318 : vector<8x64xf32>
    %cst_164 = arith.constant dense<0.000000e+00> : vector<8x32xf32>
    %320 = tpu.matmul %319, %67, %cst_164 {dimension_numbers = #tpu.dot_dimension_numbers<[1], [0], [0], [1], [0, 0, 1, 1], [], []>} : vector<8x64xf32>, vector<64x32xf32>, vector<8x32xf32> -> vector<8x32xf32>
    %321 = vector.broadcast %69 : vector<1x32xf32> to vector<8x32xf32>
    %322 = arith.addf %320, %321 : vector<8x32xf32>
    %323 = arith.addf %314, %322 : vector<8x32xf32>
    %cst_165 = arith.constant dense<0.000000e+00> : vector<8xf32>
    %324 = vector.multi_reduction <add>, %323, %cst_165 [1] : vector<8x32xf32> to vector<8xf32>
    %325 = vector.shape_cast %324 : vector<8xf32> to vector<8x1xf32>
    %cst_166 = arith.constant 3.200000e+01 : f32
    %326 = vector.broadcast %cst_166 : f32 to vector<8x1xf32>
    %327 = arith.divf %325, %326 : vector<8x1xf32>
    %328 = vector.broadcast %327 : vector<8x1xf32> to vector<8x32xf32>
    %329 = arith.subf %323, %328 : vector<8x32xf32>
    %330 = arith.mulf %329, %329 : vector<8x32xf32>
    %cst_167 = arith.constant dense<0.000000e+00> : vector<8xf32>
    %331 = vector.multi_reduction <add>, %330, %cst_167 [1] : vector<8x32xf32> to vector<8xf32>
    %332 = vector.shape_cast %331 : vector<8xf32> to vector<8x1xf32>
    %cst_168 = arith.constant 3.200000e+01 : f32
    %333 = vector.broadcast %cst_168 : f32 to vector<8x1xf32>
    %334 = arith.divf %332, %333 : vector<8x1xf32>
    %cst_169 = arith.constant 9.99999974E-6 : f32
    %335 = vector.broadcast %cst_169 : f32 to vector<8x1xf32>
    %336 = arith.addf %334, %335 : vector<8x1xf32>
    %337 = math.rsqrt %336 : vector<8x1xf32>
    %338 = vector.broadcast %337 : vector<8x1xf32> to vector<8x32xf32>
    %339 = arith.mulf %329, %338 : vector<8x32xf32>
    %340 = vector.broadcast %71 : vector<1x32xf32> to vector<8x32xf32>
    %341 = arith.mulf %339, %340 : vector<8x32xf32>
    %342 = vector.broadcast %73 : vector<1x32xf32> to vector<8x32xf32>
    %343 = arith.addf %341, %342 : vector<8x32xf32>
    %c0_170 = arith.constant 0 : index
    %c0_171 = arith.constant 0 : index
    %c0_172 = arith.constant 0 : index
    %344 = vector.load %arg20[%c0_170, %c0_171, %c0_172] : memref<2x32x32xf32, #tpu.memory_space<vmem>>, vector<1x32x32xf32>
    %345 = vector.shape_cast %344 : vector<1x32x32xf32> to vector<32x32xf32>
    %cst_173 = arith.constant dense<0.000000e+00> : vector<8x32xf32>
    %346 = tpu.matmul %343, %345, %cst_173 {dimension_numbers = #tpu.dot_dimension_numbers<[1], [0], [0], [1], [0, 0, 1, 1], [], []>} : vector<8x32xf32>, vector<32x32xf32>, vector<8x32xf32> -> vector<8x32xf32>
    %347 = arith.addf %208, %346 : vector<8x32xf32>
    %c1 = arith.constant 1 : index
    %c0_174 = arith.constant 0 : index
    %c0_175 = arith.constant 0 : index
    %348 = vector.load %arg8[%c1, %c0_174, %c0_175] : memref<4x32x96xf32, #tpu.memory_space<vmem>>, vector<1x32x96xf32>
    %349 = vector.shape_cast %348 : vector<1x32x96xf32> to vector<32x96xf32>
    %c1_176 = arith.constant 1 : index
    %c0_177 = arith.constant 0 : index
    %c0_178 = arith.constant 0 : index
    %350 = vector.load %arg9[%c1_176, %c0_177, %c0_178] : memref<4x1x96xf32, #tpu.memory_space<vmem>>, vector<1x1x96xf32>
    %351 = vector.shape_cast %350 : vector<1x1x96xf32> to vector<1x96xf32>
    %c1_179 = arith.constant 1 : index
    %c0_180 = arith.constant 0 : index
    %c0_181 = arith.constant 0 : index
    %352 = vector.load %arg10[%c1_179, %c0_180, %c0_181] : memref<4x32x32xf32, #tpu.memory_space<vmem>>, vector<1x32x32xf32>
    %353 = vector.shape_cast %352 : vector<1x32x32xf32> to vector<32x32xf32>
    %c1_182 = arith.constant 1 : index
    %c0_183 = arith.constant 0 : index
    %c0_184 = arith.constant 0 : index
    %354 = vector.load %arg11[%c1_182, %c0_183, %c0_184] : memref<4x1x32xf32, #tpu.memory_space<vmem>>, vector<1x1x32xf32>
    %355 = vector.shape_cast %354 : vector<1x1x32xf32> to vector<1x32xf32>
    %c1_185 = arith.constant 1 : index
    %c0_186 = arith.constant 0 : index
    %c0_187 = arith.constant 0 : index
    %356 = vector.load %arg12[%c1_185, %c0_186, %c0_187] : memref<4x1x32xf32, #tpu.memory_space<vmem>>, vector<1x1x32xf32>
    %357 = vector.shape_cast %356 : vector<1x1x32xf32> to vector<1x32xf32>
    %c1_188 = arith.constant 1 : index
    %c0_189 = arith.constant 0 : index
    %c0_190 = arith.constant 0 : index
    %358 = vector.load %arg13[%c1_188, %c0_189, %c0_190] : memref<4x1x32xf32, #tpu.memory_space<vmem>>, vector<1x1x32xf32>
    %359 = vector.shape_cast %358 : vector<1x1x32xf32> to vector<1x32xf32>
    %c1_191 = arith.constant 1 : index
    %c0_192 = arith.constant 0 : index
    %c0_193 = arith.constant 0 : index
    %360 = vector.load %arg14[%c1_191, %c0_192, %c0_193] : memref<4x32x64xf32, #tpu.memory_space<vmem>>, vector<1x32x64xf32>
    %361 = vector.shape_cast %360 : vector<1x32x64xf32> to vector<32x64xf32>
    %c1_194 = arith.constant 1 : index
    %c0_195 = arith.constant 0 : index
    %c0_196 = arith.constant 0 : index
    %362 = vector.load %arg15[%c1_194, %c0_195, %c0_196] : memref<4x1x64xf32, #tpu.memory_space<vmem>>, vector<1x1x64xf32>
    %363 = vector.shape_cast %362 : vector<1x1x64xf32> to vector<1x64xf32>
    %c1_197 = arith.constant 1 : index
    %c0_198 = arith.constant 0 : index
    %c0_199 = arith.constant 0 : index
    %364 = vector.load %arg16[%c1_197, %c0_198, %c0_199] : memref<4x64x32xf32, #tpu.memory_space<vmem>>, vector<1x64x32xf32>
    %365 = vector.shape_cast %364 : vector<1x64x32xf32> to vector<64x32xf32>
    %c1_200 = arith.constant 1 : index
    %c0_201 = arith.constant 0 : index
    %c0_202 = arith.constant 0 : index
    %366 = vector.load %arg17[%c1_200, %c0_201, %c0_202] : memref<4x1x32xf32, #tpu.memory_space<vmem>>, vector<1x1x32xf32>
    %367 = vector.shape_cast %366 : vector<1x1x32xf32> to vector<1x32xf32>
    %c1_203 = arith.constant 1 : index
    %c0_204 = arith.constant 0 : index
    %c0_205 = arith.constant 0 : index
    %368 = vector.load %arg18[%c1_203, %c0_204, %c0_205] : memref<4x1x32xf32, #tpu.memory_space<vmem>>, vector<1x1x32xf32>
    %369 = vector.shape_cast %368 : vector<1x1x32xf32> to vector<1x32xf32>
    %c1_206 = arith.constant 1 : index
    %c0_207 = arith.constant 0 : index
    %c0_208 = arith.constant 0 : index
    %370 = vector.load %arg19[%c1_206, %c0_207, %c0_208] : memref<4x1x32xf32, #tpu.memory_space<vmem>>, vector<1x1x32xf32>
    %371 = vector.shape_cast %370 : vector<1x1x32xf32> to vector<1x32xf32>
    %c3 = arith.constant 3 : index
    %c0_209 = arith.constant 0 : index
    %c0_210 = arith.constant 0 : index
    %372 = vector.load %arg8[%c3, %c0_209, %c0_210] : memref<4x32x96xf32, #tpu.memory_space<vmem>>, vector<1x32x96xf32>
    %373 = vector.shape_cast %372 : vector<1x32x96xf32> to vector<32x96xf32>
    %c3_211 = arith.constant 3 : index
    %c0_212 = arith.constant 0 : index
    %c0_213 = arith.constant 0 : index
    %374 = vector.load %arg9[%c3_211, %c0_212, %c0_213] : memref<4x1x96xf32, #tpu.memory_space<vmem>>, vector<1x1x96xf32>
    %375 = vector.shape_cast %374 : vector<1x1x96xf32> to vector<1x96xf32>
    %c3_214 = arith.constant 3 : index
    %c0_215 = arith.constant 0 : index
    %c0_216 = arith.constant 0 : index
    %376 = vector.load %arg10[%c3_214, %c0_215, %c0_216] : memref<4x32x32xf32, #tpu.memory_space<vmem>>, vector<1x32x32xf32>
    %377 = vector.shape_cast %376 : vector<1x32x32xf32> to vector<32x32xf32>
    %c3_217 = arith.constant 3 : index
    %c0_218 = arith.constant 0 : index
    %c0_219 = arith.constant 0 : index
    %378 = vector.load %arg11[%c3_217, %c0_218, %c0_219] : memref<4x1x32xf32, #tpu.memory_space<vmem>>, vector<1x1x32xf32>
    %379 = vector.shape_cast %378 : vector<1x1x32xf32> to vector<1x32xf32>
    %c3_220 = arith.constant 3 : index
    %c0_221 = arith.constant 0 : index
    %c0_222 = arith.constant 0 : index
    %380 = vector.load %arg12[%c3_220, %c0_221, %c0_222] : memref<4x1x32xf32, #tpu.memory_space<vmem>>, vector<1x1x32xf32>
    %381 = vector.shape_cast %380 : vector<1x1x32xf32> to vector<1x32xf32>
    %c3_223 = arith.constant 3 : index
    %c0_224 = arith.constant 0 : index
    %c0_225 = arith.constant 0 : index
    %382 = vector.load %arg13[%c3_223, %c0_224, %c0_225] : memref<4x1x32xf32, #tpu.memory_space<vmem>>, vector<1x1x32xf32>
    %383 = vector.shape_cast %382 : vector<1x1x32xf32> to vector<1x32xf32>
    %c3_226 = arith.constant 3 : index
    %c0_227 = arith.constant 0 : index
    %c0_228 = arith.constant 0 : index
    %384 = vector.load %arg14[%c3_226, %c0_227, %c0_228] : memref<4x32x64xf32, #tpu.memory_space<vmem>>, vector<1x32x64xf32>
    %385 = vector.shape_cast %384 : vector<1x32x64xf32> to vector<32x64xf32>
    %c3_229 = arith.constant 3 : index
    %c0_230 = arith.constant 0 : index
    %c0_231 = arith.constant 0 : index
    %386 = vector.load %arg15[%c3_229, %c0_230, %c0_231] : memref<4x1x64xf32, #tpu.memory_space<vmem>>, vector<1x1x64xf32>
    %387 = vector.shape_cast %386 : vector<1x1x64xf32> to vector<1x64xf32>
    %c3_232 = arith.constant 3 : index
    %c0_233 = arith.constant 0 : index
    %c0_234 = arith.constant 0 : index
    %388 = vector.load %arg16[%c3_232, %c0_233, %c0_234] : memref<4x64x32xf32, #tpu.memory_space<vmem>>, vector<1x64x32xf32>
    %389 = vector.shape_cast %388 : vector<1x64x32xf32> to vector<64x32xf32>
    %c3_235 = arith.constant 3 : index
    %c0_236 = arith.constant 0 : index
    %c0_237 = arith.constant 0 : index
    %390 = vector.load %arg17[%c3_235, %c0_236, %c0_237] : memref<4x1x32xf32, #tpu.memory_space<vmem>>, vector<1x1x32xf32>
    %391 = vector.shape_cast %390 : vector<1x1x32xf32> to vector<1x32xf32>
    %c3_238 = arith.constant 3 : index
    %c0_239 = arith.constant 0 : index
    %c0_240 = arith.constant 0 : index
    %392 = vector.load %arg18[%c3_238, %c0_239, %c0_240] : memref<4x1x32xf32, #tpu.memory_space<vmem>>, vector<1x1x32xf32>
    %393 = vector.shape_cast %392 : vector<1x1x32xf32> to vector<1x32xf32>
    %c3_241 = arith.constant 3 : index
    %c0_242 = arith.constant 0 : index
    %c0_243 = arith.constant 0 : index
    %394 = vector.load %arg19[%c3_241, %c0_242, %c0_243] : memref<4x1x32xf32, #tpu.memory_space<vmem>>, vector<1x1x32xf32>
    %395 = vector.shape_cast %394 : vector<1x1x32xf32> to vector<1x32xf32>
    %cst_244 = arith.constant dense<0.000000e+00> : vector<8x96xf32>
    %396 = tpu.matmul %347, %349, %cst_244 {dimension_numbers = #tpu.dot_dimension_numbers<[1], [0], [0], [1], [0, 0, 1, 1], [], []>} : vector<8x32xf32>, vector<32x96xf32>, vector<8x96xf32> -> vector<8x96xf32>
    %397 = vector.broadcast %351 : vector<1x96xf32> to vector<8x96xf32>
    %398 = arith.addf %396, %397 : vector<8x96xf32>
    %399 = vector.extract_strided_slice %398 {offsets = [0, 0], sizes = [8, 32], strides = [1, 1]} : vector<8x96xf32> to vector<8x32xf32>
    %400 = vector.extract_strided_slice %398 {offsets = [0, 32], sizes = [8, 32], strides = [1, 1]} : vector<8x96xf32> to vector<8x32xf32>
    %401 = vector.extract_strided_slice %398 {offsets = [0, 64], sizes = [8, 32], strides = [1, 1]} : vector<8x96xf32> to vector<8x32xf32>
    %cst_245 = arith.constant 0.000000e+00 : f32
    %402 = vector.broadcast %cst_245 : f32 to vector<8x32xf32>
    %403 = vector.broadcast %355 : vector<1x32xf32> to vector<8x32xf32>
    %404 = arith.addf %402, %403 : vector<8x32xf32>
    %405 = vector.extract_strided_slice %399 {offsets = [0, 0], sizes = [8, 8], strides = [1, 1]} : vector<8x32xf32> to vector<8x8xf32>
    %cst_246 = arith.constant 0.353553385 : f32
    %406 = vector.broadcast %cst_246 : f32 to vector<8x8xf32>
    %407 = arith.mulf %405, %406 : vector<8x8xf32>
    %408 = vector.extract_strided_slice %400 {offsets = [0, 0], sizes = [8, 8], strides = [1, 1]} : vector<8x32xf32> to vector<8x8xf32>
    %409 = vector.extract_strided_slice %401 {offsets = [0, 0], sizes = [8, 8], strides = [1, 1]} : vector<8x32xf32> to vector<8x8xf32>
    %cst_247 = arith.constant dense<0.000000e+00> : vector<8x8xf32>
    %410 = tpu.matmul %407, %408, %cst_247 {dimension_numbers = #tpu.dot_dimension_numbers<[1], [1], [0], [0], [0, 0, 1, 0], [], []>} : vector<8x8xf32>, vector<8x8xf32>, vector<8x8xf32> -> vector<8x8xf32>
    %cst_248 = arith.constant dense<0xFF800000> : vector<8xf32>
    %411 = vector.multi_reduction <maximumf>, %410, %cst_248 [1] : vector<8x8xf32> to vector<8xf32>
    %412 = vector.shape_cast %411 : vector<8xf32> to vector<8x1xf32>
    %413 = vector.broadcast %412 : vector<8x1xf32> to vector<8x8xf32>
    %414 = arith.subf %410, %413 : vector<8x8xf32>
    %415 = math.exp %414 : vector<8x8xf32>
    %cst_249 = arith.constant dense<0.000000e+00> : vector<8xf32>
    %416 = vector.multi_reduction <add>, %415, %cst_249 [1] : vector<8x8xf32> to vector<8xf32>
    %417 = vector.shape_cast %416 : vector<8xf32> to vector<8x1xf32>
    %418 = vector.broadcast %417 : vector<8x1xf32> to vector<8x8xf32>
    %419 = arith.divf %415, %418 : vector<8x8xf32>
    %cst_250 = arith.constant dense<0.000000e+00> : vector<8x8xf32>
    %420 = tpu.matmul %419, %409, %cst_250 {dimension_numbers = #tpu.dot_dimension_numbers<[1], [0], [0], [1], [0, 0, 1, 1], [], []>} : vector<8x8xf32>, vector<8x8xf32>, vector<8x8xf32> -> vector<8x8xf32>
    %421 = vector.extract_strided_slice %353 {offsets = [0, 0], sizes = [8, 32], strides = [1, 1]} : vector<32x32xf32> to vector<8x32xf32>
    %cst_251 = arith.constant dense<0.000000e+00> : vector<8x32xf32>
    %422 = tpu.matmul %420, %421, %cst_251 {dimension_numbers = #tpu.dot_dimension_numbers<[1], [0], [0], [1], [0, 0, 1, 1], [], []>} : vector<8x8xf32>, vector<8x32xf32>, vector<8x32xf32> -> vector<8x32xf32>
    %423 = arith.addf %404, %422 : vector<8x32xf32>
    %424 = vector.extract_strided_slice %399 {offsets = [0, 8], sizes = [8, 8], strides = [1, 1]} : vector<8x32xf32> to vector<8x8xf32>
    %cst_252 = arith.constant 0.353553385 : f32
    %425 = vector.broadcast %cst_252 : f32 to vector<8x8xf32>
    %426 = arith.mulf %424, %425 : vector<8x8xf32>
    %427 = vector.extract_strided_slice %400 {offsets = [0, 8], sizes = [8, 8], strides = [1, 1]} : vector<8x32xf32> to vector<8x8xf32>
    %428 = vector.extract_strided_slice %401 {offsets = [0, 8], sizes = [8, 8], strides = [1, 1]} : vector<8x32xf32> to vector<8x8xf32>
    %cst_253 = arith.constant dense<0.000000e+00> : vector<8x8xf32>
    %429 = tpu.matmul %426, %427, %cst_253 {dimension_numbers = #tpu.dot_dimension_numbers<[1], [1], [0], [0], [0, 0, 1, 0], [], []>} : vector<8x8xf32>, vector<8x8xf32>, vector<8x8xf32> -> vector<8x8xf32>
    %cst_254 = arith.constant dense<0xFF800000> : vector<8xf32>
    %430 = vector.multi_reduction <maximumf>, %429, %cst_254 [1] : vector<8x8xf32> to vector<8xf32>
    %431 = vector.shape_cast %430 : vector<8xf32> to vector<8x1xf32>
    %432 = vector.broadcast %431 : vector<8x1xf32> to vector<8x8xf32>
    %433 = arith.subf %429, %432 : vector<8x8xf32>
    %434 = math.exp %433 : vector<8x8xf32>
    %cst_255 = arith.constant dense<0.000000e+00> : vector<8xf32>
    %435 = vector.multi_reduction <add>, %434, %cst_255 [1] : vector<8x8xf32> to vector<8xf32>
    %436 = vector.shape_cast %435 : vector<8xf32> to vector<8x1xf32>
    %437 = vector.broadcast %436 : vector<8x1xf32> to vector<8x8xf32>
    %438 = arith.divf %434, %437 : vector<8x8xf32>
    %cst_256 = arith.constant dense<0.000000e+00> : vector<8x8xf32>
    %439 = tpu.matmul %438, %428, %cst_256 {dimension_numbers = #tpu.dot_dimension_numbers<[1], [0], [0], [1], [0, 0, 1, 1], [], []>} : vector<8x8xf32>, vector<8x8xf32>, vector<8x8xf32> -> vector<8x8xf32>
    %440 = vector.extract_strided_slice %353 {offsets = [8, 0], sizes = [8, 32], strides = [1, 1]} : vector<32x32xf32> to vector<8x32xf32>
    %cst_257 = arith.constant dense<0.000000e+00> : vector<8x32xf32>
    %441 = tpu.matmul %439, %440, %cst_257 {dimension_numbers = #tpu.dot_dimension_numbers<[1], [0], [0], [1], [0, 0, 1, 1], [], []>} : vector<8x8xf32>, vector<8x32xf32>, vector<8x32xf32> -> vector<8x32xf32>
    %442 = arith.addf %423, %441 : vector<8x32xf32>
    %443 = vector.extract_strided_slice %399 {offsets = [0, 16], sizes = [8, 8], strides = [1, 1]} : vector<8x32xf32> to vector<8x8xf32>
    %cst_258 = arith.constant 0.353553385 : f32
    %444 = vector.broadcast %cst_258 : f32 to vector<8x8xf32>
    %445 = arith.mulf %443, %444 : vector<8x8xf32>
    %446 = vector.extract_strided_slice %400 {offsets = [0, 16], sizes = [8, 8], strides = [1, 1]} : vector<8x32xf32> to vector<8x8xf32>
    %447 = vector.extract_strided_slice %401 {offsets = [0, 16], sizes = [8, 8], strides = [1, 1]} : vector<8x32xf32> to vector<8x8xf32>
    %cst_259 = arith.constant dense<0.000000e+00> : vector<8x8xf32>
    %448 = tpu.matmul %445, %446, %cst_259 {dimension_numbers = #tpu.dot_dimension_numbers<[1], [1], [0], [0], [0, 0, 1, 0], [], []>} : vector<8x8xf32>, vector<8x8xf32>, vector<8x8xf32> -> vector<8x8xf32>
    %cst_260 = arith.constant dense<0xFF800000> : vector<8xf32>
    %449 = vector.multi_reduction <maximumf>, %448, %cst_260 [1] : vector<8x8xf32> to vector<8xf32>
    %450 = vector.shape_cast %449 : vector<8xf32> to vector<8x1xf32>
    %451 = vector.broadcast %450 : vector<8x1xf32> to vector<8x8xf32>
    %452 = arith.subf %448, %451 : vector<8x8xf32>
    %453 = math.exp %452 : vector<8x8xf32>
    %cst_261 = arith.constant dense<0.000000e+00> : vector<8xf32>
    %454 = vector.multi_reduction <add>, %453, %cst_261 [1] : vector<8x8xf32> to vector<8xf32>
    %455 = vector.shape_cast %454 : vector<8xf32> to vector<8x1xf32>
    %456 = vector.broadcast %455 : vector<8x1xf32> to vector<8x8xf32>
    %457 = arith.divf %453, %456 : vector<8x8xf32>
    %cst_262 = arith.constant dense<0.000000e+00> : vector<8x8xf32>
    %458 = tpu.matmul %457, %447, %cst_262 {dimension_numbers = #tpu.dot_dimension_numbers<[1], [0], [0], [1], [0, 0, 1, 1], [], []>} : vector<8x8xf32>, vector<8x8xf32>, vector<8x8xf32> -> vector<8x8xf32>
    %459 = vector.extract_strided_slice %353 {offsets = [16, 0], sizes = [8, 32], strides = [1, 1]} : vector<32x32xf32> to vector<8x32xf32>
    %cst_263 = arith.constant dense<0.000000e+00> : vector<8x32xf32>
    %460 = tpu.matmul %458, %459, %cst_263 {dimension_numbers = #tpu.dot_dimension_numbers<[1], [0], [0], [1], [0, 0, 1, 1], [], []>} : vector<8x8xf32>, vector<8x32xf32>, vector<8x32xf32> -> vector<8x32xf32>
    %461 = arith.addf %442, %460 : vector<8x32xf32>
    %462 = vector.extract_strided_slice %399 {offsets = [0, 24], sizes = [8, 8], strides = [1, 1]} : vector<8x32xf32> to vector<8x8xf32>
    %cst_264 = arith.constant 0.353553385 : f32
    %463 = vector.broadcast %cst_264 : f32 to vector<8x8xf32>
    %464 = arith.mulf %462, %463 : vector<8x8xf32>
    %465 = vector.extract_strided_slice %400 {offsets = [0, 24], sizes = [8, 8], strides = [1, 1]} : vector<8x32xf32> to vector<8x8xf32>
    %466 = vector.extract_strided_slice %401 {offsets = [0, 24], sizes = [8, 8], strides = [1, 1]} : vector<8x32xf32> to vector<8x8xf32>
    %cst_265 = arith.constant dense<0.000000e+00> : vector<8x8xf32>
    %467 = tpu.matmul %464, %465, %cst_265 {dimension_numbers = #tpu.dot_dimension_numbers<[1], [1], [0], [0], [0, 0, 1, 0], [], []>} : vector<8x8xf32>, vector<8x8xf32>, vector<8x8xf32> -> vector<8x8xf32>
    %cst_266 = arith.constant dense<0xFF800000> : vector<8xf32>
    %468 = vector.multi_reduction <maximumf>, %467, %cst_266 [1] : vector<8x8xf32> to vector<8xf32>
    %469 = vector.shape_cast %468 : vector<8xf32> to vector<8x1xf32>
    %470 = vector.broadcast %469 : vector<8x1xf32> to vector<8x8xf32>
    %471 = arith.subf %467, %470 : vector<8x8xf32>
    %472 = math.exp %471 : vector<8x8xf32>
    %cst_267 = arith.constant dense<0.000000e+00> : vector<8xf32>
    %473 = vector.multi_reduction <add>, %472, %cst_267 [1] : vector<8x8xf32> to vector<8xf32>
    %474 = vector.shape_cast %473 : vector<8xf32> to vector<8x1xf32>
    %475 = vector.broadcast %474 : vector<8x1xf32> to vector<8x8xf32>
    %476 = arith.divf %472, %475 : vector<8x8xf32>
    %cst_268 = arith.constant dense<0.000000e+00> : vector<8x8xf32>
    %477 = tpu.matmul %476, %466, %cst_268 {dimension_numbers = #tpu.dot_dimension_numbers<[1], [0], [0], [1], [0, 0, 1, 1], [], []>} : vector<8x8xf32>, vector<8x8xf32>, vector<8x8xf32> -> vector<8x8xf32>
    %478 = vector.extract_strided_slice %353 {offsets = [24, 0], sizes = [8, 32], strides = [1, 1]} : vector<32x32xf32> to vector<8x32xf32>
    %cst_269 = arith.constant dense<0.000000e+00> : vector<8x32xf32>
    %479 = tpu.matmul %477, %478, %cst_269 {dimension_numbers = #tpu.dot_dimension_numbers<[1], [0], [0], [1], [0, 0, 1, 1], [], []>} : vector<8x8xf32>, vector<8x32xf32>, vector<8x32xf32> -> vector<8x32xf32>
    %480 = arith.addf %461, %479 : vector<8x32xf32>
    %481 = arith.addf %347, %480 : vector<8x32xf32>
    %cst_270 = arith.constant dense<0.000000e+00> : vector<8xf32>
    %482 = vector.multi_reduction <add>, %481, %cst_270 [1] : vector<8x32xf32> to vector<8xf32>
    %483 = vector.shape_cast %482 : vector<8xf32> to vector<8x1xf32>
    %cst_271 = arith.constant 3.200000e+01 : f32
    %484 = vector.broadcast %cst_271 : f32 to vector<8x1xf32>
    %485 = arith.divf %483, %484 : vector<8x1xf32>
    %486 = vector.broadcast %485 : vector<8x1xf32> to vector<8x32xf32>
    %487 = arith.subf %481, %486 : vector<8x32xf32>
    %488 = arith.mulf %487, %487 : vector<8x32xf32>
    %cst_272 = arith.constant dense<0.000000e+00> : vector<8xf32>
    %489 = vector.multi_reduction <add>, %488, %cst_272 [1] : vector<8x32xf32> to vector<8xf32>
    %490 = vector.shape_cast %489 : vector<8xf32> to vector<8x1xf32>
    %cst_273 = arith.constant 3.200000e+01 : f32
    %491 = vector.broadcast %cst_273 : f32 to vector<8x1xf32>
    %492 = arith.divf %490, %491 : vector<8x1xf32>
    %cst_274 = arith.constant 9.99999974E-6 : f32
    %493 = vector.broadcast %cst_274 : f32 to vector<8x1xf32>
    %494 = arith.addf %492, %493 : vector<8x1xf32>
    %495 = math.rsqrt %494 : vector<8x1xf32>
    %496 = vector.broadcast %495 : vector<8x1xf32> to vector<8x32xf32>
    %497 = arith.mulf %487, %496 : vector<8x32xf32>
    %498 = vector.broadcast %357 : vector<1x32xf32> to vector<8x32xf32>
    %499 = arith.mulf %497, %498 : vector<8x32xf32>
    %500 = vector.broadcast %359 : vector<1x32xf32> to vector<8x32xf32>
    %501 = arith.addf %499, %500 : vector<8x32xf32>
    %cst_275 = arith.constant dense<0.000000e+00> : vector<8x64xf32>
    %502 = tpu.matmul %501, %361, %cst_275 {dimension_numbers = #tpu.dot_dimension_numbers<[1], [0], [0], [1], [0, 0, 1, 1], [], []>} : vector<8x32xf32>, vector<32x64xf32>, vector<8x64xf32> -> vector<8x64xf32>
    %503 = vector.broadcast %363 : vector<1x64xf32> to vector<8x64xf32>
    %504 = arith.addf %502, %503 : vector<8x64xf32>
    %cst_276 = arith.constant 0.000000e+00 : f32
    %505 = vector.broadcast %cst_276 : f32 to vector<8x64xf32>
    %506 = arith.maximumf %504, %505 : vector<8x64xf32>
    %cst_277 = arith.constant dense<0.000000e+00> : vector<8x32xf32>
    %507 = tpu.matmul %506, %365, %cst_277 {dimension_numbers = #tpu.dot_dimension_numbers<[1], [0], [0], [1], [0, 0, 1, 1], [], []>} : vector<8x64xf32>, vector<64x32xf32>, vector<8x32xf32> -> vector<8x32xf32>
    %508 = vector.broadcast %367 : vector<1x32xf32> to vector<8x32xf32>
    %509 = arith.addf %507, %508 : vector<8x32xf32>
    %510 = arith.addf %501, %509 : vector<8x32xf32>
    %cst_278 = arith.constant dense<0.000000e+00> : vector<8xf32>
    %511 = vector.multi_reduction <add>, %510, %cst_278 [1] : vector<8x32xf32> to vector<8xf32>
    %512 = vector.shape_cast %511 : vector<8xf32> to vector<8x1xf32>
    %cst_279 = arith.constant 3.200000e+01 : f32
    %513 = vector.broadcast %cst_279 : f32 to vector<8x1xf32>
    %514 = arith.divf %512, %513 : vector<8x1xf32>
    %515 = vector.broadcast %514 : vector<8x1xf32> to vector<8x32xf32>
    %516 = arith.subf %510, %515 : vector<8x32xf32>
    %517 = arith.mulf %516, %516 : vector<8x32xf32>
    %cst_280 = arith.constant dense<0.000000e+00> : vector<8xf32>
    %518 = vector.multi_reduction <add>, %517, %cst_280 [1] : vector<8x32xf32> to vector<8xf32>
    %519 = vector.shape_cast %518 : vector<8xf32> to vector<8x1xf32>
    %cst_281 = arith.constant 3.200000e+01 : f32
    %520 = vector.broadcast %cst_281 : f32 to vector<8x1xf32>
    %521 = arith.divf %519, %520 : vector<8x1xf32>
    %cst_282 = arith.constant 9.99999974E-6 : f32
    %522 = vector.broadcast %cst_282 : f32 to vector<8x1xf32>
    %523 = arith.addf %521, %522 : vector<8x1xf32>
    %524 = math.rsqrt %523 : vector<8x1xf32>
    %525 = vector.broadcast %524 : vector<8x1xf32> to vector<8x32xf32>
    %526 = arith.mulf %516, %525 : vector<8x32xf32>
    %527 = vector.broadcast %369 : vector<1x32xf32> to vector<8x32xf32>
    %528 = arith.mulf %526, %527 : vector<8x32xf32>
    %529 = vector.broadcast %371 : vector<1x32xf32> to vector<8x32xf32>
    %530 = arith.addf %528, %529 : vector<8x32xf32>
    %cst_283 = arith.constant dense<0.000000e+00> : vector<8x96xf32>
    %531 = tpu.matmul %343, %373, %cst_283 {dimension_numbers = #tpu.dot_dimension_numbers<[1], [0], [0], [1], [0, 0, 1, 1], [], []>} : vector<8x32xf32>, vector<32x96xf32>, vector<8x96xf32> -> vector<8x96xf32>
    %532 = vector.broadcast %375 : vector<1x96xf32> to vector<8x96xf32>
    %533 = arith.addf %531, %532 : vector<8x96xf32>
    %534 = vector.extract_strided_slice %533 {offsets = [0, 0], sizes = [8, 32], strides = [1, 1]} : vector<8x96xf32> to vector<8x32xf32>
    %535 = vector.extract_strided_slice %533 {offsets = [0, 32], sizes = [8, 32], strides = [1, 1]} : vector<8x96xf32> to vector<8x32xf32>
    %536 = vector.extract_strided_slice %533 {offsets = [0, 64], sizes = [8, 32], strides = [1, 1]} : vector<8x96xf32> to vector<8x32xf32>
    %cst_284 = arith.constant 0.000000e+00 : f32
    %537 = vector.broadcast %cst_284 : f32 to vector<8x32xf32>
    %538 = vector.broadcast %379 : vector<1x32xf32> to vector<8x32xf32>
    %539 = arith.addf %537, %538 : vector<8x32xf32>
    %540 = vector.extract_strided_slice %534 {offsets = [0, 0], sizes = [8, 8], strides = [1, 1]} : vector<8x32xf32> to vector<8x8xf32>
    %cst_285 = arith.constant 0.353553385 : f32
    %541 = vector.broadcast %cst_285 : f32 to vector<8x8xf32>
    %542 = arith.mulf %540, %541 : vector<8x8xf32>
    %543 = vector.extract_strided_slice %535 {offsets = [0, 0], sizes = [8, 8], strides = [1, 1]} : vector<8x32xf32> to vector<8x8xf32>
    %544 = vector.extract_strided_slice %536 {offsets = [0, 0], sizes = [8, 8], strides = [1, 1]} : vector<8x32xf32> to vector<8x8xf32>
    %cst_286 = arith.constant dense<0.000000e+00> : vector<8x8xf32>
    %545 = tpu.matmul %542, %543, %cst_286 {dimension_numbers = #tpu.dot_dimension_numbers<[1], [1], [0], [0], [0, 0, 1, 0], [], []>} : vector<8x8xf32>, vector<8x8xf32>, vector<8x8xf32> -> vector<8x8xf32>
    %cst_287 = arith.constant dense<0xFF800000> : vector<8xf32>
    %546 = vector.multi_reduction <maximumf>, %545, %cst_287 [1] : vector<8x8xf32> to vector<8xf32>
    %547 = vector.shape_cast %546 : vector<8xf32> to vector<8x1xf32>
    %548 = vector.broadcast %547 : vector<8x1xf32> to vector<8x8xf32>
    %549 = arith.subf %545, %548 : vector<8x8xf32>
    %550 = math.exp %549 : vector<8x8xf32>
    %cst_288 = arith.constant dense<0.000000e+00> : vector<8xf32>
    %551 = vector.multi_reduction <add>, %550, %cst_288 [1] : vector<8x8xf32> to vector<8xf32>
    %552 = vector.shape_cast %551 : vector<8xf32> to vector<8x1xf32>
    %553 = vector.broadcast %552 : vector<8x1xf32> to vector<8x8xf32>
    %554 = arith.divf %550, %553 : vector<8x8xf32>
    %cst_289 = arith.constant dense<0.000000e+00> : vector<8x8xf32>
    %555 = tpu.matmul %554, %544, %cst_289 {dimension_numbers = #tpu.dot_dimension_numbers<[1], [0], [0], [1], [0, 0, 1, 1], [], []>} : vector<8x8xf32>, vector<8x8xf32>, vector<8x8xf32> -> vector<8x8xf32>
    %556 = vector.extract_strided_slice %377 {offsets = [0, 0], sizes = [8, 32], strides = [1, 1]} : vector<32x32xf32> to vector<8x32xf32>
    %cst_290 = arith.constant dense<0.000000e+00> : vector<8x32xf32>
    %557 = tpu.matmul %555, %556, %cst_290 {dimension_numbers = #tpu.dot_dimension_numbers<[1], [0], [0], [1], [0, 0, 1, 1], [], []>} : vector<8x8xf32>, vector<8x32xf32>, vector<8x32xf32> -> vector<8x32xf32>
    %558 = arith.addf %539, %557 : vector<8x32xf32>
    %559 = vector.extract_strided_slice %534 {offsets = [0, 8], sizes = [8, 8], strides = [1, 1]} : vector<8x32xf32> to vector<8x8xf32>
    %cst_291 = arith.constant 0.353553385 : f32
    %560 = vector.broadcast %cst_291 : f32 to vector<8x8xf32>
    %561 = arith.mulf %559, %560 : vector<8x8xf32>
    %562 = vector.extract_strided_slice %535 {offsets = [0, 8], sizes = [8, 8], strides = [1, 1]} : vector<8x32xf32> to vector<8x8xf32>
    %563 = vector.extract_strided_slice %536 {offsets = [0, 8], sizes = [8, 8], strides = [1, 1]} : vector<8x32xf32> to vector<8x8xf32>
    %cst_292 = arith.constant dense<0.000000e+00> : vector<8x8xf32>
    %564 = tpu.matmul %561, %562, %cst_292 {dimension_numbers = #tpu.dot_dimension_numbers<[1], [1], [0], [0], [0, 0, 1, 0], [], []>} : vector<8x8xf32>, vector<8x8xf32>, vector<8x8xf32> -> vector<8x8xf32>
    %cst_293 = arith.constant dense<0xFF800000> : vector<8xf32>
    %565 = vector.multi_reduction <maximumf>, %564, %cst_293 [1] : vector<8x8xf32> to vector<8xf32>
    %566 = vector.shape_cast %565 : vector<8xf32> to vector<8x1xf32>
    %567 = vector.broadcast %566 : vector<8x1xf32> to vector<8x8xf32>
    %568 = arith.subf %564, %567 : vector<8x8xf32>
    %569 = math.exp %568 : vector<8x8xf32>
    %cst_294 = arith.constant dense<0.000000e+00> : vector<8xf32>
    %570 = vector.multi_reduction <add>, %569, %cst_294 [1] : vector<8x8xf32> to vector<8xf32>
    %571 = vector.shape_cast %570 : vector<8xf32> to vector<8x1xf32>
    %572 = vector.broadcast %571 : vector<8x1xf32> to vector<8x8xf32>
    %573 = arith.divf %569, %572 : vector<8x8xf32>
    %cst_295 = arith.constant dense<0.000000e+00> : vector<8x8xf32>
    %574 = tpu.matmul %573, %563, %cst_295 {dimension_numbers = #tpu.dot_dimension_numbers<[1], [0], [0], [1], [0, 0, 1, 1], [], []>} : vector<8x8xf32>, vector<8x8xf32>, vector<8x8xf32> -> vector<8x8xf32>
    %575 = vector.extract_strided_slice %377 {offsets = [8, 0], sizes = [8, 32], strides = [1, 1]} : vector<32x32xf32> to vector<8x32xf32>
    %cst_296 = arith.constant dense<0.000000e+00> : vector<8x32xf32>
    %576 = tpu.matmul %574, %575, %cst_296 {dimension_numbers = #tpu.dot_dimension_numbers<[1], [0], [0], [1], [0, 0, 1, 1], [], []>} : vector<8x8xf32>, vector<8x32xf32>, vector<8x32xf32> -> vector<8x32xf32>
    %577 = arith.addf %558, %576 : vector<8x32xf32>
    %578 = vector.extract_strided_slice %534 {offsets = [0, 16], sizes = [8, 8], strides = [1, 1]} : vector<8x32xf32> to vector<8x8xf32>
    %cst_297 = arith.constant 0.353553385 : f32
    %579 = vector.broadcast %cst_297 : f32 to vector<8x8xf32>
    %580 = arith.mulf %578, %579 : vector<8x8xf32>
    %581 = vector.extract_strided_slice %535 {offsets = [0, 16], sizes = [8, 8], strides = [1, 1]} : vector<8x32xf32> to vector<8x8xf32>
    %582 = vector.extract_strided_slice %536 {offsets = [0, 16], sizes = [8, 8], strides = [1, 1]} : vector<8x32xf32> to vector<8x8xf32>
    %cst_298 = arith.constant dense<0.000000e+00> : vector<8x8xf32>
    %583 = tpu.matmul %580, %581, %cst_298 {dimension_numbers = #tpu.dot_dimension_numbers<[1], [1], [0], [0], [0, 0, 1, 0], [], []>} : vector<8x8xf32>, vector<8x8xf32>, vector<8x8xf32> -> vector<8x8xf32>
    %cst_299 = arith.constant dense<0xFF800000> : vector<8xf32>
    %584 = vector.multi_reduction <maximumf>, %583, %cst_299 [1] : vector<8x8xf32> to vector<8xf32>
    %585 = vector.shape_cast %584 : vector<8xf32> to vector<8x1xf32>
    %586 = vector.broadcast %585 : vector<8x1xf32> to vector<8x8xf32>
    %587 = arith.subf %583, %586 : vector<8x8xf32>
    %588 = math.exp %587 : vector<8x8xf32>
    %cst_300 = arith.constant dense<0.000000e+00> : vector<8xf32>
    %589 = vector.multi_reduction <add>, %588, %cst_300 [1] : vector<8x8xf32> to vector<8xf32>
    %590 = vector.shape_cast %589 : vector<8xf32> to vector<8x1xf32>
    %591 = vector.broadcast %590 : vector<8x1xf32> to vector<8x8xf32>
    %592 = arith.divf %588, %591 : vector<8x8xf32>
    %cst_301 = arith.constant dense<0.000000e+00> : vector<8x8xf32>
    %593 = tpu.matmul %592, %582, %cst_301 {dimension_numbers = #tpu.dot_dimension_numbers<[1], [0], [0], [1], [0, 0, 1, 1], [], []>} : vector<8x8xf32>, vector<8x8xf32>, vector<8x8xf32> -> vector<8x8xf32>
    %594 = vector.extract_strided_slice %377 {offsets = [16, 0], sizes = [8, 32], strides = [1, 1]} : vector<32x32xf32> to vector<8x32xf32>
    %cst_302 = arith.constant dense<0.000000e+00> : vector<8x32xf32>
    %595 = tpu.matmul %593, %594, %cst_302 {dimension_numbers = #tpu.dot_dimension_numbers<[1], [0], [0], [1], [0, 0, 1, 1], [], []>} : vector<8x8xf32>, vector<8x32xf32>, vector<8x32xf32> -> vector<8x32xf32>
    %596 = arith.addf %577, %595 : vector<8x32xf32>
    %597 = vector.extract_strided_slice %534 {offsets = [0, 24], sizes = [8, 8], strides = [1, 1]} : vector<8x32xf32> to vector<8x8xf32>
    %cst_303 = arith.constant 0.353553385 : f32
    %598 = vector.broadcast %cst_303 : f32 to vector<8x8xf32>
    %599 = arith.mulf %597, %598 : vector<8x8xf32>
    %600 = vector.extract_strided_slice %535 {offsets = [0, 24], sizes = [8, 8], strides = [1, 1]} : vector<8x32xf32> to vector<8x8xf32>
    %601 = vector.extract_strided_slice %536 {offsets = [0, 24], sizes = [8, 8], strides = [1, 1]} : vector<8x32xf32> to vector<8x8xf32>
    %cst_304 = arith.constant dense<0.000000e+00> : vector<8x8xf32>
    %602 = tpu.matmul %599, %600, %cst_304 {dimension_numbers = #tpu.dot_dimension_numbers<[1], [1], [0], [0], [0, 0, 1, 0], [], []>} : vector<8x8xf32>, vector<8x8xf32>, vector<8x8xf32> -> vector<8x8xf32>
    %cst_305 = arith.constant dense<0xFF800000> : vector<8xf32>
    %603 = vector.multi_reduction <maximumf>, %602, %cst_305 [1] : vector<8x8xf32> to vector<8xf32>
    %604 = vector.shape_cast %603 : vector<8xf32> to vector<8x1xf32>
    %605 = vector.broadcast %604 : vector<8x1xf32> to vector<8x8xf32>
    %606 = arith.subf %602, %605 : vector<8x8xf32>
    %607 = math.exp %606 : vector<8x8xf32>
    %cst_306 = arith.constant dense<0.000000e+00> : vector<8xf32>
    %608 = vector.multi_reduction <add>, %607, %cst_306 [1] : vector<8x8xf32> to vector<8xf32>
    %609 = vector.shape_cast %608 : vector<8xf32> to vector<8x1xf32>
    %610 = vector.broadcast %609 : vector<8x1xf32> to vector<8x8xf32>
    %611 = arith.divf %607, %610 : vector<8x8xf32>
    %cst_307 = arith.constant dense<0.000000e+00> : vector<8x8xf32>
    %612 = tpu.matmul %611, %601, %cst_307 {dimension_numbers = #tpu.dot_dimension_numbers<[1], [0], [0], [1], [0, 0, 1, 1], [], []>} : vector<8x8xf32>, vector<8x8xf32>, vector<8x8xf32> -> vector<8x8xf32>
    %613 = vector.extract_strided_slice %377 {offsets = [24, 0], sizes = [8, 32], strides = [1, 1]} : vector<32x32xf32> to vector<8x32xf32>
    %cst_308 = arith.constant dense<0.000000e+00> : vector<8x32xf32>
    %614 = tpu.matmul %612, %613, %cst_308 {dimension_numbers = #tpu.dot_dimension_numbers<[1], [0], [0], [1], [0, 0, 1, 1], [], []>} : vector<8x8xf32>, vector<8x32xf32>, vector<8x32xf32> -> vector<8x32xf32>
    %615 = arith.addf %596, %614 : vector<8x32xf32>
    %616 = arith.addf %343, %615 : vector<8x32xf32>
    %cst_309 = arith.constant dense<0.000000e+00> : vector<8xf32>
    %617 = vector.multi_reduction <add>, %616, %cst_309 [1] : vector<8x32xf32> to vector<8xf32>
    %618 = vector.shape_cast %617 : vector<8xf32> to vector<8x1xf32>
    %cst_310 = arith.constant 3.200000e+01 : f32
    %619 = vector.broadcast %cst_310 : f32 to vector<8x1xf32>
    %620 = arith.divf %618, %619 : vector<8x1xf32>
    %621 = vector.broadcast %620 : vector<8x1xf32> to vector<8x32xf32>
    %622 = arith.subf %616, %621 : vector<8x32xf32>
    %623 = arith.mulf %622, %622 : vector<8x32xf32>
    %cst_311 = arith.constant dense<0.000000e+00> : vector<8xf32>
    %624 = vector.multi_reduction <add>, %623, %cst_311 [1] : vector<8x32xf32> to vector<8xf32>
    %625 = vector.shape_cast %624 : vector<8xf32> to vector<8x1xf32>
    %cst_312 = arith.constant 3.200000e+01 : f32
    %626 = vector.broadcast %cst_312 : f32 to vector<8x1xf32>
    %627 = arith.divf %625, %626 : vector<8x1xf32>
    %cst_313 = arith.constant 9.99999974E-6 : f32
    %628 = vector.broadcast %cst_313 : f32 to vector<8x1xf32>
    %629 = arith.addf %627, %628 : vector<8x1xf32>
    %630 = math.rsqrt %629 : vector<8x1xf32>
    %631 = vector.broadcast %630 : vector<8x1xf32> to vector<8x32xf32>
    %632 = arith.mulf %622, %631 : vector<8x32xf32>
    %633 = vector.broadcast %381 : vector<1x32xf32> to vector<8x32xf32>
    %634 = arith.mulf %632, %633 : vector<8x32xf32>
    %635 = vector.broadcast %383 : vector<1x32xf32> to vector<8x32xf32>
    %636 = arith.addf %634, %635 : vector<8x32xf32>
    %cst_314 = arith.constant dense<0.000000e+00> : vector<8x64xf32>
    %637 = tpu.matmul %636, %385, %cst_314 {dimension_numbers = #tpu.dot_dimension_numbers<[1], [0], [0], [1], [0, 0, 1, 1], [], []>} : vector<8x32xf32>, vector<32x64xf32>, vector<8x64xf32> -> vector<8x64xf32>
    %638 = vector.broadcast %387 : vector<1x64xf32> to vector<8x64xf32>
    %639 = arith.addf %637, %638 : vector<8x64xf32>
    %cst_315 = arith.constant 0.000000e+00 : f32
    %640 = vector.broadcast %cst_315 : f32 to vector<8x64xf32>
    %641 = arith.maximumf %639, %640 : vector<8x64xf32>
    %cst_316 = arith.constant dense<0.000000e+00> : vector<8x32xf32>
    %642 = tpu.matmul %641, %389, %cst_316 {dimension_numbers = #tpu.dot_dimension_numbers<[1], [0], [0], [1], [0, 0, 1, 1], [], []>} : vector<8x64xf32>, vector<64x32xf32>, vector<8x32xf32> -> vector<8x32xf32>
    %643 = vector.broadcast %391 : vector<1x32xf32> to vector<8x32xf32>
    %644 = arith.addf %642, %643 : vector<8x32xf32>
    %645 = arith.addf %636, %644 : vector<8x32xf32>
    %cst_317 = arith.constant dense<0.000000e+00> : vector<8xf32>
    %646 = vector.multi_reduction <add>, %645, %cst_317 [1] : vector<8x32xf32> to vector<8xf32>
    %647 = vector.shape_cast %646 : vector<8xf32> to vector<8x1xf32>
    %cst_318 = arith.constant 3.200000e+01 : f32
    %648 = vector.broadcast %cst_318 : f32 to vector<8x1xf32>
    %649 = arith.divf %647, %648 : vector<8x1xf32>
    %650 = vector.broadcast %649 : vector<8x1xf32> to vector<8x32xf32>
    %651 = arith.subf %645, %650 : vector<8x32xf32>
    %652 = arith.mulf %651, %651 : vector<8x32xf32>
    %cst_319 = arith.constant dense<0.000000e+00> : vector<8xf32>
    %653 = vector.multi_reduction <add>, %652, %cst_319 [1] : vector<8x32xf32> to vector<8xf32>
    %654 = vector.shape_cast %653 : vector<8xf32> to vector<8x1xf32>
    %cst_320 = arith.constant 3.200000e+01 : f32
    %655 = vector.broadcast %cst_320 : f32 to vector<8x1xf32>
    %656 = arith.divf %654, %655 : vector<8x1xf32>
    %cst_321 = arith.constant 9.99999974E-6 : f32
    %657 = vector.broadcast %cst_321 : f32 to vector<8x1xf32>
    %658 = arith.addf %656, %657 : vector<8x1xf32>
    %659 = math.rsqrt %658 : vector<8x1xf32>
    %660 = vector.broadcast %659 : vector<8x1xf32> to vector<8x32xf32>
    %661 = arith.mulf %651, %660 : vector<8x32xf32>
    %662 = vector.broadcast %393 : vector<1x32xf32> to vector<8x32xf32>
    %663 = arith.mulf %661, %662 : vector<8x32xf32>
    %664 = vector.broadcast %395 : vector<1x32xf32> to vector<8x32xf32>
    %665 = arith.addf %663, %664 : vector<8x32xf32>
    %c1_322 = arith.constant 1 : index
    %c0_323 = arith.constant 0 : index
    %c0_324 = arith.constant 0 : index
    %666 = vector.load %arg20[%c1_322, %c0_323, %c0_324] : memref<2x32x32xf32, #tpu.memory_space<vmem>>, vector<1x32x32xf32>
    %667 = vector.shape_cast %666 : vector<1x32x32xf32> to vector<32x32xf32>
    %cst_325 = arith.constant dense<0.000000e+00> : vector<8x32xf32>
    %668 = tpu.matmul %665, %667, %cst_325 {dimension_numbers = #tpu.dot_dimension_numbers<[1], [0], [0], [1], [0, 0, 1, 1], [], []>} : vector<8x32xf32>, vector<32x32xf32>, vector<8x32xf32> -> vector<8x32xf32>
    %669 = arith.addf %530, %668 : vector<8x32xf32>
    %c0_326 = arith.constant 0 : index
    %c0_327 = arith.constant 0 : index
    %c0_328 = arith.constant 0 : index
    %670 = vector.load %arg21[%c0_326, %c0_327, %c0_328] : memref<1x8x32xf32, #tpu.memory_space<vmem>>, vector<1x8x32xf32>
    %671 = vector.shape_cast %670 : vector<1x8x32xf32> to vector<8x32xf32>
    %672 = vector.shape_cast %669 : vector<8x32xf32> to vector<1x8x32xf32>
    tpu.vector_store %arg21[%c0_326, %c0_327, %c0_328], %672 {strides = array<i32>} : memref<1x8x32xf32, #tpu.memory_space<vmem>>, vector<1x8x32xf32>,
    return
  }
  func.func @transform_0(%arg0: i32) -> (i32, i32, i32) {
    %c0_i32 = arith.constant 0 : i32
    %c0_i32_0 = arith.constant 0 : i32
    %c0_i32_1 = arith.constant 0 : i32
    return %arg0, %c0_i32, %c0_i32_0 : i32, i32, i32
  }
  func.func @transform_1(%arg0: i32) -> (i32, i32, i32) {
    %c0_i32 = arith.constant 0 : i32
    %c0_i32_0 = arith.constant 0 : i32
    %c0_i32_1 = arith.constant 0 : i32
    return %arg0, %c0_i32, %c0_i32_0 : i32, i32, i32
  }
  func.func @transform_2(%arg0: i32) -> (i32, i32) {
    %c0_i32 = arith.constant 0 : i32
    %c0_i32_0 = arith.constant 0 : i32
    %c0_i32_1 = arith.constant 0 : i32
    return %c0_i32, %c0_i32_0 : i32, i32
  }
  func.func @transform_3(%arg0: i32) -> (i32, i32) {
    %c0_i32 = arith.constant 0 : i32
    %c0_i32_0 = arith.constant 0 : i32
    %c0_i32_1 = arith.constant 0 : i32
    return %c0_i32, %c0_i32_0 : i32, i32
  }
  func.func @transform_4(%arg0: i32) -> (i32, i32) {
    %c0_i32 = arith.constant 0 : i32
    %c0_i32_0 = arith.constant 0 : i32
    %c0_i32_1 = arith.constant 0 : i32
    return %c0_i32, %c0_i32_0 : i32, i32
  }
  func.func @transform_5(%arg0: i32) -> (i32, i32) {
    %c0_i32 = arith.constant 0 : i32
    %c0_i32_0 = arith.constant 0 : i32
    %c0_i32_1 = arith.constant 0 : i32
    return %c0_i32, %c0_i32_0 : i32, i32
  }
  func.func @transform_6(%arg0: i32) -> (i32, i32) {
    %c0_i32 = arith.constant 0 : i32
    %c0_i32_0 = arith.constant 0 : i32
    %c0_i32_1 = arith.constant 0 : i32
    return %c0_i32, %c0_i32_0 : i32, i32
  }
  func.func @transform_7(%arg0: i32) -> (i32, i32, i32) {
    %c0_i32 = arith.constant 0 : i32
    %c0_i32_0 = arith.constant 0 : i32
    %c0_i32_1 = arith.constant 0 : i32
    %c0_i32_2 = arith.constant 0 : i32
    return %c0_i32, %c0_i32_0, %c0_i32_1 : i32, i32, i32
  }
  func.func @transform_8(%arg0: i32) -> (i32, i32, i32) {
    %c0_i32 = arith.constant 0 : i32
    %c0_i32_0 = arith.constant 0 : i32
    %c0_i32_1 = arith.constant 0 : i32
    %c0_i32_2 = arith.constant 0 : i32
    return %c0_i32, %c0_i32_0, %c0_i32_1 : i32, i32, i32
  }
  func.func @transform_9(%arg0: i32) -> (i32, i32, i32) {
    %c0_i32 = arith.constant 0 : i32
    %c0_i32_0 = arith.constant 0 : i32
    %c0_i32_1 = arith.constant 0 : i32
    %c0_i32_2 = arith.constant 0 : i32
    return %c0_i32, %c0_i32_0, %c0_i32_1 : i32, i32, i32
  }
  func.func @transform_10(%arg0: i32) -> (i32, i32, i32) {
    %c0_i32 = arith.constant 0 : i32
    %c0_i32_0 = arith.constant 0 : i32
    %c0_i32_1 = arith.constant 0 : i32
    %c0_i32_2 = arith.constant 0 : i32
    return %c0_i32, %c0_i32_0, %c0_i32_1 : i32, i32, i32
  }
  func.func @transform_11(%arg0: i32) -> (i32, i32, i32) {
    %c0_i32 = arith.constant 0 : i32
    %c0_i32_0 = arith.constant 0 : i32
    %c0_i32_1 = arith.constant 0 : i32
    %c0_i32_2 = arith.constant 0 : i32
    return %c0_i32, %c0_i32_0, %c0_i32_1 : i32, i32, i32
  }
  func.func @transform_12(%arg0: i32) -> (i32, i32, i32) {
    %c0_i32 = arith.constant 0 : i32
    %c0_i32_0 = arith.constant 0 : i32
    %c0_i32_1 = arith.constant 0 : i32
    %c0_i32_2 = arith.constant 0 : i32
    return %c0_i32, %c0_i32_0, %c0_i32_1 : i32, i32, i32
  }
  func.func @transform_13(%arg0: i32) -> (i32, i32, i32) {
    %c0_i32 = arith.constant 0 : i32
    %c0_i32_0 = arith.constant 0 : i32
    %c0_i32_1 = arith.constant 0 : i32
    %c0_i32_2 = arith.constant 0 : i32
    return %c0_i32, %c0_i32_0, %c0_i32_1 : i32, i32, i32
  }
  func.func @transform_14(%arg0: i32) -> (i32, i32, i32) {
    %c0_i32 = arith.constant 0 : i32
    %c0_i32_0 = arith.constant 0 : i32
    %c0_i32_1 = arith.constant 0 : i32
    %c0_i32_2 = arith.constant 0 : i32
    return %c0_i32, %c0_i32_0, %c0_i32_1 : i32, i32, i32
  }
  func.func @transform_15(%arg0: i32) -> (i32, i32, i32) {
    %c0_i32 = arith.constant 0 : i32
    %c0_i32_0 = arith.constant 0 : i32
    %c0_i32_1 = arith.constant 0 : i32
    %c0_i32_2 = arith.constant 0 : i32
    return %c0_i32, %c0_i32_0, %c0_i32_1 : i32, i32, i32
  }
  func.func @transform_16(%arg0: i32) -> (i32, i32, i32) {
    %c0_i32 = arith.constant 0 : i32
    %c0_i32_0 = arith.constant 0 : i32
    %c0_i32_1 = arith.constant 0 : i32
    %c0_i32_2 = arith.constant 0 : i32
    return %c0_i32, %c0_i32_0, %c0_i32_1 : i32, i32, i32
  }
  func.func @transform_17(%arg0: i32) -> (i32, i32, i32) {
    %c0_i32 = arith.constant 0 : i32
    %c0_i32_0 = arith.constant 0 : i32
    %c0_i32_1 = arith.constant 0 : i32
    %c0_i32_2 = arith.constant 0 : i32
    return %c0_i32, %c0_i32_0, %c0_i32_1 : i32, i32, i32
  }
  func.func @transform_18(%arg0: i32) -> (i32, i32, i32) {
    %c0_i32 = arith.constant 0 : i32
    %c0_i32_0 = arith.constant 0 : i32
    %c0_i32_1 = arith.constant 0 : i32
    %c0_i32_2 = arith.constant 0 : i32
    return %c0_i32, %c0_i32_0, %c0_i32_1 : i32, i32, i32
  }
  func.func @transform_19(%arg0: i32) -> (i32, i32, i32) {
    %c0_i32 = arith.constant 0 : i32
    %c0_i32_0 = arith.constant 0 : i32
    %c0_i32_1 = arith.constant 0 : i32
    %c0_i32_2 = arith.constant 0 : i32
    return %c0_i32, %c0_i32_0, %c0_i32_1 : i32, i32, i32
  }
  func.func @transform_20(%arg0: i32) -> (i32, i32, i32) {
    %c0_i32 = arith.constant 0 : i32
    %c0_i32_0 = arith.constant 0 : i32
    %c0_i32_1 = arith.constant 0 : i32
    return %arg0, %c0_i32, %c0_i32_0 : i32, i32, i32
  }
}

</mosaic_0001>

<llo_original>
// kernel: modified_transformer_encoder.1
$region0: #{modified_transformer_encoder.1}
  #allocation0 [shape = 'u32[]', space=smem, size = 0x4, offset = 0x4, fixed_abs, tag = 'smem constant byte address 0x4 - core index']
  #allocation1 [shape = 'u32[144,128]{1,0:T(1,128)}', space=vmem, size = 0x12000, scoped, tag = 'internal scratch']
  %s0 = inlined_call_operand.vmem [shape: f32[2,8,32], index: 0, kind: input, shape index: {}]
  %s1 = inlined_call_operand.vmem [shape: f32[2,3,768], index: 1, kind: input, shape index: {}]
  %s2 = inlined_call_operand.hbm [shape: f32[768,512], index: 2, kind: input, shape index: {}]
  %s3 = inlined_call_operand.hbm [shape: f32[1,512], index: 3, kind: input, shape index: {}]
  %s4 = inlined_call_operand.vmem [shape: f32[1536,32], index: 4, kind: input, shape index: {}]
  %s5 = inlined_call_operand.hbm [shape: f32[1,32], index: 5, kind: input, shape index: {}]
  %s6 = inlined_call_operand.hbm [shape: f32[32,32], index: 6, kind: input, shape index: {}]
  %s7 = inlined_call_operand.hbm [shape: f32[4,32,96], index: 7, kind: input, shape index: {}]
  %s8 = inlined_call_operand.hbm [shape: f32[4,1,96], index: 8, kind: input, shape index: {}]
  %s9 = inlined_call_operand.hbm [shape: f32[4,32,32], index: 9, kind: input, shape index: {}]
  %s10 = inlined_call_operand.hbm [shape: f32[4,1,32], index: 10, kind: input, shape index: {}]
  %s11 = inlined_call_operand.hbm [shape: f32[4,1,32], index: 11, kind: input, shape index: {}]
  %s12 = inlined_call_operand.hbm [shape: f32[4,1,32], index: 12, kind: input, shape index: {}]
  %s13 = inlined_call_operand.hbm [shape: f32[4,32,64], index: 13, kind: input, shape index: {}]
  %s14 = inlined_call_operand.hbm [shape: f32[4,1,64], index: 14, kind: input, shape index: {}]
  %s15 = inlined_call_operand.vmem [shape: f32[4,64,32], index: 15, kind: input, shape index: {}]
  %s16 = inlined_call_operand.hbm [shape: f32[4,1,32], index: 16, kind: input, shape index: {}]
  %s17 = inlined_call_operand.hbm [shape: f32[4,1,32], index: 17, kind: input, shape index: {}]
  %s18 = inlined_call_operand.hbm [shape: f32[4,1,32], index: 18, kind: input, shape index: {}]
  %s19 = inlined_call_operand.hbm [shape: f32[2,32,32], index: 19, kind: input, shape index: {}]
  %s20 = inlined_call_operand.vmem [shape: f32[2,8,32], index: 20, kind: output, shape index: {}]
  %s21 = sld [smem:[#allocation0]]
  $region177: #{modified_transformer_encoder.1} parent=0
    _
  %s23 = ssub.s32 1, %s21
  %s24 = scalar_select 0, %s23, %s21
  $region1: #{modified_transformer_encoder.1} parent=0
    #allocation2 [shape = 'u8[1572864]{0}', space=vmem, size = 0x180000, scoped, tag = 'input window, operand 2, single buffered']
    #allocation3 [shape = 's32[2]{0}', space=sflag, size = 0x8, scoped, tag = 'scoped memory for modified_transformer_encoder.1']
    #allocation4 [shape = 'u8[2048]{0}', space=vmem, size = 0x800, scoped, tag = 'input window, operand 3, single buffered']
    #allocation5 [shape = 's32[1]{0}', space=sflag, size = 0x4, scoped, tag = 'scoped memory for modified_transformer_encoder.1']
    #allocation6 [shape = 'u8[512]{0}', space=vmem, size = 0x400, scoped, tag = 'input window, operand 5, single buffered']
    #allocation7 [shape = 'u8[16384]{0}', space=vmem, size = 0x4000, scoped, tag = 'input window, operand 6, single buffered']
    #allocation8 [shape = 's32[1]{0}', space=sflag, size = 0x4, scoped, tag = 'scoped memory for modified_transformer_encoder.1']
    #allocation9 [shape = 'u8[65536]{0}', space=vmem, size = 0x10000, scoped, tag = 'input window, operand 7, single buffered']
    #allocation10 [shape = 'u8[2048]{0}', space=vmem, size = 0x800, scoped, tag = 'input window, operand 8, single buffered']
    #allocation11 [shape = 's32[1]{0}', space=sflag, size = 0x4, scoped, tag = 'scoped memory for modified_transformer_encoder.1']
    #allocation12 [shape = 'u8[65536]{0}', space=vmem, size = 0x10000, scoped, tag = 'input window, operand 9, single buffered']
    #allocation13 [shape = 'u8[2048]{0}', space=vmem, size = 0x800, scoped, tag = 'input window, operand 10, single buffered']
    #allocation14 [shape = 's32[1]{0}', space=sflag, size = 0x4, scoped, tag = 'scoped memory for modified_transformer_encoder.1']
    #allocation15 [shape = 'u8[2048]{0}', space=vmem, size = 0x800, scoped, tag = 'input window, operand 11, single buffered']
    #allocation16 [shape = 'u8[2048]{0}', space=vmem, size = 0x800, scoped, tag = 'input window, operand 12, single buffered']
    #allocation17 [shape = 's32[1]{0}', space=sflag, size = 0x4, scoped, tag = 'scoped memory for modified_transformer_encoder.1']
    #allocation18 [shape = 'u8[65536]{0}', space=vmem, size = 0x10000, scoped, tag = 'input window, operand 13, single buffered']
    #allocation19 [shape = 'u8[2048]{0}', space=vmem, size = 0x800, scoped, tag = 'input window, operand 14, single buffered']
    #allocation20 [shape = 's32[1]{0}', space=sflag, size = 0x4, scoped, tag = 'scoped memory for modified_transformer_encoder.1']
    #allocation21 [shape = 'u8[2048]{0}', space=vmem, size = 0x800, scoped, tag = 'input window, operand 16, single buffered']
    #allocation22 [shape = 'u8[2048]{0}', space=vmem, size = 0x800, scoped, tag = 'input window, operand 17, single buffered']
    #allocation23 [shape = 's32[1]{0}', space=sflag, size = 0x4, scoped, tag = 'scoped memory for modified_transformer_encoder.1']
    #allocation24 [shape = 'u8[2048]{0}', space=vmem, size = 0x800, scoped, tag = 'input window, operand 18, single buffered']
    #allocation25 [shape = 'u8[32768]{0}', space=vmem, size = 0x8000, scoped, tag = 'input window, operand 19, single buffered']
    #allocation26 [shape = 's32[1]{0}', space=sflag, size = 0x4, scoped, tag = 'scoped memory for modified_transformer_encoder.1']
    %25 = vsyncpa [#allocation3], 0
    %26 = vsyncpa [#allocation5], 0
    %27 = vsyncpa [#allocation8], 0
    %28 = vsyncpa [#allocation11], 0
    %29 = vsyncpa [#allocation14], 0
    %30 = vsyncpa [#allocation17], 0
    %31 = vsyncpa [#allocation20], 0
    %32 = vsyncpa [#allocation23], 0
    %33 = vsyncpa [#allocation26], 0
    loop: start=0, step=1, limit=4
    $region2: #{modified_transformer_encoder.1} parent=1 // loop_pre_header
      _
    $region3: #{modified_transformer_encoder.1} parent=1 // loop_header
      %s35 = sphi 0, %s39
      %p36 = scmp.ge.s32.totalorder %s35, 4
      %s45 = sphi 0, %s47
      %s48 = sphi 0, %s45
      %s49 = sphi 0, %s48
      %s65 = sphi 0, %s49
      %s71 = sphi 0, %s73
      %s74 = sphi 0, %s71
      %s75 = sphi 0, %s74
      %s91 = sphi 0, %s75
      %s95 = sphi 0, %s95
      %s97 = sphi 0, %s95
      %s98 = sphi 0, %s97
      %s112 = sphi 0, %s98
      %s116 = sphi 0, %s116
      %s118 = sphi 0, %s116
      %s119 = sphi 0, %s118
      %s133 = sphi 0, %s119
      %s137 = sphi 0, %s137
      %s139 = sphi 0, %s137
      %s140 = sphi 0, %s139
      %s154 = sphi 0, %s140
      %s158 = sphi 0, %s158
      %s160 = sphi 0, %s158
      %s161 = sphi 0, %s160
      %s175 = sphi 0, %s161
      %s179 = sphi 0, %s179
      %s181 = sphi 0, %s179
      %s182 = sphi 0, %s181
      %s196 = sphi 0, %s182
      %s200 = sphi 0, %s200
      %s202 = sphi 0, %s200
      %s203 = sphi 0, %s202
      %s217 = sphi 0, %s203
      %s221 = sphi 0, %s221
      %s223 = sphi 0, %s221
      %s224 = sphi 0, %s223
      %s238 = sphi 0, %s224
      %s242 = sphi 0, %s242
      %s244 = sphi 0, %s242
      %s245 = sphi 0, %s244
      %s259 = sphi 0, %s245
      %s263 = sphi 0, %s263
      %s265 = sphi 0, %s263
      %s266 = sphi 0, %s265
      %s280 = sphi 0, %s266
      %s284 = sphi 0, %s284
      %s286 = sphi 0, %s284
      %s287 = sphi 0, %s286
      %s301 = sphi 0, %s287
      %s305 = sphi 0, %s305
      %s307 = sphi 0, %s305
      %s308 = sphi 0, %s307
      %s322 = sphi 0, %s308
      %s326 = sphi 0, %s326
      %s328 = sphi 0, %s326
      %s329 = sphi 0, %s328
      %s343 = sphi 0, %s329
      %s347 = sphi 0, %s347
      %s349 = sphi 0, %s347
      %s350 = sphi 0, %s349
      %s364 = sphi 0, %s350
      %s368 = sphi 0, %s368
      %s370 = sphi 0, %s368
      %s371 = sphi 0, %s370
      %s385 = sphi 0, %s371
      %s389 = sphi 0, %s389
      %s391 = sphi 0, %s389
      %s392 = sphi 0, %s391
      %s406 = sphi 0, %s392
      %s410 = sphi 0, %s410
      %s412 = sphi 0, %s410
      %s413 = sphi 0, %s412
      %s427 = sphi 0, %s413
      %s431 = sphi 0, %s431
      %s433 = sphi 0, %s431
      %s434 = sphi 0, %s433
      %s448 = sphi 0, %s434
      %s452 = sphi 0, %s452
      %s454 = sphi 0, %s452
      %s455 = sphi 0, %s454
      %s469 = sphi 0, %s455
      %s475 = sphi 0, %s477
      %s478 = sphi 0, %s475
      %s479 = sphi 0, %s478
      %s495 = sphi 0, %s479
    $region4: #{modified_transformer_encoder.1} parent=1 // loop_header_branch
      %38 = sbr.rel (%p36) target = $region8
    $region5: #{modified_transformer_encoder.1} parent=1 // loop_body
      %s40 = ssub.s32 %s35, 1
      %s41 = ssub.s32 %s35, 2
      %s42 = sadd.s32 %s35, 1
      %s43 = ssub.s32 %s35, %s42
      %p44 = scmp.eq.s32.totalorder %s43, 0
      %s46 = sadd.s32 %s45, 1
      %s47 = scalar_select %p44, %s45, %s46
      %p50 = pneg %p44
      %p51 = scmp.eq.s32.totalorder %s35, 1
      %p52 = por %p50, %p51
      %p53 = scmp.ne.s32.totalorder %s45, %s48
      %p54 = scmp.eq.s32.totalorder %s35, 0
      %p55 = por %p53, %p54
      %p56 = scmp.ne.s32.totalorder %s45, %s48
      %p57 = scmp.eq.s32.totalorder %s40, 1
      %p58 = por %p56, %p57
      %p59 = scmp.ne.s32.totalorder %s48, %s49
      %p60 = scmp.eq.s32.totalorder %s40, 0
      %p61 = por %p59, %p60
      %p62 = scmp.ne.s32.totalorder %s48, %s49
      %p63 = scmp.eq.s32.totalorder %s41, 1
      %p64 = por %p62, %p63
      %p66 = scmp.ne.s32.totalorder %s49, %s65
      %p67 = scmp.eq.s32.totalorder %s41, 0
      %p68 = por %p66, %p67
      %s69 = ssub.s32 %s35, %s42
      %p70 = scmp.eq.s32.totalorder %s69, 0
      %s72 = sadd.s32 %s71, 1
      %s73 = scalar_select %p70, %s71, %s72
      %p76 = pneg %p70
      %p77 = scmp.eq.s32.totalorder %s35, 1
      %p78 = por %p76, %p77
      %p79 = scmp.ne.s32.totalorder %s71, %s74
      %p80 = scmp.eq.s32.totalorder %s35, 0
      %p81 = por %p79, %p80
      %p82 = scmp.ne.s32.totalorder %s71, %s74
      %p83 = scmp.eq.s32.totalorder %s40, 1
      %p84 = por %p82, %p83
      %p85 = scmp.ne.s32.totalorder %s74, %s75
      %p86 = scmp.eq.s32.totalorder %s40, 0
      %p87 = por %p85, %p86
      %p88 = scmp.ne.s32.totalorder %s74, %s75
      %p89 = scmp.eq.s32.totalorder %s41, 1
      %p90 = por %p88, %p89
      %p92 = scmp.ne.s32.totalorder %s75, %s91
      %p93 = scmp.eq.s32.totalorder %s41, 0
      %p94 = por %p92, %p93
      %s96 = sadd.s32 %s95, 1
      %p99 = scmp.eq.s32.totalorder %s35, 1
      %p100 = scmp.ne.s32.totalorder %s95, %s97
      %p101 = scmp.eq.s32.totalorder %s35, 0
      %p102 = por %p100, %p101
      %p103 = scmp.ne.s32.totalorder %s95, %s97
      %p104 = scmp.eq.s32.totalorder %s40, 1
      %p105 = por %p103, %p104
      %p106 = scmp.ne.s32.totalorder %s97, %s98
      %p107 = scmp.eq.s32.totalorder %s40, 0
      %p108 = por %p106, %p107
      %p109 = scmp.ne.s32.totalorder %s97, %s98
      %p110 = scmp.eq.s32.totalorder %s41, 1
      %p111 = por %p109, %p110
      %p113 = scmp.ne.s32.totalorder %s98, %s112
      %p114 = scmp.eq.s32.totalorder %s41, 0
      %p115 = por %p113, %p114
      %s117 = sadd.s32 %s116, 1
      %p120 = scmp.eq.s32.totalorder %s35, 1
      %p121 = scmp.ne.s32.totalorder %s116, %s118
      %p122 = scmp.eq.s32.totalorder %s35, 0
      %p123 = por %p121, %p122
      %p124 = scmp.ne.s32.totalorder %s116, %s118
      %p125 = scmp.eq.s32.totalorder %s40, 1
      %p126 = por %p124, %p125
      %p127 = scmp.ne.s32.totalorder %s118, %s119
      %p128 = scmp.eq.s32.totalorder %s40, 0
      %p129 = por %p127, %p128
      %p130 = scmp.ne.s32.totalorder %s118, %s119
      %p131 = scmp.eq.s32.totalorder %s41, 1
      %p132 = por %p130, %p131
      %p134 = scmp.ne.s32.totalorder %s119, %s133
      %p135 = scmp.eq.s32.totalorder %s41, 0
      %p136 = por %p134, %p135
      %s138 = sadd.s32 %s137, 1
      %p141 = scmp.eq.s32.totalorder %s35, 1
      %p142 = scmp.ne.s32.totalorder %s137, %s139
      %p143 = scmp.eq.s32.totalorder %s35, 0
      %p144 = por %p142, %p143
      %p145 = scmp.ne.s32.totalorder %s137, %s139
      %p146 = scmp.eq.s32.totalorder %s40, 1
      %p147 = por %p145, %p146
      %p148 = scmp.ne.s32.totalorder %s139, %s140
      %p149 = scmp.eq.s32.totalorder %s40, 0
      %p150 = por %p148, %p149
      %p151 = scmp.ne.s32.totalorder %s139, %s140
      %p152 = scmp.eq.s32.totalorder %s41, 1
      %p153 = por %p151, %p152
      %p155 = scmp.ne.s32.totalorder %s140, %s154
      %p156 = scmp.eq.s32.totalorder %s41, 0
      %p157 = por %p155, %p156
      %s159 = sadd.s32 %s158, 1
      %p162 = scmp.eq.s32.totalorder %s35, 1
      %p163 = scmp.ne.s32.totalorder %s158, %s160
      %p164 = scmp.eq.s32.totalorder %s35, 0
      %p165 = por %p163, %p164
      %p166 = scmp.ne.s32.totalorder %s158, %s160
      %p167 = scmp.eq.s32.totalorder %s40, 1
      %p168 = por %p166, %p167
      %p169 = scmp.ne.s32.totalorder %s160, %s161
      %p170 = scmp.eq.s32.totalorder %s40, 0
      %p171 = por %p169, %p170
      %p172 = scmp.ne.s32.totalorder %s160, %s161
      %p173 = scmp.eq.s32.totalorder %s41, 1
      %p174 = por %p172, %p173
      %p176 = scmp.ne.s32.totalorder %s161, %s175
      %p177 = scmp.eq.s32.totalorder %s41, 0
      %p178 = por %p176, %p177
      %s180 = sadd.s32 %s179, 1
      %p183 = scmp.eq.s32.totalorder %s35, 1
      %p184 = scmp.ne.s32.totalorder %s179, %s181
      %p185 = scmp.eq.s32.totalorder %s35, 0
      %p186 = por %p184, %p185
      %p187 = scmp.ne.s32.totalorder %s179, %s181
      %p188 = scmp.eq.s32.totalorder %s40, 1
      %p189 = por %p187, %p188
      %p190 = scmp.ne.s32.totalorder %s181, %s182
      %p191 = scmp.eq.s32.totalorder %s40, 0
      %p192 = por %p190, %p191
      %p193 = scmp.ne.s32.totalorder %s181, %s182
      %p194 = scmp.eq.s32.totalorder %s41, 1
      %p195 = por %p193, %p194
      %p197 = scmp.ne.s32.totalorder %s182, %s196
      %p198 = scmp.eq.s32.totalorder %s41, 0
      %p199 = por %p197, %p198
      %s201 = sadd.s32 %s200, 1
      %p204 = scmp.eq.s32.totalorder %s35, 1
      %p205 = scmp.ne.s32.totalorder %s200, %s202
      %p206 = scmp.eq.s32.totalorder %s35, 0
      %p207 = por %p205, %p206
      %p208 = scmp.ne.s32.totalorder %s200, %s202
      %p209 = scmp.eq.s32.totalorder %s40, 1
      %p210 = por %p208, %p209
      %p211 = scmp.ne.s32.totalorder %s202, %s203
      %p212 = scmp.eq.s32.totalorder %s40, 0
      %p213 = por %p211, %p212
      %p214 = scmp.ne.s32.totalorder %s202, %s203
      %p215 = scmp.eq.s32.totalorder %s41, 1
      %p216 = por %p214, %p215
      %p218 = scmp.ne.s32.totalorder %s203, %s217
      %p219 = scmp.eq.s32.totalorder %s41, 0
      %p220 = por %p218, %p219
      %s222 = sadd.s32 %s221, 1
      %p225 = scmp.eq.s32.totalorder %s35, 1
      %p226 = scmp.ne.s32.totalorder %s221, %s223
      %p227 = scmp.eq.s32.totalorder %s35, 0
      %p228 = por %p226, %p227
      %p229 = scmp.ne.s32.totalorder %s221, %s223
      %p230 = scmp.eq.s32.totalorder %s40, 1
      %p231 = por %p229, %p230
      %p232 = scmp.ne.s32.totalorder %s223, %s224
      %p233 = scmp.eq.s32.totalorder %s40, 0
      %p234 = por %p232, %p233
      %p235 = scmp.ne.s32.totalorder %s223, %s224
      %p236 = scmp.eq.s32.totalorder %s41, 1
      %p237 = por %p235, %p236
      %p239 = scmp.ne.s32.totalorder %s224, %s238
      %p240 = scmp.eq.s32.totalorder %s41, 0
      %p241 = por %p239, %p240
      %s243 = sadd.s32 %s242, 1
      %p246 = scmp.eq.s32.totalorder %s35, 1
      %p247 = scmp.ne.s32.totalorder %s242, %s244
      %p248 = scmp.eq.s32.totalorder %s35, 0
      %p249 = por %p247, %p248
      %p250 = scmp.ne.s32.totalorder %s242, %s244
      %p251 = scmp.eq.s32.totalorder %s40, 1
      %p252 = por %p250, %p251
      %p253 = scmp.ne.s32.totalorder %s244, %s245
      %p254 = scmp.eq.s32.totalorder %s40, 0
      %p255 = por %p253, %p254
      %p256 = scmp.ne.s32.totalorder %s244, %s245
      %p257 = scmp.eq.s32.totalorder %s41, 1
      %p258 = por %p256, %p257
      %p260 = scmp.ne.s32.totalorder %s245, %s259
      %p261 = scmp.eq.s32.totalorder %s41, 0
      %p262 = por %p260, %p261
      %s264 = sadd.s32 %s263, 1
      %p267 = scmp.eq.s32.totalorder %s35, 1
      %p268 = scmp.ne.s32.totalorder %s263, %s265
      %p269 = scmp.eq.s32.totalorder %s35, 0
      %p270 = por %p268, %p269
      %p271 = scmp.ne.s32.totalorder %s263, %s265
      %p272 = scmp.eq.s32.totalorder %s40, 1
      %p273 = por %p271, %p272
      %p274 = scmp.ne.s32.totalorder %s265, %s266
      %p275 = scmp.eq.s32.totalorder %s40, 0
      %p276 = por %p274, %p275
      %p277 = scmp.ne.s32.totalorder %s265, %s266
      %p278 = scmp.eq.s32.totalorder %s41, 1
      %p279 = por %p277, %p278
      %p281 = scmp.ne.s32.totalorder %s266, %s280
      %p282 = scmp.eq.s32.totalorder %s41, 0
      %p283 = por %p281, %p282
      %s285 = sadd.s32 %s284, 1
      %p288 = scmp.eq.s32.totalorder %s35, 1
      %p289 = scmp.ne.s32.totalorder %s284, %s286
      %p290 = scmp.eq.s32.totalorder %s35, 0
      %p291 = por %p289, %p290
      %p292 = scmp.ne.s32.totalorder %s284, %s286
      %p293 = scmp.eq.s32.totalorder %s40, 1
      %p294 = por %p292, %p293
      %p295 = scmp.ne.s32.totalorder %s286, %s287
      %p296 = scmp.eq.s32.totalorder %s40, 0
      %p297 = por %p295, %p296
      %p298 = scmp.ne.s32.totalorder %s286, %s287
      %p299 = scmp.eq.s32.totalorder %s41, 1
      %p300 = por %p298, %p299
      %p302 = scmp.ne.s32.totalorder %s287, %s301
      %p303 = scmp.eq.s32.totalorder %s41, 0
      %p304 = por %p302, %p303
      %s306 = sadd.s32 %s305, 1
      %p309 = scmp.eq.s32.totalorder %s35, 1
      %p310 = scmp.ne.s32.totalorder %s305, %s307
      %p311 = scmp.eq.s32.totalorder %s35, 0
      %p312 = por %p310, %p311
      %p313 = scmp.ne.s32.totalorder %s305, %s307
      %p314 = scmp.eq.s32.totalorder %s40, 1
      %p315 = por %p313, %p314
      %p316 = scmp.ne.s32.totalorder %s307, %s308
      %p317 = scmp.eq.s32.totalorder %s40, 0
      %p318 = por %p316, %p317
      %p319 = scmp.ne.s32.totalorder %s307, %s308
      %p320 = scmp.eq.s32.totalorder %s41, 1
      %p321 = por %p319, %p320
      %p323 = scmp.ne.s32.totalorder %s308, %s322
      %p324 = scmp.eq.s32.totalorder %s41, 0
      %p325 = por %p323, %p324
      %s327 = sadd.s32 %s326, 1
      %p330 = scmp.eq.s32.totalorder %s35, 1
      %p331 = scmp.ne.s32.totalorder %s326, %s328
      %p332 = scmp.eq.s32.totalorder %s35, 0
      %p333 = por %p331, %p332
      %p334 = scmp.ne.s32.totalorder %s326, %s328
      %p335 = scmp.eq.s32.totalorder %s40, 1
      %p336 = por %p334, %p335
      %p337 = scmp.ne.s32.totalorder %s328, %s329
      %p338 = scmp.eq.s32.totalorder %s40, 0
      %p339 = por %p337, %p338
      %p340 = scmp.ne.s32.totalorder %s328, %s329
      %p341 = scmp.eq.s32.totalorder %s41, 1
      %p342 = por %p340, %p341
      %p344 = scmp.ne.s32.totalorder %s329, %s343
      %p345 = scmp.eq.s32.totalorder %s41, 0
      %p346 = por %p344, %p345
      %s348 = sadd.s32 %s347, 1
      %p351 = scmp.eq.s32.totalorder %s35, 1
      %p352 = scmp.ne.s32.totalorder %s347, %s349
      %p353 = scmp.eq.s32.totalorder %s35, 0
      %p354 = por %p352, %p353
      %p355 = scmp.ne.s32.totalorder %s347, %s349
      %p356 = scmp.eq.s32.totalorder %s40, 1
      %p357 = por %p355, %p356
      %p358 = scmp.ne.s32.totalorder %s349, %s350
      %p359 = scmp.eq.s32.totalorder %s40, 0
      %p360 = por %p358, %p359
      %p361 = scmp.ne.s32.totalorder %s349, %s350
      %p362 = scmp.eq.s32.totalorder %s41, 1
      %p363 = por %p361, %p362
      %p365 = scmp.ne.s32.totalorder %s350, %s364
      %p366 = scmp.eq.s32.totalorder %s41, 0
      %p367 = por %p365, %p366
      %s369 = sadd.s32 %s368, 1
      %p372 = scmp.eq.s32.totalorder %s35, 1
      %p373 = scmp.ne.s32.totalorder %s368, %s370
      %p374 = scmp.eq.s32.totalorder %s35, 0
      %p375 = por %p373, %p374
      %p376 = scmp.ne.s32.totalorder %s368, %s370
      %p377 = scmp.eq.s32.totalorder %s40, 1
      %p378 = por %p376, %p377
      %p379 = scmp.ne.s32.totalorder %s370, %s371
      %p380 = scmp.eq.s32.totalorder %s40, 0
      %p381 = por %p379, %p380
      %p382 = scmp.ne.s32.totalorder %s370, %s371
      %p383 = scmp.eq.s32.totalorder %s41, 1
      %p384 = por %p382, %p383
      %p386 = scmp.ne.s32.totalorder %s371, %s385
      %p387 = scmp.eq.s32.totalorder %s41, 0
      %p388 = por %p386, %p387
      %s390 = sadd.s32 %s389, 1
      %p393 = scmp.eq.s32.totalorder %s35, 1
      %p394 = scmp.ne.s32.totalorder %s389, %s391
      %p395 = scmp.eq.s32.totalorder %s35, 0
      %p396 = por %p394, %p395
      %p397 = scmp.ne.s32.totalorder %s389, %s391
      %p398 = scmp.eq.s32.totalorder %s40, 1
      %p399 = por %p397, %p398
      %p400 = scmp.ne.s32.totalorder %s391, %s392
      %p401 = scmp.eq.s32.totalorder %s40, 0
      %p402 = por %p400, %p401
      %p403 = scmp.ne.s32.totalorder %s391, %s392
      %p404 = scmp.eq.s32.totalorder %s41, 1
      %p405 = por %p403, %p404
      %p407 = scmp.ne.s32.totalorder %s392, %s406
      %p408 = scmp.eq.s32.totalorder %s41, 0
      %p409 = por %p407, %p408
      %s411 = sadd.s32 %s410, 1
      %p414 = scmp.eq.s32.totalorder %s35, 1
      %p415 = scmp.ne.s32.totalorder %s410, %s412
      %p416 = scmp.eq.s32.totalorder %s35, 0
      %p417 = por %p415, %p416
      %p418 = scmp.ne.s32.totalorder %s410, %s412
      %p419 = scmp.eq.s32.totalorder %s40, 1
      %p420 = por %p418, %p419
      %p421 = scmp.ne.s32.totalorder %s412, %s413
      %p422 = scmp.eq.s32.totalorder %s40, 0
      %p423 = por %p421, %p422
      %p424 = scmp.ne.s32.totalorder %s412, %s413
      %p425 = scmp.eq.s32.totalorder %s41, 1
      %p426 = por %p424, %p425
      %p428 = scmp.ne.s32.totalorder %s413, %s427
      %p429 = scmp.eq.s32.totalorder %s41, 0
      %p430 = por %p428, %p429
      %s432 = sadd.s32 %s431, 1
      %p435 = scmp.eq.s32.totalorder %s35, 1
      %p436 = scmp.ne.s32.totalorder %s431, %s433
      %p437 = scmp.eq.s32.totalorder %s35, 0
      %p438 = por %p436, %p437
      %p439 = scmp.ne.s32.totalorder %s431, %s433
      %p440 = scmp.eq.s32.totalorder %s40, 1
      %p441 = por %p439, %p440
      %p442 = scmp.ne.s32.totalorder %s433, %s434
      %p443 = scmp.eq.s32.totalorder %s40, 0
      %p444 = por %p442, %p443
      %p445 = scmp.ne.s32.totalorder %s433, %s434
      %p446 = scmp.eq.s32.totalorder %s41, 1
      %p447 = por %p445, %p446
      %p449 = scmp.ne.s32.totalorder %s434, %s448
      %p450 = scmp.eq.s32.totalorder %s41, 0
      %p451 = por %p449, %p450
      %s453 = sadd.s32 %s452, 1
      %p456 = scmp.eq.s32.totalorder %s35, 1
      %p457 = scmp.ne.s32.totalorder %s452, %s454
      %p458 = scmp.eq.s32.totalorder %s35, 0
      %p459 = por %p457, %p458
      %p460 = scmp.ne.s32.totalorder %s452, %s454
      %p461 = scmp.eq.s32.totalorder %s40, 1
      %p462 = por %p460, %p461
      %p463 = scmp.ne.s32.totalorder %s454, %s455
      %p464 = scmp.eq.s32.totalorder %s40, 0
      %p465 = por %p463, %p464
      %p466 = scmp.ne.s32.totalorder %s454, %s455
      %p467 = scmp.eq.s32.totalorder %s41, 1
      %p468 = por %p466, %p467
      %p470 = scmp.ne.s32.totalorder %s455, %s469
      %p471 = scmp.eq.s32.totalorder %s41, 0
      %p472 = por %p470, %p471
      %s473 = ssub.s32 %s35, %s42
      %p474 = scmp.eq.s32.totalorder %s473, 0
      %s476 = sadd.s32 %s475, 1
      %s477 = scalar_select %p474, %s475, %s476
      %p480 = pneg %p474
      %p481 = scmp.eq.s32.totalorder %s35, 1
      %p482 = por %p480, %p481
      %p483 = scmp.ne.s32.totalorder %s475, %s478
      %p484 = scmp.eq.s32.totalorder %s35, 0
      %p485 = por %p483, %p484
      %p486 = scmp.ne.s32.totalorder %s475, %s478
      %p487 = scmp.eq.s32.totalorder %s40, 1
      %p488 = por %p486, %p487
      %p489 = scmp.ne.s32.totalorder %s478, %s479
      %p490 = scmp.eq.s32.totalorder %s40, 0
      %p491 = por %p489, %p490
      %p492 = scmp.ne.s32.totalorder %s478, %s479
      %p493 = scmp.eq.s32.totalorder %s41, 1
      %p494 = por %p492, %p493
      %p496 = scmp.ne.s32.totalorder %s479, %s495
      %p497 = scmp.eq.s32.totalorder %s41, 0
      %p498 = por %p496, %p497
      %p499 = scmp.le.s32.totalorder 1, %s35
      %p500 = scmp.lt.s32.totalorder %s35, 3
      %p501 = pnand %p499, %p500
      %p502 = pneg %p501
      // Predicated region
      $region9: #{modified_transformer_encoder.1} parent=5 // pred_check
        _
      $region10: #{modified_transformer_encoder.1} parent=5 // pred_check_branch
        %504 = sbr.rel (%p501) target = $region12
      $region11: #{modified_transformer_encoder.1} parent=5 // pred_region
        %s505 = ssub.s32 %s35, 1
        // Predicated region
        $region13: #{modified_transformer_encoder.1} parent=11 // pred_check
          %p506 = pneg %p108
        $region14: #{modified_transformer_encoder.1} parent=11 // pred_check_branch
          %508 = sbr.rel (%p506) target = $region16
        $region15: #{modified_transformer_encoder.1} parent=11 // pred_region
          %s510 = ssub.s32 49152, 49152
          %511 = vsyncadd [#allocation3], %s510
          %s512 = sshll.u32 [#allocation2], 4
          %s513 = int_to_ptr.vmem [resolvable:$true] %s512
          %518 = dma.hbm_to_vmem [thread:$0]  %s2, 49152, %s513, [#allocation3], 512, 512, 32
        $region16: #{modified_transformer_encoder.1} parent=11 // pred_fallthru
          _
        // Predicated region
        $region17: #{modified_transformer_encoder.1} parent=11 // pred_check
          %p519 = pneg %p129
        $region18: #{modified_transformer_encoder.1} parent=11 // pred_check_branch
          %521 = sbr.rel (%p519) target = $region20
        $region19: #{modified_transformer_encoder.1} parent=11 // pred_region
          %s523 = ssub.s32 64, 64
          %524 = vsyncadd [#allocation5], %s523
          %s526 = sshll.u32 [#allocation4], 4
          %s527 = int_to_ptr.vmem [resolvable:$true] %s526
          %529 = dma.hbm_to_vmem [thread:$0]  %s3, 64, %s527, [#allocation5]
        $region20: #{modified_transformer_encoder.1} parent=11 // pred_fallthru
          _
        // Predicated region
        $region21: #{modified_transformer_encoder.1} parent=11 // pred_check
          %p530 = pneg %p150
        $region22: #{modified_transformer_encoder.1} parent=11 // pred_check_branch
          %532 = sbr.rel (%p530) target = $region24
        $region23: #{modified_transformer_encoder.1} parent=11 // pred_region
          _
        $region24: #{modified_transformer_encoder.1} parent=11 // pred_fallthru
          _
        // Predicated region
        $region25: #{modified_transformer_encoder.1} parent=11 // pred_check
          %p533 = pneg %p171
        $region26: #{modified_transformer_encoder.1} parent=11 // pred_check_branch
          %535 = sbr.rel (%p533) target = $region28
        $region27: #{modified_transformer_encoder.1} parent=11 // pred_region
          %s537 = ssub.s32 16, 16
          %538 = vsyncadd [#allocation5], %s537
          %s540 = sshll.u32 [#allocation6], 4
          %s541 = int_to_ptr.vmem [resolvable:$true] %s540
          %543 = dma.hbm_to_vmem [thread:$0]  %s5, 16, %s541, [#allocation5]
        $region28: #{modified_transformer_encoder.1} parent=11 // pred_fallthru
          _
        // Predicated region
        $region29: #{modified_transformer_encoder.1} parent=11 // pred_check
          %p544 = pneg %p192
        $region30: #{modified_transformer_encoder.1} parent=11 // pred_check_branch
          %546 = sbr.rel (%p544) target = $region32
        $region31: #{modified_transformer_encoder.1} parent=11 // pred_region
          %s548 = ssub.s32 512, 512
          %549 = vsyncadd [#allocation8], %s548
          %s550 = sshll.u32 [#allocation7], 4
          %s551 = int_to_ptr.vmem [resolvable:$true] %s550
          %556 = dma.hbm_to_vmem [thread:$0]  %s6, 512, %s551, [#allocation8], 128, 128, 8
        $region32: #{modified_transformer_encoder.1} parent=11 // pred_fallthru
          _
        // Predicated region
        $region33: #{modified_transformer_encoder.1} parent=11 // pred_check
          %p557 = pneg %p213
        $region34: #{modified_transformer_encoder.1} parent=11 // pred_check_branch
          %559 = sbr.rel (%p557) target = $region36
        $region35: #{modified_transformer_encoder.1} parent=11 // pred_region
          %s561 = ssub.s32 2048, 2048
          %562 = vsyncadd [#allocation8], %s561
          %s563 = sshll.u32 [#allocation9], 4
          %s564 = int_to_ptr.vmem [resolvable:$true] %s563
          %569 = dma.hbm_to_vmem [thread:$0]  %s7, 2048, %s564, [#allocation8], 128, 128, 8
        $region36: #{modified_transformer_encoder.1} parent=11 // pred_fallthru
          _
        // Predicated region
        $region37: #{modified_transformer_encoder.1} parent=11 // pred_check
          %p570 = pneg %p234
        $region38: #{modified_transformer_encoder.1} parent=11 // pred_check_branch
          %572 = sbr.rel (%p570) target = $region40
        $region39: #{modified_transformer_encoder.1} parent=11 // pred_region
          %s574 = ssub.s32 64, 64
          %575 = vsyncadd [#allocation11], %s574
          %s576 = sshll.u32 [#allocation10], 4
          %s577 = int_to_ptr.vmem [resolvable:$true] %s576
          %582 = dma.hbm_to_vmem [thread:$0]  %s8, 64, %s577, [#allocation11], 16, 16, 1
        $region40: #{modified_transformer_encoder.1} parent=11 // pred_fallthru
          _
        // Predicated region
        $region41: #{modified_transformer_encoder.1} parent=11 // pred_check
          %p583 = pneg %p255
        $region42: #{modified_transformer_encoder.1} parent=11 // pred_check_branch
          %585 = sbr.rel (%p583) target = $region44
        $region43: #{modified_transformer_encoder.1} parent=11 // pred_region
          %s587 = ssub.s32 2048, 2048
          %588 = vsyncadd [#allocation11], %s587
          %s589 = sshll.u32 [#allocation12], 4
          %s590 = int_to_ptr.vmem [resolvable:$true] %s589
          %595 = dma.hbm_to_vmem [thread:$0]  %s9, 2048, %s590, [#allocation11], 128, 128, 8
        $region44: #{modified_transformer_encoder.1} parent=11 // pred_fallthru
          _
        // Predicated region
        $region45: #{modified_transformer_encoder.1} parent=11 // pred_check
          %p596 = pneg %p276
        $region46: #{modified_transformer_encoder.1} parent=11 // pred_check_branch
          %598 = sbr.rel (%p596) target = $region48
        $region47: #{modified_transformer_encoder.1} parent=11 // pred_region
          %s600 = ssub.s32 64, 64
          %601 = vsyncadd [#allocation14], %s600
          %s602 = sshll.u32 [#allocation13], 4
          %s603 = int_to_ptr.vmem [resolvable:$true] %s602
          %608 = dma.hbm_to_vmem [thread:$0]  %s10, 64, %s603, [#allocation14], 16, 16, 1
        $region48: #{modified_transformer_encoder.1} parent=11 // pred_fallthru
          _
        // Predicated region
        $region49: #{modified_transformer_encoder.1} parent=11 // pred_check
          %p609 = pneg %p297
        $region50: #{modified_transformer_encoder.1} parent=11 // pred_check_branch
          %611 = sbr.rel (%p609) target = $region52
        $region51: #{modified_transformer_encoder.1} parent=11 // pred_region
          %s613 = ssub.s32 64, 64
          %614 = vsyncadd [#allocation14], %s613
          %s615 = sshll.u32 [#allocation15], 4
          %s616 = int_to_ptr.vmem [resolvable:$true] %s615
          %621 = dma.hbm_to_vmem [thread:$0]  %s11, 64, %s616, [#allocation14], 16, 16, 1
        $region52: #{modified_transformer_encoder.1} parent=11 // pred_fallthru
          _
        // Predicated region
        $region53: #{modified_transformer_encoder.1} parent=11 // pred_check
          %p622 = pneg %p318
        $region54: #{modified_transformer_encoder.1} parent=11 // pred_check_branch
          %624 = sbr.rel (%p622) target = $region56
        $region55: #{modified_transformer_encoder.1} parent=11 // pred_region
          %s626 = ssub.s32 64, 64
          %627 = vsyncadd [#allocation17], %s626
          %s628 = sshll.u32 [#allocation16], 4
          %s629 = int_to_ptr.vmem [resolvable:$true] %s628
          %634 = dma.hbm_to_vmem [thread:$0]  %s12, 64, %s629, [#allocation17], 16, 16, 1
        $region56: #{modified_transformer_encoder.1} parent=11 // pred_fallthru
          _
        // Predicated region
        $region57: #{modified_transformer_encoder.1} parent=11 // pred_check
          %p635 = pneg %p339
        $region58: #{modified_transformer_encoder.1} parent=11 // pred_check_branch
          %637 = sbr.rel (%p635) target = $region60
        $region59: #{modified_transformer_encoder.1} parent=11 // pred_region
          %s639 = ssub.s32 2048, 2048
          %640 = vsyncadd [#allocation17], %s639
          %s641 = sshll.u32 [#allocation18], 4
          %s642 = int_to_ptr.vmem [resolvable:$true] %s641
          %647 = dma.hbm_to_vmem [thread:$0]  %s13, 2048, %s642, [#allocation17], 128, 128, 8
        $region60: #{modified_transformer_encoder.1} parent=11 // pred_fallthru
          _
        // Predicated region
        $region61: #{modified_transformer_encoder.1} parent=11 // pred_check
          %p648 = pneg %p360
        $region62: #{modified_transformer_encoder.1} parent=11 // pred_check_branch
          %650 = sbr.rel (%p648) target = $region64
        $region63: #{modified_transformer_encoder.1} parent=11 // pred_region
          %s652 = ssub.s32 64, 64
          %653 = vsyncadd [#allocation20], %s652
          %s654 = sshll.u32 [#allocation19], 4
          %s655 = int_to_ptr.vmem [resolvable:$true] %s654
          %660 = dma.hbm_to_vmem [thread:$0]  %s14, 64, %s655, [#allocation20], 16, 16, 1
        $region64: #{modified_transformer_encoder.1} parent=11 // pred_fallthru
          _
        // Predicated region
        $region65: #{modified_transformer_encoder.1} parent=11 // pred_check
          %p661 = pneg %p381
        $region66: #{modified_transformer_encoder.1} parent=11 // pred_check_branch
          %663 = sbr.rel (%p661) target = $region68
        $region67: #{modified_transformer_encoder.1} parent=11 // pred_region
          _
        $region68: #{modified_transformer_encoder.1} parent=11 // pred_fallthru
          _
        // Predicated region
        $region69: #{modified_transformer_encoder.1} parent=11 // pred_check
          %p664 = pneg %p402
        $region70: #{modified_transformer_encoder.1} parent=11 // pred_check_branch
          %666 = sbr.rel (%p664) target = $region72
        $region71: #{modified_transformer_encoder.1} parent=11 // pred_region
          %s668 = ssub.s32 64, 64
          %669 = vsyncadd [#allocation20], %s668
          %s670 = sshll.u32 [#allocation21], 4
          %s671 = int_to_ptr.vmem [resolvable:$true] %s670
          %676 = dma.hbm_to_vmem [thread:$0]  %s16, 64, %s671, [#allocation20], 16, 16, 1
        $region72: #{modified_transformer_encoder.1} parent=11 // pred_fallthru
          _
        // Predicated region
        $region73: #{modified_transformer_encoder.1} parent=11 // pred_check
          %p677 = pneg %p423
        $region74: #{modified_transformer_encoder.1} parent=11 // pred_check_branch
          %679 = sbr.rel (%p677) target = $region76
        $region75: #{modified_transformer_encoder.1} parent=11 // pred_region
          %s681 = ssub.s32 64, 64
          %682 = vsyncadd [#allocation23], %s681
          %s683 = sshll.u32 [#allocation22], 4
          %s684 = int_to_ptr.vmem [resolvable:$true] %s683
          %689 = dma.hbm_to_vmem [thread:$0]  %s17, 64, %s684, [#allocation23], 16, 16, 1
        $region76: #{modified_transformer_encoder.1} parent=11 // pred_fallthru
          _
        // Predicated region
        $region77: #{modified_transformer_encoder.1} parent=11 // pred_check
          %p690 = pneg %p444
        $region78: #{modified_transformer_encoder.1} parent=11 // pred_check_branch
          %692 = sbr.rel (%p690) target = $region80
        $region79: #{modified_transformer_encoder.1} parent=11 // pred_region
          %s694 = ssub.s32 64, 64
          %695 = vsyncadd [#allocation23], %s694
          %s696 = sshll.u32 [#allocation24], 4
          %s697 = int_to_ptr.vmem [resolvable:$true] %s696
          %702 = dma.hbm_to_vmem [thread:$0]  %s18, 64, %s697, [#allocation23], 16, 16, 1
        $region80: #{modified_transformer_encoder.1} parent=11 // pred_fallthru
          _
        // Predicated region
        $region81: #{modified_transformer_encoder.1} parent=11 // pred_check
          %p703 = pneg %p465
        $region82: #{modified_transformer_encoder.1} parent=11 // pred_check_branch
          %705 = sbr.rel (%p703) target = $region84
        $region83: #{modified_transformer_encoder.1} parent=11 // pred_region
          %s707 = ssub.s32 1024, 1024
          %708 = vsyncadd [#allocation26], %s707
          %s709 = sshll.u32 [#allocation25], 4
          %s710 = int_to_ptr.vmem [resolvable:$true] %s709
          %715 = dma.hbm_to_vmem [thread:$0]  %s19, 1024, %s710, [#allocation26], 128, 128, 8
        $region84: #{modified_transformer_encoder.1} parent=11 // pred_fallthru
          _
      $region12: #{modified_transformer_encoder.1} parent=5 // pred_fallthru
        _
      %p716 = scmp.lt.s32.totalorder %s35, 2
      // Predicated region
      $region85: #{modified_transformer_encoder.1} parent=5 // pred_check
        %p717 = pneg %p716
      $region86: #{modified_transformer_encoder.1} parent=5 // pred_check_branch
        %719 = sbr.rel (%p717) target = $region88
      $region87: #{modified_transformer_encoder.1} parent=5 // pred_region
        // Predicated region
        $region89: #{modified_transformer_encoder.1} parent=87 // pred_check
          %p720 = pneg %p55
        $region90: #{modified_transformer_encoder.1} parent=87 // pred_check_branch
          %722 = sbr.rel (%p720) target = $region92
        $region91: #{modified_transformer_encoder.1} parent=87 // pred_region
          %p723 = scmp.lt.s32.totalorder %s35, 1
          %s724 = scalar_select %p723, %s35, 1
          %s725 = smul.addr %s724, 8
          %s726 = scalar_lea.vmem %s0, %s725
        $region92: #{modified_transformer_encoder.1} parent=87 // pred_fallthru
          _
        // Predicated region
        $region93: #{modified_transformer_encoder.1} parent=87 // pred_check
          %p727 = pneg %p81
        $region94: #{modified_transformer_encoder.1} parent=87 // pred_check_branch
          %729 = sbr.rel (%p727) target = $region96
        $region95: #{modified_transformer_encoder.1} parent=87 // pred_region
          %p730 = scmp.lt.s32.totalorder %s35, 1
          %s731 = scalar_select %p730, %s35, 1
          %s732 = smul.addr %s731, 6
          %s733 = smul.addr %s732, 4
          %s734 = scalar_lea.vmem %s1, %s733
        $region96: #{modified_transformer_encoder.1} parent=87 // pred_fallthru
          _
      $region88: #{modified_transformer_encoder.1} parent=5 // pred_fallthru
        _
      %p735 = scmp.le.s32.totalorder 1, %s35
      %p736 = scmp.lt.s32.totalorder %s35, 3
      %p737 = pnand %p735, %p736
      %p738 = pneg %p737
      // Predicated region
      $region97: #{modified_transformer_encoder.1} parent=5 // pred_check
        _
      $region98: #{modified_transformer_encoder.1} parent=5 // pred_check_branch
        %740 = sbr.rel (%p737) target = $region100
      $region99: #{modified_transformer_encoder.1} parent=5 // pred_region
        %s741 = ssub.s32 %s35, 1
        // Predicated region
        $region101: #{modified_transformer_encoder.1} parent=99 // pred_check
          %p742 = pneg %p108
        $region102: #{modified_transformer_encoder.1} parent=99 // pred_check_branch
          %744 = sbr.rel (%p742) target = $region104
        $region103: #{modified_transformer_encoder.1} parent=99 // pred_region
          %745 = dma.done [#allocation3], 49152
        $region104: #{modified_transformer_encoder.1} parent=99 // pred_fallthru
          _
        // Predicated region
        $region105: #{modified_transformer_encoder.1} parent=99 // pred_check
          %p746 = pneg %p129
        $region106: #{modified_transformer_encoder.1} parent=99 // pred_check_branch
          %748 = sbr.rel (%p746) target = $region108
        $region107: #{modified_transformer_encoder.1} parent=99 // pred_region
          %749 = dma.done [#allocation5], 64
        $region108: #{modified_transformer_encoder.1} parent=99 // pred_fallthru
          _
        // Predicated region
        $region109: #{modified_transformer_encoder.1} parent=99 // pred_check
          %p750 = pneg %p171
        $region110: #{modified_transformer_encoder.1} parent=99 // pred_check_branch
          %752 = sbr.rel (%p750) target = $region112
        $region111: #{modified_transformer_encoder.1} parent=99 // pred_region
          %753 = dma.done [#allocation5], 16
        $region112: #{modified_transformer_encoder.1} parent=99 // pred_fallthru
          _
        // Predicated region
        $region113: #{modified_transformer_encoder.1} parent=99 // pred_check
          %p754 = pneg %p192
        $region114: #{modified_transformer_encoder.1} parent=99 // pred_check_branch
          %756 = sbr.rel (%p754) target = $region116
        $region115: #{modified_transformer_encoder.1} parent=99 // pred_region
          %757 = dma.done [#allocation8], 512
        $region116: #{modified_transformer_encoder.1} parent=99 // pred_fallthru
          _
        // Predicated region
        $region117: #{modified_transformer_encoder.1} parent=99 // pred_check
          %p758 = pneg %p213
        $region118: #{modified_transformer_encoder.1} parent=99 // pred_check_branch
          %760 = sbr.rel (%p758) target = $region120
        $region119: #{modified_transformer_encoder.1} parent=99 // pred_region
          %761 = dma.done [#allocation8], 2048
        $region120: #{modified_transformer_encoder.1} parent=99 // pred_fallthru
          _
        // Predicated region
        $region121: #{modified_transformer_encoder.1} parent=99 // pred_check
          %p762 = pneg %p234
        $region122: #{modified_transformer_encoder.1} parent=99 // pred_check_branch
          %764 = sbr.rel (%p762) target = $region124
        $region123: #{modified_transformer_encoder.1} parent=99 // pred_region
          %765 = dma.done [#allocation11], 64
        $region124: #{modified_transformer_encoder.1} parent=99 // pred_fallthru
          _
        // Predicated region
        $region125: #{modified_transformer_encoder.1} parent=99 // pred_check
          %p766 = pneg %p255
        $region126: #{modified_transformer_encoder.1} parent=99 // pred_check_branch
          %768 = sbr.rel (%p766) target = $region128
        $region127: #{modified_transformer_encoder.1} parent=99 // pred_region
          %769 = dma.done [#allocation11], 2048
        $region128: #{modified_transformer_encoder.1} parent=99 // pred_fallthru
          _
        // Predicated region
        $region129: #{modified_transformer_encoder.1} parent=99 // pred_check
          %p770 = pneg %p276
        $region130: #{modified_transformer_encoder.1} parent=99 // pred_check_branch
          %772 = sbr.rel (%p770) target = $region132
        $region131: #{modified_transformer_encoder.1} parent=99 // pred_region
          %773 = dma.done [#allocation14], 64
        $region132: #{modified_transformer_encoder.1} parent=99 // pred_fallthru
          _
        // Predicated region
        $region133: #{modified_transformer_encoder.1} parent=99 // pred_check
          %p774 = pneg %p297
        $region134: #{modified_transformer_encoder.1} parent=99 // pred_check_branch
          %776 = sbr.rel (%p774) target = $region136
        $region135: #{modified_transformer_encoder.1} parent=99 // pred_region
          %777 = dma.done [#allocation14], 64
        $region136: #{modified_transformer_encoder.1} parent=99 // pred_fallthru
          _
        // Predicated region
        $region137: #{modified_transformer_encoder.1} parent=99 // pred_check
          %p778 = pneg %p318
        $region138: #{modified_transformer_encoder.1} parent=99 // pred_check_branch
          %780 = sbr.rel (%p778) target = $region140
        $region139: #{modified_transformer_encoder.1} parent=99 // pred_region
          %781 = dma.done [#allocation17], 64
        $region140: #{modified_transformer_encoder.1} parent=99 // pred_fallthru
          _
        // Predicated region
        $region141: #{modified_transformer_encoder.1} parent=99 // pred_check
          %p782 = pneg %p339
        $region142: #{modified_transformer_encoder.1} parent=99 // pred_check_branch
          %784 = sbr.rel (%p782) target = $region144
        $region143: #{modified_transformer_encoder.1} parent=99 // pred_region
          %785 = dma.done [#allocation17], 2048
        $region144: #{modified_transformer_encoder.1} parent=99 // pred_fallthru
          _
        // Predicated region
        $region145: #{modified_transformer_encoder.1} parent=99 // pred_check
          %p786 = pneg %p360
        $region146: #{modified_transformer_encoder.1} parent=99 // pred_check_branch
          %788 = sbr.rel (%p786) target = $region148
        $region147: #{modified_transformer_encoder.1} parent=99 // pred_region
          %789 = dma.done [#allocation20], 64
        $region148: #{modified_transformer_encoder.1} parent=99 // pred_fallthru
          _
        // Predicated region
        $region149: #{modified_transformer_encoder.1} parent=99 // pred_check
          %p790 = pneg %p402
        $region150: #{modified_transformer_encoder.1} parent=99 // pred_check_branch
          %792 = sbr.rel (%p790) target = $region152
        $region151: #{modified_transformer_encoder.1} parent=99 // pred_region
          %793 = dma.done [#allocation20], 64
        $region152: #{modified_transformer_encoder.1} parent=99 // pred_fallthru
          _
        // Predicated region
        $region153: #{modified_transformer_encoder.1} parent=99 // pred_check
          %p794 = pneg %p423
        $region154: #{modified_transformer_encoder.1} parent=99 // pred_check_branch
          %796 = sbr.rel (%p794) target = $region156
        $region155: #{modified_transformer_encoder.1} parent=99 // pred_region
          %797 = dma.done [#allocation23], 64
        $region156: #{modified_transformer_encoder.1} parent=99 // pred_fallthru
          _
        // Predicated region
        $region157: #{modified_transformer_encoder.1} parent=99 // pred_check
          %p798 = pneg %p444
        $region158: #{modified_transformer_encoder.1} parent=99 // pred_check_branch
          %800 = sbr.rel (%p798) target = $region160
        $region159: #{modified_transformer_encoder.1} parent=99 // pred_region
          %801 = dma.done [#allocation23], 64
        $region160: #{modified_transformer_encoder.1} parent=99 // pred_fallthru
          _
        // Predicated region
        $region161: #{modified_transformer_encoder.1} parent=99 // pred_check
          %p802 = pneg %p465
        $region162: #{modified_transformer_encoder.1} parent=99 // pred_check_branch
          %804 = sbr.rel (%p802) target = $region164
        $region163: #{modified_transformer_encoder.1} parent=99 // pred_region
          %805 = dma.done [#allocation26], 1024
        $region164: #{modified_transformer_encoder.1} parent=99 // pred_fallthru
          _
        %p806 = scmp.lt.s32.totalorder %s40, 1
        %s807 = scalar_select %p806, %s40, 1
        %s808 = smul.addr %s807, 8
        %s809 = scalar_lea.vmem %s0, %s808
        %p810 = pneg %p61
        %p811 = pneg %p58
        %p812 = scmp.lt.s32.totalorder %s40, 1
        %s813 = scalar_select %p812, %s40, 1
        %s814 = smul.addr %s813, 6
        %s815 = smul.addr %s814, 4
        %s816 = scalar_lea.vmem %s1, %s815
        %p817 = pneg %p87
        %p818 = pneg %p84
        %p819 = pneg %p108
        %p820 = pneg %p105
        %p821 = pneg %p129
        %p822 = pneg %p126
        %p823 = pneg %p150
        %p824 = pneg %p147
        %p825 = pneg %p171
        %p826 = pneg %p168
        %p827 = pneg %p192
        %p828 = pneg %p189
        %p829 = pneg %p213
        %p830 = pneg %p210
        %p831 = pneg %p234
        %p832 = pneg %p231
        %p833 = pneg %p255
        %p834 = pneg %p252
        %p835 = pneg %p276
        %p836 = pneg %p273
        %p837 = pneg %p297
        %p838 = pneg %p294
        %p839 = pneg %p318
        %p840 = pneg %p315
        %p841 = pneg %p339
        %p842 = pneg %p336
        %p843 = pneg %p360
        %p844 = pneg %p357
        %p845 = pneg %p381
        %p846 = pneg %p378
        %p847 = pneg %p402
        %p848 = pneg %p399
        %p849 = pneg %p423
        %p850 = pneg %p420
        %p851 = pneg %p444
        %p852 = pneg %p441
        %p853 = pneg %p465
        %p854 = pneg %p462
        %p855 = pneg %p491
        %p856 = pneg %p488
        %p857 = scmp.lt.s32.totalorder %s40, 1
        %s858 = scalar_select %p857, %s40, 1
        %s859 = smul.addr %s858, 8
        %s860 = scalar_lea.vmem %s20, %s859
        %p861 = scmp.lt.s32.totalorder %s40, 1
        %s862 = scalar_select %p861, %s40, 1
        %s863 = smul.addr %s862, 8
        %s864 = scalar_lea.vmem %s0, %s863
        %p865 = scmp.lt.s32.totalorder %s40, 1
        %s866 = scalar_select %p865, %s40, 1
        %s867 = smul.addr %s866, 6
        %s868 = smul.addr %s867, 4
        %s869 = scalar_lea.vmem %s1, %s868
        %p870 = scmp.lt.s32.totalorder %s40, 1
        %s871 = scalar_select %p870, %s40, 1
        %s872 = smul.addr %s871, 8
        %s873 = scalar_lea.vmem %s20, %s872
        %v874 = vld [vmem:[%s864] sm:$0xff]
        %v875 = vld [vmem:[%s869] sm:$0x77]
        %v876 = vld [vmem:[%s869 + $0x8] sm:$0x77]
        %v877 = vld [vmem:[%s869 + $0x10] sm:$0x77]
        %v878 = vld [vmem:[#allocation2] sm:$0xff]
        %v879 = vld [vmem:[#allocation2 + $0x8] sm:$0xff]
        %v880 = vld [vmem:[#allocation2 + $0x10] sm:$0xff]
        %v881 = vld [vmem:[#allocation2 + $0x18] sm:$0xff]
        %v882 = vld [vmem:[#allocation2 + $0x20] sm:$0xff]
        %v883 = vld [vmem:[#allocation2 + $0x28] sm:$0xff]
        %v884 = vld [vmem:[#allocation2 + $0x30] sm:$0xff]
        %v885 = vld [vmem:[#allocation2 + $0x38] sm:$0xff]
        %v886 = vld [vmem:[#allocation2 + $0x40] sm:$0xff]
        %v887 = vld [vmem:[#allocation2 + $0x48] sm:$0xff]
        %v888 = vld [vmem:[#allocation2 + $0x50] sm:$0xff]
        %v889 = vld [vmem:[#allocation2 + $0x58] sm:$0xff]
        %v890 = vld [vmem:[#allocation2 + $0x60] sm:$0xff]
        %v891 = vld [vmem:[#allocation2 + $0x68] sm:$0xff]
        %v892 = vld [vmem:[#allocation2 + $0x70] sm:$0xff]
        %v893 = vld [vmem:[#allocation2 + $0x78] sm:$0xff]
        %v894 = vld [vmem:[#allocation2 + $0x80] sm:$0xff]
        %v895 = vld [vmem:[#allocation2 + $0x88] sm:$0xff]
        %v896 = vld [vmem:[#allocation2 + $0x90] sm:$0xff]
        %v897 = vld [vmem:[#allocation2 + $0x98] sm:$0xff]
        %v898 = vld [vmem:[#allocation2 + $0xa0] sm:$0xff]
        %v899 = vld [vmem:[#allocation2 + $0xa8] sm:$0xff]
        %v900 = vld [vmem:[#allocation2 + $0xb0] sm:$0xff]
        %v901 = vld [vmem:[#allocation2 + $0xb8] sm:$0xff]
        %v902 = vld [vmem:[#allocation2 + $0xc0] sm:$0xff]
        %v903 = vld [vmem:[#allocation2 + $0xc8] sm:$0xff]
        %v904 = vld [vmem:[#allocation2 + $0xd0] sm:$0xff]
        %v905 = vld [vmem:[#allocation2 + $0xd8] sm:$0xff]
        %v906 = vld [vmem:[#allocation2 + $0xe0] sm:$0xff]
        %v907 = vld [vmem:[#allocation2 + $0xe8] sm:$0xff]
        %v908 = vld [vmem:[#allocation2 + $0xf0] sm:$0xff]
        %v909 = vld [vmem:[#allocation2 + $0xf8] sm:$0xff]
        %v910 = vld [vmem:[#allocation2 + $0x100] sm:$0xff]
        %v911 = vld [vmem:[#allocation2 + $0x108] sm:$0xff]
        %v912 = vld [vmem:[#allocation2 + $0x110] sm:$0xff]
        %v913 = vld [vmem:[#allocation2 + $0x118] sm:$0xff]
        %v914 = vld [vmem:[#allocation2 + $0x120] sm:$0xff]
        %v915 = vld [vmem:[#allocation2 + $0x128] sm:$0xff]
        %v916 = vld [vmem:[#allocation2 + $0x130] sm:$0xff]
        %v917 = vld [vmem:[#allocation2 + $0x138] sm:$0xff]
        %v918 = vld [vmem:[#allocation2 + $0x140] sm:$0xff]
        %v919 = vld [vmem:[#allocation2 + $0x148] sm:$0xff]
        %v920 = vld [vmem:[#allocation2 + $0x150] sm:$0xff]
        %v921 = vld [vmem:[#allocation2 + $0x158] sm:$0xff]
        %v922 = vld [vmem:[#allocation2 + $0x160] sm:$0xff]
        %v923 = vld [vmem:[#allocation2 + $0x168] sm:$0xff]
        %v924 = vld [vmem:[#allocation2 + $0x170] sm:$0xff]
        %v925 = vld [vmem:[#allocation2 + $0x178] sm:$0xff]
        %v926 = vld [vmem:[#allocation2 + $0x180] sm:$0xff]
        %v927 = vld [vmem:[#allocation2 + $0x188] sm:$0xff]
        %v928 = vld [vmem:[#allocation2 + $0x190] sm:$0xff]
        %v929 = vld [vmem:[#allocation2 + $0x198] sm:$0xff]
        %v930 = vld [vmem:[#allocation2 + $0x1a0] sm:$0xff]
        %v931 = vld [vmem:[#allocation2 + $0x1a8] sm:$0xff]
        %v932 = vld [vmem:[#allocation2 + $0x1b0] sm:$0xff]
        %v933 = vld [vmem:[#allocation2 + $0x1b8] sm:$0xff]
        %v934 = vld [vmem:[#allocation2 + $0x1c0] sm:$0xff]
        %v935 = vld [vmem:[#allocation2 + $0x1c8] sm:$0xff]
        %v936 = vld [vmem:[#allocation2 + $0x1d0] sm:$0xff]
        %v937 = vld [vmem:[#allocation2 + $0x1d8] sm:$0xff]
        %v938 = vld [vmem:[#allocation2 + $0x1e0] sm:$0xff]
        %v939 = vld [vmem:[#allocation2 + $0x1e8] sm:$0xff]
        %v940 = vld [vmem:[#allocation2 + $0x1f0] sm:$0xff]
        %v941 = vld [vmem:[#allocation2 + $0x1f8] sm:$0xff]
        %v942 = vld [vmem:[#allocation2 + $0x200] sm:$0xff]
        %v943 = vld [vmem:[#allocation2 + $0x208] sm:$0xff]
        %v944 = vld [vmem:[#allocation2 + $0x210] sm:$0xff]
        %v945 = vld [vmem:[#allocation2 + $0x218] sm:$0xff]
        %v946 = vld [vmem:[#allocation2 + $0x220] sm:$0xff]
        %v947 = vld [vmem:[#allocation2 + $0x228] sm:$0xff]
        %v948 = vld [vmem:[#allocation2 + $0x230] sm:$0xff]
        %v949 = vld [vmem:[#allocation2 + $0x238] sm:$0xff]
        %v950 = vld [vmem:[#allocation2 + $0x240] sm:$0xff]
        %v951 = vld [vmem:[#allocation2 + $0x248] sm:$0xff]
        %v952 = vld [vmem:[#allocation2 + $0x250] sm:$0xff]
        %v953 = vld [vmem:[#allocation2 + $0x258] sm:$0xff]
        %v954 = vld [vmem:[#allocation2 + $0x260] sm:$0xff]
        %v955 = vld [vmem:[#allocation2 + $0x268] sm:$0xff]
        %v956 = vld [vmem:[#allocation2 + $0x270] sm:$0xff]
        %v957 = vld [vmem:[#allocation2 + $0x278] sm:$0xff]
        %v958 = vld [vmem:[#allocation2 + $0x280] sm:$0xff]
        %v959 = vld [vmem:[#allocation2 + $0x288] sm:$0xff]
        %v960 = vld [vmem:[#allocation2 + $0x290] sm:$0xff]
        %v961 = vld [vmem:[#allocation2 + $0x298] sm:$0xff]
        %v962 = vld [vmem:[#allocation2 + $0x2a0] sm:$0xff]
        %v963 = vld [vmem:[#allocation2 + $0x2a8] sm:$0xff]
        %v964 = vld [vmem:[#allocation2 + $0x2b0] sm:$0xff]
        %v965 = vld [vmem:[#allocation2 + $0x2b8] sm:$0xff]
        %v966 = vld [vmem:[#allocation2 + $0x2c0] sm:$0xff]
        %v967 = vld [vmem:[#allocation2 + $0x2c8] sm:$0xff]
        %v968 = vld [vmem:[#allocation2 + $0x2d0] sm:$0xff]
        %v969 = vld [vmem:[#allocation2 + $0x2d8] sm:$0xff]
        %v970 = vld [vmem:[#allocation2 + $0x2e0] sm:$0xff]
        %v971 = vld [vmem:[#allocation2 + $0x2e8] sm:$0xff]
        %v972 = vld [vmem:[#allocation2 + $0x2f0] sm:$0xff]
        %v973 = vld [vmem:[#allocation2 + $0x2f8] sm:$0xff]
        %v974 = vld [vmem:[#allocation2 + $0x300] sm:$0xff]
        %v975 = vld [vmem:[#allocation2 + $0x308] sm:$0xff]
        %v976 = vld [vmem:[#allocation2 + $0x310] sm:$0xff]
        %v977 = vld [vmem:[#allocation2 + $0x318] sm:$0xff]
        %v978 = vld [vmem:[#allocation2 + $0x320] sm:$0xff]
        %v979 = vld [vmem:[#allocation2 + $0x328] sm:$0xff]
        %v980 = vld [vmem:[#allocation2 + $0x330] sm:$0xff]
        %v981 = vld [vmem:[#allocation2 + $0x338] sm:$0xff]
        %v982 = vld [vmem:[#allocation2 + $0x340] sm:$0xff]
        %v983 = vld [vmem:[#allocation2 + $0x348] sm:$0xff]
        %v984 = vld [vmem:[#allocation2 + $0x350] sm:$0xff]
        %v985 = vld [vmem:[#allocation2 + $0x358] sm:$0xff]
        %v986 = vld [vmem:[#allocation2 + $0x360] sm:$0xff]
        %v987 = vld [vmem:[#allocation2 + $0x368] sm:$0xff]
        %v988 = vld [vmem:[#allocation2 + $0x370] sm:$0xff]
        %v989 = vld [vmem:[#allocation2 + $0x378] sm:$0xff]
        %v990 = vld [vmem:[#allocation2 + $0x380] sm:$0xff]
        %v991 = vld [vmem:[#allocation2 + $0x388] sm:$0xff]
        %v992 = vld [vmem:[#allocation2 + $0x390] sm:$0xff]
        %v993 = vld [vmem:[#allocation2 + $0x398] sm:$0xff]
        %v994 = vld [vmem:[#allocation2 + $0x3a0] sm:$0xff]
        %v995 = vld [vmem:[#allocation2 + $0x3a8] sm:$0xff]
        %v996 = vld [vmem:[#allocation2 + $0x3b0] sm:$0xff]
        %v997 = vld [vmem:[#allocation2 + $0x3b8] sm:$0xff]
        %v998 = vld [vmem:[#allocation2 + $0x3c0] sm:$0xff]
        %v999 = vld [vmem:[#allocation2 + $0x3c8] sm:$0xff]
        %v1000 = vld [vmem:[#allocation2 + $0x3d0] sm:$0xff]
        %v1001 = vld [vmem:[#allocation2 + $0x3d8] sm:$0xff]
        %v1002 = vld [vmem:[#allocation2 + $0x3e0] sm:$0xff]
        %v1003 = vld [vmem:[#allocation2 + $0x3e8] sm:$0xff]
        %v1004 = vld [vmem:[#allocation2 + $0x3f0] sm:$0xff]
        %v1005 = vld [vmem:[#allocation2 + $0x3f8] sm:$0xff]
        %v1006 = vld [vmem:[#allocation2 + $0x400] sm:$0xff]
        %v1007 = vld [vmem:[#allocation2 + $0x408] sm:$0xff]
        %v1008 = vld [vmem:[#allocation2 + $0x410] sm:$0xff]
        %v1009 = vld [vmem:[#allocation2 + $0x418] sm:$0xff]
        %v1010 = vld [vmem:[#allocation2 + $0x420] sm:$0xff]
        %v1011 = vld [vmem:[#allocation2 + $0x428] sm:$0xff]
        %v1012 = vld [vmem:[#allocation2 + $0x430] sm:$0xff]
        %v1013 = vld [vmem:[#allocation2 + $0x438] sm:$0xff]
        %v1014 = vld [vmem:[#allocation2 + $0x440] sm:$0xff]
        %v1015 = vld [vmem:[#allocation2 + $0x448] sm:$0xff]
        %v1016 = vld [vmem:[#allocation2 + $0x450] sm:$0xff]
        %v1017 = vld [vmem:[#allocation2 + $0x458] sm:$0xff]
        %v1018 = vld [vmem:[#allocation2 + $0x460] sm:$0xff]
        %v1019 = vld [vmem:[#allocation2 + $0x468] sm:$0xff]
        %v1020 = vld [vmem:[#allocation2 + $0x470] sm:$0xff]
        %v1021 = vld [vmem:[#allocation2 + $0x478] sm:$0xff]
        %v1022 = vld [vmem:[#allocation2 + $0x480] sm:$0xff]
        %v1023 = vld [vmem:[#allocation2 + $0x488] sm:$0xff]
        %v1024 = vld [vmem:[#allocation2 + $0x490] sm:$0xff]
        %v1025 = vld [vmem:[#allocation2 + $0x498] sm:$0xff]
        %v1026 = vld [vmem:[#allocation2 + $0x4a0] sm:$0xff]
        %v1027 = vld [vmem:[#allocation2 + $0x4a8] sm:$0xff]
        %v1028 = vld [vmem:[#allocation2 + $0x4b0] sm:$0xff]
        %v1029 = vld [vmem:[#allocation2 + $0x4b8] sm:$0xff]
        %v1030 = vld [vmem:[#allocation2 + $0x4c0] sm:$0xff]
        %v1031 = vld [vmem:[#allocation2 + $0x4c8] sm:$0xff]
        %v1032 = vld [vmem:[#allocation2 + $0x4d0] sm:$0xff]
        %v1033 = vld [vmem:[#allocation2 + $0x4d8] sm:$0xff]
        %v1034 = vld [vmem:[#allocation2 + $0x4e0] sm:$0xff]
        %v1035 = vld [vmem:[#allocation2 + $0x4e8] sm:$0xff]
        %v1036 = vld [vmem:[#allocation2 + $0x4f0] sm:$0xff]
        %v1037 = vld [vmem:[#allocation2 + $0x4f8] sm:$0xff]
        %v1038 = vld [vmem:[#allocation2 + $0x500] sm:$0xff]
        %v1039 = vld [vmem:[#allocation2 + $0x508] sm:$0xff]
        %v1040 = vld [vmem:[#allocation2 + $0x510] sm:$0xff]
        %v1041 = vld [vmem:[#allocation2 + $0x518] sm:$0xff]
        %v1042 = vld [vmem:[#allocation2 + $0x520] sm:$0xff]
        %v1043 = vld [vmem:[#allocation2 + $0x528] sm:$0xff]
        %v1044 = vld [vmem:[#allocation2 + $0x530] sm:$0xff]
        %v1045 = vld [vmem:[#allocation2 + $0x538] sm:$0xff]
        %v1046 = vld [vmem:[#allocation2 + $0x540] sm:$0xff]
        %v1047 = vld [vmem:[#allocation2 + $0x548] sm:$0xff]
        %v1048 = vld [vmem:[#allocation2 + $0x550] sm:$0xff]
        %v1049 = vld [vmem:[#allocation2 + $0x558] sm:$0xff]
        %v1050 = vld [vmem:[#allocation2 + $0x560] sm:$0xff]
        %v1051 = vld [vmem:[#allocation2 + $0x568] sm:$0xff]
        %v1052 = vld [vmem:[#allocation2 + $0x570] sm:$0xff]
        %v1053 = vld [vmem:[#allocation2 + $0x578] sm:$0xff]
        %v1054 = vld [vmem:[#allocation2 + $0x580] sm:$0xff]
        %v1055 = vld [vmem:[#allocation2 + $0x588] sm:$0xff]
        %v1056 = vld [vmem:[#allocation2 + $0x590] sm:$0xff]
        %v1057 = vld [vmem:[#allocation2 + $0x598] sm:$0xff]
        %v1058 = vld [vmem:[#allocation2 + $0x5a0] sm:$0xff]
        %v1059 = vld [vmem:[#allocation2 + $0x5a8] sm:$0xff]
        %v1060 = vld [vmem:[#allocation2 + $0x5b0] sm:$0xff]
        %v1061 = vld [vmem:[#allocation2 + $0x5b8] sm:$0xff]
        %v1062 = vld [vmem:[#allocation2 + $0x5c0] sm:$0xff]
        %v1063 = vld [vmem:[#allocation2 + $0x5c8] sm:$0xff]
        %v1064 = vld [vmem:[#allocation2 + $0x5d0] sm:$0xff]
        %v1065 = vld [vmem:[#allocation2 + $0x5d8] sm:$0xff]
        %v1066 = vld [vmem:[#allocation2 + $0x5e0] sm:$0xff]
        %v1067 = vld [vmem:[#allocation2 + $0x5e8] sm:$0xff]
        %v1068 = vld [vmem:[#allocation2 + $0x5f0] sm:$0xff]
        %v1069 = vld [vmem:[#allocation2 + $0x5f8] sm:$0xff]
        %v1070 = vld [vmem:[#allocation2 + $0x600] sm:$0xff]
        %v1071 = vld [vmem:[#allocation2 + $0x608] sm:$0xff]
        %v1072 = vld [vmem:[#allocation2 + $0x610] sm:$0xff]
        %v1073 = vld [vmem:[#allocation2 + $0x618] sm:$0xff]
        %v1074 = vld [vmem:[#allocation2 + $0x620] sm:$0xff]
        %v1075 = vld [vmem:[#allocation2 + $0x628] sm:$0xff]
        %v1076 = vld [vmem:[#allocation2 + $0x630] sm:$0xff]
        %v1077 = vld [vmem:[#allocation2 + $0x638] sm:$0xff]
        %v1078 = vld [vmem:[#allocation2 + $0x640] sm:$0xff]
        %v1079 = vld [vmem:[#allocation2 + $0x648] sm:$0xff]
        %v1080 = vld [vmem:[#allocation2 + $0x650] sm:$0xff]
        %v1081 = vld [vmem:[#allocation2 + $0x658] sm:$0xff]
        %v1082 = vld [vmem:[#allocation2 + $0x660] sm:$0xff]
        %v1083 = vld [vmem:[#allocation2 + $0x668] sm:$0xff]
        %v1084 = vld [vmem:[#allocation2 + $0x670] sm:$0xff]
        %v1085 = vld [vmem:[#allocation2 + $0x678] sm:$0xff]
        %v1086 = vld [vmem:[#allocation2 + $0x680] sm:$0xff]
        %v1087 = vld [vmem:[#allocation2 + $0x688] sm:$0xff]
        %v1088 = vld [vmem:[#allocation2 + $0x690] sm:$0xff]
        %v1089 = vld [vmem:[#allocation2 + $0x698] sm:$0xff]
        %v1090 = vld [vmem:[#allocation2 + $0x6a0] sm:$0xff]
        %v1091 = vld [vmem:[#allocation2 + $0x6a8] sm:$0xff]
        %v1092 = vld [vmem:[#allocation2 + $0x6b0] sm:$0xff]
        %v1093 = vld [vmem:[#allocation2 + $0x6b8] sm:$0xff]
        %v1094 = vld [vmem:[#allocation2 + $0x6c0] sm:$0xff]
        %v1095 = vld [vmem:[#allocation2 + $0x6c8] sm:$0xff]
        %v1096 = vld [vmem:[#allocation2 + $0x6d0] sm:$0xff]
        %v1097 = vld [vmem:[#allocation2 + $0x6d8] sm:$0xff]
        %v1098 = vld [vmem:[#allocation2 + $0x6e0] sm:$0xff]
        %v1099 = vld [vmem:[#allocation2 + $0x6e8] sm:$0xff]
        %v1100 = vld [vmem:[#allocation2 + $0x6f0] sm:$0xff]
        %v1101 = vld [vmem:[#allocation2 + $0x6f8] sm:$0xff]
        %v1102 = vld [vmem:[#allocation2 + $0x700] sm:$0xff]
        %v1103 = vld [vmem:[#allocation2 + $0x708] sm:$0xff]
        %v1104 = vld [vmem:[#allocation2 + $0x710] sm:$0xff]
        %v1105 = vld [vmem:[#allocation2 + $0x718] sm:$0xff]
        %v1106 = vld [vmem:[#allocation2 + $0x720] sm:$0xff]
        %v1107 = vld [vmem:[#allocation2 + $0x728] sm:$0xff]
        %v1108 = vld [vmem:[#allocation2 + $0x730] sm:$0xff]
        %v1109 = vld [vmem:[#allocation2 + $0x738] sm:$0xff]
        %v1110 = vld [vmem:[#allocation2 + $0x740] sm:$0xff]
        %v1111 = vld [vmem:[#allocation2 + $0x748] sm:$0xff]
        %v1112 = vld [vmem:[#allocation2 + $0x750] sm:$0xff]
        %v1113 = vld [vmem:[#allocation2 + $0x758] sm:$0xff]
        %v1114 = vld [vmem:[#allocation2 + $0x760] sm:$0xff]
        %v1115 = vld [vmem:[#allocation2 + $0x768] sm:$0xff]
        %v1116 = vld [vmem:[#allocation2 + $0x770] sm:$0xff]
        %v1117 = vld [vmem:[#allocation2 + $0x778] sm:$0xff]
        %v1118 = vld [vmem:[#allocation2 + $0x780] sm:$0xff]
        %v1119 = vld [vmem:[#allocation2 + $0x788] sm:$0xff]
        %v1120 = vld [vmem:[#allocation2 + $0x790] sm:$0xff]
        %v1121 = vld [vmem:[#allocation2 + $0x798] sm:$0xff]
        %v1122 = vld [vmem:[#allocation2 + $0x7a0] sm:$0xff]
        %v1123 = vld [vmem:[#allocation2 + $0x7a8] sm:$0xff]
        %v1124 = vld [vmem:[#allocation2 + $0x7b0] sm:$0xff]
        %v1125 = vld [vmem:[#allocation2 + $0x7b8] sm:$0xff]
        %v1126 = vld [vmem:[#allocation2 + $0x7c0] sm:$0xff]
        %v1127 = vld [vmem:[#allocation2 + $0x7c8] sm:$0xff]
        %v1128 = vld [vmem:[#allocation2 + $0x7d0] sm:$0xff]
        %v1129 = vld [vmem:[#allocation2 + $0x7d8] sm:$0xff]
        %v1130 = vld [vmem:[#allocation2 + $0x7e0] sm:$0xff]
        %v1131 = vld [vmem:[#allocation2 + $0x7e8] sm:$0xff]
        %v1132 = vld [vmem:[#allocation2 + $0x7f0] sm:$0xff]
        %v1133 = vld [vmem:[#allocation2 + $0x7f8] sm:$0xff]
        %v1134 = vld [vmem:[#allocation2 + $0x800] sm:$0xff]
        %v1135 = vld [vmem:[#allocation2 + $0x808] sm:$0xff]
        %v1136 = vld [vmem:[#allocation2 + $0x810] sm:$0xff]
        %v1137 = vld [vmem:[#allocation2 + $0x818] sm:$0xff]
        %v1138 = vld [vmem:[#allocation2 + $0x820] sm:$0xff]
        %v1139 = vld [vmem:[#allocation2 + $0x828] sm:$0xff]
        %v1140 = vld [vmem:[#allocation2 + $0x830] sm:$0xff]
        %v1141 = vld [vmem:[#allocation2 + $0x838] sm:$0xff]
        %v1142 = vld [vmem:[#allocation2 + $0x840] sm:$0xff]
        %v1143 = vld [vmem:[#allocation2 + $0x848] sm:$0xff]
        %v1144 = vld [vmem:[#allocation2 + $0x850] sm:$0xff]
        %v1145 = vld [vmem:[#allocation2 + $0x858] sm:$0xff]
        %v1146 = vld [vmem:[#allocation2 + $0x860] sm:$0xff]
        %v1147 = vld [vmem:[#allocation2 + $0x868] sm:$0xff]
        %v1148 = vld [vmem:[#allocation2 + $0x870] sm:$0xff]
        %v1149 = vld [vmem:[#allocation2 + $0x878] sm:$0xff]
        %v1150 = vld [vmem:[#allocation2 + $0x880] sm:$0xff]
        %v1151 = vld [vmem:[#allocation2 + $0x888] sm:$0xff]
        %v1152 = vld [vmem:[#allocation2 + $0x890] sm:$0xff]
        %v1153 = vld [vmem:[#allocation2 + $0x898] sm:$0xff]
        %v1154 = vld [vmem:[#allocation2 + $0x8a0] sm:$0xff]
        %v1155 = vld [vmem:[#allocation2 + $0x8a8] sm:$0xff]
        %v1156 = vld [vmem:[#allocation2 + $0x8b0] sm:$0xff]
        %v1157 = vld [vmem:[#allocation2 + $0x8b8] sm:$0xff]
        %v1158 = vld [vmem:[#allocation2 + $0x8c0] sm:$0xff]
        %v1159 = vld [vmem:[#allocation2 + $0x8c8] sm:$0xff]
        %v1160 = vld [vmem:[#allocation2 + $0x8d0] sm:$0xff]
        %v1161 = vld [vmem:[#allocation2 + $0x8d8] sm:$0xff]
        %v1162 = vld [vmem:[#allocation2 + $0x8e0] sm:$0xff]
        %v1163 = vld [vmem:[#allocation2 + $0x8e8] sm:$0xff]
        %v1164 = vld [vmem:[#allocation2 + $0x8f0] sm:$0xff]
        %v1165 = vld [vmem:[#allocation2 + $0x8f8] sm:$0xff]
        %v1166 = vld [vmem:[#allocation2 + $0x900] sm:$0xff]
        %v1167 = vld [vmem:[#allocation2 + $0x908] sm:$0xff]
        %v1168 = vld [vmem:[#allocation2 + $0x910] sm:$0xff]
        %v1169 = vld [vmem:[#allocation2 + $0x918] sm:$0xff]
        %v1170 = vld [vmem:[#allocation2 + $0x920] sm:$0xff]
        %v1171 = vld [vmem:[#allocation2 + $0x928] sm:$0xff]
        %v1172 = vld [vmem:[#allocation2 + $0x930] sm:$0xff]
        %v1173 = vld [vmem:[#allocation2 + $0x938] sm:$0xff]
        %v1174 = vld [vmem:[#allocation2 + $0x940] sm:$0xff]
        %v1175 = vld [vmem:[#allocation2 + $0x948] sm:$0xff]
        %v1176 = vld [vmem:[#allocation2 + $0x950] sm:$0xff]
        %v1177 = vld [vmem:[#allocation2 + $0x958] sm:$0xff]
        %v1178 = vld [vmem:[#allocation2 + $0x960] sm:$0xff]
        %v1179 = vld [vmem:[#allocation2 + $0x968] sm:$0xff]
        %v1180 = vld [vmem:[#allocation2 + $0x970] sm:$0xff]
        %v1181 = vld [vmem:[#allocation2 + $0x978] sm:$0xff]
        %v1182 = vld [vmem:[#allocation2 + $0x980] sm:$0xff]
        %v1183 = vld [vmem:[#allocation2 + $0x988] sm:$0xff]
        %v1184 = vld [vmem:[#allocation2 + $0x990] sm:$0xff]
        %v1185 = vld [vmem:[#allocation2 + $0x998] sm:$0xff]
        %v1186 = vld [vmem:[#allocation2 + $0x9a0] sm:$0xff]
        %v1187 = vld [vmem:[#allocation2 + $0x9a8] sm:$0xff]
        %v1188 = vld [vmem:[#allocation2 + $0x9b0] sm:$0xff]
        %v1189 = vld [vmem:[#allocation2 + $0x9b8] sm:$0xff]
        %v1190 = vld [vmem:[#allocation2 + $0x9c0] sm:$0xff]
        %v1191 = vld [vmem:[#allocation2 + $0x9c8] sm:$0xff]
        %v1192 = vld [vmem:[#allocation2 + $0x9d0] sm:$0xff]
        %v1193 = vld [vmem:[#allocation2 + $0x9d8] sm:$0xff]
        %v1194 = vld [vmem:[#allocation2 + $0x9e0] sm:$0xff]
        %v1195 = vld [vmem:[#allocation2 + $0x9e8] sm:$0xff]
        %v1196 = vld [vmem:[#allocation2 + $0x9f0] sm:$0xff]
        %v1197 = vld [vmem:[#allocation2 + $0x9f8] sm:$0xff]
        %v1198 = vld [vmem:[#allocation2 + $0xa00] sm:$0xff]
        %v1199 = vld [vmem:[#allocation2 + $0xa08] sm:$0xff]
        %v1200 = vld [vmem:[#allocation2 + $0xa10] sm:$0xff]
        %v1201 = vld [vmem:[#allocation2 + $0xa18] sm:$0xff]
        %v1202 = vld [vmem:[#allocation2 + $0xa20] sm:$0xff]
        %v1203 = vld [vmem:[#allocation2 + $0xa28] sm:$0xff]
        %v1204 = vld [vmem:[#allocation2 + $0xa30] sm:$0xff]
        %v1205 = vld [vmem:[#allocation2 + $0xa38] sm:$0xff]
        %v1206 = vld [vmem:[#allocation2 + $0xa40] sm:$0xff]
        %v1207 = vld [vmem:[#allocation2 + $0xa48] sm:$0xff]
        %v1208 = vld [vmem:[#allocation2 + $0xa50] sm:$0xff]
        %v1209 = vld [vmem:[#allocation2 + $0xa58] sm:$0xff]
        %v1210 = vld [vmem:[#allocation2 + $0xa60] sm:$0xff]
        %v1211 = vld [vmem:[#allocation2 + $0xa68] sm:$0xff]
        %v1212 = vld [vmem:[#allocation2 + $0xa70] sm:$0xff]
        %v1213 = vld [vmem:[#allocation2 + $0xa78] sm:$0xff]
        %v1214 = vld [vmem:[#allocation2 + $0xa80] sm:$0xff]
        %v1215 = vld [vmem:[#allocation2 + $0xa88] sm:$0xff]
        %v1216 = vld [vmem:[#allocation2 + $0xa90] sm:$0xff]
        %v1217 = vld [vmem:[#allocation2 + $0xa98] sm:$0xff]
        %v1218 = vld [vmem:[#allocation2 + $0xaa0] sm:$0xff]
        %v1219 = vld [vmem:[#allocation2 + $0xaa8] sm:$0xff]
        %v1220 = vld [vmem:[#allocation2 + $0xab0] sm:$0xff]
        %v1221 = vld [vmem:[#allocation2 + $0xab8] sm:$0xff]
        %v1222 = vld [vmem:[#allocation2 + $0xac0] sm:$0xff]
        %v1223 = vld [vmem:[#allocation2 + $0xac8] sm:$0xff]
        %v1224 = vld [vmem:[#allocation2 + $0xad0] sm:$0xff]
        %v1225 = vld [vmem:[#allocation2 + $0xad8] sm:$0xff]
        %v1226 = vld [vmem:[#allocation2 + $0xae0] sm:$0xff]
        %v1227 = vld [vmem:[#allocation2 + $0xae8] sm:$0xff]
        %v1228 = vld [vmem:[#allocation2 + $0xaf0] sm:$0xff]
        %v1229 = vld [vmem:[#allocation2 + $0xaf8] sm:$0xff]
        %v1230 = vld [vmem:[#allocation2 + $0xb00] sm:$0xff]
        %v1231 = vld [vmem:[#allocation2 + $0xb08] sm:$0xff]
        %v1232 = vld [vmem:[#allocation2 + $0xb10] sm:$0xff]
        %v1233 = vld [vmem:[#allocation2 + $0xb18] sm:$0xff]
        %v1234 = vld [vmem:[#allocation2 + $0xb20] sm:$0xff]
        %v1235 = vld [vmem:[#allocation2 + $0xb28] sm:$0xff]
        %v1236 = vld [vmem:[#allocation2 + $0xb30] sm:$0xff]
        %v1237 = vld [vmem:[#allocation2 + $0xb38] sm:$0xff]
        %v1238 = vld [vmem:[#allocation2 + $0xb40] sm:$0xff]
        %v1239 = vld [vmem:[#allocation2 + $0xb48] sm:$0xff]
        %v1240 = vld [vmem:[#allocation2 + $0xb50] sm:$0xff]
        %v1241 = vld [vmem:[#allocation2 + $0xb58] sm:$0xff]
        %v1242 = vld [vmem:[#allocation2 + $0xb60] sm:$0xff]
        %v1243 = vld [vmem:[#allocation2 + $0xb68] sm:$0xff]
        %v1244 = vld [vmem:[#allocation2 + $0xb70] sm:$0xff]
        %v1245 = vld [vmem:[#allocation2 + $0xb78] sm:$0xff]
        %v1246 = vld [vmem:[#allocation2 + $0xb80] sm:$0xff]
        %v1247 = vld [vmem:[#allocation2 + $0xb88] sm:$0xff]
        %v1248 = vld [vmem:[#allocation2 + $0xb90] sm:$0xff]
        %v1249 = vld [vmem:[#allocation2 + $0xb98] sm:$0xff]
        %v1250 = vld [vmem:[#allocation2 + $0xba0] sm:$0xff]
        %v1251 = vld [vmem:[#allocation2 + $0xba8] sm:$0xff]
        %v1252 = vld [vmem:[#allocation2 + $0xbb0] sm:$0xff]
        %v1253 = vld [vmem:[#allocation2 + $0xbb8] sm:$0xff]
        %v1254 = vld [vmem:[#allocation2 + $0xbc0] sm:$0xff]
        %v1255 = vld [vmem:[#allocation2 + $0xbc8] sm:$0xff]
        %v1256 = vld [vmem:[#allocation2 + $0xbd0] sm:$0xff]
        %v1257 = vld [vmem:[#allocation2 + $0xbd8] sm:$0xff]
        %v1258 = vld [vmem:[#allocation2 + $0xbe0] sm:$0xff]
        %v1259 = vld [vmem:[#allocation2 + $0xbe8] sm:$0xff]
        %v1260 = vld [vmem:[#allocation2 + $0xbf0] sm:$0xff]
        %v1261 = vld [vmem:[#allocation2 + $0xbf8] sm:$0xff]
        %v1262 = vld [vmem:[#allocation4] sm:$0xf]
        %v1264 = vlaneseq
        %v1265 = vshrl.u32 %v1264, 7
        %v1266 = vsub.s32 0, %v1265
        %v1267 = vrot.slane %v1262, %v1266
        %v1268 = vlaneseq
        %v1269 = vshrl.u32 %v1268, 7
        %v1270 = vsub.s32 1, %v1269
        %v1271 = vrot.slane %v1262, %v1270
        %v1272 = vlaneseq
        %v1273 = vshrl.u32 %v1272, 7
        %v1274 = vsub.s32 2, %v1273
        %v1275 = vrot.slane %v1262, %v1274
        %v1276 = vlaneseq
        %v1277 = vshrl.u32 %v1276, 7
        %v1278 = vsub.s32 3, %v1277
        %v1279 = vrot.slane %v1262, %v1278
        %v1287 = vcombine.high %v875, %v875
        %v1288 = vcombine.high %v876, %v876
        %v1289 = vcombine.high %v877, %v877
        %1293 = vmatprep.subr.mxu0 %v879
        %1294 = vmatpush1.msra.mxu0 %v878
        %1295 = vmatprep.subr.mxu0 %v883
        %1296 = vmatpush1.msra.mxu0 %v882
        %1297 = vmatprep.subr.mxu0 %v887
        %1298 = vmatpush1.msra.mxu0 %v886
        %1299 = vmatprep.subr.mxu0 %v891
        %1300 = vmatpush1.msra.mxu0 %v890
        %1301 = vmatprep.subr.mxu0 %v895
        %1302 = vmatpush1.msra.mxu0 %v894
        %1303 = vmatprep.subr.mxu0 %v899
        %1304 = vmatpush1.msra.mxu0 %v898
        %1305 = vmatprep.subr.mxu0 %v903
        %1306 = vmatpush1.msra.mxu0 %v902
        %1307 = vmatprep.subr.mxu0 %v907
        %1308 = vmatpush1.msra.mxu0 %v906
        %1309 = vmatprep.subr.mxu0 %v911
        %1310 = vmatpush1.msra.mxu0 %v910
        %1311 = vmatprep.subr.mxu0 %v915
        %1312 = vmatpush1.msra.mxu0 %v914
        %1313 = vmatprep.subr.mxu0 %v919
        %1314 = vmatpush1.msra.mxu0 %v918
        %1315 = vmatprep.subr.mxu0 %v923
        %1316 = vmatpush1.msra.mxu0 %v922
        %1317 = vmatprep.subr.mxu0 %v927
        %1318 = vmatpush1.msra.mxu0 %v926
        %1319 = vmatprep.subr.mxu0 %v931
        %1320 = vmatpush1.msra.mxu0 %v930
        %1321 = vmatprep.subr.mxu0 %v935
        %1322 = vmatpush1.msra.mxu0 %v934
        %1323 = vmatprep.subr.mxu0 %v939
        %1324 = vmatpush1.msra.mxu0 %v938
        %1325 = vmatprep.subr.mxu0 %v943
        %1326 = vmatpush1.msra.mxu0 %v942
        %1327 = vmatprep.subr.mxu0 %v947
        %1328 = vmatpush1.msra.mxu0 %v946
        %1329 = vmatprep.subr.mxu0 %v951
        %1330 = vmatpush1.msra.mxu0 %v950
        %1331 = vmatprep.subr.mxu0 %v955
        %1332 = vmatpush1.msra.mxu0 %v954
        %1333 = vmatprep.subr.mxu0 %v959
        %1334 = vmatpush1.msra.mxu0 %v958
        %1335 = vmatprep.subr.mxu0 %v963
        %1336 = vmatpush1.msra.mxu0 %v962
        %1337 = vmatprep.subr.mxu0 %v967
        %1338 = vmatpush1.msra.mxu0 %v966
        %1339 = vmatprep.subr.mxu0 %v971
        %1340 = vmatpush1.msra.mxu0 %v970
        %1341 = vmatprep.subr.mxu0 %v975
        %1342 = vmatpush1.msra.mxu0 %v974
        %1343 = vmatprep.subr.mxu0 %v979
        %1344 = vmatpush1.msra.mxu0 %v978
        %1345 = vmatprep.subr.mxu0 %v983
        %1346 = vmatpush1.msra.mxu0 %v982
        %1347 = vmatprep.subr.mxu0 %v987
        %1348 = vmatpush1.msra.mxu0 %v986
        %1349 = vmatprep.subr.mxu0 %v991
        %1350 = vmatpush1.msra.mxu0 %v990
        %1351 = vmatprep.subr.mxu0 %v995
        %1352 = vmatpush1.msra.mxu0 %v994
        %1353 = vmatprep.subr.mxu0 %v999
        %1354 = vmatpush1.msra.mxu0 %v998
        %1355 = vmatprep.subr.mxu0 %v1003
        %1356 = vmatpush1.msra.mxu0 %v1002
        %1357 = vmatprep.mubr.f32.mxu0 %v1287
        %1358 = vmatmul.mubr.f32.gmra.mrb[0].mxu0 %v875
        %v1359 = vpop.f32.mrb[0].mxu0
        %v1360 = vadd.f32 %v1267, %v1359
        %v1361 = vpop.f32.mrb[0].mxu0
        %v1362 = vadd.f32 %v1271, %v1361
        %1363 = vdwg.mxu0
        %1364 = vmatprep.subr.mxu0 %v1007
        %1365 = vmatpush1.msra.mxu0 %v1006
        %1366 = vmatprep.subr.mxu0 %v1011
        %1367 = vmatpush1.msra.mxu0 %v1010
        %1368 = vmatprep.subr.mxu0 %v1015
        %1369 = vmatpush1.msra.mxu0 %v1014
        %1370 = vmatprep.subr.mxu0 %v1019
        %1371 = vmatpush1.msra.mxu0 %v1018
        %1372 = vmatprep.subr.mxu0 %v1023
        %1373 = vmatpush1.msra.mxu0 %v1022
        %1374 = vmatprep.subr.mxu0 %v1027
        %1375 = vmatpush1.msra.mxu0 %v1026
        %1376 = vmatprep.subr.mxu0 %v1031
        %1377 = vmatpush1.msra.mxu0 %v1030
        %1378 = vmatprep.subr.mxu0 %v1035
        %1379 = vmatpush1.msra.mxu0 %v1034
        %1380 = vmatprep.subr.mxu0 %v1039
        %1381 = vmatpush1.msra.mxu0 %v1038
        %1382 = vmatprep.subr.mxu0 %v1043
        %1383 = vmatpush1.msra.mxu0 %v1042
        %1384 = vmatprep.subr.mxu0 %v1047
        %1385 = vmatpush1.msra.mxu0 %v1046
        %1386 = vmatprep.subr.mxu0 %v1051
        %1387 = vmatpush1.msra.mxu0 %v1050
        %1388 = vmatprep.subr.mxu0 %v1055
        %1389 = vmatpush1.msra.mxu0 %v1054
        %1390 = vmatprep.subr.mxu0 %v1059
        %1391 = vmatpush1.msra.mxu0 %v1058
        %1392 = vmatprep.subr.mxu0 %v1063
        %1393 = vmatpush1.msra.mxu0 %v1062
        %1394 = vmatprep.subr.mxu0 %v1067
        %1395 = vmatpush1.msra.mxu0 %v1066
        %1396 = vmatprep.subr.mxu0 %v1071
        %1397 = vmatpush1.msra.mxu0 %v1070
        %1398 = vmatprep.subr.mxu0 %v1075
        %1399 = vmatpush1.msra.mxu0 %v1074
        %1400 = vmatprep.subr.mxu0 %v1079
        %1401 = vmatpush1.msra.mxu0 %v1078
        %1402 = vmatprep.subr.mxu0 %v1083
        %1403 = vmatpush1.msra.mxu0 %v1082
        %1404 = vmatprep.subr.mxu0 %v1087
        %1405 = vmatpush1.msra.mxu0 %v1086
        %1406 = vmatprep.subr.mxu0 %v1091
        %1407 = vmatpush1.msra.mxu0 %v1090
        %1408 = vmatprep.subr.mxu0 %v1095
        %1409 = vmatpush1.msra.mxu0 %v1094
        %1410 = vmatprep.subr.mxu0 %v1099
        %1411 = vmatpush1.msra.mxu0 %v1098
        %1412 = vmatprep.subr.mxu0 %v1103
        %1413 = vmatpush1.msra.mxu0 %v1102
        %1414 = vmatprep.subr.mxu0 %v1107
        %1415 = vmatpush1.msra.mxu0 %v1106
        %1416 = vmatprep.subr.mxu0 %v1111
        %1417 = vmatpush1.msra.mxu0 %v1110
        %1418 = vmatprep.subr.mxu0 %v1115
        %1419 = vmatpush1.msra.mxu0 %v1114
        %1420 = vmatprep.subr.mxu0 %v1119
        %1421 = vmatpush1.msra.mxu0 %v1118
        %1422 = vmatprep.subr.mxu0 %v1123
        %1423 = vmatpush1.msra.mxu0 %v1122
        %1424 = vmatprep.subr.mxu0 %v1127
        %1425 = vmatpush1.msra.mxu0 %v1126
        %1426 = vmatprep.subr.mxu0 %v1131
        %1427 = vmatpush1.msra.mxu0 %v1130
        %1428 = vmatprep.mubr.f32.mxu0 %v1288
        %1429 = vmatmul.mubr.f32.gmra.mrb[0].mxu0 %v876
        %v1430 = vpop.f32.mrb[0].mxu0
        %v1431 = vadd.f32 %v1360, %v1430
        %v1432 = vpop.f32.mrb[0].mxu0
        %v1433 = vadd.f32 %v1362, %v1432
        %1434 = vdwg.mxu0
        %1435 = vmatprep.subr.mxu0 %v1135
        %1436 = vmatpush1.msra.mxu0 %v1134
        %1437 = vmatprep.subr.mxu0 %v1139
        %1438 = vmatpush1.msra.mxu0 %v1138
        %1439 = vmatprep.subr.mxu0 %v1143
        %1440 = vmatpush1.msra.mxu0 %v1142
        %1441 = vmatprep.subr.mxu0 %v1147
        %1442 = vmatpush1.msra.mxu0 %v1146
        %1443 = vmatprep.subr.mxu0 %v1151
        %1444 = vmatpush1.msra.mxu0 %v1150
        %1445 = vmatprep.subr.mxu0 %v1155
        %1446 = vmatpush1.msra.mxu0 %v1154
        %1447 = vmatprep.subr.mxu0 %v1159
        %1448 = vmatpush1.msra.mxu0 %v1158
        %1449 = vmatprep.subr.mxu0 %v1163
        %1450 = vmatpush1.msra.mxu0 %v1162
        %1451 = vmatprep.subr.mxu0 %v1167
        %1452 = vmatpush1.msra.mxu0 %v1166
        %1453 = vmatprep.subr.mxu0 %v1171
        %1454 = vmatpush1.msra.mxu0 %v1170
        %1455 = vmatprep.subr.mxu0 %v1175
        %1456 = vmatpush1.msra.mxu0 %v1174
        %1457 = vmatprep.subr.mxu0 %v1179
        %1458 = vmatpush1.msra.mxu0 %v1178
        %1459 = vmatprep.subr.mxu0 %v1183
        %1460 = vmatpush1.msra.mxu0 %v1182
        %1461 = vmatprep.subr.mxu0 %v1187
        %1462 = vmatpush1.msra.mxu0 %v1186
        %1463 = vmatprep.subr.mxu0 %v1191
        %1464 = vmatpush1.msra.mxu0 %v1190
        %1465 = vmatprep.subr.mxu0 %v1195
        %1466 = vmatpush1.msra.mxu0 %v1194
        %1467 = vmatprep.subr.mxu0 %v1199
        %1468 = vmatpush1.msra.mxu0 %v1198
        %1469 = vmatprep.subr.mxu0 %v1203
        %1470 = vmatpush1.msra.mxu0 %v1202
        %1471 = vmatprep.subr.mxu0 %v1207
        %1472 = vmatpush1.msra.mxu0 %v1206
        %1473 = vmatprep.subr.mxu0 %v1211
        %1474 = vmatpush1.msra.mxu0 %v1210
        %1475 = vmatprep.subr.mxu0 %v1215
        %1476 = vmatpush1.msra.mxu0 %v1214
        %1477 = vmatprep.subr.mxu0 %v1219
        %1478 = vmatpush1.msra.mxu0 %v1218
        %1479 = vmatprep.subr.mxu0 %v1223
        %1480 = vmatpush1.msra.mxu0 %v1222
        %1481 = vmatprep.subr.mxu0 %v1227
        %1482 = vmatpush1.msra.mxu0 %v1226
        %1483 = vmatprep.subr.mxu0 %v1231
        %1484 = vmatpush1.msra.mxu0 %v1230
        %1485 = vmatprep.subr.mxu0 %v1235
        %1486 = vmatpush1.msra.mxu0 %v1234
        %1487 = vmatprep.subr.mxu0 %v1239
        %1488 = vmatpush1.msra.mxu0 %v1238
        %1489 = vmatprep.subr.mxu0 %v1243
        %1490 = vmatpush1.msra.mxu0 %v1242
        %1491 = vmatprep.subr.mxu0 %v1247
        %1492 = vmatpush1.msra.mxu0 %v1246
        %1493 = vmatprep.subr.mxu0 %v1251
        %1494 = vmatpush1.msra.mxu0 %v1250
        %1495 = vmatprep.subr.mxu0 %v1255
        %1496 = vmatpush1.msra.mxu0 %v1254
        %1497 = vmatprep.subr.mxu0 %v1259
        %1498 = vmatpush1.msra.mxu0 %v1258
        %1499 = vmatprep.mubr.f32.mxu0 %v1289
        %1500 = vmatmul.mubr.f32.gmra.mrb[0].mxu0 %v877
        %v1501 = vpop.f32.mrb[0].mxu0
        %v1502 = vadd.f32 %v1431, %v1501
        %v1503 = vpop.f32.mrb[0].mxu0
        %v1504 = vadd.f32 %v1433, %v1503
        %1505 = vdwg.mxu0
        %1506 = vmatprep.subr.mxu0 %v881
        %1507 = vmatpush1.msra.mxu0 %v880
        %1508 = vmatprep.subr.mxu0 %v885
        %1509 = vmatpush1.msra.mxu0 %v884
        %1510 = vmatprep.subr.mxu0 %v889
        %1511 = vmatpush1.msra.mxu0 %v888
        %1512 = vmatprep.subr.mxu0 %v893
        %1513 = vmatpush1.msra.mxu0 %v892
        %1514 = vmatprep.subr.mxu0 %v897
        %1515 = vmatpush1.msra.mxu0 %v896
        %1516 = vmatprep.subr.mxu0 %v901
        %1517 = vmatpush1.msra.mxu0 %v900
        %1518 = vmatprep.subr.mxu0 %v905
        %1519 = vmatpush1.msra.mxu0 %v904
        %1520 = vmatprep.subr.mxu0 %v909
        %1521 = vmatpush1.msra.mxu0 %v908
        %1522 = vmatprep.subr.mxu0 %v913
        %1523 = vmatpush1.msra.mxu0 %v912
        %1524 = vmatprep.subr.mxu0 %v917
        %1525 = vmatpush1.msra.mxu0 %v916
        %1526 = vmatprep.subr.mxu0 %v921
        %1527 = vmatpush1.msra.mxu0 %v920
        %1528 = vmatprep.subr.mxu0 %v925
        %1529 = vmatpush1.msra.mxu0 %v924
        %1530 = vmatprep.subr.mxu0 %v929
        %1531 = vmatpush1.msra.mxu0 %v928
        %1532 = vmatprep.subr.mxu0 %v933
        %1533 = vmatpush1.msra.mxu0 %v932
        %1534 = vmatprep.subr.mxu0 %v937
        %1535 = vmatpush1.msra.mxu0 %v936
        %1536 = vmatprep.subr.mxu0 %v941
        %1537 = vmatpush1.msra.mxu0 %v940
        %1538 = vmatprep.subr.mxu0 %v945
        %1539 = vmatpush1.msra.mxu0 %v944
        %1540 = vmatprep.subr.mxu0 %v949
        %1541 = vmatpush1.msra.mxu0 %v948
        %1542 = vmatprep.subr.mxu0 %v953
        %1543 = vmatpush1.msra.mxu0 %v952
        %1544 = vmatprep.subr.mxu0 %v957
        %1545 = vmatpush1.msra.mxu0 %v956
        %1546 = vmatprep.subr.mxu0 %v961
        %1547 = vmatpush1.msra.mxu0 %v960
        %1548 = vmatprep.subr.mxu0 %v965
        %1549 = vmatpush1.msra.mxu0 %v964
        %1550 = vmatprep.subr.mxu0 %v969
        %1551 = vmatpush1.msra.mxu0 %v968
        %1552 = vmatprep.subr.mxu0 %v973
        %1553 = vmatpush1.msra.mxu0 %v972
        %1554 = vmatprep.subr.mxu0 %v977
        %1555 = vmatpush1.msra.mxu0 %v976
        %1556 = vmatprep.subr.mxu0 %v981
        %1557 = vmatpush1.msra.mxu0 %v980
        %1558 = vmatprep.subr.mxu0 %v985
        %1559 = vmatpush1.msra.mxu0 %v984
        %1560 = vmatprep.subr.mxu0 %v989
        %1561 = vmatpush1.msra.mxu0 %v988
        %1562 = vmatprep.subr.mxu0 %v993
        %1563 = vmatpush1.msra.mxu0 %v992
        %1564 = vmatprep.subr.mxu0 %v997
        %1565 = vmatpush1.msra.mxu0 %v996
        %1566 = vmatprep.subr.mxu0 %v1001
        %1567 = vmatpush1.msra.mxu0 %v1000
        %1568 = vmatprep.subr.mxu0 %v1005
        %1569 = vmatpush1.msra.mxu0 %v1004
        %1570 = vmatprep.mubr.f32.mxu0 %v1287
        %1571 = vmatmul.mubr.f32.gmra.mrb[0].mxu0 %v875
        %v1572 = vpop.f32.mrb[0].mxu0
        %v1573 = vadd.f32 %v1275, %v1572
        %v1574 = vpop.f32.mrb[0].mxu0
        %v1575 = vadd.f32 %v1279, %v1574
        %1576 = vdwg.mxu0
        %1577 = vmatprep.subr.mxu0 %v1009
        %1578 = vmatpush1.msra.mxu0 %v1008
        %1579 = vmatprep.subr.mxu0 %v1013
        %1580 = vmatpush1.msra.mxu0 %v1012
        %1581 = vmatprep.subr.mxu0 %v1017
        %1582 = vmatpush1.msra.mxu0 %v1016
        %1583 = vmatprep.subr.mxu0 %v1021
        %1584 = vmatpush1.msra.mxu0 %v1020
        %1585 = vmatprep.subr.mxu0 %v1025
        %1586 = vmatpush1.msra.mxu0 %v1024
        %1587 = vmatprep.subr.mxu0 %v1029
        %1588 = vmatpush1.msra.mxu0 %v1028
        %1589 = vmatprep.subr.mxu0 %v1033
        %1590 = vmatpush1.msra.mxu0 %v1032
        %1591 = vmatprep.subr.mxu0 %v1037
        %1592 = vmatpush1.msra.mxu0 %v1036
        %1593 = vmatprep.subr.mxu0 %v1041
        %1594 = vmatpush1.msra.mxu0 %v1040
        %1595 = vmatprep.subr.mxu0 %v1045
        %1596 = vmatpush1.msra.mxu0 %v1044
        %1597 = vmatprep.subr.mxu0 %v1049
        %1598 = vmatpush1.msra.mxu0 %v1048
        %1599 = vmatprep.subr.mxu0 %v1053
        %1600 = vmatpush1.msra.mxu0 %v1052
        %1601 = vmatprep.subr.mxu0 %v1057
        %1602 = vmatpush1.msra.mxu0 %v1056
        %1603 = vmatprep.subr.mxu0 %v1061
        %1604 = vmatpush1.msra.mxu0 %v1060
        %1605 = vmatprep.subr.mxu0 %v1065
        %1606 = vmatpush1.msra.mxu0 %v1064
        %1607 = vmatprep.subr.mxu0 %v1069
        %1608 = vmatpush1.msra.mxu0 %v1068
        %1609 = vmatprep.subr.mxu0 %v1073
        %1610 = vmatpush1.msra.mxu0 %v1072
        %1611 = vmatprep.subr.mxu0 %v1077
        %1612 = vmatpush1.msra.mxu0 %v1076
        %1613 = vmatprep.subr.mxu0 %v1081
        %1614 = vmatpush1.msra.mxu0 %v1080
        %1615 = vmatprep.subr.mxu0 %v1085
        %1616 = vmatpush1.msra.mxu0 %v1084
        %1617 = vmatprep.subr.mxu0 %v1089
        %1618 = vmatpush1.msra.mxu0 %v1088
        %1619 = vmatprep.subr.mxu0 %v1093
        %1620 = vmatpush1.msra.mxu0 %v1092
        %1621 = vmatprep.subr.mxu0 %v1097
        %1622 = vmatpush1.msra.mxu0 %v1096
        %1623 = vmatprep.subr.mxu0 %v1101
        %1624 = vmatpush1.msra.mxu0 %v1100
        %1625 = vmatprep.subr.mxu0 %v1105
        %1626 = vmatpush1.msra.mxu0 %v1104
        %1627 = vmatprep.subr.mxu0 %v1109
        %1628 = vmatpush1.msra.mxu0 %v1108
        %1629 = vmatprep.subr.mxu0 %v1113
        %1630 = vmatpush1.msra.mxu0 %v1112
        %1631 = vmatprep.subr.mxu0 %v1117
        %1632 = vmatpush1.msra.mxu0 %v1116
        %1633 = vmatprep.subr.mxu0 %v1121
        %1634 = vmatpush1.msra.mxu0 %v1120
        %1635 = vmatprep.subr.mxu0 %v1125
        %1636 = vmatpush1.msra.mxu0 %v1124
        %1637 = vmatprep.subr.mxu0 %v1129
        %1638 = vmatpush1.msra.mxu0 %v1128
        %1639 = vmatprep.subr.mxu0 %v1133
        %1640 = vmatpush1.msra.mxu0 %v1132
        %1641 = vmatprep.mubr.f32.mxu0 %v1288
        %1642 = vmatmul.mubr.f32.gmra.mrb[0].mxu0 %v876
        %v1643 = vpop.f32.mrb[0].mxu0
        %v1644 = vadd.f32 %v1573, %v1643
        %v1645 = vpop.f32.mrb[0].mxu0
        %v1646 = vadd.f32 %v1575, %v1645
        %1647 = vdwg.mxu0
        %1648 = vmatprep.subr.mxu0 %v1137
        %1649 = vmatpush1.msra.mxu0 %v1136
        %1650 = vmatprep.subr.mxu0 %v1141
        %1651 = vmatpush1.msra.mxu0 %v1140
        %1652 = vmatprep.subr.mxu0 %v1145
        %1653 = vmatpush1.msra.mxu0 %v1144
        %1654 = vmatprep.subr.mxu0 %v1149
        %1655 = vmatpush1.msra.mxu0 %v1148
        %1656 = vmatprep.subr.mxu0 %v1153
        %1657 = vmatpush1.msra.mxu0 %v1152
        %1658 = vmatprep.subr.mxu0 %v1157
        %1659 = vmatpush1.msra.mxu0 %v1156
        %1660 = vmatprep.subr.mxu0 %v1161
        %1661 = vmatpush1.msra.mxu0 %v1160
        %1662 = vmatprep.subr.mxu0 %v1165
        %1663 = vmatpush1.msra.mxu0 %v1164
        %1664 = vmatprep.subr.mxu0 %v1169
        %1665 = vmatpush1.msra.mxu0 %v1168
        %1666 = vmatprep.subr.mxu0 %v1173
        %1667 = vmatpush1.msra.mxu0 %v1172
        %1668 = vmatprep.subr.mxu0 %v1177
        %1669 = vmatpush1.msra.mxu0 %v1176
        %1670 = vmatprep.subr.mxu0 %v1181
        %1671 = vmatpush1.msra.mxu0 %v1180
        %1672 = vmatprep.subr.mxu0 %v1185
        %1673 = vmatpush1.msra.mxu0 %v1184
        %1674 = vmatprep.subr.mxu0 %v1189
        %1675 = vmatpush1.msra.mxu0 %v1188
        %1676 = vmatprep.subr.mxu0 %v1193
        %1677 = vmatpush1.msra.mxu0 %v1192
        %1678 = vmatprep.subr.mxu0 %v1197
        %1679 = vmatpush1.msra.mxu0 %v1196
        %1680 = vmatprep.subr.mxu0 %v1201
        %1681 = vmatpush1.msra.mxu0 %v1200
        %1682 = vmatprep.subr.mxu0 %v1205
        %1683 = vmatpush1.msra.mxu0 %v1204
        %1684 = vmatprep.subr.mxu0 %v1209
        %1685 = vmatpush1.msra.mxu0 %v1208
        %1686 = vmatprep.subr.mxu0 %v1213
        %1687 = vmatpush1.msra.mxu0 %v1212
        %1688 = vmatprep.subr.mxu0 %v1217
        %1689 = vmatpush1.msra.mxu0 %v1216
        %1690 = vmatprep.subr.mxu0 %v1221
        %1691 = vmatpush1.msra.mxu0 %v1220
        %1692 = vmatprep.subr.mxu0 %v1225
        %1693 = vmatpush1.msra.mxu0 %v1224
        %1694 = vmatprep.subr.mxu0 %v1229
        %1695 = vmatpush1.msra.mxu0 %v1228
        %1696 = vmatprep.subr.mxu0 %v1233
        %1697 = vmatpush1.msra.mxu0 %v1232
        %1698 = vmatprep.subr.mxu0 %v1237
        %1699 = vmatpush1.msra.mxu0 %v1236
        %1700 = vmatprep.subr.mxu0 %v1241
        %1701 = vmatpush1.msra.mxu0 %v1240
        %1702 = vmatprep.subr.mxu0 %v1245
        %1703 = vmatpush1.msra.mxu0 %v1244
        %1704 = vmatprep.subr.mxu0 %v1249
        %1705 = vmatpush1.msra.mxu0 %v1248
        %1706 = vmatprep.subr.mxu0 %v1253
        %1707 = vmatpush1.msra.mxu0 %v1252
        %1708 = vmatprep.subr.mxu0 %v1257
        %1709 = vmatpush1.msra.mxu0 %v1256
        %1710 = vmatprep.subr.mxu0 %v1261
        %1711 = vmatpush1.msra.mxu0 %v1260
        %1712 = vmatprep.mubr.f32.mxu0 %v1289
        %1713 = vmatmul.mubr.f32.gmra.mrb[0].mxu0 %v877
        %v1714 = vpop.f32.mrb[0].mxu0
        %v1715 = vadd.f32 %v1644, %v1714
        %v1716 = vpop.f32.mrb[0].mxu0
        %v1717 = vadd.f32 %v1646, %v1716
        %1718 = vdwg.mxu0
        %v1719 = vld [vmem:[#allocation6] sm:$0x1]
        %v1720 = vld [vmem:[%s4] sm:$0xff]
        %v1721 = vld [vmem:[%s4 + $0x8] sm:$0xff]
        %v1722 = vld [vmem:[%s4 + $0x10] sm:$0xff]
        %v1723 = vld [vmem:[%s4 + $0x18] sm:$0xff]
        %v1724 = vld [vmem:[%s4 + $0x20] sm:$0xff]
        %v1725 = vld [vmem:[%s4 + $0x28] sm:$0xff]
        %v1726 = vld [vmem:[%s4 + $0x30] sm:$0xff]
        %v1727 = vld [vmem:[%s4 + $0x38] sm:$0xff]
        %v1728 = vld [vmem:[%s4 + $0x40] sm:$0xff]
        %v1729 = vld [vmem:[%s4 + $0x48] sm:$0xff]
        %v1730 = vld [vmem:[%s4 + $0x50] sm:$0xff]
        %v1731 = vld [vmem:[%s4 + $0x58] sm:$0xff]
        %v1732 = vld [vmem:[%s4 + $0x60] sm:$0xff]
        %v1733 = vld [vmem:[%s4 + $0x68] sm:$0xff]
        %v1734 = vld [vmem:[%s4 + $0x70] sm:$0xff]
        %v1735 = vld [vmem:[%s4 + $0x78] sm:$0xff]
        %v1736 = vld [vmem:[%s4 + $0x80] sm:$0xff]
        %v1737 = vld [vmem:[%s4 + $0x88] sm:$0xff]
        %v1738 = vld [vmem:[%s4 + $0x90] sm:$0xff]
        %v1739 = vld [vmem:[%s4 + $0x98] sm:$0xff]
        %v1740 = vld [vmem:[%s4 + $0xa0] sm:$0xff]
        %v1741 = vld [vmem:[%s4 + $0xa8] sm:$0xff]
        %v1742 = vld [vmem:[%s4 + $0xb0] sm:$0xff]
        %v1743 = vld [vmem:[%s4 + $0xb8] sm:$0xff]
        %v1744 = vld [vmem:[%s4 + $0xc0] sm:$0xff]
        %v1745 = vld [vmem:[%s4 + $0xc8] sm:$0xff]
        %v1746 = vld [vmem:[%s4 + $0xd0] sm:$0xff]
        %v1747 = vld [vmem:[%s4 + $0xd8] sm:$0xff]
        %v1748 = vld [vmem:[%s4 + $0xe0] sm:$0xff]
        %v1749 = vld [vmem:[%s4 + $0xe8] sm:$0xff]
        %v1750 = vld [vmem:[%s4 + $0xf0] sm:$0xff]
        %v1751 = vld [vmem:[%s4 + $0xf8] sm:$0xff]
        %v1752 = vld [vmem:[%s4 + $0x100] sm:$0xff]
        %v1753 = vld [vmem:[%s4 + $0x108] sm:$0xff]
        %v1754 = vld [vmem:[%s4 + $0x110] sm:$0xff]
        %v1755 = vld [vmem:[%s4 + $0x118] sm:$0xff]
        %v1756 = vld [vmem:[%s4 + $0x120] sm:$0xff]
        %v1757 = vld [vmem:[%s4 + $0x128] sm:$0xff]
        %v1758 = vld [vmem:[%s4 + $0x130] sm:$0xff]
        %v1759 = vld [vmem:[%s4 + $0x138] sm:$0xff]
        %v1760 = vld [vmem:[%s4 + $0x140] sm:$0xff]
        %v1761 = vld [vmem:[%s4 + $0x148] sm:$0xff]
        %v1762 = vld [vmem:[%s4 + $0x150] sm:$0xff]
        %v1763 = vld [vmem:[%s4 + $0x158] sm:$0xff]
        %v1764 = vld [vmem:[%s4 + $0x160] sm:$0xff]
        %v1765 = vld [vmem:[%s4 + $0x168] sm:$0xff]
        %v1766 = vld [vmem:[%s4 + $0x170] sm:$0xff]
        %v1767 = vld [vmem:[%s4 + $0x178] sm:$0xff]
        %v1768 = vld [vmem:[%s4 + $0x180] sm:$0xff]
        %v1769 = vld [vmem:[%s4 + $0x188] sm:$0xff]
        %v1770 = vld [vmem:[%s4 + $0x190] sm:$0xff]
        %v1771 = vld [vmem:[%s4 + $0x198] sm:$0xff]
        %v1772 = vld [vmem:[%s4 + $0x1a0] sm:$0xff]
        %v1773 = vld [vmem:[%s4 + $0x1a8] sm:$0xff]
        %v1774 = vld [vmem:[%s4 + $0x1b0] sm:$0xff]
        %v1775 = vld [vmem:[%s4 + $0x1b8] sm:$0xff]
        %v1776 = vld [vmem:[%s4 + $0x1c0] sm:$0xff]
        %v1777 = vld [vmem:[%s4 + $0x1c8] sm:$0xff]
        %v1778 = vld [vmem:[%s4 + $0x1d0] sm:$0xff]
        %v1779 = vld [vmem:[%s4 + $0x1d8] sm:$0xff]
        %v1780 = vld [vmem:[%s4 + $0x1e0] sm:$0xff]
        %v1781 = vld [vmem:[%s4 + $0x1e8] sm:$0xff]
        %v1782 = vld [vmem:[%s4 + $0x1f0] sm:$0xff]
        %v1783 = vld [vmem:[%s4 + $0x1f8] sm:$0xff]
        %1784 = vmatprep.subr.mxu0 0.0
        %1785 = vmatpush1.msra.mxu0 %v1720
        %1786 = vmatprep.subr.mxu0 0.0
        %1787 = vmatpush1.msra.mxu0 %v1721
        %1788 = vmatprep.subr.mxu0 0.0
        %1789 = vmatpush1.msra.mxu0 %v1722
        %1790 = vmatprep.subr.mxu0 0.0
        %1791 = vmatpush1.msra.mxu0 %v1723
        %1792 = vmatprep.subr.mxu0 0.0
        %1793 = vmatpush1.msra.mxu0 %v1724
        %1794 = vmatprep.subr.mxu0 0.0
        %1795 = vmatpush1.msra.mxu0 %v1725
        %1796 = vmatprep.subr.mxu0 0.0
        %1797 = vmatpush1.msra.mxu0 %v1726
        %1798 = vmatprep.subr.mxu0 0.0
        %1799 = vmatpush1.msra.mxu0 %v1727
        %1800 = vmatprep.subr.mxu0 0.0
        %1801 = vmatpush1.msra.mxu0 %v1728
        %1802 = vmatprep.subr.mxu0 0.0
        %1803 = vmatpush1.msra.mxu0 %v1729
        %1804 = vmatprep.subr.mxu0 0.0
        %1805 = vmatpush1.msra.mxu0 %v1730
        %1806 = vmatprep.subr.mxu0 0.0
        %1807 = vmatpush1.msra.mxu0 %v1731
        %1808 = vmatprep.subr.mxu0 0.0
        %1809 = vmatpush1.msra.mxu0 %v1732
        %1810 = vmatprep.subr.mxu0 0.0
        %1811 = vmatpush1.msra.mxu0 %v1733
        %1812 = vmatprep.subr.mxu0 0.0
        %1813 = vmatpush1.msra.mxu0 %v1734
        %1814 = vmatprep.subr.mxu0 0.0
        %1815 = vmatpush1.msra.mxu0 %v1735
        %1816 = vmatprep.subr.mxu0 0.0
        %1817 = vmatpush1.msra.mxu0 %v1736
        %1818 = vmatprep.subr.mxu0 0.0
        %1819 = vmatpush1.msra.mxu0 %v1737
        %1820 = vmatprep.subr.mxu0 0.0
        %1821 = vmatpush1.msra.mxu0 %v1738
        %1822 = vmatprep.subr.mxu0 0.0
        %1823 = vmatpush1.msra.mxu0 %v1739
        %1824 = vmatprep.subr.mxu0 0.0
        %1825 = vmatpush1.msra.mxu0 %v1740
        %1826 = vmatprep.subr.mxu0 0.0
        %1827 = vmatpush1.msra.mxu0 %v1741
        %1828 = vmatprep.subr.mxu0 0.0
        %1829 = vmatpush1.msra.mxu0 %v1742
        %1830 = vmatprep.subr.mxu0 0.0
        %1831 = vmatpush1.msra.mxu0 %v1743
        %1832 = vmatprep.subr.mxu0 0.0
        %1833 = vmatpush1.msra.mxu0 %v1744
        %1834 = vmatprep.subr.mxu0 0.0
        %1835 = vmatpush1.msra.mxu0 %v1745
        %1836 = vmatprep.subr.mxu0 0.0
        %1837 = vmatpush1.msra.mxu0 %v1746
        %1838 = vmatprep.subr.mxu0 0.0
        %1839 = vmatpush1.msra.mxu0 %v1747
        %1840 = vmatprep.subr.mxu0 0.0
        %1841 = vmatpush1.msra.mxu0 %v1748
        %1842 = vmatprep.subr.mxu0 0.0
        %1843 = vmatpush1.msra.mxu0 %v1749
        %1844 = vmatprep.subr.mxu0 0.0
        %1845 = vmatpush1.msra.mxu0 %v1750
        %1846 = vmatprep.subr.mxu0 0.0
        %1847 = vmatpush1.msra.mxu0 %v1751
        %1848 = vmatprep.mubr.f32.mxu0 %v1504
        %1849 = vmatmul.mubr.f32.gmra.mrb[0].mxu0 %v1502
        %v1850 = vpop.f32.mrb[0].mxu0
        %v1851 = vadd.f32 0.0, %v1850
        %v1852 = vpop.f32.mrb[0].mxu0
        %1853 = vdwg.mxu0
        %1854 = vmatprep.subr.mxu0 0.0
        %1855 = vmatpush1.msra.mxu0 %v1752
        %1856 = vmatprep.subr.mxu0 0.0
        %1857 = vmatpush1.msra.mxu0 %v1753
        %1858 = vmatprep.subr.mxu0 0.0
        %1859 = vmatpush1.msra.mxu0 %v1754
        %1860 = vmatprep.subr.mxu0 0.0
        %1861 = vmatpush1.msra.mxu0 %v1755
        %1862 = vmatprep.subr.mxu0 0.0
        %1863 = vmatpush1.msra.mxu0 %v1756
        %1864 = vmatprep.subr.mxu0 0.0
        %1865 = vmatpush1.msra.mxu0 %v1757
        %1866 = vmatprep.subr.mxu0 0.0
        %1867 = vmatpush1.msra.mxu0 %v1758
        %1868 = vmatprep.subr.mxu0 0.0
        %1869 = vmatpush1.msra.mxu0 %v1759
        %1870 = vmatprep.subr.mxu0 0.0
        %1871 = vmatpush1.msra.mxu0 %v1760
        %1872 = vmatprep.subr.mxu0 0.0
        %1873 = vmatpush1.msra.mxu0 %v1761
        %1874 = vmatprep.subr.mxu0 0.0
        %1875 = vmatpush1.msra.mxu0 %v1762
        %1876 = vmatprep.subr.mxu0 0.0
        %1877 = vmatpush1.msra.mxu0 %v1763
        %1878 = vmatprep.subr.mxu0 0.0
        %1879 = vmatpush1.msra.mxu0 %v1764
        %1880 = vmatprep.subr.mxu0 0.0
        %1881 = vmatpush1.msra.mxu0 %v1765
        %1882 = vmatprep.subr.mxu0 0.0
        %1883 = vmatpush1.msra.mxu0 %v1766
        %1884 = vmatprep.subr.mxu0 0.0
        %1885 = vmatpush1.msra.mxu0 %v1767
        %1886 = vmatprep.subr.mxu0 0.0
        %1887 = vmatpush1.msra.mxu0 %v1768
        %1888 = vmatprep.subr.mxu0 0.0
        %1889 = vmatpush1.msra.mxu0 %v1769
        %1890 = vmatprep.subr.mxu0 0.0
        %1891 = vmatpush1.msra.mxu0 %v1770
        %1892 = vmatprep.subr.mxu0 0.0
        %1893 = vmatpush1.msra.mxu0 %v1771
        %1894 = vmatprep.subr.mxu0 0.0
        %1895 = vmatpush1.msra.mxu0 %v1772
        %1896 = vmatprep.subr.mxu0 0.0
        %1897 = vmatpush1.msra.mxu0 %v1773
        %1898 = vmatprep.subr.mxu0 0.0
        %1899 = vmatpush1.msra.mxu0 %v1774
        %1900 = vmatprep.subr.mxu0 0.0
        %1901 = vmatpush1.msra.mxu0 %v1775
        %1902 = vmatprep.subr.mxu0 0.0
        %1903 = vmatpush1.msra.mxu0 %v1776
        %1904 = vmatprep.subr.mxu0 0.0
        %1905 = vmatpush1.msra.mxu0 %v1777
        %1906 = vmatprep.subr.mxu0 0.0
        %1907 = vmatpush1.msra.mxu0 %v1778
        %1908 = vmatprep.subr.mxu0 0.0
        %1909 = vmatpush1.msra.mxu0 %v1779
        %1910 = vmatprep.subr.mxu0 0.0
        %1911 = vmatpush1.msra.mxu0 %v1780
        %1912 = vmatprep.subr.mxu0 0.0
        %1913 = vmatpush1.msra.mxu0 %v1781
        %1914 = vmatprep.subr.mxu0 0.0
        %1915 = vmatpush1.msra.mxu0 %v1782
        %1916 = vmatprep.subr.mxu0 0.0
        %1917 = vmatpush1.msra.mxu0 %v1783
        %1918 = vmatprep.mubr.f32.mxu0 %v1717
        %1919 = vmatmul.mubr.f32.gmra.mrb[0].mxu0 %v1715
        %v1920 = vpop.f32.mrb[0].mxu0
        %v1921 = vadd.f32 %v1851, %v1920
        %v1922 = vpop.f32.mrb[0].mxu0
        %1923 = vdwg.mxu0
        %v1924 = vadd.f32 %v1719, %v1921
        %v1925 = vld [vmem:[%s4 + $0x200] sm:$0xff]
        %v1926 = vld [vmem:[%s4 + $0x208] sm:$0xff]
        %v1927 = vld [vmem:[%s4 + $0x210] sm:$0xff]
        %v1928 = vld [vmem:[%s4 + $0x218] sm:$0xff]
        %v1929 = vld [vmem:[%s4 + $0x220] sm:$0xff]
        %v1930 = vld [vmem:[%s4 + $0x228] sm:$0xff]
        %v1931 = vld [vmem:[%s4 + $0x230] sm:$0xff]
        %v1932 = vld [vmem:[%s4 + $0x238] sm:$0xff]
        %v1933 = vld [vmem:[%s4 + $0x240] sm:$0xff]
        %v1934 = vld [vmem:[%s4 + $0x248] sm:$0xff]
        %v1935 = vld [vmem:[%s4 + $0x250] sm:$0xff]
        %v1936 = vld [vmem:[%s4 + $0x258] sm:$0xff]
        %v1937 = vld [vmem:[%s4 + $0x260] sm:$0xff]
        %v1938 = vld [vmem:[%s4 + $0x268] sm:$0xff]
        %v1939 = vld [vmem:[%s4 + $0x270] sm:$0xff]
        %v1940 = vld [vmem:[%s4 + $0x278] sm:$0xff]
        %v1941 = vld [vmem:[%s4 + $0x280] sm:$0xff]
        %v1942 = vld [vmem:[%s4 + $0x288] sm:$0xff]
        %v1943 = vld [vmem:[%s4 + $0x290] sm:$0xff]
        %v1944 = vld [vmem:[%s4 + $0x298] sm:$0xff]
        %v1945 = vld [vmem:[%s4 + $0x2a0] sm:$0xff]
        %v1946 = vld [vmem:[%s4 + $0x2a8] sm:$0xff]
        %v1947 = vld [vmem:[%s4 + $0x2b0] sm:$0xff]
        %v1948 = vld [vmem:[%s4 + $0x2b8] sm:$0xff]
        %v1949 = vld [vmem:[%s4 + $0x2c0] sm:$0xff]
        %v1950 = vld [vmem:[%s4 + $0x2c8] sm:$0xff]
        %v1951 = vld [vmem:[%s4 + $0x2d0] sm:$0xff]
        %v1952 = vld [vmem:[%s4 + $0x2d8] sm:$0xff]
        %v1953 = vld [vmem:[%s4 + $0x2e0] sm:$0xff]
        %v1954 = vld [vmem:[%s4 + $0x2e8] sm:$0xff]
        %v1955 = vld [vmem:[%s4 + $0x2f0] sm:$0xff]
        %v1956 = vld [vmem:[%s4 + $0x2f8] sm:$0xff]
        %v1957 = vld [vmem:[%s4 + $0x300] sm:$0xff]
        %v1958 = vld [vmem:[%s4 + $0x308] sm:$0xff]
        %v1959 = vld [vmem:[%s4 + $0x310] sm:$0xff]
        %v1960 = vld [vmem:[%s4 + $0x318] sm:$0xff]
        %v1961 = vld [vmem:[%s4 + $0x320] sm:$0xff]
        %v1962 = vld [vmem:[%s4 + $0x328] sm:$0xff]
        %v1963 = vld [vmem:[%s4 + $0x330] sm:$0xff]
        %v1964 = vld [vmem:[%s4 + $0x338] sm:$0xff]
        %v1965 = vld [vmem:[%s4 + $0x340] sm:$0xff]
        %v1966 = vld [vmem:[%s4 + $0x348] sm:$0xff]
        %v1967 = vld [vmem:[%s4 + $0x350] sm:$0xff]
        %v1968 = vld [vmem:[%s4 + $0x358] sm:$0xff]
        %v1969 = vld [vmem:[%s4 + $0x360] sm:$0xff]
        %v1970 = vld [vmem:[%s4 + $0x368] sm:$0xff]
        %v1971 = vld [vmem:[%s4 + $0x370] sm:$0xff]
        %v1972 = vld [vmem:[%s4 + $0x378] sm:$0xff]
        %v1973 = vld [vmem:[%s4 + $0x380] sm:$0xff]
        %v1974 = vld [vmem:[%s4 + $0x388] sm:$0xff]
        %v1975 = vld [vmem:[%s4 + $0x390] sm:$0xff]
        %v1976 = vld [vmem:[%s4 + $0x398] sm:$0xff]
        %v1977 = vld [vmem:[%s4 + $0x3a0] sm:$0xff]
        %v1978 = vld [vmem:[%s4 + $0x3a8] sm:$0xff]
        %v1979 = vld [vmem:[%s4 + $0x3b0] sm:$0xff]
        %v1980 = vld [vmem:[%s4 + $0x3b8] sm:$0xff]
        %v1981 = vld [vmem:[%s4 + $0x3c0] sm:$0xff]
        %v1982 = vld [vmem:[%s4 + $0x3c8] sm:$0xff]
        %v1983 = vld [vmem:[%s4 + $0x3d0] sm:$0xff]
        %v1984 = vld [vmem:[%s4 + $0x3d8] sm:$0xff]
        %v1985 = vld [vmem:[%s4 + $0x3e0] sm:$0xff]
        %v1986 = vld [vmem:[%s4 + $0x3e8] sm:$0xff]
        %v1987 = vld [vmem:[%s4 + $0x3f0] sm:$0xff]
        %v1988 = vld [vmem:[%s4 + $0x3f8] sm:$0xff]
        %v1993 = vrot.slane %v1502, 1
        %v1994 = vrot.slane %v1504, 1
        %v1995 = vrot.slane %v1715, 1
        %v1996 = vrot.slane %v1717, 1
        %2001 = vmatprep.subr.mxu0 0.0
        %2002 = vmatpush1.msra.mxu0 %v1925
        %2003 = vmatprep.subr.mxu0 0.0
        %2004 = vmatpush1.msra.mxu0 %v1926
        %2005 = vmatprep.subr.mxu0 0.0
        %2006 = vmatpush1.msra.mxu0 %v1927
        %2007 = vmatprep.subr.mxu0 0.0
        %2008 = vmatpush1.msra.mxu0 %v1928
        %2009 = vmatprep.subr.mxu0 0.0
        %2010 = vmatpush1.msra.mxu0 %v1929
        %2011 = vmatprep.subr.mxu0 0.0
        %2012 = vmatpush1.msra.mxu0 %v1930
        %2013 = vmatprep.subr.mxu0 0.0
        %2014 = vmatpush1.msra.mxu0 %v1931
        %2015 = vmatprep.subr.mxu0 0.0
        %2016 = vmatpush1.msra.mxu0 %v1932
        %2017 = vmatprep.subr.mxu0 0.0
        %2018 = vmatpush1.msra.mxu0 %v1933
        %2019 = vmatprep.subr.mxu0 0.0
        %2020 = vmatpush1.msra.mxu0 %v1934
        %2021 = vmatprep.subr.mxu0 0.0
        %2022 = vmatpush1.msra.mxu0 %v1935
        %2023 = vmatprep.subr.mxu0 0.0
        %2024 = vmatpush1.msra.mxu0 %v1936
        %2025 = vmatprep.subr.mxu0 0.0
        %2026 = vmatpush1.msra.mxu0 %v1937
        %2027 = vmatprep.subr.mxu0 0.0
        %2028 = vmatpush1.msra.mxu0 %v1938
        %2029 = vmatprep.subr.mxu0 0.0
        %2030 = vmatpush1.msra.mxu0 %v1939
        %2031 = vmatprep.subr.mxu0 0.0
        %2032 = vmatpush1.msra.mxu0 %v1940
        %2033 = vmatprep.subr.mxu0 0.0
        %2034 = vmatpush1.msra.mxu0 %v1941
        %2035 = vmatprep.subr.mxu0 0.0
        %2036 = vmatpush1.msra.mxu0 %v1942
        %2037 = vmatprep.subr.mxu0 0.0
        %2038 = vmatpush1.msra.mxu0 %v1943
        %2039 = vmatprep.subr.mxu0 0.0
        %2040 = vmatpush1.msra.mxu0 %v1944
        %2041 = vmatprep.subr.mxu0 0.0
        %2042 = vmatpush1.msra.mxu0 %v1945
        %2043 = vmatprep.subr.mxu0 0.0
        %2044 = vmatpush1.msra.mxu0 %v1946
        %2045 = vmatprep.subr.mxu0 0.0
        %2046 = vmatpush1.msra.mxu0 %v1947
        %2047 = vmatprep.subr.mxu0 0.0
        %2048 = vmatpush1.msra.mxu0 %v1948
        %2049 = vmatprep.subr.mxu0 0.0
        %2050 = vmatpush1.msra.mxu0 %v1949
        %2051 = vmatprep.subr.mxu0 0.0
        %2052 = vmatpush1.msra.mxu0 %v1950
        %2053 = vmatprep.subr.mxu0 0.0
        %2054 = vmatpush1.msra.mxu0 %v1951
        %2055 = vmatprep.subr.mxu0 0.0
        %2056 = vmatpush1.msra.mxu0 %v1952
        %2057 = vmatprep.subr.mxu0 0.0
        %2058 = vmatpush1.msra.mxu0 %v1953
        %2059 = vmatprep.subr.mxu0 0.0
        %2060 = vmatpush1.msra.mxu0 %v1954
        %2061 = vmatprep.subr.mxu0 0.0
        %2062 = vmatpush1.msra.mxu0 %v1955
        %2063 = vmatprep.subr.mxu0 0.0
        %2064 = vmatpush1.msra.mxu0 %v1956
        %2065 = vmatprep.mubr.f32.mxu0 %v1994
        %2066 = vmatmul.mubr.f32.gmra.mrb[0].mxu0 %v1993
        %v2067 = vpop.f32.mrb[0].mxu0
        %v2068 = vadd.f32 0.0, %v2067
        %v2069 = vpop.f32.mrb[0].mxu0
        %2070 = vdwg.mxu0
        %2071 = vmatprep.subr.mxu0 0.0
        %2072 = vmatpush1.msra.mxu0 %v1957
        %2073 = vmatprep.subr.mxu0 0.0
        %2074 = vmatpush1.msra.mxu0 %v1958
        %2075 = vmatprep.subr.mxu0 0.0
        %2076 = vmatpush1.msra.mxu0 %v1959
        %2077 = vmatprep.subr.mxu0 0.0
        %2078 = vmatpush1.msra.mxu0 %v1960
        %2079 = vmatprep.subr.mxu0 0.0
        %2080 = vmatpush1.msra.mxu0 %v1961
        %2081 = vmatprep.subr.mxu0 0.0
        %2082 = vmatpush1.msra.mxu0 %v1962
        %2083 = vmatprep.subr.mxu0 0.0
        %2084 = vmatpush1.msra.mxu0 %v1963
        %2085 = vmatprep.subr.mxu0 0.0
        %2086 = vmatpush1.msra.mxu0 %v1964
        %2087 = vmatprep.subr.mxu0 0.0
        %2088 = vmatpush1.msra.mxu0 %v1965
        %2089 = vmatprep.subr.mxu0 0.0
        %2090 = vmatpush1.msra.mxu0 %v1966
        %2091 = vmatprep.subr.mxu0 0.0
        %2092 = vmatpush1.msra.mxu0 %v1967
        %2093 = vmatprep.subr.mxu0 0.0
        %2094 = vmatpush1.msra.mxu0 %v1968
        %2095 = vmatprep.subr.mxu0 0.0
        %2096 = vmatpush1.msra.mxu0 %v1969
        %2097 = vmatprep.subr.mxu0 0.0
        %2098 = vmatpush1.msra.mxu0 %v1970
        %2099 = vmatprep.subr.mxu0 0.0
        %2100 = vmatpush1.msra.mxu0 %v1971
        %2101 = vmatprep.subr.mxu0 0.0
        %2102 = vmatpush1.msra.mxu0 %v1972
        %2103 = vmatprep.subr.mxu0 0.0
        %2104 = vmatpush1.msra.mxu0 %v1973
        %2105 = vmatprep.subr.mxu0 0.0
        %2106 = vmatpush1.msra.mxu0 %v1974
        %2107 = vmatprep.subr.mxu0 0.0
        %2108 = vmatpush1.msra.mxu0 %v1975
        %2109 = vmatprep.subr.mxu0 0.0
        %2110 = vmatpush1.msra.mxu0 %v1976
        %2111 = vmatprep.subr.mxu0 0.0
        %2112 = vmatpush1.msra.mxu0 %v1977
        %2113 = vmatprep.subr.mxu0 0.0
        %2114 = vmatpush1.msra.mxu0 %v1978
        %2115 = vmatprep.subr.mxu0 0.0
        %2116 = vmatpush1.msra.mxu0 %v1979
        %2117 = vmatprep.subr.mxu0 0.0
        %2118 = vmatpush1.msra.mxu0 %v1980
        %2119 = vmatprep.subr.mxu0 0.0
        %2120 = vmatpush1.msra.mxu0 %v1981
        %2121 = vmatprep.subr.mxu0 0.0
        %2122 = vmatpush1.msra.mxu0 %v1982
        %2123 = vmatprep.subr.mxu0 0.0
        %2124 = vmatpush1.msra.mxu0 %v1983
        %2125 = vmatprep.subr.mxu0 0.0
        %2126 = vmatpush1.msra.mxu0 %v1984
        %2127 = vmatprep.subr.mxu0 0.0
        %2128 = vmatpush1.msra.mxu0 %v1985
        %2129 = vmatprep.subr.mxu0 0.0
        %2130 = vmatpush1.msra.mxu0 %v1986
        %2131 = vmatprep.subr.mxu0 0.0
        %2132 = vmatpush1.msra.mxu0 %v1987
        %2133 = vmatprep.subr.mxu0 0.0
        %2134 = vmatpush1.msra.mxu0 %v1988
        %2135 = vmatprep.mubr.f32.mxu0 %v1996
        %2136 = vmatmul.mubr.f32.gmra.mrb[0].mxu0 %v1995
        %v2137 = vpop.f32.mrb[0].mxu0
        %v2138 = vadd.f32 %v2068, %v2137
        %v2139 = vpop.f32.mrb[0].mxu0
        %2140 = vdwg.mxu0
        %v2141 = vadd.f32 %v1924, %v2138
        %v2142 = vld [vmem:[%s4 + $0x400] sm:$0xff]
        %v2143 = vld [vmem:[%s4 + $0x408] sm:$0xff]
        %v2144 = vld [vmem:[%s4 + $0x410] sm:$0xff]
        %v2145 = vld [vmem:[%s4 + $0x418] sm:$0xff]
        %v2146 = vld [vmem:[%s4 + $0x420] sm:$0xff]
        %v2147 = vld [vmem:[%s4 + $0x428] sm:$0xff]
        %v2148 = vld [vmem:[%s4 + $0x430] sm:$0xff]
        %v2149 = vld [vmem:[%s4 + $0x438] sm:$0xff]
        %v2150 = vld [vmem:[%s4 + $0x440] sm:$0xff]
        %v2151 = vld [vmem:[%s4 + $0x448] sm:$0xff]
        %v2152 = vld [vmem:[%s4 + $0x450] sm:$0xff]
        %v2153 = vld [vmem:[%s4 + $0x458] sm:$0xff]
        %v2154 = vld [vmem:[%s4 + $0x460] sm:$0xff]
        %v2155 = vld [vmem:[%s4 + $0x468] sm:$0xff]
        %v2156 = vld [vmem:[%s4 + $0x470] sm:$0xff]
        %v2157 = vld [vmem:[%s4 + $0x478] sm:$0xff]
        %v2158 = vld [vmem:[%s4 + $0x480] sm:$0xff]
        %v2159 = vld [vmem:[%s4 + $0x488] sm:$0xff]
        %v2160 = vld [vmem:[%s4 + $0x490] sm:$0xff]
        %v2161 = vld [vmem:[%s4 + $0x498] sm:$0xff]
        %v2162 = vld [vmem:[%s4 + $0x4a0] sm:$0xff]
        %v2163 = vld [vmem:[%s4 + $0x4a8] sm:$0xff]
        %v2164 = vld [vmem:[%s4 + $0x4b0] sm:$0xff]
        %v2165 = vld [vmem:[%s4 + $0x4b8] sm:$0xff]
        %v2166 = vld [vmem:[%s4 + $0x4c0] sm:$0xff]
        %v2167 = vld [vmem:[%s4 + $0x4c8] sm:$0xff]
        %v2168 = vld [vmem:[%s4 + $0x4d0] sm:$0xff]
        %v2169 = vld [vmem:[%s4 + $0x4d8] sm:$0xff]
        %v2170 = vld [vmem:[%s4 + $0x4e0] sm:$0xff]
        %v2171 = vld [vmem:[%s4 + $0x4e8] sm:$0xff]
        %v2172 = vld [vmem:[%s4 + $0x4f0] sm:$0xff]
        %v2173 = vld [vmem:[%s4 + $0x4f8] sm:$0xff]
        %v2174 = vld [vmem:[%s4 + $0x500] sm:$0xff]
        %v2175 = vld [vmem:[%s4 + $0x508] sm:$0xff]
        %v2176 = vld [vmem:[%s4 + $0x510] sm:$0xff]
        %v2177 = vld [vmem:[%s4 + $0x518] sm:$0xff]
        %v2178 = vld [vmem:[%s4 + $0x520] sm:$0xff]
        %v2179 = vld [vmem:[%s4 + $0x528] sm:$0xff]
        %v2180 = vld [vmem:[%s4 + $0x530] sm:$0xff]
        %v2181 = vld [vmem:[%s4 + $0x538] sm:$0xff]
        %v2182 = vld [vmem:[%s4 + $0x540] sm:$0xff]
        %v2183 = vld [vmem:[%s4 + $0x548] sm:$0xff]
        %v2184 = vld [vmem:[%s4 + $0x550] sm:$0xff]
        %v2185 = vld [vmem:[%s4 + $0x558] sm:$0xff]
        %v2186 = vld [vmem:[%s4 + $0x560] sm:$0xff]
        %v2187 = vld [vmem:[%s4 + $0x568] sm:$0xff]
        %v2188 = vld [vmem:[%s4 + $0x570] sm:$0xff]
        %v2189 = vld [vmem:[%s4 + $0x578] sm:$0xff]
        %v2190 = vld [vmem:[%s4 + $0x580] sm:$0xff]
        %v2191 = vld [vmem:[%s4 + $0x588] sm:$0xff]
        %v2192 = vld [vmem:[%s4 + $0x590] sm:$0xff]
        %v2193 = vld [vmem:[%s4 + $0x598] sm:$0xff]
        %v2194 = vld [vmem:[%s4 + $0x5a0] sm:$0xff]
        %v2195 = vld [vmem:[%s4 + $0x5a8] sm:$0xff]
        %v2196 = vld [vmem:[%s4 + $0x5b0] sm:$0xff]
        %v2197 = vld [vmem:[%s4 + $0x5b8] sm:$0xff]
        %v2198 = vld [vmem:[%s4 + $0x5c0] sm:$0xff]
        %v2199 = vld [vmem:[%s4 + $0x5c8] sm:$0xff]
        %v2200 = vld [vmem:[%s4 + $0x5d0] sm:$0xff]
        %v2201 = vld [vmem:[%s4 + $0x5d8] sm:$0xff]
        %v2202 = vld [vmem:[%s4 + $0x5e0] sm:$0xff]
        %v2203 = vld [vmem:[%s4 + $0x5e8] sm:$0xff]
        %v2204 = vld [vmem:[%s4 + $0x5f0] sm:$0xff]
        %v2205 = vld [vmem:[%s4 + $0x5f8] sm:$0xff]
        %v2206 = vrot.slane %v1502, 2
        %v2207 = vrot.slane %v1504, 2
        %v2208 = vrot.slane %v1715, 2
        %v2209 = vrot.slane %v1717, 2
        %2214 = vmatprep.subr.mxu0 0.0
        %2215 = vmatpush1.msra.mxu0 %v2142
        %2216 = vmatprep.subr.mxu0 0.0
        %2217 = vmatpush1.msra.mxu0 %v2143
        %2218 = vmatprep.subr.mxu0 0.0
        %2219 = vmatpush1.msra.mxu0 %v2144
        %2220 = vmatprep.subr.mxu0 0.0
        %2221 = vmatpush1.msra.mxu0 %v2145
        %2222 = vmatprep.subr.mxu0 0.0
        %2223 = vmatpush1.msra.mxu0 %v2146
        %2224 = vmatprep.subr.mxu0 0.0
        %2225 = vmatpush1.msra.mxu0 %v2147
        %2226 = vmatprep.subr.mxu0 0.0
        %2227 = vmatpush1.msra.mxu0 %v2148
        %2228 = vmatprep.subr.mxu0 0.0
        %2229 = vmatpush1.msra.mxu0 %v2149
        %2230 = vmatprep.subr.mxu0 0.0
        %2231 = vmatpush1.msra.mxu0 %v2150
        %2232 = vmatprep.subr.mxu0 0.0
        %2233 = vmatpush1.msra.mxu0 %v2151
        %2234 = vmatprep.subr.mxu0 0.0
        %2235 = vmatpush1.msra.mxu0 %v2152
        %2236 = vmatprep.subr.mxu0 0.0
        %2237 = vmatpush1.msra.mxu0 %v2153
        %2238 = vmatprep.subr.mxu0 0.0
        %2239 = vmatpush1.msra.mxu0 %v2154
        %2240 = vmatprep.subr.mxu0 0.0
        %2241 = vmatpush1.msra.mxu0 %v2155
        %2242 = vmatprep.subr.mxu0 0.0
        %2243 = vmatpush1.msra.mxu0 %v2156
        %2244 = vmatprep.subr.mxu0 0.0
        %2245 = vmatpush1.msra.mxu0 %v2157
        %2246 = vmatprep.subr.mxu0 0.0
        %2247 = vmatpush1.msra.mxu0 %v2158
        %2248 = vmatprep.subr.mxu0 0.0
        %2249 = vmatpush1.msra.mxu0 %v2159
        %2250 = vmatprep.subr.mxu0 0.0
        %2251 = vmatpush1.msra.mxu0 %v2160
        %2252 = vmatprep.subr.mxu0 0.0
        %2253 = vmatpush1.msra.mxu0 %v2161
        %2254 = vmatprep.subr.mxu0 0.0
        %2255 = vmatpush1.msra.mxu0 %v2162
        %2256 = vmatprep.subr.mxu0 0.0
        %2257 = vmatpush1.msra.mxu0 %v2163
        %2258 = vmatprep.subr.mxu0 0.0
        %2259 = vmatpush1.msra.mxu0 %v2164
        %2260 = vmatprep.subr.mxu0 0.0
        %2261 = vmatpush1.msra.mxu0 %v2165
        %2262 = vmatprep.subr.mxu0 0.0
        %2263 = vmatpush1.msra.mxu0 %v2166
        %2264 = vmatprep.subr.mxu0 0.0
        %2265 = vmatpush1.msra.mxu0 %v2167
        %2266 = vmatprep.subr.mxu0 0.0
        %2267 = vmatpush1.msra.mxu0 %v2168
        %2268 = vmatprep.subr.mxu0 0.0
        %2269 = vmatpush1.msra.mxu0 %v2169
        %2270 = vmatprep.subr.mxu0 0.0
        %2271 = vmatpush1.msra.mxu0 %v2170
        %2272 = vmatprep.subr.mxu0 0.0
        %2273 = vmatpush1.msra.mxu0 %v2171
        %2274 = vmatprep.subr.mxu0 0.0
        %2275 = vmatpush1.msra.mxu0 %v2172
        %2276 = vmatprep.subr.mxu0 0.0
        %2277 = vmatpush1.msra.mxu0 %v2173
        %2278 = vmatprep.mubr.f32.mxu0 %v2207
        %2279 = vmatmul.mubr.f32.gmra.mrb[0].mxu0 %v2206
        %v2280 = vpop.f32.mrb[0].mxu0
        %v2281 = vadd.f32 0.0, %v2280
        %v2282 = vpop.f32.mrb[0].mxu0
        %2283 = vdwg.mxu0
        %2284 = vmatprep.subr.mxu0 0.0
        %2285 = vmatpush1.msra.mxu0 %v2174
        %2286 = vmatprep.subr.mxu0 0.0
        %2287 = vmatpush1.msra.mxu0 %v2175
        %2288 = vmatprep.subr.mxu0 0.0
        %2289 = vmatpush1.msra.mxu0 %v2176
        %2290 = vmatprep.subr.mxu0 0.0
        %2291 = vmatpush1.msra.mxu0 %v2177
        %2292 = vmatprep.subr.mxu0 0.0
        %2293 = vmatpush1.msra.mxu0 %v2178
        %2294 = vmatprep.subr.mxu0 0.0
        %2295 = vmatpush1.msra.mxu0 %v2179
        %2296 = vmatprep.subr.mxu0 0.0
        %2297 = vmatpush1.msra.mxu0 %v2180
        %2298 = vmatprep.subr.mxu0 0.0
        %2299 = vmatpush1.msra.mxu0 %v2181
        %2300 = vmatprep.subr.mxu0 0.0
        %2301 = vmatpush1.msra.mxu0 %v2182
        %2302 = vmatprep.subr.mxu0 0.0
        %2303 = vmatpush1.msra.mxu0 %v2183
        %2304 = vmatprep.subr.mxu0 0.0
        %2305 = vmatpush1.msra.mxu0 %v2184
        %2306 = vmatprep.subr.mxu0 0.0
        %2307 = vmatpush1.msra.mxu0 %v2185
        %2308 = vmatprep.subr.mxu0 0.0
        %2309 = vmatpush1.msra.mxu0 %v2186
        %2310 = vmatprep.subr.mxu0 0.0
        %2311 = vmatpush1.msra.mxu0 %v2187
        %2312 = vmatprep.subr.mxu0 0.0
        %2313 = vmatpush1.msra.mxu0 %v2188
        %2314 = vmatprep.subr.mxu0 0.0
        %2315 = vmatpush1.msra.mxu0 %v2189
        %2316 = vmatprep.subr.mxu0 0.0
        %2317 = vmatpush1.msra.mxu0 %v2190
        %2318 = vmatprep.subr.mxu0 0.0
        %2319 = vmatpush1.msra.mxu0 %v2191
        %2320 = vmatprep.subr.mxu0 0.0
        %2321 = vmatpush1.msra.mxu0 %v2192
        %2322 = vmatprep.subr.mxu0 0.0
        %2323 = vmatpush1.msra.mxu0 %v2193
        %2324 = vmatprep.subr.mxu0 0.0
        %2325 = vmatpush1.msra.mxu0 %v2194
        %2326 = vmatprep.subr.mxu0 0.0
        %2327 = vmatpush1.msra.mxu0 %v2195
        %2328 = vmatprep.subr.mxu0 0.0
        %2329 = vmatpush1.msra.mxu0 %v2196
        %2330 = vmatprep.subr.mxu0 0.0
        %2331 = vmatpush1.msra.mxu0 %v2197
        %2332 = vmatprep.subr.mxu0 0.0
        %2333 = vmatpush1.msra.mxu0 %v2198
        %2334 = vmatprep.subr.mxu0 0.0
        %2335 = vmatpush1.msra.mxu0 %v2199
        %2336 = vmatprep.subr.mxu0 0.0
        %2337 = vmatpush1.msra.mxu0 %v2200
        %2338 = vmatprep.subr.mxu0 0.0
        %2339 = vmatpush1.msra.mxu0 %v2201
        %2340 = vmatprep.subr.mxu0 0.0
        %2341 = vmatpush1.msra.mxu0 %v2202
        %2342 = vmatprep.subr.mxu0 0.0
        %2343 = vmatpush1.msra.mxu0 %v2203
        %2344 = vmatprep.subr.mxu0 0.0
        %2345 = vmatpush1.msra.mxu0 %v2204
        %2346 = vmatprep.subr.mxu0 0.0
        %2347 = vmatpush1.msra.mxu0 %v2205
        %2348 = vmatprep.mubr.f32.mxu0 %v2209
        %2349 = vmatmul.mubr.f32.gmra.mrb[0].mxu0 %v2208
        %v2350 = vpop.f32.mrb[0].mxu0
        %v2351 = vadd.f32 %v2281, %v2350
        %v2352 = vpop.f32.mrb[0].mxu0
        %2353 = vdwg.mxu0
        %v2354 = vadd.f32 %v2141, %v2351
        %v2355 = vld [vmem:[#allocation7] sm:$0xff]
        %v2356 = vld [vmem:[#allocation7 + $0x8] sm:$0xff]
        %v2357 = vld [vmem:[#allocation7 + $0x10] sm:$0xff]
        %v2358 = vld [vmem:[#allocation7 + $0x18] sm:$0xff]
        %vm2359 = vcmask 261120
        %v2361 = vsel %vm2359, %v2354, 0
        %2363 = vmatprep.subr.mxu0 0.0
        %2364 = vmatpush1.msra.mxu0 %v2355
        %2365 = vmatprep.subr.mxu0 0.0
        %2366 = vmatpush1.msra.mxu0 %v2356
        %2367 = vmatprep.subr.mxu0 0.0
        %2368 = vmatpush1.msra.mxu0 %v2357
        %2369 = vmatprep.subr.mxu0 0.0
        %2370 = vmatpush1.msra.mxu0 %v2358
        %2371 = vmatprep.subr.mxu0 0.0
        %2372 = vmatpush1.msra.mxu0 0.0
        %2373 = vmatprep.subr.mxu0 0.0
        %2374 = vmatpush1.msra.mxu0 0.0
        %2375 = vmatprep.subr.mxu0 0.0
        %2376 = vmatpush1.msra.mxu0 0.0
        %2377 = vmatprep.subr.mxu0 0.0
        %2378 = vmatpush1.msra.mxu0 0.0
        %2379 = vmatprep.subr.mxu0 0.0
        %2380 = vmatpush1.msra.mxu0 0.0
        %2381 = vmatprep.subr.mxu0 0.0
        %2382 = vmatpush1.msra.mxu0 0.0
        %2383 = vmatprep.subr.mxu0 0.0
        %2384 = vmatpush1.msra.mxu0 0.0
        %2385 = vmatprep.subr.mxu0 0.0
        %2386 = vmatpush1.msra.mxu0 0.0
        %2387 = vmatprep.subr.mxu0 0.0
        %2388 = vmatpush1.msra.mxu0 0.0
        %2389 = vmatprep.subr.mxu0 0.0
        %2390 = vmatpush1.msra.mxu0 0.0
        %2391 = vmatprep.subr.mxu0 0.0
        %2392 = vmatpush1.msra.mxu0 0.0
        %2393 = vmatprep.subr.mxu0 0.0
        %2394 = vmatpush1.msra.mxu0 0.0
        %2395 = vmatprep.subr.mxu0 0.0
        %2396 = vmatpush1.msra.mxu0 0.0
        %2397 = vmatprep.subr.mxu0 0.0
        %2398 = vmatpush1.msra.mxu0 0.0
        %2399 = vmatprep.subr.mxu0 0.0
        %2400 = vmatpush1.msra.mxu0 0.0
        %2401 = vmatprep.subr.mxu0 0.0
        %2402 = vmatpush1.msra.mxu0 0.0
        %2403 = vmatprep.subr.mxu0 0.0
        %2404 = vmatpush1.msra.mxu0 0.0
        %2405 = vmatprep.subr.mxu0 0.0
        %2406 = vmatpush1.msra.mxu0 0.0
        %2407 = vmatprep.subr.mxu0 0.0
        %2408 = vmatpush1.msra.mxu0 0.0
        %2409 = vmatprep.subr.mxu0 0.0
        %2410 = vmatpush1.msra.mxu0 0.0
        %2411 = vmatprep.subr.mxu0 0.0
        %2412 = vmatpush1.msra.mxu0 0.0
        %2413 = vmatprep.subr.mxu0 0.0
        %2414 = vmatpush1.msra.mxu0 0.0
        %2415 = vmatprep.subr.mxu0 0.0
        %2416 = vmatpush1.msra.mxu0 0.0
        %2417 = vmatprep.subr.mxu0 0.0
        %2418 = vmatpush1.msra.mxu0 0.0
        %2419 = vmatprep.subr.mxu0 0.0
        %2420 = vmatpush1.msra.mxu0 0.0
        %2421 = vmatprep.subr.mxu0 0.0
        %2422 = vmatpush1.msra.mxu0 0.0
        %2423 = vmatprep.subr.mxu0 0.0
        %2424 = vmatpush1.msra.mxu0 0.0
        %2425 = vmatprep.subr.mxu0 0.0
        %2426 = vmatpush1.msra.mxu0 0.0
        %2427 = vmatprep.mubr.f32.mxu0 0.0
        %2428 = vmatmul.mubr.f32.gmra.mrb[0].mxu0 %v2361
        %v2429 = vpop.f32.mrb[0].mxu0
        %v2430 = vadd.f32 0.0, %v2429
        %v2431 = vpop.f32.mrb[0].mxu0
        %2432 = vdwg.mxu0
        %v2433 = vlaneseq
        %v2434 = vshrl.u32 %v2433, 7
        %v2435 = vsub.s32 0, %v2434
        %v2436 = vrot.slane %v2430, %v2435
        %v2437 = vadd.f32 %v874, %v2436
        %v2438 = vld [vmem:[#allocation9] sm:$0xff]
        %v2439 = vld [vmem:[#allocation9 + $0x8] sm:$0xff]
        %v2440 = vld [vmem:[#allocation9 + $0x10] sm:$0xff]
        %v2441 = vld [vmem:[#allocation9 + $0x18] sm:$0xff]
        %v2442 = vld [vmem:[#allocation10] sm:$0x1]
        %v2443 = vld [vmem:[#allocation12] sm:$0xff]
        %v2444 = vld [vmem:[#allocation12 + $0x8] sm:$0xff]
        %v2445 = vld [vmem:[#allocation12 + $0x10] sm:$0xff]
        %v2446 = vld [vmem:[#allocation12 + $0x18] sm:$0xff]
        %v2447 = vld [vmem:[#allocation13] sm:$0x1]
        %v2448 = vld [vmem:[#allocation15] sm:$0x1]
        %v2449 = vld [vmem:[#allocation16] sm:$0x1]
        %v2450 = vld [vmem:[#allocation18] sm:$0xff]
        %v2451 = vld [vmem:[#allocation18 + $0x8] sm:$0xff]
        %v2452 = vld [vmem:[#allocation18 + $0x10] sm:$0xff]
        %v2453 = vld [vmem:[#allocation18 + $0x18] sm:$0xff]
        %v2454 = vld [vmem:[#allocation19] sm:$0x1]
        %v2455 = vld [vmem:[%s15] sm:$0xff]
        %v2456 = vld [vmem:[%s15 + $0x8] sm:$0xff]
        %v2457 = vld [vmem:[%s15 + $0x10] sm:$0xff]
        %v2458 = vld [vmem:[%s15 + $0x18] sm:$0xff]
        %v2459 = vld [vmem:[%s15 + $0x20] sm:$0xff]
        %v2460 = vld [vmem:[%s15 + $0x28] sm:$0xff]
        %v2461 = vld [vmem:[%s15 + $0x30] sm:$0xff]
        %v2462 = vld [vmem:[%s15 + $0x38] sm:$0xff]
        %v2463 = vld [vmem:[#allocation21] sm:$0x1]
        %v2464 = vld [vmem:[#allocation22] sm:$0x1]
        %v2465 = vld [vmem:[#allocation24] sm:$0x1]
        %s2466 = scalar_lea.vmem [#allocation9], 64
        %v2467 = vld [vmem:[%s2466] sm:$0xff]
        %v2468 = vld [vmem:[%s2466 + $0x8] sm:$0xff]
        %v2469 = vld [vmem:[%s2466 + $0x10] sm:$0xff]
        %v2470 = vld [vmem:[%s2466 + $0x18] sm:$0xff]
        %s2471 = scalar_lea.vmem [#allocation10], 2
        %v2472 = vld [vmem:[%s2471] sm:$0x1]
        %s2473 = scalar_lea.vmem [#allocation12], 64
        %v2474 = vld [vmem:[%s2473] sm:$0xff]
        %v2475 = vld [vmem:[%s2473 + $0x8] sm:$0xff]
        %v2476 = vld [vmem:[%s2473 + $0x10] sm:$0xff]
        %v2477 = vld [vmem:[%s2473 + $0x18] sm:$0xff]
        %s2478 = scalar_lea.vmem [#allocation13], 2
        %v2479 = vld [vmem:[%s2478] sm:$0x1]
        %s2480 = scalar_lea.vmem [#allocation15], 2
        %v2481 = vld [vmem:[%s2480] sm:$0x1]
        %s2482 = scalar_lea.vmem [#allocation16], 2
        %v2483 = vld [vmem:[%s2482] sm:$0x1]
        %s2484 = scalar_lea.vmem [#allocation18], 64
        %v2485 = vld [vmem:[%s2484] sm:$0xff]
        %v2486 = vld [vmem:[%s2484 + $0x8] sm:$0xff]
        %v2487 = vld [vmem:[%s2484 + $0x10] sm:$0xff]
        %v2488 = vld [vmem:[%s2484 + $0x18] sm:$0xff]
        %s2489 = scalar_lea.vmem [#allocation19], 2
        %v2490 = vld [vmem:[%s2489] sm:$0x1]
        %s2491 = scalar_lea.vmem %s15, 128
        %v2492 = vld [vmem:[%s2491] sm:$0xff]
        %v2493 = vld [vmem:[%s2491 + $0x8] sm:$0xff]
        %v2494 = vld [vmem:[%s2491 + $0x10] sm:$0xff]
        %v2495 = vld [vmem:[%s2491 + $0x18] sm:$0xff]
        %v2496 = vld [vmem:[%s2491 + $0x20] sm:$0xff]
        %v2497 = vld [vmem:[%s2491 + $0x28] sm:$0xff]
        %v2498 = vld [vmem:[%s2491 + $0x30] sm:$0xff]
        %v2499 = vld [vmem:[%s2491 + $0x38] sm:$0xff]
        %s2500 = scalar_lea.vmem [#allocation21], 2
        %v2501 = vld [vmem:[%s2500] sm:$0x1]
        %s2502 = scalar_lea.vmem [#allocation22], 2
        %v2503 = vld [vmem:[%s2502] sm:$0x1]
        %s2504 = scalar_lea.vmem [#allocation24], 2
        %v2505 = vld [vmem:[%s2504] sm:$0x1]
        %v2507 = vlaneseq
        %v2508 = vshrl.u32 %v2507, 7
        %v2509 = vsub.s32 0, %v2508
        %v2510 = vrot.slane %v2442, %v2509
        %v2513 = vsel %vm2359, %v874, 0
        %2515 = vmatprep.subr.mxu0 0.0
        %2516 = vmatpush1.msra.mxu0 %v2438
        %2517 = vmatprep.subr.mxu0 0.0
        %2518 = vmatpush1.msra.mxu0 %v2439
        %2519 = vmatprep.subr.mxu0 0.0
        %2520 = vmatpush1.msra.mxu0 %v2440
        %2521 = vmatprep.subr.mxu0 0.0
        %2522 = vmatpush1.msra.mxu0 %v2441
        %2523 = vmatprep.subr.mxu0 0.0
        %2524 = vmatpush1.msra.mxu0 0.0
        %2525 = vmatprep.subr.mxu0 0.0
        %2526 = vmatpush1.msra.mxu0 0.0
        %2527 = vmatprep.subr.mxu0 0.0
        %2528 = vmatpush1.msra.mxu0 0.0
        %2529 = vmatprep.subr.mxu0 0.0
        %2530 = vmatpush1.msra.mxu0 0.0
        %2531 = vmatprep.subr.mxu0 0.0
        %2532 = vmatpush1.msra.mxu0 0.0
        %2533 = vmatprep.subr.mxu0 0.0
        %2534 = vmatpush1.msra.mxu0 0.0
        %2535 = vmatprep.subr.mxu0 0.0
        %2536 = vmatpush1.msra.mxu0 0.0
        %2537 = vmatprep.subr.mxu0 0.0
        %2538 = vmatpush1.msra.mxu0 0.0
        %2539 = vmatprep.subr.mxu0 0.0
        %2540 = vmatpush1.msra.mxu0 0.0
        %2541 = vmatprep.subr.mxu0 0.0
        %2542 = vmatpush1.msra.mxu0 0.0
        %2543 = vmatprep.subr.mxu0 0.0
        %2544 = vmatpush1.msra.mxu0 0.0
        %2545 = vmatprep.subr.mxu0 0.0
        %2546 = vmatpush1.msra.mxu0 0.0
        %2547 = vmatprep.subr.mxu0 0.0
        %2548 = vmatpush1.msra.mxu0 0.0
        %2549 = vmatprep.subr.mxu0 0.0
        %2550 = vmatpush1.msra.mxu0 0.0
        %2551 = vmatprep.subr.mxu0 0.0
        %2552 = vmatpush1.msra.mxu0 0.0
        %2553 = vmatprep.subr.mxu0 0.0
        %2554 = vmatpush1.msra.mxu0 0.0
        %2555 = vmatprep.subr.mxu0 0.0
        %2556 = vmatpush1.msra.mxu0 0.0
        %2557 = vmatprep.subr.mxu0 0.0
        %2558 = vmatpush1.msra.mxu0 0.0
        %2559 = vmatprep.subr.mxu0 0.0
        %2560 = vmatpush1.msra.mxu0 0.0
        %2561 = vmatprep.subr.mxu0 0.0
        %2562 = vmatpush1.msra.mxu0 0.0
        %2563 = vmatprep.subr.mxu0 0.0
        %2564 = vmatpush1.msra.mxu0 0.0
        %2565 = vmatprep.subr.mxu0 0.0
        %2566 = vmatpush1.msra.mxu0 0.0
        %2567 = vmatprep.subr.mxu0 0.0
        %2568 = vmatpush1.msra.mxu0 0.0
        %2569 = vmatprep.subr.mxu0 0.0
        %2570 = vmatpush1.msra.mxu0 0.0
        %2571 = vmatprep.subr.mxu0 0.0
        %2572 = vmatpush1.msra.mxu0 0.0
        %2573 = vmatprep.subr.mxu0 0.0
        %2574 = vmatpush1.msra.mxu0 0.0
        %2575 = vmatprep.subr.mxu0 0.0
        %2576 = vmatpush1.msra.mxu0 0.0
        %2577 = vmatprep.subr.mxu0 0.0
        %2578 = vmatpush1.msra.mxu0 0.0
        %2579 = vmatprep.mubr.f32.mxu0 0.0
        %2580 = vmatmul.mubr.f32.gmra.mrb[0].mxu0 %v2513
        %v2581 = vpop.f32.mrb[0].mxu0
        %v2582 = vadd.f32 %v2510, %v2581
        %v2583 = vpop.f32.mrb[0].mxu0
        %2584 = vdwg.mxu0
        %v2586 = vlaneseq
        %v2587 = vshrl.u32 %v2586, 7
        %v2588 = vsub.s32 0, %v2587
        %v2589 = vrot.slane %v2447, %v2588
        %v2591 = vadd.f32 %v2589, 0.0
        %v2592 = vmul.f32 %v2582, 0.35355338
        %2594 = vrot.lane.b32.xlu0 %v2582, 96
        %v2595 = vpop.permute.xlu0 %2594
        %vm2596 = vcmask 64512
        %v2598 = vsel %vm2596, %v2592, 0
        %v2600 = vsel %vm2596, %v2595, 0
        %2602 = vmatprep.subr.mxu0 0.0
        %2603 = vmatpush1.xpose.msra.mxu0 %v2600
        %2604 = vmatprep.subr.mxu0 0.0
        %2605 = vmatpush1.xpose.msra.mxu0 0.0
        %2606 = vmatprep.subr.mxu0 0.0
        %2607 = vmatpush1.xpose.msra.mxu0 0.0
        %2608 = vmatprep.subr.mxu0 0.0
        %2609 = vmatpush1.xpose.msra.mxu0 0.0
        %2610 = vmatprep.subr.mxu0 0.0
        %2611 = vmatpush1.xpose.msra.mxu0 0.0
        %2612 = vmatprep.subr.mxu0 0.0
        %2613 = vmatpush1.xpose.msra.mxu0 0.0
        %2614 = vmatprep.subr.mxu0 0.0
        %2615 = vmatpush1.xpose.msra.mxu0 0.0
        %2616 = vmatprep.subr.mxu0 0.0
        %2617 = vmatpush1.xpose.msra.mxu0 0.0
        %2618 = vmatprep.subr.mxu0 0.0
        %2619 = vmatpush1.xpose.msra.mxu0 0.0
        %2620 = vmatprep.subr.mxu0 0.0
        %2621 = vmatpush1.xpose.msra.mxu0 0.0
        %2622 = vmatprep.subr.mxu0 0.0
        %2623 = vmatpush1.xpose.msra.mxu0 0.0
        %2624 = vmatprep.subr.mxu0 0.0
        %2625 = vmatpush1.xpose.msra.mxu0 0.0
        %2626 = vmatprep.subr.mxu0 0.0
        %2627 = vmatpush1.xpose.msra.mxu0 0.0
        %2628 = vmatprep.subr.mxu0 0.0
        %2629 = vmatpush1.xpose.msra.mxu0 0.0
        %2630 = vmatprep.subr.mxu0 0.0
        %2631 = vmatpush1.xpose.msra.mxu0 0.0
        %2632 = vmatprep.subr.mxu0 0.0
        %2633 = vmatpush1.xpose.msra.mxu0 0.0
        %2634 = vmatprep.subr.mxu0 0.0
        %2635 = vmatpush1.xpose.msra.mxu0 0.0
        %2636 = vmatprep.subr.mxu0 0.0
        %2637 = vmatpush1.xpose.msra.mxu0 0.0
        %2638 = vmatprep.subr.mxu0 0.0
        %2639 = vmatpush1.xpose.msra.mxu0 0.0
        %2640 = vmatprep.subr.mxu0 0.0
        %2641 = vmatpush1.xpose.msra.mxu0 0.0
        %2642 = vmatprep.subr.mxu0 0.0
        %2643 = vmatpush1.xpose.msra.mxu0 0.0
        %2644 = vmatprep.subr.mxu0 0.0
        %2645 = vmatpush1.xpose.msra.mxu0 0.0
        %2646 = vmatprep.subr.mxu0 0.0
        %2647 = vmatpush1.xpose.msra.mxu0 0.0
        %2648 = vmatprep.subr.mxu0 0.0
        %2649 = vmatpush1.xpose.msra.mxu0 0.0
        %2650 = vmatprep.subr.mxu0 0.0
        %2651 = vmatpush1.xpose.msra.mxu0 0.0
        %2652 = vmatprep.subr.mxu0 0.0
        %2653 = vmatpush1.xpose.msra.mxu0 0.0
        %2654 = vmatprep.subr.mxu0 0.0
        %2655 = vmatpush1.xpose.msra.mxu0 0.0
        %2656 = vmatprep.subr.mxu0 0.0
        %2657 = vmatpush1.xpose.msra.mxu0 0.0
        %2658 = vmatprep.subr.mxu0 0.0
        %2659 = vmatpush1.xpose.msra.mxu0 0.0
        %2660 = vmatprep.subr.mxu0 0.0
        %2661 = vmatpush1.xpose.msra.mxu0 0.0
        %2662 = vmatprep.subr.mxu0 0.0
        %2663 = vmatpush1.xpose.msra.mxu0 0.0
        %2664 = vmatprep.subr.mxu0 0.0
        %2665 = vmatpush1.xpose.msra.mxu0 0.0
        %2666 = vmatprep.mubr.f32.mxu0 0.0
        %2667 = vmatmul.mubr.f32.gmra.mrb[0].mxu0 %v2598
        %v2668 = vpop.f32.mrb[0].mxu0
        %v2669 = vadd.f32 0.0, %v2668
        %v2670 = vpop.f32.mrb[0].mxu0
        %2671 = vdwg.mxu0
        %v2672 = vsel %vm2596, %v2669, -inf
        %2673 = vmax.xlane.f32.xlu0 %v2672
        %v2674 = vpop.xlane.xlu0 %2673
        %v2675 = vsub.f32 %v2669, %v2674
        %v2676 = vmul.f32 %v2675, 1.442695
        %v2677 = vpow.pop %v2676
        %v2678 = vsel %vm2596, %v2677, 0.0
        %2679 = vadd.xlane.f32.xlu0 %v2678
        %v2680 = vpop.xlane.xlu0 %2679
        %v2681 = vrcp.pop %v2680
        %v2682 = vmul.f32 %v2677, %v2681
        %2683 = vrot.lane.b32.xlu0 %v2582, 64
        %v2684 = vpop.permute.xlu0 %2683
        %v2687 = vsel %vm2596, %v2682, 0
        %2689 = vmatprep.subr.mxu0 0.0
        %2690 = vmatpush1.msra.mxu0 %v2684
        %2691 = vmatprep.subr.mxu0 0.0
        %2692 = vmatpush1.msra.mxu0 0.0
        %2693 = vmatprep.subr.mxu0 0.0
        %2694 = vmatpush1.msra.mxu0 0.0
        %2695 = vmatprep.subr.mxu0 0.0
        %2696 = vmatpush1.msra.mxu0 0.0
        %2697 = vmatprep.subr.mxu0 0.0
        %2698 = vmatpush1.msra.mxu0 0.0
        %2699 = vmatprep.subr.mxu0 0.0
        %2700 = vmatpush1.msra.mxu0 0.0
        %2701 = vmatprep.subr.mxu0 0.0
        %2702 = vmatpush1.msra.mxu0 0.0
        %2703 = vmatprep.subr.mxu0 0.0
        %2704 = vmatpush1.msra.mxu0 0.0
        %2705 = vmatprep.subr.mxu0 0.0
        %2706 = vmatpush1.msra.mxu0 0.0
        %2707 = vmatprep.subr.mxu0 0.0
        %2708 = vmatpush1.msra.mxu0 0.0
        %2709 = vmatprep.subr.mxu0 0.0
        %2710 = vmatpush1.msra.mxu0 0.0
        %2711 = vmatprep.subr.mxu0 0.0
        %2712 = vmatpush1.msra.mxu0 0.0
        %2713 = vmatprep.subr.mxu0 0.0
        %2714 = vmatpush1.msra.mxu0 0.0
        %2715 = vmatprep.subr.mxu0 0.0
        %2716 = vmatpush1.msra.mxu0 0.0
        %2717 = vmatprep.subr.mxu0 0.0
        %2718 = vmatpush1.msra.mxu0 0.0
        %2719 = vmatprep.subr.mxu0 0.0
        %2720 = vmatpush1.msra.mxu0 0.0
        %2721 = vmatprep.subr.mxu0 0.0
        %2722 = vmatpush1.msra.mxu0 0.0
        %2723 = vmatprep.subr.mxu0 0.0
        %2724 = vmatpush1.msra.mxu0 0.0
        %2725 = vmatprep.subr.mxu0 0.0
        %2726 = vmatpush1.msra.mxu0 0.0
        %2727 = vmatprep.subr.mxu0 0.0
        %2728 = vmatpush1.msra.mxu0 0.0
        %2729 = vmatprep.subr.mxu0 0.0
        %2730 = vmatpush1.msra.mxu0 0.0
        %2731 = vmatprep.subr.mxu0 0.0
        %2732 = vmatpush1.msra.mxu0 0.0
        %2733 = vmatprep.subr.mxu0 0.0
        %2734 = vmatpush1.msra.mxu0 0.0
        %2735 = vmatprep.subr.mxu0 0.0
        %2736 = vmatpush1.msra.mxu0 0.0
        %2737 = vmatprep.subr.mxu0 0.0
        %2738 = vmatpush1.msra.mxu0 0.0
        %2739 = vmatprep.subr.mxu0 0.0
        %2740 = vmatpush1.msra.mxu0 0.0
        %2741 = vmatprep.subr.mxu0 0.0
        %2742 = vmatpush1.msra.mxu0 0.0
        %2743 = vmatprep.subr.mxu0 0.0
        %2744 = vmatpush1.msra.mxu0 0.0
        %2745 = vmatprep.subr.mxu0 0.0
        %2746 = vmatpush1.msra.mxu0 0.0
        %2747 = vmatprep.subr.mxu0 0.0
        %2748 = vmatpush1.msra.mxu0 0.0
        %2749 = vmatprep.subr.mxu0 0.0
        %2750 = vmatpush1.msra.mxu0 0.0
        %2751 = vmatprep.subr.mxu0 0.0
        %2752 = vmatpush1.msra.mxu0 0.0
        %2753 = vmatprep.mubr.f32.mxu0 0.0
        %2754 = vmatmul.mubr.f32.gmra.mrb[0].mxu0 %v2687
        %v2755 = vpop.f32.mrb[0].mxu0
        %v2756 = vadd.f32 0.0, %v2755
        %v2757 = vpop.f32.mrb[0].mxu0
        %2758 = vdwg.mxu0
        %v2760 = vsel %vm2596, %v2756, 0
        %2762 = vmatprep.subr.mxu0 0.0
        %2763 = vmatpush1.msra.mxu0 %v2443
        %2764 = vmatprep.subr.mxu0 0.0
        %2765 = vmatpush1.msra.mxu0 0.0
        %2766 = vmatprep.subr.mxu0 0.0
        %2767 = vmatpush1.msra.mxu0 0.0
        %2768 = vmatprep.subr.mxu0 0.0
        %2769 = vmatpush1.msra.mxu0 0.0
        %2770 = vmatprep.subr.mxu0 0.0
        %2771 = vmatpush1.msra.mxu0 0.0
        %2772 = vmatprep.subr.mxu0 0.0
        %2773 = vmatpush1.msra.mxu0 0.0
        %2774 = vmatprep.subr.mxu0 0.0
        %2775 = vmatpush1.msra.mxu0 0.0
        %2776 = vmatprep.subr.mxu0 0.0
        %2777 = vmatpush1.msra.mxu0 0.0
        %2778 = vmatprep.subr.mxu0 0.0
        %2779 = vmatpush1.msra.mxu0 0.0
        %2780 = vmatprep.subr.mxu0 0.0
        %2781 = vmatpush1.msra.mxu0 0.0
        %2782 = vmatprep.subr.mxu0 0.0
        %2783 = vmatpush1.msra.mxu0 0.0
        %2784 = vmatprep.subr.mxu0 0.0
        %2785 = vmatpush1.msra.mxu0 0.0
        %2786 = vmatprep.subr.mxu0 0.0
        %2787 = vmatpush1.msra.mxu0 0.0
        %2788 = vmatprep.subr.mxu0 0.0
        %2789 = vmatpush1.msra.mxu0 0.0
        %2790 = vmatprep.subr.mxu0 0.0
        %2791 = vmatpush1.msra.mxu0 0.0
        %2792 = vmatprep.subr.mxu0 0.0
        %2793 = vmatpush1.msra.mxu0 0.0
        %2794 = vmatprep.subr.mxu0 0.0
        %2795 = vmatpush1.msra.mxu0 0.0
        %2796 = vmatprep.subr.mxu0 0.0
        %2797 = vmatpush1.msra.mxu0 0.0
        %2798 = vmatprep.subr.mxu0 0.0
        %2799 = vmatpush1.msra.mxu0 0.0
        %2800 = vmatprep.subr.mxu0 0.0
        %2801 = vmatpush1.msra.mxu0 0.0
        %2802 = vmatprep.subr.mxu0 0.0
        %2803 = vmatpush1.msra.mxu0 0.0
        %2804 = vmatprep.subr.mxu0 0.0
        %2805 = vmatpush1.msra.mxu0 0.0
        %2806 = vmatprep.subr.mxu0 0.0
        %2807 = vmatpush1.msra.mxu0 0.0
        %2808 = vmatprep.subr.mxu0 0.0
        %2809 = vmatpush1.msra.mxu0 0.0
        %2810 = vmatprep.subr.mxu0 0.0
        %2811 = vmatpush1.msra.mxu0 0.0
        %2812 = vmatprep.subr.mxu0 0.0
        %2813 = vmatpush1.msra.mxu0 0.0
        %2814 = vmatprep.subr.mxu0 0.0
        %2815 = vmatpush1.msra.mxu0 0.0
        %2816 = vmatprep.subr.mxu0 0.0
        %2817 = vmatpush1.msra.mxu0 0.0
        %2818 = vmatprep.subr.mxu0 0.0
        %2819 = vmatpush1.msra.mxu0 0.0
        %2820 = vmatprep.subr.mxu0 0.0
        %2821 = vmatpush1.msra.mxu0 0.0
        %2822 = vmatprep.subr.mxu0 0.0
        %2823 = vmatpush1.msra.mxu0 0.0
        %2824 = vmatprep.subr.mxu0 0.0
        %2825 = vmatpush1.msra.mxu0 0.0
        %2826 = vmatprep.mubr.f32.mxu0 0.0
        %2827 = vmatmul.mubr.f32.gmra.mrb[0].mxu0 %v2760
        %v2828 = vpop.f32.mrb[0].mxu0
        %v2829 = vadd.f32 0.0, %v2828
        %v2830 = vpop.f32.mrb[0].mxu0
        %2831 = vdwg.mxu0
        %v2832 = vadd.f32 %v2591, %v2829
        %2833 = vrot.lane.b32.xlu0 %v2592, 120
        %v2834 = vpop.permute.xlu0 %2833
        %2835 = vrot.lane.b32.xlu0 %v2582, 88
        %v2836 = vpop.permute.xlu0 %2835
        %v2837 = vsel %vm2596, %v2834, 0
        %v2839 = vsel %vm2596, %v2836, 0
        %2841 = vmatprep.subr.mxu0 0.0
        %2842 = vmatpush1.xpose.msra.mxu0 %v2839
        %2843 = vmatprep.subr.mxu0 0.0
        %2844 = vmatpush1.xpose.msra.mxu0 0.0
        %2845 = vmatprep.subr.mxu0 0.0
        %2846 = vmatpush1.xpose.msra.mxu0 0.0
        %2847 = vmatprep.subr.mxu0 0.0
        %2848 = vmatpush1.xpose.msra.mxu0 0.0
        %2849 = vmatprep.subr.mxu0 0.0
        %2850 = vmatpush1.xpose.msra.mxu0 0.0
        %2851 = vmatprep.subr.mxu0 0.0
        %2852 = vmatpush1.xpose.msra.mxu0 0.0
        %2853 = vmatprep.subr.mxu0 0.0
        %2854 = vmatpush1.xpose.msra.mxu0 0.0
        %2855 = vmatprep.subr.mxu0 0.0
        %2856 = vmatpush1.xpose.msra.mxu0 0.0
        %2857 = vmatprep.subr.mxu0 0.0
        %2858 = vmatpush1.xpose.msra.mxu0 0.0
        %2859 = vmatprep.subr.mxu0 0.0
        %2860 = vmatpush1.xpose.msra.mxu0 0.0
        %2861 = vmatprep.subr.mxu0 0.0
        %2862 = vmatpush1.xpose.msra.mxu0 0.0
        %2863 = vmatprep.subr.mxu0 0.0
        %2864 = vmatpush1.xpose.msra.mxu0 0.0
        %2865 = vmatprep.subr.mxu0 0.0
        %2866 = vmatpush1.xpose.msra.mxu0 0.0
        %2867 = vmatprep.subr.mxu0 0.0
        %2868 = vmatpush1.xpose.msra.mxu0 0.0
        %2869 = vmatprep.subr.mxu0 0.0
        %2870 = vmatpush1.xpose.msra.mxu0 0.0
        %2871 = vmatprep.subr.mxu0 0.0
        %2872 = vmatpush1.xpose.msra.mxu0 0.0
        %2873 = vmatprep.subr.mxu0 0.0
        %2874 = vmatpush1.xpose.msra.mxu0 0.0
        %2875 = vmatprep.subr.mxu0 0.0
        %2876 = vmatpush1.xpose.msra.mxu0 0.0
        %2877 = vmatprep.subr.mxu0 0.0
        %2878 = vmatpush1.xpose.msra.mxu0 0.0
        %2879 = vmatprep.subr.mxu0 0.0
        %2880 = vmatpush1.xpose.msra.mxu0 0.0
        %2881 = vmatprep.subr.mxu0 0.0
        %2882 = vmatpush1.xpose.msra.mxu0 0.0
        %2883 = vmatprep.subr.mxu0 0.0
        %2884 = vmatpush1.xpose.msra.mxu0 0.0
        %2885 = vmatprep.subr.mxu0 0.0
        %2886 = vmatpush1.xpose.msra.mxu0 0.0
        %2887 = vmatprep.subr.mxu0 0.0
        %2888 = vmatpush1.xpose.msra.mxu0 0.0
        %2889 = vmatprep.subr.mxu0 0.0
        %2890 = vmatpush1.xpose.msra.mxu0 0.0
        %2891 = vmatprep.subr.mxu0 0.0
        %2892 = vmatpush1.xpose.msra.mxu0 0.0
        %2893 = vmatprep.subr.mxu0 0.0
        %2894 = vmatpush1.xpose.msra.mxu0 0.0
        %2895 = vmatprep.subr.mxu0 0.0
        %2896 = vmatpush1.xpose.msra.mxu0 0.0
        %2897 = vmatprep.subr.mxu0 0.0
        %2898 = vmatpush1.xpose.msra.mxu0 0.0
        %2899 = vmatprep.subr.mxu0 0.0
        %2900 = vmatpush1.xpose.msra.mxu0 0.0
        %2901 = vmatprep.subr.mxu0 0.0
        %2902 = vmatpush1.xpose.msra.mxu0 0.0
        %2903 = vmatprep.subr.mxu0 0.0
        %2904 = vmatpush1.xpose.msra.mxu0 0.0
        %2905 = vmatprep.mubr.f32.mxu0 0.0
        %2906 = vmatmul.mubr.f32.gmra.mrb[0].mxu0 %v2837
        %v2907 = vpop.f32.mrb[0].mxu0
        %v2908 = vadd.f32 0.0, %v2907
        %v2909 = vpop.f32.mrb[0].mxu0
        %2910 = vdwg.mxu0
        %v2911 = vsel %vm2596, %v2908, -inf
        %2912 = vmax.xlane.f32.xlu0 %v2911
        %v2913 = vpop.xlane.xlu0 %2912
        %v2914 = vsub.f32 %v2908, %v2913
        %v2915 = vmul.f32 %v2914, 1.442695
        %v2916 = vpow.pop %v2915
        %v2917 = vsel %vm2596, %v2916, 0.0
        %2918 = vadd.xlane.f32.xlu0 %v2917
        %v2919 = vpop.xlane.xlu0 %2918
        %v2920 = vrcp.pop %v2919
        %v2921 = vmul.f32 %v2916, %v2920
        %2922 = vrot.lane.b32.xlu0 %v2582, 56
        %v2923 = vpop.permute.xlu0 %2922
        %v2926 = vsel %vm2596, %v2921, 0
        %2928 = vmatprep.subr.mxu0 0.0
        %2929 = vmatpush1.msra.mxu0 %v2923
        %2930 = vmatprep.subr.mxu0 0.0
        %2931 = vmatpush1.msra.mxu0 0.0
        %2932 = vmatprep.subr.mxu0 0.0
        %2933 = vmatpush1.msra.mxu0 0.0
        %2934 = vmatprep.subr.mxu0 0.0
        %2935 = vmatpush1.msra.mxu0 0.0
        %2936 = vmatprep.subr.mxu0 0.0
        %2937 = vmatpush1.msra.mxu0 0.0
        %2938 = vmatprep.subr.mxu0 0.0
        %2939 = vmatpush1.msra.mxu0 0.0
        %2940 = vmatprep.subr.mxu0 0.0
        %2941 = vmatpush1.msra.mxu0 0.0
        %2942 = vmatprep.subr.mxu0 0.0
        %2943 = vmatpush1.msra.mxu0 0.0
        %2944 = vmatprep.subr.mxu0 0.0
        %2945 = vmatpush1.msra.mxu0 0.0
        %2946 = vmatprep.subr.mxu0 0.0
        %2947 = vmatpush1.msra.mxu0 0.0
        %2948 = vmatprep.subr.mxu0 0.0
        %2949 = vmatpush1.msra.mxu0 0.0
        %2950 = vmatprep.subr.mxu0 0.0
        %2951 = vmatpush1.msra.mxu0 0.0
        %2952 = vmatprep.subr.mxu0 0.0
        %2953 = vmatpush1.msra.mxu0 0.0
        %2954 = vmatprep.subr.mxu0 0.0
        %2955 = vmatpush1.msra.mxu0 0.0
        %2956 = vmatprep.subr.mxu0 0.0
        %2957 = vmatpush1.msra.mxu0 0.0
        %2958 = vmatprep.subr.mxu0 0.0
        %2959 = vmatpush1.msra.mxu0 0.0
        %2960 = vmatprep.subr.mxu0 0.0
        %2961 = vmatpush1.msra.mxu0 0.0
        %2962 = vmatprep.subr.mxu0 0.0
        %2963 = vmatpush1.msra.mxu0 0.0
        %2964 = vmatprep.subr.mxu0 0.0
        %2965 = vmatpush1.msra.mxu0 0.0
        %2966 = vmatprep.subr.mxu0 0.0
        %2967 = vmatpush1.msra.mxu0 0.0
        %2968 = vmatprep.subr.mxu0 0.0
        %2969 = vmatpush1.msra.mxu0 0.0
        %2970 = vmatprep.subr.mxu0 0.0
        %2971 = vmatpush1.msra.mxu0 0.0
        %2972 = vmatprep.subr.mxu0 0.0
        %2973 = vmatpush1.msra.mxu0 0.0
        %2974 = vmatprep.subr.mxu0 0.0
        %2975 = vmatpush1.msra.mxu0 0.0
        %2976 = vmatprep.subr.mxu0 0.0
        %2977 = vmatpush1.msra.mxu0 0.0
        %2978 = vmatprep.subr.mxu0 0.0
        %2979 = vmatpush1.msra.mxu0 0.0
        %2980 = vmatprep.subr.mxu0 0.0
        %2981 = vmatpush1.msra.mxu0 0.0
        %2982 = vmatprep.subr.mxu0 0.0
        %2983 = vmatpush1.msra.mxu0 0.0
        %2984 = vmatprep.subr.mxu0 0.0
        %2985 = vmatpush1.msra.mxu0 0.0
        %2986 = vmatprep.subr.mxu0 0.0
        %2987 = vmatpush1.msra.mxu0 0.0
        %2988 = vmatprep.subr.mxu0 0.0
        %2989 = vmatpush1.msra.mxu0 0.0
        %2990 = vmatprep.subr.mxu0 0.0
        %2991 = vmatpush1.msra.mxu0 0.0
        %2992 = vmatprep.mubr.f32.mxu0 0.0
        %2993 = vmatmul.mubr.f32.gmra.mrb[0].mxu0 %v2926
        %v2994 = vpop.f32.mrb[0].mxu0
        %v2995 = vadd.f32 0.0, %v2994
        %v2996 = vpop.f32.mrb[0].mxu0
        %2997 = vdwg.mxu0
        %v2999 = vsel %vm2596, %v2995, 0
        %3001 = vmatprep.subr.mxu0 0.0
        %3002 = vmatpush1.msra.mxu0 %v2444
        %3003 = vmatprep.subr.mxu0 0.0
        %3004 = vmatpush1.msra.mxu0 0.0
        %3005 = vmatprep.subr.mxu0 0.0
        %3006 = vmatpush1.msra.mxu0 0.0
        %3007 = vmatprep.subr.mxu0 0.0
        %3008 = vmatpush1.msra.mxu0 0.0
        %3009 = vmatprep.subr.mxu0 0.0
        %3010 = vmatpush1.msra.mxu0 0.0
        %3011 = vmatprep.subr.mxu0 0.0
        %3012 = vmatpush1.msra.mxu0 0.0
        %3013 = vmatprep.subr.mxu0 0.0
        %3014 = vmatpush1.msra.mxu0 0.0
        %3015 = vmatprep.subr.mxu0 0.0
        %3016 = vmatpush1.msra.mxu0 0.0
        %3017 = vmatprep.subr.mxu0 0.0
        %3018 = vmatpush1.msra.mxu0 0.0
        %3019 = vmatprep.subr.mxu0 0.0
        %3020 = vmatpush1.msra.mxu0 0.0
        %3021 = vmatprep.subr.mxu0 0.0
        %3022 = vmatpush1.msra.mxu0 0.0
        %3023 = vmatprep.subr.mxu0 0.0
        %3024 = vmatpush1.msra.mxu0 0.0
        %3025 = vmatprep.subr.mxu0 0.0
        %3026 = vmatpush1.msra.mxu0 0.0
        %3027 = vmatprep.subr.mxu0 0.0
        %3028 = vmatpush1.msra.mxu0 0.0
        %3029 = vmatprep.subr.mxu0 0.0
        %3030 = vmatpush1.msra.mxu0 0.0
        %3031 = vmatprep.subr.mxu0 0.0
        %3032 = vmatpush1.msra.mxu0 0.0
        %3033 = vmatprep.subr.mxu0 0.0
        %3034 = vmatpush1.msra.mxu0 0.0
        %3035 = vmatprep.subr.mxu0 0.0
        %3036 = vmatpush1.msra.mxu0 0.0
        %3037 = vmatprep.subr.mxu0 0.0
        %3038 = vmatpush1.msra.mxu0 0.0
        %3039 = vmatprep.subr.mxu0 0.0
        %3040 = vmatpush1.msra.mxu0 0.0
        %3041 = vmatprep.subr.mxu0 0.0
        %3042 = vmatpush1.msra.mxu0 0.0
        %3043 = vmatprep.subr.mxu0 0.0
        %3044 = vmatpush1.msra.mxu0 0.0
        %3045 = vmatprep.subr.mxu0 0.0
        %3046 = vmatpush1.msra.mxu0 0.0
        %3047 = vmatprep.subr.mxu0 0.0
        %3048 = vmatpush1.msra.mxu0 0.0
        %3049 = vmatprep.subr.mxu0 0.0
        %3050 = vmatpush1.msra.mxu0 0.0
        %3051 = vmatprep.subr.mxu0 0.0
        %3052 = vmatpush1.msra.mxu0 0.0
        %3053 = vmatprep.subr.mxu0 0.0
        %3054 = vmatpush1.msra.mxu0 0.0
        %3055 = vmatprep.subr.mxu0 0.0
        %3056 = vmatpush1.msra.mxu0 0.0
        %3057 = vmatprep.subr.mxu0 0.0
        %3058 = vmatpush1.msra.mxu0 0.0
        %3059 = vmatprep.subr.mxu0 0.0
        %3060 = vmatpush1.msra.mxu0 0.0
        %3061 = vmatprep.subr.mxu0 0.0
        %3062 = vmatpush1.msra.mxu0 0.0
        %3063 = vmatprep.subr.mxu0 0.0
        %3064 = vmatpush1.msra.mxu0 0.0
        %3065 = vmatprep.mubr.f32.mxu0 0.0
        %3066 = vmatmul.mubr.f32.gmra.mrb[0].mxu0 %v2999
        %v3067 = vpop.f32.mrb[0].mxu0
        %v3068 = vadd.f32 0.0, %v3067
        %v3069 = vpop.f32.mrb[0].mxu0
        %3070 = vdwg.mxu0
        %v3071 = vadd.f32 %v2832, %v3068
        %3072 = vrot.lane.b32.xlu0 %v2592, 112
        %v3073 = vpop.permute.xlu0 %3072
        %3074 = vrot.lane.b32.xlu0 %v2582, 80
        %v3075 = vpop.permute.xlu0 %3074
        %v3076 = vsel %vm2596, %v3073, 0
        %v3078 = vsel %vm2596, %v3075, 0
        %3080 = vmatprep.subr.mxu0 0.0
        %3081 = vmatpush1.xpose.msra.mxu0 %v3078
        %3082 = vmatprep.subr.mxu0 0.0
        %3083 = vmatpush1.xpose.msra.mxu0 0.0
        %3084 = vmatprep.subr.mxu0 0.0
        %3085 = vmatpush1.xpose.msra.mxu0 0.0
        %3086 = vmatprep.subr.mxu0 0.0
        %3087 = vmatpush1.xpose.msra.mxu0 0.0
        %3088 = vmatprep.subr.mxu0 0.0
        %3089 = vmatpush1.xpose.msra.mxu0 0.0
        %3090 = vmatprep.subr.mxu0 0.0
        %3091 = vmatpush1.xpose.msra.mxu0 0.0
        %3092 = vmatprep.subr.mxu0 0.0
        %3093 = vmatpush1.xpose.msra.mxu0 0.0
        %3094 = vmatprep.subr.mxu0 0.0
        %3095 = vmatpush1.xpose.msra.mxu0 0.0
        %3096 = vmatprep.subr.mxu0 0.0
        %3097 = vmatpush1.xpose.msra.mxu0 0.0
        %3098 = vmatprep.subr.mxu0 0.0
        %3099 = vmatpush1.xpose.msra.mxu0 0.0
        %3100 = vmatprep.subr.mxu0 0.0
        %3101 = vmatpush1.xpose.msra.mxu0 0.0
        %3102 = vmatprep.subr.mxu0 0.0
        %3103 = vmatpush1.xpose.msra.mxu0 0.0
        %3104 = vmatprep.subr.mxu0 0.0
        %3105 = vmatpush1.xpose.msra.mxu0 0.0
        %3106 = vmatprep.subr.mxu0 0.0
        %3107 = vmatpush1.xpose.msra.mxu0 0.0
        %3108 = vmatprep.subr.mxu0 0.0
        %3109 = vmatpush1.xpose.msra.mxu0 0.0
        %3110 = vmatprep.subr.mxu0 0.0
        %3111 = vmatpush1.xpose.msra.mxu0 0.0
        %3112 = vmatprep.subr.mxu0 0.0
        %3113 = vmatpush1.xpose.msra.mxu0 0.0
        %3114 = vmatprep.subr.mxu0 0.0
        %3115 = vmatpush1.xpose.msra.mxu0 0.0
        %3116 = vmatprep.subr.mxu0 0.0
        %3117 = vmatpush1.xpose.msra.mxu0 0.0
        %3118 = vmatprep.subr.mxu0 0.0
        %3119 = vmatpush1.xpose.msra.mxu0 0.0
        %3120 = vmatprep.subr.mxu0 0.0
        %3121 = vmatpush1.xpose.msra.mxu0 0.0
        %3122 = vmatprep.subr.mxu0 0.0
        %3123 = vmatpush1.xpose.msra.mxu0 0.0
        %3124 = vmatprep.subr.mxu0 0.0
        %3125 = vmatpush1.xpose.msra.mxu0 0.0
        %3126 = vmatprep.subr.mxu0 0.0
        %3127 = vmatpush1.xpose.msra.mxu0 0.0
        %3128 = vmatprep.subr.mxu0 0.0
        %3129 = vmatpush1.xpose.msra.mxu0 0.0
        %3130 = vmatprep.subr.mxu0 0.0
        %3131 = vmatpush1.xpose.msra.mxu0 0.0
        %3132 = vmatprep.subr.mxu0 0.0
        %3133 = vmatpush1.xpose.msra.mxu0 0.0
        %3134 = vmatprep.subr.mxu0 0.0
        %3135 = vmatpush1.xpose.msra.mxu0 0.0
        %3136 = vmatprep.subr.mxu0 0.0
        %3137 = vmatpush1.xpose.msra.mxu0 0.0
        %3138 = vmatprep.subr.mxu0 0.0
        %3139 = vmatpush1.xpose.msra.mxu0 0.0
        %3140 = vmatprep.subr.mxu0 0.0
        %3141 = vmatpush1.xpose.msra.mxu0 0.0
        %3142 = vmatprep.subr.mxu0 0.0
        %3143 = vmatpush1.xpose.msra.mxu0 0.0
        %3144 = vmatprep.mubr.f32.mxu0 0.0
        %3145 = vmatmul.mubr.f32.gmra.mrb[0].mxu0 %v3076
        %v3146 = vpop.f32.mrb[0].mxu0
        %v3147 = vadd.f32 0.0, %v3146
        %v3148 = vpop.f32.mrb[0].mxu0
        %3149 = vdwg.mxu0
        %v3150 = vsel %vm2596, %v3147, -inf
        %3151 = vmax.xlane.f32.xlu0 %v3150
        %v3152 = vpop.xlane.xlu0 %3151
        %v3153 = vsub.f32 %v3147, %v3152
        %v3154 = vmul.f32 %v3153, 1.442695
        %v3155 = vpow.pop %v3154
        %v3156 = vsel %vm2596, %v3155, 0.0
        %3157 = vadd.xlane.f32.xlu0 %v3156
        %v3158 = vpop.xlane.xlu0 %3157
        %v3159 = vrcp.pop %v3158
        %v3160 = vmul.f32 %v3155, %v3159
        %3161 = vrot.lane.b32.xlu0 %v2582, 48
        %v3162 = vpop.permute.xlu0 %3161
        %v3165 = vsel %vm2596, %v3160, 0
        %3167 = vmatprep.subr.mxu0 0.0
        %3168 = vmatpush1.msra.mxu0 %v3162
        %3169 = vmatprep.subr.mxu0 0.0
        %3170 = vmatpush1.msra.mxu0 0.0
        %3171 = vmatprep.subr.mxu0 0.0
        %3172 = vmatpush1.msra.mxu0 0.0
        %3173 = vmatprep.subr.mxu0 0.0
        %3174 = vmatpush1.msra.mxu0 0.0
        %3175 = vmatprep.subr.mxu0 0.0
        %3176 = vmatpush1.msra.mxu0 0.0
        %3177 = vmatprep.subr.mxu0 0.0
        %3178 = vmatpush1.msra.mxu0 0.0
        %3179 = vmatprep.subr.mxu0 0.0
        %3180 = vmatpush1.msra.mxu0 0.0
        %3181 = vmatprep.subr.mxu0 0.0
        %3182 = vmatpush1.msra.mxu0 0.0
        %3183 = vmatprep.subr.mxu0 0.0
        %3184 = vmatpush1.msra.mxu0 0.0
        %3185 = vmatprep.subr.mxu0 0.0
        %3186 = vmatpush1.msra.mxu0 0.0
        %3187 = vmatprep.subr.mxu0 0.0
        %3188 = vmatpush1.msra.mxu0 0.0
        %3189 = vmatprep.subr.mxu0 0.0
        %3190 = vmatpush1.msra.mxu0 0.0
        %3191 = vmatprep.subr.mxu0 0.0
        %3192 = vmatpush1.msra.mxu0 0.0
        %3193 = vmatprep.subr.mxu0 0.0
        %3194 = vmatpush1.msra.mxu0 0.0
        %3195 = vmatprep.subr.mxu0 0.0
        %3196 = vmatpush1.msra.mxu0 0.0
        %3197 = vmatprep.subr.mxu0 0.0
        %3198 = vmatpush1.msra.mxu0 0.0
        %3199 = vmatprep.subr.mxu0 0.0
        %3200 = vmatpush1.msra.mxu0 0.0
        %3201 = vmatprep.subr.mxu0 0.0
        %3202 = vmatpush1.msra.mxu0 0.0
        %3203 = vmatprep.subr.mxu0 0.0
        %3204 = vmatpush1.msra.mxu0 0.0
        %3205 = vmatprep.subr.mxu0 0.0
        %3206 = vmatpush1.msra.mxu0 0.0
        %3207 = vmatprep.subr.mxu0 0.0
        %3208 = vmatpush1.msra.mxu0 0.0
        %3209 = vmatprep.subr.mxu0 0.0
        %3210 = vmatpush1.msra.mxu0 0.0
        %3211 = vmatprep.subr.mxu0 0.0
        %3212 = vmatpush1.msra.mxu0 0.0
        %3213 = vmatprep.subr.mxu0 0.0
        %3214 = vmatpush1.msra.mxu0 0.0
        %3215 = vmatprep.subr.mxu0 0.0
        %3216 = vmatpush1.msra.mxu0 0.0
        %3217 = vmatprep.subr.mxu0 0.0
        %3218 = vmatpush1.msra.mxu0 0.0
        %3219 = vmatprep.subr.mxu0 0.0
        %3220 = vmatpush1.msra.mxu0 0.0
        %3221 = vmatprep.subr.mxu0 0.0
        %3222 = vmatpush1.msra.mxu0 0.0
        %3223 = vmatprep.subr.mxu0 0.0
        %3224 = vmatpush1.msra.mxu0 0.0
        %3225 = vmatprep.subr.mxu0 0.0
        %3226 = vmatpush1.msra.mxu0 0.0
        %3227 = vmatprep.subr.mxu0 0.0
        %3228 = vmatpush1.msra.mxu0 0.0
        %3229 = vmatprep.subr.mxu0 0.0
        %3230 = vmatpush1.msra.mxu0 0.0
        %3231 = vmatprep.mubr.f32.mxu0 0.0
        %3232 = vmatmul.mubr.f32.gmra.mrb[0].mxu0 %v3165
        %v3233 = vpop.f32.mrb[0].mxu0
        %v3234 = vadd.f32 0.0, %v3233
        %v3235 = vpop.f32.mrb[0].mxu0
        %3236 = vdwg.mxu0
        %v3238 = vsel %vm2596, %v3234, 0
        %3240 = vmatprep.subr.mxu0 0.0
        %3241 = vmatpush1.msra.mxu0 %v2445
        %3242 = vmatprep.subr.mxu0 0.0
        %3243 = vmatpush1.msra.mxu0 0.0
        %3244 = vmatprep.subr.mxu0 0.0
        %3245 = vmatpush1.msra.mxu0 0.0
        %3246 = vmatprep.subr.mxu0 0.0
        %3247 = vmatpush1.msra.mxu0 0.0
        %3248 = vmatprep.subr.mxu0 0.0
        %3249 = vmatpush1.msra.mxu0 0.0
        %3250 = vmatprep.subr.mxu0 0.0
        %3251 = vmatpush1.msra.mxu0 0.0
        %3252 = vmatprep.subr.mxu0 0.0
        %3253 = vmatpush1.msra.mxu0 0.0
        %3254 = vmatprep.subr.mxu0 0.0
        %3255 = vmatpush1.msra.mxu0 0.0
        %3256 = vmatprep.subr.mxu0 0.0
        %3257 = vmatpush1.msra.mxu0 0.0
        %3258 = vmatprep.subr.mxu0 0.0
        %3259 = vmatpush1.msra.mxu0 0.0
        %3260 = vmatprep.subr.mxu0 0.0
        %3261 = vmatpush1.msra.mxu0 0.0
        %3262 = vmatprep.subr.mxu0 0.0
        %3263 = vmatpush1.msra.mxu0 0.0
        %3264 = vmatprep.subr.mxu0 0.0
        %3265 = vmatpush1.msra.mxu0 0.0
        %3266 = vmatprep.subr.mxu0 0.0
        %3267 = vmatpush1.msra.mxu0 0.0
        %3268 = vmatprep.subr.mxu0 0.0
        %3269 = vmatpush1.msra.mxu0 0.0
        %3270 = vmatprep.subr.mxu0 0.0
        %3271 = vmatpush1.msra.mxu0 0.0
        %3272 = vmatprep.subr.mxu0 0.0
        %3273 = vmatpush1.msra.mxu0 0.0
        %3274 = vmatprep.subr.mxu0 0.0
        %3275 = vmatpush1.msra.mxu0 0.0
        %3276 = vmatprep.subr.mxu0 0.0
        %3277 = vmatpush1.msra.mxu0 0.0
        %3278 = vmatprep.subr.mxu0 0.0
        %3279 = vmatpush1.msra.mxu0 0.0
        %3280 = vmatprep.subr.mxu0 0.0
        %3281 = vmatpush1.msra.mxu0 0.0
        %3282 = vmatprep.subr.mxu0 0.0
        %3283 = vmatpush1.msra.mxu0 0.0
        %3284 = vmatprep.subr.mxu0 0.0
        %3285 = vmatpush1.msra.mxu0 0.0
        %3286 = vmatprep.subr.mxu0 0.0
        %3287 = vmatpush1.msra.mxu0 0.0
        %3288 = vmatprep.subr.mxu0 0.0
        %3289 = vmatpush1.msra.mxu0 0.0
        %3290 = vmatprep.subr.mxu0 0.0
        %3291 = vmatpush1.msra.mxu0 0.0
        %3292 = vmatprep.subr.mxu0 0.0
        %3293 = vmatpush1.msra.mxu0 0.0
        %3294 = vmatprep.subr.mxu0 0.0
        %3295 = vmatpush1.msra.mxu0 0.0
        %3296 = vmatprep.subr.mxu0 0.0
        %3297 = vmatpush1.msra.mxu0 0.0
        %3298 = vmatprep.subr.mxu0 0.0
        %3299 = vmatpush1.msra.mxu0 0.0
        %3300 = vmatprep.subr.mxu0 0.0
        %3301 = vmatpush1.msra.mxu0 0.0
        %3302 = vmatprep.subr.mxu0 0.0
        %3303 = vmatpush1.msra.mxu0 0.0
        %3304 = vmatprep.mubr.f32.mxu0 0.0
        %3305 = vmatmul.mubr.f32.gmra.mrb[0].mxu0 %v3238
        %v3306 = vpop.f32.mrb[0].mxu0
        %v3307 = vadd.f32 0.0, %v3306
        %v3308 = vpop.f32.mrb[0].mxu0
        %3309 = vdwg.mxu0
        %v3310 = vadd.f32 %v3071, %v3307
        %3311 = vrot.lane.b32.xlu0 %v2592, 104
        %v3312 = vpop.permute.xlu0 %3311
        %3313 = vrot.lane.b32.xlu0 %v2582, 72
        %v3314 = vpop.permute.xlu0 %3313
        %v3315 = vsel %vm2596, %v3312, 0
        %v3317 = vsel %vm2596, %v3314, 0
        %3319 = vmatprep.subr.mxu0 0.0
        %3320 = vmatpush1.xpose.msra.mxu0 %v3317
        %3321 = vmatprep.subr.mxu0 0.0
        %3322 = vmatpush1.xpose.msra.mxu0 0.0
        %3323 = vmatprep.subr.mxu0 0.0
        %3324 = vmatpush1.xpose.msra.mxu0 0.0
        %3325 = vmatprep.subr.mxu0 0.0
        %3326 = vmatpush1.xpose.msra.mxu0 0.0
        %3327 = vmatprep.subr.mxu0 0.0
        %3328 = vmatpush1.xpose.msra.mxu0 0.0
        %3329 = vmatprep.subr.mxu0 0.0
        %3330 = vmatpush1.xpose.msra.mxu0 0.0
        %3331 = vmatprep.subr.mxu0 0.0
        %3332 = vmatpush1.xpose.msra.mxu0 0.0
        %3333 = vmatprep.subr.mxu0 0.0
        %3334 = vmatpush1.xpose.msra.mxu0 0.0
        %3335 = vmatprep.subr.mxu0 0.0
        %3336 = vmatpush1.xpose.msra.mxu0 0.0
        %3337 = vmatprep.subr.mxu0 0.0
        %3338 = vmatpush1.xpose.msra.mxu0 0.0
        %3339 = vmatprep.subr.mxu0 0.0
        %3340 = vmatpush1.xpose.msra.mxu0 0.0
        %3341 = vmatprep.subr.mxu0 0.0
        %3342 = vmatpush1.xpose.msra.mxu0 0.0
        %3343 = vmatprep.subr.mxu0 0.0
        %3344 = vmatpush1.xpose.msra.mxu0 0.0
        %3345 = vmatprep.subr.mxu0 0.0
        %3346 = vmatpush1.xpose.msra.mxu0 0.0
        %3347 = vmatprep.subr.mxu0 0.0
        %3348 = vmatpush1.xpose.msra.mxu0 0.0
        %3349 = vmatprep.subr.mxu0 0.0
        %3350 = vmatpush1.xpose.msra.mxu0 0.0
        %3351 = vmatprep.subr.mxu0 0.0
        %3352 = vmatpush1.xpose.msra.mxu0 0.0
        %3353 = vmatprep.subr.mxu0 0.0
        %3354 = vmatpush1.xpose.msra.mxu0 0.0
        %3355 = vmatprep.subr.mxu0 0.0
        %3356 = vmatpush1.xpose.msra.mxu0 0.0
        %3357 = vmatprep.subr.mxu0 0.0
        %3358 = vmatpush1.xpose.msra.mxu0 0.0
        %3359 = vmatprep.subr.mxu0 0.0
        %3360 = vmatpush1.xpose.msra.mxu0 0.0
        %3361 = vmatprep.subr.mxu0 0.0
        %3362 = vmatpush1.xpose.msra.mxu0 0.0
        %3363 = vmatprep.subr.mxu0 0.0
        %3364 = vmatpush1.xpose.msra.mxu0 0.0
        %3365 = vmatprep.subr.mxu0 0.0
        %3366 = vmatpush1.xpose.msra.mxu0 0.0
        %3367 = vmatprep.subr.mxu0 0.0
        %3368 = vmatpush1.xpose.msra.mxu0 0.0
        %3369 = vmatprep.subr.mxu0 0.0
        %3370 = vmatpush1.xpose.msra.mxu0 0.0
        %3371 = vmatprep.subr.mxu0 0.0
        %3372 = vmatpush1.xpose.msra.mxu0 0.0
        %3373 = vmatprep.subr.mxu0 0.0
        %3374 = vmatpush1.xpose.msra.mxu0 0.0
        %3375 = vmatprep.subr.mxu0 0.0
        %3376 = vmatpush1.xpose.msra.mxu0 0.0
        %3377 = vmatprep.subr.mxu0 0.0
        %3378 = vmatpush1.xpose.msra.mxu0 0.0
        %3379 = vmatprep.subr.mxu0 0.0
        %3380 = vmatpush1.xpose.msra.mxu0 0.0
        %3381 = vmatprep.subr.mxu0 0.0
        %3382 = vmatpush1.xpose.msra.mxu0 0.0
        %3383 = vmatprep.mubr.f32.mxu0 0.0
        %3384 = vmatmul.mubr.f32.gmra.mrb[0].mxu0 %v3315
        %v3385 = vpop.f32.mrb[0].mxu0
        %v3386 = vadd.f32 0.0, %v3385
        %v3387 = vpop.f32.mrb[0].mxu0
        %3388 = vdwg.mxu0
        %v3389 = vsel %vm2596, %v3386, -inf
        %3390 = vmax.xlane.f32.xlu0 %v3389
        %v3391 = vpop.xlane.xlu0 %3390
        %v3392 = vsub.f32 %v3386, %v3391
        %v3393 = vmul.f32 %v3392, 1.442695
        %v3394 = vpow.pop %v3393
        %v3395 = vsel %vm2596, %v3394, 0.0
        %3396 = vadd.xlane.f32.xlu0 %v3395
        %v3397 = vpop.xlane.xlu0 %3396
        %v3398 = vrcp.pop %v3397
        %v3399 = vmul.f32 %v3394, %v3398
        %3400 = vrot.lane.b32.xlu0 %v2582, 40
        %v3401 = vpop.permute.xlu0 %3400
        %v3404 = vsel %vm2596, %v3399, 0
        %3406 = vmatprep.subr.mxu0 0.0
        %3407 = vmatpush1.msra.mxu0 %v3401
        %3408 = vmatprep.subr.mxu0 0.0
        %3409 = vmatpush1.msra.mxu0 0.0
        %3410 = vmatprep.subr.mxu0 0.0
        %3411 = vmatpush1.msra.mxu0 0.0
        %3412 = vmatprep.subr.mxu0 0.0
        %3413 = vmatpush1.msra.mxu0 0.0
        %3414 = vmatprep.subr.mxu0 0.0
        %3415 = vmatpush1.msra.mxu0 0.0
        %3416 = vmatprep.subr.mxu0 0.0
        %3417 = vmatpush1.msra.mxu0 0.0
        %3418 = vmatprep.subr.mxu0 0.0
        %3419 = vmatpush1.msra.mxu0 0.0
        %3420 = vmatprep.subr.mxu0 0.0
        %3421 = vmatpush1.msra.mxu0 0.0
        %3422 = vmatprep.subr.mxu0 0.0
        %3423 = vmatpush1.msra.mxu0 0.0
        %3424 = vmatprep.subr.mxu0 0.0
        %3425 = vmatpush1.msra.mxu0 0.0
        %3426 = vmatprep.subr.mxu0 0.0
        %3427 = vmatpush1.msra.mxu0 0.0
        %3428 = vmatprep.subr.mxu0 0.0
        %3429 = vmatpush1.msra.mxu0 0.0
        %3430 = vmatprep.subr.mxu0 0.0
        %3431 = vmatpush1.msra.mxu0 0.0
        %3432 = vmatprep.subr.mxu0 0.0
        %3433 = vmatpush1.msra.mxu0 0.0
        %3434 = vmatprep.subr.mxu0 0.0
        %3435 = vmatpush1.msra.mxu0 0.0
        %3436 = vmatprep.subr.mxu0 0.0
        %3437 = vmatpush1.msra.mxu0 0.0
        %3438 = vmatprep.subr.mxu0 0.0
        %3439 = vmatpush1.msra.mxu0 0.0
        %3440 = vmatprep.subr.mxu0 0.0
        %3441 = vmatpush1.msra.mxu0 0.0
        %3442 = vmatprep.subr.mxu0 0.0
        %3443 = vmatpush1.msra.mxu0 0.0
        %3444 = vmatprep.subr.mxu0 0.0
        %3445 = vmatpush1.msra.mxu0 0.0
        %3446 = vmatprep.subr.mxu0 0.0
        %3447 = vmatpush1.msra.mxu0 0.0
        %3448 = vmatprep.subr.mxu0 0.0
        %3449 = vmatpush1.msra.mxu0 0.0
        %3450 = vmatprep.subr.mxu0 0.0
        %3451 = vmatpush1.msra.mxu0 0.0
        %3452 = vmatprep.subr.mxu0 0.0
        %3453 = vmatpush1.msra.mxu0 0.0
        %3454 = vmatprep.subr.mxu0 0.0
        %3455 = vmatpush1.msra.mxu0 0.0
        %3456 = vmatprep.subr.mxu0 0.0
        %3457 = vmatpush1.msra.mxu0 0.0
        %3458 = vmatprep.subr.mxu0 0.0
        %3459 = vmatpush1.msra.mxu0 0.0
        %3460 = vmatprep.subr.mxu0 0.0
        %3461 = vmatpush1.msra.mxu0 0.0
        %3462 = vmatprep.subr.mxu0 0.0
        %3463 = vmatpush1.msra.mxu0 0.0
        %3464 = vmatprep.subr.mxu0 0.0
        %3465 = vmatpush1.msra.mxu0 0.0
        %3466 = vmatprep.subr.mxu0 0.0
        %3467 = vmatpush1.msra.mxu0 0.0
        %3468 = vmatprep.subr.mxu0 0.0
        %3469 = vmatpush1.msra.mxu0 0.0
        %3470 = vmatprep.mubr.f32.mxu0 0.0
        %3471 = vmatmul.mubr.f32.gmra.mrb[0].mxu0 %v3404
        %v3472 = vpop.f32.mrb[0].mxu0
        %v3473 = vadd.f32 0.0, %v3472
        %v3474 = vpop.f32.mrb[0].mxu0
        %3475 = vdwg.mxu0
        %v3477 = vsel %vm2596, %v3473, 0
        %3479 = vmatprep.subr.mxu0 0.0
        %3480 = vmatpush1.msra.mxu0 %v2446
        %3481 = vmatprep.subr.mxu0 0.0
        %3482 = vmatpush1.msra.mxu0 0.0
        %3483 = vmatprep.subr.mxu0 0.0
        %3484 = vmatpush1.msra.mxu0 0.0
        %3485 = vmatprep.subr.mxu0 0.0
        %3486 = vmatpush1.msra.mxu0 0.0
        %3487 = vmatprep.subr.mxu0 0.0
        %3488 = vmatpush1.msra.mxu0 0.0
        %3489 = vmatprep.subr.mxu0 0.0
        %3490 = vmatpush1.msra.mxu0 0.0
        %3491 = vmatprep.subr.mxu0 0.0
        %3492 = vmatpush1.msra.mxu0 0.0
        %3493 = vmatprep.subr.mxu0 0.0
        %3494 = vmatpush1.msra.mxu0 0.0
        %3495 = vmatprep.subr.mxu0 0.0
        %3496 = vmatpush1.msra.mxu0 0.0
        %3497 = vmatprep.subr.mxu0 0.0
        %3498 = vmatpush1.msra.mxu0 0.0
        %3499 = vmatprep.subr.mxu0 0.0
        %3500 = vmatpush1.msra.mxu0 0.0
        %3501 = vmatprep.subr.mxu0 0.0
        %3502 = vmatpush1.msra.mxu0 0.0
        %3503 = vmatprep.subr.mxu0 0.0
        %3504 = vmatpush1.msra.mxu0 0.0
        %3505 = vmatprep.subr.mxu0 0.0
        %3506 = vmatpush1.msra.mxu0 0.0
        %3507 = vmatprep.subr.mxu0 0.0
        %3508 = vmatpush1.msra.mxu0 0.0
        %3509 = vmatprep.subr.mxu0 0.0
        %3510 = vmatpush1.msra.mxu0 0.0
        %3511 = vmatprep.subr.mxu0 0.0
        %3512 = vmatpush1.msra.mxu0 0.0
        %3513 = vmatprep.subr.mxu0 0.0
        %3514 = vmatpush1.msra.mxu0 0.0
        %3515 = vmatprep.subr.mxu0 0.0
        %3516 = vmatpush1.msra.mxu0 0.0
        %3517 = vmatprep.subr.mxu0 0.0
        %3518 = vmatpush1.msra.mxu0 0.0
        %3519 = vmatprep.subr.mxu0 0.0
        %3520 = vmatpush1.msra.mxu0 0.0
        %3521 = vmatprep.subr.mxu0 0.0
        %3522 = vmatpush1.msra.mxu0 0.0
        %3523 = vmatprep.subr.mxu0 0.0
        %3524 = vmatpush1.msra.mxu0 0.0
        %3525 = vmatprep.subr.mxu0 0.0
        %3526 = vmatpush1.msra.mxu0 0.0
        %3527 = vmatprep.subr.mxu0 0.0
        %3528 = vmatpush1.msra.mxu0 0.0
        %3529 = vmatprep.subr.mxu0 0.0
        %3530 = vmatpush1.msra.mxu0 0.0
        %3531 = vmatprep.subr.mxu0 0.0
        %3532 = vmatpush1.msra.mxu0 0.0
        %3533 = vmatprep.subr.mxu0 0.0
        %3534 = vmatpush1.msra.mxu0 0.0
        %3535 = vmatprep.subr.mxu0 0.0
        %3536 = vmatpush1.msra.mxu0 0.0
        %3537 = vmatprep.subr.mxu0 0.0
        %3538 = vmatpush1.msra.mxu0 0.0
        %3539 = vmatprep.subr.mxu0 0.0
        %3540 = vmatpush1.msra.mxu0 0.0
        %3541 = vmatprep.subr.mxu0 0.0
        %3542 = vmatpush1.msra.mxu0 0.0
        %3543 = vmatprep.mubr.f32.mxu0 0.0
        %3544 = vmatmul.mubr.f32.gmra.mrb[0].mxu0 %v3477
        %v3545 = vpop.f32.mrb[0].mxu0
        %v3546 = vadd.f32 0.0, %v3545
        %v3547 = vpop.f32.mrb[0].mxu0
        %3548 = vdwg.mxu0
        %v3549 = vadd.f32 %v3310, %v3546
        %v3550 = vadd.f32 %v874, %v3549
        %v3551 = vsel %vm2359, %v3550, 0.0
        %3552 = vadd.xlane.f32.xlu0 %v3551
        %v3553 = vpop.xlane.xlu0 %3552
        %v3554 = vrcp.pop 32.0
        %v3555 = vmul.f32 %v3553, %v3554
        %v3556 = vsub.f32 %v3550, %v3555
        %v3557 = vmul.f32 %v3556, %v3556
        %v3558 = vsel %vm2359, %v3557, 0.0
        %3559 = vadd.xlane.f32.xlu0 %v3558
        %v3560 = vpop.xlane.xlu0 %3559
        %v3561 = vmul.f32 %v3560, %v3554
        %v3562 = vadd.f32 %v3561, 1e-05
        %v3563 = vrsqrt.pop %v3562
        %v3564 = vmul.f32 %v3556, %v3563
        %v3566 = vlaneseq
        %v3567 = vshrl.u32 %v3566, 7
        %v3568 = vsub.s32 0, %v3567
        %v3569 = vrot.slane %v2448, %v3568
        %v3571 = vmul.f32 %v3564, %v3569
        %v3573 = vlaneseq
        %v3574 = vshrl.u32 %v3573, 7
        %v3575 = vsub.s32 0, %v3574
        %v3576 = vrot.slane %v2449, %v3575
        %v3578 = vadd.f32 %v3571, %v3576
        %v3580 = vlaneseq
        %v3581 = vshrl.u32 %v3580, 7
        %v3582 = vsub.s32 0, %v3581
        %v3583 = vrot.slane %v2454, %v3582
        %v3586 = vsel %vm2359, %v3578, 0
        %3588 = vmatprep.subr.mxu0 0.0
        %3589 = vmatpush1.msra.mxu0 %v2450
        %3590 = vmatprep.subr.mxu0 0.0
        %3591 = vmatpush1.msra.mxu0 %v2451
        %3592 = vmatprep.subr.mxu0 0.0
        %3593 = vmatpush1.msra.mxu0 %v2452
        %3594 = vmatprep.subr.mxu0 0.0
        %3595 = vmatpush1.msra.mxu0 %v2453
        %3596 = vmatprep.subr.mxu0 0.0
        %3597 = vmatpush1.msra.mxu0 0.0
        %3598 = vmatprep.subr.mxu0 0.0
        %3599 = vmatpush1.msra.mxu0 0.0
        %3600 = vmatprep.subr.mxu0 0.0
        %3601 = vmatpush1.msra.mxu0 0.0
        %3602 = vmatprep.subr.mxu0 0.0
        %3603 = vmatpush1.msra.mxu0 0.0
        %3604 = vmatprep.subr.mxu0 0.0
        %3605 = vmatpush1.msra.mxu0 0.0
        %3606 = vmatprep.subr.mxu0 0.0
        %3607 = vmatpush1.msra.mxu0 0.0
        %3608 = vmatprep.subr.mxu0 0.0
        %3609 = vmatpush1.msra.mxu0 0.0
        %3610 = vmatprep.subr.mxu0 0.0
        %3611 = vmatpush1.msra.mxu0 0.0
        %3612 = vmatprep.subr.mxu0 0.0
        %3613 = vmatpush1.msra.mxu0 0.0
        %3614 = vmatprep.subr.mxu0 0.0
        %3615 = vmatpush1.msra.mxu0 0.0
        %3616 = vmatprep.subr.mxu0 0.0
        %3617 = vmatpush1.msra.mxu0 0.0
        %3618 = vmatprep.subr.mxu0 0.0
        %3619 = vmatpush1.msra.mxu0 0.0
        %3620 = vmatprep.subr.mxu0 0.0
        %3621 = vmatpush1.msra.mxu0 0.0
        %3622 = vmatprep.subr.mxu0 0.0
        %3623 = vmatpush1.msra.mxu0 0.0
        %3624 = vmatprep.subr.mxu0 0.0
        %3625 = vmatpush1.msra.mxu0 0.0
        %3626 = vmatprep.subr.mxu0 0.0
        %3627 = vmatpush1.msra.mxu0 0.0
        %3628 = vmatprep.subr.mxu0 0.0
        %3629 = vmatpush1.msra.mxu0 0.0
        %3630 = vmatprep.subr.mxu0 0.0
        %3631 = vmatpush1.msra.mxu0 0.0
        %3632 = vmatprep.subr.mxu0 0.0
        %3633 = vmatpush1.msra.mxu0 0.0
        %3634 = vmatprep.subr.mxu0 0.0
        %3635 = vmatpush1.msra.mxu0 0.0
        %3636 = vmatprep.subr.mxu0 0.0
        %3637 = vmatpush1.msra.mxu0 0.0
        %3638 = vmatprep.subr.mxu0 0.0
        %3639 = vmatpush1.msra.mxu0 0.0
        %3640 = vmatprep.subr.mxu0 0.0
        %3641 = vmatpush1.msra.mxu0 0.0
        %3642 = vmatprep.subr.mxu0 0.0
        %3643 = vmatpush1.msra.mxu0 0.0
        %3644 = vmatprep.subr.mxu0 0.0
        %3645 = vmatpush1.msra.mxu0 0.0
        %3646 = vmatprep.subr.mxu0 0.0
        %3647 = vmatpush1.msra.mxu0 0.0
        %3648 = vmatprep.subr.mxu0 0.0
        %3649 = vmatpush1.msra.mxu0 0.0
        %3650 = vmatprep.subr.mxu0 0.0
        %3651 = vmatpush1.msra.mxu0 0.0
        %3652 = vmatprep.mubr.f32.mxu0 0.0
        %3653 = vmatmul.mubr.f32.gmra.mrb[0].mxu0 %v3586
        %v3654 = vpop.f32.mrb[0].mxu0
        %v3655 = vadd.f32 %v3583, %v3654
        %v3656 = vpop.f32.mrb[0].mxu0
        %3657 = vdwg.mxu0
        %v3658 = vmax.f32 %v3655, 0.0
        %v3660 = vlaneseq
        %v3661 = vshrl.u32 %v3660, 7
        %v3662 = vsub.s32 0, %v3661
        %v3663 = vrot.slane %v2463, %v3662
        %vm3665 = vcmask 523264
        %v3667 = vsel %vm3665, %v3658, 0
        %3669 = vmatprep.subr.mxu0 0.0
        %3670 = vmatpush1.msra.mxu0 %v2455
        %3671 = vmatprep.subr.mxu0 0.0
        %3672 = vmatpush1.msra.mxu0 %v2456
        %3673 = vmatprep.subr.mxu0 0.0
        %3674 = vmatpush1.msra.mxu0 %v2457
        %3675 = vmatprep.subr.mxu0 0.0
        %3676 = vmatpush1.msra.mxu0 %v2458
        %3677 = vmatprep.subr.mxu0 0.0
        %3678 = vmatpush1.msra.mxu0 %v2459
        %3679 = vmatprep.subr.mxu0 0.0
        %3680 = vmatpush1.msra.mxu0 %v2460
        %3681 = vmatprep.subr.mxu0 0.0
        %3682 = vmatpush1.msra.mxu0 %v2461
        %3683 = vmatprep.subr.mxu0 0.0
        %3684 = vmatpush1.msra.mxu0 %v2462
        %3685 = vmatprep.subr.mxu0 0.0
        %3686 = vmatpush1.msra.mxu0 0.0
        %3687 = vmatprep.subr.mxu0 0.0
        %3688 = vmatpush1.msra.mxu0 0.0
        %3689 = vmatprep.subr.mxu0 0.0
        %3690 = vmatpush1.msra.mxu0 0.0
        %3691 = vmatprep.subr.mxu0 0.0
        %3692 = vmatpush1.msra.mxu0 0.0
        %3693 = vmatprep.subr.mxu0 0.0
        %3694 = vmatpush1.msra.mxu0 0.0
        %3695 = vmatprep.subr.mxu0 0.0
        %3696 = vmatpush1.msra.mxu0 0.0
        %3697 = vmatprep.subr.mxu0 0.0
        %3698 = vmatpush1.msra.mxu0 0.0
        %3699 = vmatprep.subr.mxu0 0.0
        %3700 = vmatpush1.msra.mxu0 0.0
        %3701 = vmatprep.subr.mxu0 0.0
        %3702 = vmatpush1.msra.mxu0 0.0
        %3703 = vmatprep.subr.mxu0 0.0
        %3704 = vmatpush1.msra.mxu0 0.0
        %3705 = vmatprep.subr.mxu0 0.0
        %3706 = vmatpush1.msra.mxu0 0.0
        %3707 = vmatprep.subr.mxu0 0.0
        %3708 = vmatpush1.msra.mxu0 0.0
        %3709 = vmatprep.subr.mxu0 0.0
        %3710 = vmatpush1.msra.mxu0 0.0
        %3711 = vmatprep.subr.mxu0 0.0
        %3712 = vmatpush1.msra.mxu0 0.0
        %3713 = vmatprep.subr.mxu0 0.0
        %3714 = vmatpush1.msra.mxu0 0.0
        %3715 = vmatprep.subr.mxu0 0.0
        %3716 = vmatpush1.msra.mxu0 0.0
        %3717 = vmatprep.subr.mxu0 0.0
        %3718 = vmatpush1.msra.mxu0 0.0
        %3719 = vmatprep.subr.mxu0 0.0
        %3720 = vmatpush1.msra.mxu0 0.0
        %3721 = vmatprep.subr.mxu0 0.0
        %3722 = vmatpush1.msra.mxu0 0.0
        %3723 = vmatprep.subr.mxu0 0.0
        %3724 = vmatpush1.msra.mxu0 0.0
        %3725 = vmatprep.subr.mxu0 0.0
        %3726 = vmatpush1.msra.mxu0 0.0
        %3727 = vmatprep.subr.mxu0 0.0
        %3728 = vmatpush1.msra.mxu0 0.0
        %3729 = vmatprep.subr.mxu0 0.0
        %3730 = vmatpush1.msra.mxu0 0.0
        %3731 = vmatprep.subr.mxu0 0.0
        %3732 = vmatpush1.msra.mxu0 0.0
        %3733 = vmatprep.mubr.f32.mxu0 0.0
        %3734 = vmatmul.mubr.f32.gmra.mrb[0].mxu0 %v3667
        %v3735 = vpop.f32.mrb[0].mxu0
        %v3736 = vadd.f32 %v3663, %v3735
        %v3737 = vpop.f32.mrb[0].mxu0
        %3738 = vdwg.mxu0
        %v3739 = vadd.f32 %v3578, %v3736
        %v3740 = vsel %vm2359, %v3739, 0.0
        %3741 = vadd.xlane.f32.xlu0 %v3740
        %v3742 = vpop.xlane.xlu0 %3741
        %v3743 = vmul.f32 %v3742, %v3554
        %v3744 = vsub.f32 %v3739, %v3743
        %v3745 = vmul.f32 %v3744, %v3744
        %v3746 = vsel %vm2359, %v3745, 0.0
        %3747 = vadd.xlane.f32.xlu0 %v3746
        %v3748 = vpop.xlane.xlu0 %3747
        %v3749 = vmul.f32 %v3748, %v3554
        %v3750 = vadd.f32 %v3749, 1e-05
        %v3751 = vrsqrt.pop %v3750
        %v3752 = vmul.f32 %v3744, %v3751
        %v3754 = vlaneseq
        %v3755 = vshrl.u32 %v3754, 7
        %v3756 = vsub.s32 0, %v3755
        %v3757 = vrot.slane %v2464, %v3756
        %v3759 = vmul.f32 %v3752, %v3757
        %v3761 = vlaneseq
        %v3762 = vshrl.u32 %v3761, 7
        %v3763 = vsub.s32 0, %v3762
        %v3764 = vrot.slane %v2465, %v3763
        %v3766 = vadd.f32 %v3759, %v3764
        %v3768 = vlaneseq
        %v3769 = vshrl.u32 %v3768, 7
        %v3770 = vsub.s32 0, %v3769
        %v3771 = vrot.slane %v2472, %v3770
        %v3774 = vsel %vm2359, %v2437, 0
        %3776 = vmatprep.subr.mxu0 0.0
        %3777 = vmatpush1.msra.mxu0 %v2467
        %3778 = vmatprep.subr.mxu0 0.0
        %3779 = vmatpush1.msra.mxu0 %v2468
        %3780 = vmatprep.subr.mxu0 0.0
        %3781 = vmatpush1.msra.mxu0 %v2469
        %3782 = vmatprep.subr.mxu0 0.0
        %3783 = vmatpush1.msra.mxu0 %v2470
        %3784 = vmatprep.subr.mxu0 0.0
        %3785 = vmatpush1.msra.mxu0 0.0
        %3786 = vmatprep.subr.mxu0 0.0
        %3787 = vmatpush1.msra.mxu0 0.0
        %3788 = vmatprep.subr.mxu0 0.0
        %3789 = vmatpush1.msra.mxu0 0.0
        %3790 = vmatprep.subr.mxu0 0.0
        %3791 = vmatpush1.msra.mxu0 0.0
        %3792 = vmatprep.subr.mxu0 0.0
        %3793 = vmatpush1.msra.mxu0 0.0
        %3794 = vmatprep.subr.mxu0 0.0
        %3795 = vmatpush1.msra.mxu0 0.0
        %3796 = vmatprep.subr.mxu0 0.0
        %3797 = vmatpush1.msra.mxu0 0.0
        %3798 = vmatprep.subr.mxu0 0.0
        %3799 = vmatpush1.msra.mxu0 0.0
        %3800 = vmatprep.subr.mxu0 0.0
        %3801 = vmatpush1.msra.mxu0 0.0
        %3802 = vmatprep.subr.mxu0 0.0
        %3803 = vmatpush1.msra.mxu0 0.0
        %3804 = vmatprep.subr.mxu0 0.0
        %3805 = vmatpush1.msra.mxu0 0.0
        %3806 = vmatprep.subr.mxu0 0.0
        %3807 = vmatpush1.msra.mxu0 0.0
        %3808 = vmatprep.subr.mxu0 0.0
        %3809 = vmatpush1.msra.mxu0 0.0
        %3810 = vmatprep.subr.mxu0 0.0
        %3811 = vmatpush1.msra.mxu0 0.0
        %3812 = vmatprep.subr.mxu0 0.0
        %3813 = vmatpush1.msra.mxu0 0.0
        %3814 = vmatprep.subr.mxu0 0.0
        %3815 = vmatpush1.msra.mxu0 0.0
        %3816 = vmatprep.subr.mxu0 0.0
        %3817 = vmatpush1.msra.mxu0 0.0
        %3818 = vmatprep.subr.mxu0 0.0
        %3819 = vmatpush1.msra.mxu0 0.0
        %3820 = vmatprep.subr.mxu0 0.0
        %3821 = vmatpush1.msra.mxu0 0.0
        %3822 = vmatprep.subr.mxu0 0.0
        %3823 = vmatpush1.msra.mxu0 0.0
        %3824 = vmatprep.subr.mxu0 0.0
        %3825 = vmatpush1.msra.mxu0 0.0
        %3826 = vmatprep.subr.mxu0 0.0
        %3827 = vmatpush1.msra.mxu0 0.0
        %3828 = vmatprep.subr.mxu0 0.0
        %3829 = vmatpush1.msra.mxu0 0.0
        %3830 = vmatprep.subr.mxu0 0.0
        %3831 = vmatpush1.msra.mxu0 0.0
        %3832 = vmatprep.subr.mxu0 0.0
        %3833 = vmatpush1.msra.mxu0 0.0
        %3834 = vmatprep.subr.mxu0 0.0
        %3835 = vmatpush1.msra.mxu0 0.0
        %3836 = vmatprep.subr.mxu0 0.0
        %3837 = vmatpush1.msra.mxu0 0.0
        %3838 = vmatprep.subr.mxu0 0.0
        %3839 = vmatpush1.msra.mxu0 0.0
        %3840 = vmatprep.mubr.f32.mxu0 0.0
        %3841 = vmatmul.mubr.f32.gmra.mrb[0].mxu0 %v3774
        %v3842 = vpop.f32.mrb[0].mxu0
        %v3843 = vadd.f32 %v3771, %v3842
        %v3844 = vpop.f32.mrb[0].mxu0
        %3845 = vdwg.mxu0
        %v3847 = vlaneseq
        %v3848 = vshrl.u32 %v3847, 7
        %v3849 = vsub.s32 0, %v3848
        %v3850 = vrot.slane %v2479, %v3849
        %v3852 = vadd.f32 %v3850, 0.0
        %v3853 = vmul.f32 %v3843, 0.35355338
        %3855 = vrot.lane.b32.xlu0 %v3843, 96
        %v3856 = vpop.permute.xlu0 %3855
        %v3858 = vsel %vm2596, %v3853, 0
        %v3860 = vsel %vm2596, %v3856, 0
        %3862 = vmatprep.subr.mxu0 0.0
        %3863 = vmatpush1.xpose.msra.mxu0 %v3860
        %3864 = vmatprep.subr.mxu0 0.0
        %3865 = vmatpush1.xpose.msra.mxu0 0.0
        %3866 = vmatprep.subr.mxu0 0.0
        %3867 = vmatpush1.xpose.msra.mxu0 0.0
        %3868 = vmatprep.subr.mxu0 0.0
        %3869 = vmatpush1.xpose.msra.mxu0 0.0
        %3870 = vmatprep.subr.mxu0 0.0
        %3871 = vmatpush1.xpose.msra.mxu0 0.0
        %3872 = vmatprep.subr.mxu0 0.0
        %3873 = vmatpush1.xpose.msra.mxu0 0.0
        %3874 = vmatprep.subr.mxu0 0.0
        %3875 = vmatpush1.xpose.msra.mxu0 0.0
        %3876 = vmatprep.subr.mxu0 0.0
        %3877 = vmatpush1.xpose.msra.mxu0 0.0
        %3878 = vmatprep.subr.mxu0 0.0
        %3879 = vmatpush1.xpose.msra.mxu0 0.0
        %3880 = vmatprep.subr.mxu0 0.0
        %3881 = vmatpush1.xpose.msra.mxu0 0.0
        %3882 = vmatprep.subr.mxu0 0.0
        %3883 = vmatpush1.xpose.msra.mxu0 0.0
        %3884 = vmatprep.subr.mxu0 0.0
        %3885 = vmatpush1.xpose.msra.mxu0 0.0
        %3886 = vmatprep.subr.mxu0 0.0
        %3887 = vmatpush1.xpose.msra.mxu0 0.0
        %3888 = vmatprep.subr.mxu0 0.0
        %3889 = vmatpush1.xpose.msra.mxu0 0.0
        %3890 = vmatprep.subr.mxu0 0.0
        %3891 = vmatpush1.xpose.msra.mxu0 0.0
        %3892 = vmatprep.subr.mxu0 0.0
        %3893 = vmatpush1.xpose.msra.mxu0 0.0
        %3894 = vmatprep.subr.mxu0 0.0
        %3895 = vmatpush1.xpose.msra.mxu0 0.0
        %3896 = vmatprep.subr.mxu0 0.0
        %3897 = vmatpush1.xpose.msra.mxu0 0.0
        %3898 = vmatprep.subr.mxu0 0.0
        %3899 = vmatpush1.xpose.msra.mxu0 0.0
        %3900 = vmatprep.subr.mxu0 0.0
        %3901 = vmatpush1.xpose.msra.mxu0 0.0
        %3902 = vmatprep.subr.mxu0 0.0
        %3903 = vmatpush1.xpose.msra.mxu0 0.0
        %3904 = vmatprep.subr.mxu0 0.0
        %3905 = vmatpush1.xpose.msra.mxu0 0.0
        %3906 = vmatprep.subr.mxu0 0.0
        %3907 = vmatpush1.xpose.msra.mxu0 0.0
        %3908 = vmatprep.subr.mxu0 0.0
        %3909 = vmatpush1.xpose.msra.mxu0 0.0
        %3910 = vmatprep.subr.mxu0 0.0
        %3911 = vmatpush1.xpose.msra.mxu0 0.0
        %3912 = vmatprep.subr.mxu0 0.0
        %3913 = vmatpush1.xpose.msra.mxu0 0.0
        %3914 = vmatprep.subr.mxu0 0.0
        %3915 = vmatpush1.xpose.msra.mxu0 0.0
        %3916 = vmatprep.subr.mxu0 0.0
        %3917 = vmatpush1.xpose.msra.mxu0 0.0
        %3918 = vmatprep.subr.mxu0 0.0
        %3919 = vmatpush1.xpose.msra.mxu0 0.0
        %3920 = vmatprep.subr.mxu0 0.0
        %3921 = vmatpush1.xpose.msra.mxu0 0.0
        %3922 = vmatprep.subr.mxu0 0.0
        %3923 = vmatpush1.xpose.msra.mxu0 0.0
        %3924 = vmatprep.subr.mxu0 0.0
        %3925 = vmatpush1.xpose.msra.mxu0 0.0
        %3926 = vmatprep.mubr.f32.mxu0 0.0
        %3927 = vmatmul.mubr.f32.gmra.mrb[0].mxu0 %v3858
        %v3928 = vpop.f32.mrb[0].mxu0
        %v3929 = vadd.f32 0.0, %v3928
        %v3930 = vpop.f32.mrb[0].mxu0
        %3931 = vdwg.mxu0
        %v3932 = vsel %vm2596, %v3929, -inf
        %3933 = vmax.xlane.f32.xlu0 %v3932
        %v3934 = vpop.xlane.xlu0 %3933
        %v3935 = vsub.f32 %v3929, %v3934
        %v3936 = vmul.f32 %v3935, 1.442695
        %v3937 = vpow.pop %v3936
        %v3938 = vsel %vm2596, %v3937, 0.0
        %3939 = vadd.xlane.f32.xlu0 %v3938
        %v3940 = vpop.xlane.xlu0 %3939
        %v3941 = vrcp.pop %v3940
        %v3942 = vmul.f32 %v3937, %v3941
        %3943 = vrot.lane.b32.xlu0 %v3843, 64
        %v3944 = vpop.permute.xlu0 %3943
        %v3947 = vsel %vm2596, %v3942, 0
        %3949 = vmatprep.subr.mxu0 0.0
        %3950 = vmatpush1.msra.mxu0 %v3944
        %3951 = vmatprep.subr.mxu0 0.0
        %3952 = vmatpush1.msra.mxu0 0.0
        %3953 = vmatprep.subr.mxu0 0.0
        %3954 = vmatpush1.msra.mxu0 0.0
        %3955 = vmatprep.subr.mxu0 0.0
        %3956 = vmatpush1.msra.mxu0 0.0
        %3957 = vmatprep.subr.mxu0 0.0
        %3958 = vmatpush1.msra.mxu0 0.0
        %3959 = vmatprep.subr.mxu0 0.0
        %3960 = vmatpush1.msra.mxu0 0.0
        %3961 = vmatprep.subr.mxu0 0.0
        %3962 = vmatpush1.msra.mxu0 0.0
        %3963 = vmatprep.subr.mxu0 0.0
        %3964 = vmatpush1.msra.mxu0 0.0
        %3965 = vmatprep.subr.mxu0 0.0
        %3966 = vmatpush1.msra.mxu0 0.0
        %3967 = vmatprep.subr.mxu0 0.0
        %3968 = vmatpush1.msra.mxu0 0.0
        %3969 = vmatprep.subr.mxu0 0.0
        %3970 = vmatpush1.msra.mxu0 0.0
        %3971 = vmatprep.subr.mxu0 0.0
        %3972 = vmatpush1.msra.mxu0 0.0
        %3973 = vmatprep.subr.mxu0 0.0
        %3974 = vmatpush1.msra.mxu0 0.0
        %3975 = vmatprep.subr.mxu0 0.0
        %3976 = vmatpush1.msra.mxu0 0.0
        %3977 = vmatprep.subr.mxu0 0.0
        %3978 = vmatpush1.msra.mxu0 0.0
        %3979 = vmatprep.subr.mxu0 0.0
        %3980 = vmatpush1.msra.mxu0 0.0
        %3981 = vmatprep.subr.mxu0 0.0
        %3982 = vmatpush1.msra.mxu0 0.0
        %3983 = vmatprep.subr.mxu0 0.0
        %3984 = vmatpush1.msra.mxu0 0.0
        %3985 = vmatprep.subr.mxu0 0.0
        %3986 = vmatpush1.msra.mxu0 0.0
        %3987 = vmatprep.subr.mxu0 0.0
        %3988 = vmatpush1.msra.mxu0 0.0
        %3989 = vmatprep.subr.mxu0 0.0
        %3990 = vmatpush1.msra.mxu0 0.0
        %3991 = vmatprep.subr.mxu0 0.0
        %3992 = vmatpush1.msra.mxu0 0.0
        %3993 = vmatprep.subr.mxu0 0.0
        %3994 = vmatpush1.msra.mxu0 0.0
        %3995 = vmatprep.subr.mxu0 0.0
        %3996 = vmatpush1.msra.mxu0 0.0
        %3997 = vmatprep.subr.mxu0 0.0
        %3998 = vmatpush1.msra.mxu0 0.0
        %3999 = vmatprep.subr.mxu0 0.0
        %4000 = vmatpush1.msra.mxu0 0.0
        %4001 = vmatprep.subr.mxu0 0.0
        %4002 = vmatpush1.msra.mxu0 0.0
        %4003 = vmatprep.subr.mxu0 0.0
        %4004 = vmatpush1.msra.mxu0 0.0
        %4005 = vmatprep.subr.mxu0 0.0
        %4006 = vmatpush1.msra.mxu0 0.0
        %4007 = vmatprep.subr.mxu0 0.0
        %4008 = vmatpush1.msra.mxu0 0.0
        %4009 = vmatprep.subr.mxu0 0.0
        %4010 = vmatpush1.msra.mxu0 0.0
        %4011 = vmatprep.subr.mxu0 0.0
        %4012 = vmatpush1.msra.mxu0 0.0
        %4013 = vmatprep.mubr.f32.mxu0 0.0
        %4014 = vmatmul.mubr.f32.gmra.mrb[0].mxu0 %v3947
        %v4015 = vpop.f32.mrb[0].mxu0
        %v4016 = vadd.f32 0.0, %v4015
        %v4017 = vpop.f32.mrb[0].mxu0
        %4018 = vdwg.mxu0
        %v4020 = vsel %vm2596, %v4016, 0
        %4022 = vmatprep.subr.mxu0 0.0
        %4023 = vmatpush1.msra.mxu0 %v2474
        %4024 = vmatprep.subr.mxu0 0.0
        %4025 = vmatpush1.msra.mxu0 0.0
        %4026 = vmatprep.subr.mxu0 0.0
        %4027 = vmatpush1.msra.mxu0 0.0
        %4028 = vmatprep.subr.mxu0 0.0
        %4029 = vmatpush1.msra.mxu0 0.0
        %4030 = vmatprep.subr.mxu0 0.0
        %4031 = vmatpush1.msra.mxu0 0.0
        %4032 = vmatprep.subr.mxu0 0.0
        %4033 = vmatpush1.msra.mxu0 0.0
        %4034 = vmatprep.subr.mxu0 0.0
        %4035 = vmatpush1.msra.mxu0 0.0
        %4036 = vmatprep.subr.mxu0 0.0
        %4037 = vmatpush1.msra.mxu0 0.0
        %4038 = vmatprep.subr.mxu0 0.0
        %4039 = vmatpush1.msra.mxu0 0.0
        %4040 = vmatprep.subr.mxu0 0.0
        %4041 = vmatpush1.msra.mxu0 0.0
        %4042 = vmatprep.subr.mxu0 0.0
        %4043 = vmatpush1.msra.mxu0 0.0
        %4044 = vmatprep.subr.mxu0 0.0
        %4045 = vmatpush1.msra.mxu0 0.0
        %4046 = vmatprep.subr.mxu0 0.0
        %4047 = vmatpush1.msra.mxu0 0.0
        %4048 = vmatprep.subr.mxu0 0.0
        %4049 = vmatpush1.msra.mxu0 0.0
        %4050 = vmatprep.subr.mxu0 0.0
        %4051 = vmatpush1.msra.mxu0 0.0
        %4052 = vmatprep.subr.mxu0 0.0
        %4053 = vmatpush1.msra.mxu0 0.0
        %4054 = vmatprep.subr.mxu0 0.0
        %4055 = vmatpush1.msra.mxu0 0.0
        %4056 = vmatprep.subr.mxu0 0.0
        %4057 = vmatpush1.msra.mxu0 0.0
        %4058 = vmatprep.subr.mxu0 0.0
        %4059 = vmatpush1.msra.mxu0 0.0
        %4060 = vmatprep.subr.mxu0 0.0
        %4061 = vmatpush1.msra.mxu0 0.0
        %4062 = vmatprep.subr.mxu0 0.0
        %4063 = vmatpush1.msra.mxu0 0.0
        %4064 = vmatprep.subr.mxu0 0.0
        %4065 = vmatpush1.msra.mxu0 0.0
        %4066 = vmatprep.subr.mxu0 0.0
        %4067 = vmatpush1.msra.mxu0 0.0
        %4068 = vmatprep.subr.mxu0 0.0
        %4069 = vmatpush1.msra.mxu0 0.0
        %4070 = vmatprep.subr.mxu0 0.0
        %4071 = vmatpush1.msra.mxu0 0.0
        %4072 = vmatprep.subr.mxu0 0.0
        %4073 = vmatpush1.msra.mxu0 0.0
        %4074 = vmatprep.subr.mxu0 0.0
        %4075 = vmatpush1.msra.mxu0 0.0
        %4076 = vmatprep.subr.mxu0 0.0
        %4077 = vmatpush1.msra.mxu0 0.0
        %4078 = vmatprep.subr.mxu0 0.0
        %4079 = vmatpush1.msra.mxu0 0.0
        %4080 = vmatprep.subr.mxu0 0.0
        %4081 = vmatpush1.msra.mxu0 0.0
        %4082 = vmatprep.subr.mxu0 0.0
        %4083 = vmatpush1.msra.mxu0 0.0
        %4084 = vmatprep.subr.mxu0 0.0
        %4085 = vmatpush1.msra.mxu0 0.0
        %4086 = vmatprep.mubr.f32.mxu0 0.0
        %4087 = vmatmul.mubr.f32.gmra.mrb[0].mxu0 %v4020
        %v4088 = vpop.f32.mrb[0].mxu0
        %v4089 = vadd.f32 0.0, %v4088
        %v4090 = vpop.f32.mrb[0].mxu0
        %4091 = vdwg.mxu0
        %v4092 = vadd.f32 %v3852, %v4089
        %4093 = vrot.lane.b32.xlu0 %v3853, 120
        %v4094 = vpop.permute.xlu0 %4093
        %4095 = vrot.lane.b32.xlu0 %v3843, 88
        %v4096 = vpop.permute.xlu0 %4095
        %v4097 = vsel %vm2596, %v4094, 0
        %v4099 = vsel %vm2596, %v4096, 0
        %4101 = vmatprep.subr.mxu0 0.0
        %4102 = vmatpush1.xpose.msra.mxu0 %v4099
        %4103 = vmatprep.subr.mxu0 0.0
        %4104 = vmatpush1.xpose.msra.mxu0 0.0
        %4105 = vmatprep.subr.mxu0 0.0
        %4106 = vmatpush1.xpose.msra.mxu0 0.0
        %4107 = vmatprep.subr.mxu0 0.0
        %4108 = vmatpush1.xpose.msra.mxu0 0.0
        %4109 = vmatprep.subr.mxu0 0.0
        %4110 = vmatpush1.xpose.msra.mxu0 0.0
        %4111 = vmatprep.subr.mxu0 0.0
        %4112 = vmatpush1.xpose.msra.mxu0 0.0
        %4113 = vmatprep.subr.mxu0 0.0
        %4114 = vmatpush1.xpose.msra.mxu0 0.0
        %4115 = vmatprep.subr.mxu0 0.0
        %4116 = vmatpush1.xpose.msra.mxu0 0.0
        %4117 = vmatprep.subr.mxu0 0.0
        %4118 = vmatpush1.xpose.msra.mxu0 0.0
        %4119 = vmatprep.subr.mxu0 0.0
        %4120 = vmatpush1.xpose.msra.mxu0 0.0
        %4121 = vmatprep.subr.mxu0 0.0
        %4122 = vmatpush1.xpose.msra.mxu0 0.0
        %4123 = vmatprep.subr.mxu0 0.0
        %4124 = vmatpush1.xpose.msra.mxu0 0.0
        %4125 = vmatprep.subr.mxu0 0.0
        %4126 = vmatpush1.xpose.msra.mxu0 0.0
        %4127 = vmatprep.subr.mxu0 0.0
        %4128 = vmatpush1.xpose.msra.mxu0 0.0
        %4129 = vmatprep.subr.mxu0 0.0
        %4130 = vmatpush1.xpose.msra.mxu0 0.0
        %4131 = vmatprep.subr.mxu0 0.0
        %4132 = vmatpush1.xpose.msra.mxu0 0.0
        %4133 = vmatprep.subr.mxu0 0.0
        %4134 = vmatpush1.xpose.msra.mxu0 0.0
        %4135 = vmatprep.subr.mxu0 0.0
        %4136 = vmatpush1.xpose.msra.mxu0 0.0
        %4137 = vmatprep.subr.mxu0 0.0
        %4138 = vmatpush1.xpose.msra.mxu0 0.0
        %4139 = vmatprep.subr.mxu0 0.0
        %4140 = vmatpush1.xpose.msra.mxu0 0.0
        %4141 = vmatprep.subr.mxu0 0.0
        %4142 = vmatpush1.xpose.msra.mxu0 0.0
        %4143 = vmatprep.subr.mxu0 0.0
        %4144 = vmatpush1.xpose.msra.mxu0 0.0
        %4145 = vmatprep.subr.mxu0 0.0
        %4146 = vmatpush1.xpose.msra.mxu0 0.0
        %4147 = vmatprep.subr.mxu0 0.0
        %4148 = vmatpush1.xpose.msra.mxu0 0.0
        %4149 = vmatprep.subr.mxu0 0.0
        %4150 = vmatpush1.xpose.msra.mxu0 0.0
        %4151 = vmatprep.subr.mxu0 0.0
        %4152 = vmatpush1.xpose.msra.mxu0 0.0
        %4153 = vmatprep.subr.mxu0 0.0
        %4154 = vmatpush1.xpose.msra.mxu0 0.0
        %4155 = vmatprep.subr.mxu0 0.0
        %4156 = vmatpush1.xpose.msra.mxu0 0.0
        %4157 = vmatprep.subr.mxu0 0.0
        %4158 = vmatpush1.xpose.msra.mxu0 0.0
        %4159 = vmatprep.subr.mxu0 0.0
        %4160 = vmatpush1.xpose.msra.mxu0 0.0
        %4161 = vmatprep.subr.mxu0 0.0
        %4162 = vmatpush1.xpose.msra.mxu0 0.0
        %4163 = vmatprep.subr.mxu0 0.0
        %4164 = vmatpush1.xpose.msra.mxu0 0.0
        %4165 = vmatprep.mubr.f32.mxu0 0.0
        %4166 = vmatmul.mubr.f32.gmra.mrb[0].mxu0 %v4097
        %v4167 = vpop.f32.mrb[0].mxu0
        %v4168 = vadd.f32 0.0, %v4167
        %v4169 = vpop.f32.mrb[0].mxu0
        %4170 = vdwg.mxu0
        %v4171 = vsel %vm2596, %v4168, -inf
        %4172 = vmax.xlane.f32.xlu0 %v4171
        %v4173 = vpop.xlane.xlu0 %4172
        %v4174 = vsub.f32 %v4168, %v4173
        %v4175 = vmul.f32 %v4174, 1.442695
        %v4176 = vpow.pop %v4175
        %v4177 = vsel %vm2596, %v4176, 0.0
        %4178 = vadd.xlane.f32.xlu0 %v4177
        %v4179 = vpop.xlane.xlu0 %4178
        %v4180 = vrcp.pop %v4179
        %v4181 = vmul.f32 %v4176, %v4180
        %4182 = vrot.lane.b32.xlu0 %v3843, 56
        %v4183 = vpop.permute.xlu0 %4182
        %v4186 = vsel %vm2596, %v4181, 0
        %4188 = vmatprep.subr.mxu0 0.0
        %4189 = vmatpush1.msra.mxu0 %v4183
        %4190 = vmatprep.subr.mxu0 0.0
        %4191 = vmatpush1.msra.mxu0 0.0
        %4192 = vmatprep.subr.mxu0 0.0
        %4193 = vmatpush1.msra.mxu0 0.0
        %4194 = vmatprep.subr.mxu0 0.0
        %4195 = vmatpush1.msra.mxu0 0.0
        %4196 = vmatprep.subr.mxu0 0.0
        %4197 = vmatpush1.msra.mxu0 0.0
        %4198 = vmatprep.subr.mxu0 0.0
        %4199 = vmatpush1.msra.mxu0 0.0
        %4200 = vmatprep.subr.mxu0 0.0
        %4201 = vmatpush1.msra.mxu0 0.0
        %4202 = vmatprep.subr.mxu0 0.0
        %4203 = vmatpush1.msra.mxu0 0.0
        %4204 = vmatprep.subr.mxu0 0.0
        %4205 = vmatpush1.msra.mxu0 0.0
        %4206 = vmatprep.subr.mxu0 0.0
        %4207 = vmatpush1.msra.mxu0 0.0
        %4208 = vmatprep.subr.mxu0 0.0
        %4209 = vmatpush1.msra.mxu0 0.0
        %4210 = vmatprep.subr.mxu0 0.0
        %4211 = vmatpush1.msra.mxu0 0.0
        %4212 = vmatprep.subr.mxu0 0.0
        %4213 = vmatpush1.msra.mxu0 0.0
        %4214 = vmatprep.subr.mxu0 0.0
        %4215 = vmatpush1.msra.mxu0 0.0
        %4216 = vmatprep.subr.mxu0 0.0
        %4217 = vmatpush1.msra.mxu0 0.0
        %4218 = vmatprep.subr.mxu0 0.0
        %4219 = vmatpush1.msra.mxu0 0.0
        %4220 = vmatprep.subr.mxu0 0.0
        %4221 = vmatpush1.msra.mxu0 0.0
        %4222 = vmatprep.subr.mxu0 0.0
        %4223 = vmatpush1.msra.mxu0 0.0
        %4224 = vmatprep.subr.mxu0 0.0
        %4225 = vmatpush1.msra.mxu0 0.0
        %4226 = vmatprep.subr.mxu0 0.0
        %4227 = vmatpush1.msra.mxu0 0.0
        %4228 = vmatprep.subr.mxu0 0.0
        %4229 = vmatpush1.msra.mxu0 0.0
        %4230 = vmatprep.subr.mxu0 0.0
        %4231 = vmatpush1.msra.mxu0 0.0
        %4232 = vmatprep.subr.mxu0 0.0
        %4233 = vmatpush1.msra.mxu0 0.0
        %4234 = vmatprep.subr.mxu0 0.0
        %4235 = vmatpush1.msra.mxu0 0.0
        %4236 = vmatprep.subr.mxu0 0.0
        %4237 = vmatpush1.msra.mxu0 0.0
        %4238 = vmatprep.subr.mxu0 0.0
        %4239 = vmatpush1.msra.mxu0 0.0
        %4240 = vmatprep.subr.mxu0 0.0
        %4241 = vmatpush1.msra.mxu0 0.0
        %4242 = vmatprep.subr.mxu0 0.0
        %4243 = vmatpush1.msra.mxu0 0.0
        %4244 = vmatprep.subr.mxu0 0.0
        %4245 = vmatpush1.msra.mxu0 0.0
        %4246 = vmatprep.subr.mxu0 0.0
        %4247 = vmatpush1.msra.mxu0 0.0
        %4248 = vmatprep.subr.mxu0 0.0
        %4249 = vmatpush1.msra.mxu0 0.0
        %4250 = vmatprep.subr.mxu0 0.0
        %4251 = vmatpush1.msra.mxu0 0.0
        %4252 = vmatprep.mubr.f32.mxu0 0.0
        %4253 = vmatmul.mubr.f32.gmra.mrb[0].mxu0 %v4186
        %v4254 = vpop.f32.mrb[0].mxu0
        %v4255 = vadd.f32 0.0, %v4254
        %v4256 = vpop.f32.mrb[0].mxu0
        %4257 = vdwg.mxu0
        %v4259 = vsel %vm2596, %v4255, 0
        %4261 = vmatprep.subr.mxu0 0.0
        %4262 = vmatpush1.msra.mxu0 %v2475
        %4263 = vmatprep.subr.mxu0 0.0
        %4264 = vmatpush1.msra.mxu0 0.0
        %4265 = vmatprep.subr.mxu0 0.0
        %4266 = vmatpush1.msra.mxu0 0.0
        %4267 = vmatprep.subr.mxu0 0.0
        %4268 = vmatpush1.msra.mxu0 0.0
        %4269 = vmatprep.subr.mxu0 0.0
        %4270 = vmatpush1.msra.mxu0 0.0
        %4271 = vmatprep.subr.mxu0 0.0
        %4272 = vmatpush1.msra.mxu0 0.0
        %4273 = vmatprep.subr.mxu0 0.0
        %4274 = vmatpush1.msra.mxu0 0.0
        %4275 = vmatprep.subr.mxu0 0.0
        %4276 = vmatpush1.msra.mxu0 0.0
        %4277 = vmatprep.subr.mxu0 0.0
        %4278 = vmatpush1.msra.mxu0 0.0
        %4279 = vmatprep.subr.mxu0 0.0
        %4280 = vmatpush1.msra.mxu0 0.0
        %4281 = vmatprep.subr.mxu0 0.0
        %4282 = vmatpush1.msra.mxu0 0.0
        %4283 = vmatprep.subr.mxu0 0.0
        %4284 = vmatpush1.msra.mxu0 0.0
        %4285 = vmatprep.subr.mxu0 0.0
        %4286 = vmatpush1.msra.mxu0 0.0
        %4287 = vmatprep.subr.mxu0 0.0
        %4288 = vmatpush1.msra.mxu0 0.0
        %4289 = vmatprep.subr.mxu0 0.0
        %4290 = vmatpush1.msra.mxu0 0.0
        %4291 = vmatprep.subr.mxu0 0.0
        %4292 = vmatpush1.msra.mxu0 0.0
        %4293 = vmatprep.subr.mxu0 0.0
        %4294 = vmatpush1.msra.mxu0 0.0
        %4295 = vmatprep.subr.mxu0 0.0
        %4296 = vmatpush1.msra.mxu0 0.0
        %4297 = vmatprep.subr.mxu0 0.0
        %4298 = vmatpush1.msra.mxu0 0.0
        %4299 = vmatprep.subr.mxu0 0.0
        %4300 = vmatpush1.msra.mxu0 0.0
        %4301 = vmatprep.subr.mxu0 0.0
        %4302 = vmatpush1.msra.mxu0 0.0
        %4303 = vmatprep.subr.mxu0 0.0
        %4304 = vmatpush1.msra.mxu0 0.0
        %4305 = vmatprep.subr.mxu0 0.0
        %4306 = vmatpush1.msra.mxu0 0.0
        %4307 = vmatprep.subr.mxu0 0.0
        %4308 = vmatpush1.msra.mxu0 0.0
        %4309 = vmatprep.subr.mxu0 0.0
        %4310 = vmatpush1.msra.mxu0 0.0
        %4311 = vmatprep.subr.mxu0 0.0
        %4312 = vmatpush1.msra.mxu0 0.0
        %4313 = vmatprep.subr.mxu0 0.0
        %4314 = vmatpush1.msra.mxu0 0.0
        %4315 = vmatprep.subr.mxu0 0.0
        %4316 = vmatpush1.msra.mxu0 0.0
        %4317 = vmatprep.subr.mxu0 0.0
        %4318 = vmatpush1.msra.mxu0 0.0
        %4319 = vmatprep.subr.mxu0 0.0
        %4320 = vmatpush1.msra.mxu0 0.0
        %4321 = vmatprep.subr.mxu0 0.0
        %4322 = vmatpush1.msra.mxu0 0.0
        %4323 = vmatprep.subr.mxu0 0.0
        %4324 = vmatpush1.msra.mxu0 0.0
        %4325 = vmatprep.mubr.f32.mxu0 0.0
        %4326 = vmatmul.mubr.f32.gmra.mrb[0].mxu0 %v4259
        %v4327 = vpop.f32.mrb[0].mxu0
        %v4328 = vadd.f32 0.0, %v4327
        %v4329 = vpop.f32.mrb[0].mxu0
        %4330 = vdwg.mxu0
        %v4331 = vadd.f32 %v4092, %v4328
        %4332 = vrot.lane.b32.xlu0 %v3853, 112
        %v4333 = vpop.permute.xlu0 %4332
        %4334 = vrot.lane.b32.xlu0 %v3843, 80
        %v4335 = vpop.permute.xlu0 %4334
        %v4336 = vsel %vm2596, %v4333, 0
        %v4338 = vsel %vm2596, %v4335, 0
        %4340 = vmatprep.subr.mxu0 0.0
        %4341 = vmatpush1.xpose.msra.mxu0 %v4338
        %4342 = vmatprep.subr.mxu0 0.0
        %4343 = vmatpush1.xpose.msra.mxu0 0.0
        %4344 = vmatprep.subr.mxu0 0.0
        %4345 = vmatpush1.xpose.msra.mxu0 0.0
        %4346 = vmatprep.subr.mxu0 0.0
        %4347 = vmatpush1.xpose.msra.mxu0 0.0
        %4348 = vmatprep.subr.mxu0 0.0
        %4349 = vmatpush1.xpose.msra.mxu0 0.0
        %4350 = vmatprep.subr.mxu0 0.0
        %4351 = vmatpush1.xpose.msra.mxu0 0.0
        %4352 = vmatprep.subr.mxu0 0.0
        %4353 = vmatpush1.xpose.msra.mxu0 0.0
        %4354 = vmatprep.subr.mxu0 0.0
        %4355 = vmatpush1.xpose.msra.mxu0 0.0
        %4356 = vmatprep.subr.mxu0 0.0
        %4357 = vmatpush1.xpose.msra.mxu0 0.0
        %4358 = vmatprep.subr.mxu0 0.0
        %4359 = vmatpush1.xpose.msra.mxu0 0.0
        %4360 = vmatprep.subr.mxu0 0.0
        %4361 = vmatpush1.xpose.msra.mxu0 0.0
        %4362 = vmatprep.subr.mxu0 0.0
        %4363 = vmatpush1.xpose.msra.mxu0 0.0
        %4364 = vmatprep.subr.mxu0 0.0
        %4365 = vmatpush1.xpose.msra.mxu0 0.0
        %4366 = vmatprep.subr.mxu0 0.0
        %4367 = vmatpush1.xpose.msra.mxu0 0.0
        %4368 = vmatprep.subr.mxu0 0.0
        %4369 = vmatpush1.xpose.msra.mxu0 0.0
        %4370 = vmatprep.subr.mxu0 0.0
        %4371 = vmatpush1.xpose.msra.mxu0 0.0
        %4372 = vmatprep.subr.mxu0 0.0
        %4373 = vmatpush1.xpose.msra.mxu0 0.0
        %4374 = vmatprep.subr.mxu0 0.0
        %4375 = vmatpush1.xpose.msra.mxu0 0.0
        %4376 = vmatprep.subr.mxu0 0.0
        %4377 = vmatpush1.xpose.msra.mxu0 0.0
        %4378 = vmatprep.subr.mxu0 0.0
        %4379 = vmatpush1.xpose.msra.mxu0 0.0
        %4380 = vmatprep.subr.mxu0 0.0
        %4381 = vmatpush1.xpose.msra.mxu0 0.0
        %4382 = vmatprep.subr.mxu0 0.0
        %4383 = vmatpush1.xpose.msra.mxu0 0.0
        %4384 = vmatprep.subr.mxu0 0.0
        %4385 = vmatpush1.xpose.msra.mxu0 0.0
        %4386 = vmatprep.subr.mxu0 0.0
        %4387 = vmatpush1.xpose.msra.mxu0 0.0
        %4388 = vmatprep.subr.mxu0 0.0
        %4389 = vmatpush1.xpose.msra.mxu0 0.0
        %4390 = vmatprep.subr.mxu0 0.0
        %4391 = vmatpush1.xpose.msra.mxu0 0.0
        %4392 = vmatprep.subr.mxu0 0.0
        %4393 = vmatpush1.xpose.msra.mxu0 0.0
        %4394 = vmatprep.subr.mxu0 0.0
        %4395 = vmatpush1.xpose.msra.mxu0 0.0
        %4396 = vmatprep.subr.mxu0 0.0
        %4397 = vmatpush1.xpose.msra.mxu0 0.0
        %4398 = vmatprep.subr.mxu0 0.0
        %4399 = vmatpush1.xpose.msra.mxu0 0.0
        %4400 = vmatprep.subr.mxu0 0.0
        %4401 = vmatpush1.xpose.msra.mxu0 0.0
        %4402 = vmatprep.subr.mxu0 0.0
        %4403 = vmatpush1.xpose.msra.mxu0 0.0
        %4404 = vmatprep.mubr.f32.mxu0 0.0
        %4405 = vmatmul.mubr.f32.gmra.mrb[0].mxu0 %v4336
        %v4406 = vpop.f32.mrb[0].mxu0
        %v4407 = vadd.f32 0.0, %v4406
        %v4408 = vpop.f32.mrb[0].mxu0
        %4409 = vdwg.mxu0
        %v4410 = vsel %vm2596, %v4407, -inf
        %4411 = vmax.xlane.f32.xlu0 %v4410
        %v4412 = vpop.xlane.xlu0 %4411
        %v4413 = vsub.f32 %v4407, %v4412
        %v4414 = vmul.f32 %v4413, 1.442695
        %v4415 = vpow.pop %v4414
        %v4416 = vsel %vm2596, %v4415, 0.0
        %4417 = vadd.xlane.f32.xlu0 %v4416
        %v4418 = vpop.xlane.xlu0 %4417
        %v4419 = vrcp.pop %v4418
        %v4420 = vmul.f32 %v4415, %v4419
        %4421 = vrot.lane.b32.xlu0 %v3843, 48
        %v4422 = vpop.permute.xlu0 %4421
        %v4425 = vsel %vm2596, %v4420, 0
        %4427 = vmatprep.subr.mxu0 0.0
        %4428 = vmatpush1.msra.mxu0 %v4422
        %4429 = vmatprep.subr.mxu0 0.0
        %4430 = vmatpush1.msra.mxu0 0.0
        %4431 = vmatprep.subr.mxu0 0.0
        %4432 = vmatpush1.msra.mxu0 0.0
        %4433 = vmatprep.subr.mxu0 0.0
        %4434 = vmatpush1.msra.mxu0 0.0
        %4435 = vmatprep.subr.mxu0 0.0
        %4436 = vmatpush1.msra.mxu0 0.0
        %4437 = vmatprep.subr.mxu0 0.0
        %4438 = vmatpush1.msra.mxu0 0.0
        %4439 = vmatprep.subr.mxu0 0.0
        %4440 = vmatpush1.msra.mxu0 0.0
        %4441 = vmatprep.subr.mxu0 0.0
        %4442 = vmatpush1.msra.mxu0 0.0
        %4443 = vmatprep.subr.mxu0 0.0
        %4444 = vmatpush1.msra.mxu0 0.0
        %4445 = vmatprep.subr.mxu0 0.0
        %4446 = vmatpush1.msra.mxu0 0.0
        %4447 = vmatprep.subr.mxu0 0.0
        %4448 = vmatpush1.msra.mxu0 0.0
        %4449 = vmatprep.subr.mxu0 0.0
        %4450 = vmatpush1.msra.mxu0 0.0
        %4451 = vmatprep.subr.mxu0 0.0
        %4452 = vmatpush1.msra.mxu0 0.0
        %4453 = vmatprep.subr.mxu0 0.0
        %4454 = vmatpush1.msra.mxu0 0.0
        %4455 = vmatprep.subr.mxu0 0.0
        %4456 = vmatpush1.msra.mxu0 0.0
        %4457 = vmatprep.subr.mxu0 0.0
        %4458 = vmatpush1.msra.mxu0 0.0
        %4459 = vmatprep.subr.mxu0 0.0
        %4460 = vmatpush1.msra.mxu0 0.0
        %4461 = vmatprep.subr.mxu0 0.0
        %4462 = vmatpush1.msra.mxu0 0.0
        %4463 = vmatprep.subr.mxu0 0.0
        %4464 = vmatpush1.msra.mxu0 0.0
        %4465 = vmatprep.subr.mxu0 0.0
        %4466 = vmatpush1.msra.mxu0 0.0
        %4467 = vmatprep.subr.mxu0 0.0
        %4468 = vmatpush1.msra.mxu0 0.0
        %4469 = vmatprep.subr.mxu0 0.0
        %4470 = vmatpush1.msra.mxu0 0.0
        %4471 = vmatprep.subr.mxu0 0.0
        %4472 = vmatpush1.msra.mxu0 0.0
        %4473 = vmatprep.subr.mxu0 0.0
        %4474 = vmatpush1.msra.mxu0 0.0
        %4475 = vmatprep.subr.mxu0 0.0
        %4476 = vmatpush1.msra.mxu0 0.0
        %4477 = vmatprep.subr.mxu0 0.0
        %4478 = vmatpush1.msra.mxu0 0.0
        %4479 = vmatprep.subr.mxu0 0.0
        %4480 = vmatpush1.msra.mxu0 0.0
        %4481 = vmatprep.subr.mxu0 0.0
        %4482 = vmatpush1.msra.mxu0 0.0
        %4483 = vmatprep.subr.mxu0 0.0
        %4484 = vmatpush1.msra.mxu0 0.0
        %4485 = vmatprep.subr.mxu0 0.0
        %4486 = vmatpush1.msra.mxu0 0.0
        %4487 = vmatprep.subr.mxu0 0.0
        %4488 = vmatpush1.msra.mxu0 0.0
        %4489 = vmatprep.subr.mxu0 0.0
        %4490 = vmatpush1.msra.mxu0 0.0
        %4491 = vmatprep.mubr.f32.mxu0 0.0
        %4492 = vmatmul.mubr.f32.gmra.mrb[0].mxu0 %v4425
        %v4493 = vpop.f32.mrb[0].mxu0
        %v4494 = vadd.f32 0.0, %v4493
        %v4495 = vpop.f32.mrb[0].mxu0
        %4496 = vdwg.mxu0
        %v4498 = vsel %vm2596, %v4494, 0
        %4500 = vmatprep.subr.mxu0 0.0
        %4501 = vmatpush1.msra.mxu0 %v2476
        %4502 = vmatprep.subr.mxu0 0.0
        %4503 = vmatpush1.msra.mxu0 0.0
        %4504 = vmatprep.subr.mxu0 0.0
        %4505 = vmatpush1.msra.mxu0 0.0
        %4506 = vmatprep.subr.mxu0 0.0
        %4507 = vmatpush1.msra.mxu0 0.0
        %4508 = vmatprep.subr.mxu0 0.0
        %4509 = vmatpush1.msra.mxu0 0.0
        %4510 = vmatprep.subr.mxu0 0.0
        %4511 = vmatpush1.msra.mxu0 0.0
        %4512 = vmatprep.subr.mxu0 0.0
        %4513 = vmatpush1.msra.mxu0 0.0
        %4514 = vmatprep.subr.mxu0 0.0
        %4515 = vmatpush1.msra.mxu0 0.0
        %4516 = vmatprep.subr.mxu0 0.0
        %4517 = vmatpush1.msra.mxu0 0.0
        %4518 = vmatprep.subr.mxu0 0.0
        %4519 = vmatpush1.msra.mxu0 0.0
        %4520 = vmatprep.subr.mxu0 0.0
        %4521 = vmatpush1.msra.mxu0 0.0
        %4522 = vmatprep.subr.mxu0 0.0
        %4523 = vmatpush1.msra.mxu0 0.0
        %4524 = vmatprep.subr.mxu0 0.0
        %4525 = vmatpush1.msra.mxu0 0.0
        %4526 = vmatprep.subr.mxu0 0.0
        %4527 = vmatpush1.msra.mxu0 0.0
        %4528 = vmatprep.subr.mxu0 0.0
        %4529 = vmatpush1.msra.mxu0 0.0
        %4530 = vmatprep.subr.mxu0 0.0
        %4531 = vmatpush1.msra.mxu0 0.0
        %4532 = vmatprep.subr.mxu0 0.0
        %4533 = vmatpush1.msra.mxu0 0.0
        %4534 = vmatprep.subr.mxu0 0.0
        %4535 = vmatpush1.msra.mxu0 0.0
        %4536 = vmatprep.subr.mxu0 0.0
        %4537 = vmatpush1.msra.mxu0 0.0
        %4538 = vmatprep.subr.mxu0 0.0
        %4539 = vmatpush1.msra.mxu0 0.0
        %4540 = vmatprep.subr.mxu0 0.0
        %4541 = vmatpush1.msra.mxu0 0.0
        %4542 = vmatprep.subr.mxu0 0.0
        %4543 = vmatpush1.msra.mxu0 0.0
        %4544 = vmatprep.subr.mxu0 0.0
        %4545 = vmatpush1.msra.mxu0 0.0
        %4546 = vmatprep.subr.mxu0 0.0
        %4547 = vmatpush1.msra.mxu0 0.0
        %4548 = vmatprep.subr.mxu0 0.0
        %4549 = vmatpush1.msra.mxu0 0.0
        %4550 = vmatprep.subr.mxu0 0.0
        %4551 = vmatpush1.msra.mxu0 0.0
        %4552 = vmatprep.subr.mxu0 0.0
        %4553 = vmatpush1.msra.mxu0 0.0
        %4554 = vmatprep.subr.mxu0 0.0
        %4555 = vmatpush1.msra.mxu0 0.0
        %4556 = vmatprep.subr.mxu0 0.0
        %4557 = vmatpush1.msra.mxu0 0.0
        %4558 = vmatprep.subr.mxu0 0.0
        %4559 = vmatpush1.msra.mxu0 0.0
        %4560 = vmatprep.subr.mxu0 0.0
        %4561 = vmatpush1.msra.mxu0 0.0
        %4562 = vmatprep.subr.mxu0 0.0
        %4563 = vmatpush1.msra.mxu0 0.0
        %4564 = vmatprep.mubr.f32.mxu0 0.0
        %4565 = vmatmul.mubr.f32.gmra.mrb[0].mxu0 %v4498
        %v4566 = vpop.f32.mrb[0].mxu0
        %v4567 = vadd.f32 0.0, %v4566
        %v4568 = vpop.f32.mrb[0].mxu0
        %4569 = vdwg.mxu0
        %v4570 = vadd.f32 %v4331, %v4567
        %4571 = vrot.lane.b32.xlu0 %v3853, 104
        %v4572 = vpop.permute.xlu0 %4571
        %4573 = vrot.lane.b32.xlu0 %v3843, 72
        %v4574 = vpop.permute.xlu0 %4573
        %v4575 = vsel %vm2596, %v4572, 0
        %v4577 = vsel %vm2596, %v4574, 0
        %4579 = vmatprep.subr.mxu0 0.0
        %4580 = vmatpush1.xpose.msra.mxu0 %v4577
        %4581 = vmatprep.subr.mxu0 0.0
        %4582 = vmatpush1.xpose.msra.mxu0 0.0
        %4583 = vmatprep.subr.mxu0 0.0
        %4584 = vmatpush1.xpose.msra.mxu0 0.0
        %4585 = vmatprep.subr.mxu0 0.0
        %4586 = vmatpush1.xpose.msra.mxu0 0.0
        %4587 = vmatprep.subr.mxu0 0.0
        %4588 = vmatpush1.xpose.msra.mxu0 0.0
        %4589 = vmatprep.subr.mxu0 0.0
        %4590 = vmatpush1.xpose.msra.mxu0 0.0
        %4591 = vmatprep.subr.mxu0 0.0
        %4592 = vmatpush1.xpose.msra.mxu0 0.0
        %4593 = vmatprep.subr.mxu0 0.0
        %4594 = vmatpush1.xpose.msra.mxu0 0.0
        %4595 = vmatprep.subr.mxu0 0.0
        %4596 = vmatpush1.xpose.msra.mxu0 0.0
        %4597 = vmatprep.subr.mxu0 0.0
        %4598 = vmatpush1.xpose.msra.mxu0 0.0
        %4599 = vmatprep.subr.mxu0 0.0
        %4600 = vmatpush1.xpose.msra.mxu0 0.0
        %4601 = vmatprep.subr.mxu0 0.0
        %4602 = vmatpush1.xpose.msra.mxu0 0.0
        %4603 = vmatprep.subr.mxu0 0.0
        %4604 = vmatpush1.xpose.msra.mxu0 0.0
        %4605 = vmatprep.subr.mxu0 0.0
        %4606 = vmatpush1.xpose.msra.mxu0 0.0
        %4607 = vmatprep.subr.mxu0 0.0
        %4608 = vmatpush1.xpose.msra.mxu0 0.0
        %4609 = vmatprep.subr.mxu0 0.0
        %4610 = vmatpush1.xpose.msra.mxu0 0.0
        %4611 = vmatprep.subr.mxu0 0.0
        %4612 = vmatpush1.xpose.msra.mxu0 0.0
        %4613 = vmatprep.subr.mxu0 0.0
        %4614 = vmatpush1.xpose.msra.mxu0 0.0
        %4615 = vmatprep.subr.mxu0 0.0
        %4616 = vmatpush1.xpose.msra.mxu0 0.0
        %4617 = vmatprep.subr.mxu0 0.0
        %4618 = vmatpush1.xpose.msra.mxu0 0.0
        %4619 = vmatprep.subr.mxu0 0.0
        %4620 = vmatpush1.xpose.msra.mxu0 0.0
        %4621 = vmatprep.subr.mxu0 0.0
        %4622 = vmatpush1.xpose.msra.mxu0 0.0
        %4623 = vmatprep.subr.mxu0 0.0
        %4624 = vmatpush1.xpose.msra.mxu0 0.0
        %4625 = vmatprep.subr.mxu0 0.0
        %4626 = vmatpush1.xpose.msra.mxu0 0.0
        %4627 = vmatprep.subr.mxu0 0.0
        %4628 = vmatpush1.xpose.msra.mxu0 0.0
        %4629 = vmatprep.subr.mxu0 0.0
        %4630 = vmatpush1.xpose.msra.mxu0 0.0
        %4631 = vmatprep.subr.mxu0 0.0
        %4632 = vmatpush1.xpose.msra.mxu0 0.0
        %4633 = vmatprep.subr.mxu0 0.0
        %4634 = vmatpush1.xpose.msra.mxu0 0.0
        %4635 = vmatprep.subr.mxu0 0.0
        %4636 = vmatpush1.xpose.msra.mxu0 0.0
        %4637 = vmatprep.subr.mxu0 0.0
        %4638 = vmatpush1.xpose.msra.mxu0 0.0
        %4639 = vmatprep.subr.mxu0 0.0
        %4640 = vmatpush1.xpose.msra.mxu0 0.0
        %4641 = vmatprep.subr.mxu0 0.0
        %4642 = vmatpush1.xpose.msra.mxu0 0.0
        %4643 = vmatprep.mubr.f32.mxu0 0.0
        %4644 = vmatmul.mubr.f32.gmra.mrb[0].mxu0 %v4575
        %v4645 = vpop.f32.mrb[0].mxu0
        %v4646 = vadd.f32 0.0, %v4645
        %v4647 = vpop.f32.mrb[0].mxu0
        %4648 = vdwg.mxu0
        %v4649 = vsel %vm2596, %v4646, -inf
        %4650 = vmax.xlane.f32.xlu0 %v4649
        %v4651 = vpop.xlane.xlu0 %4650
        %v4652 = vsub.f32 %v4646, %v4651
        %v4653 = vmul.f32 %v4652, 1.442695
        %v4654 = vpow.pop %v4653
        %v4655 = vsel %vm2596, %v4654, 0.0
        %4656 = vadd.xlane.f32.xlu0 %v4655
        %v4657 = vpop.xlane.xlu0 %4656
        %v4658 = vrcp.pop %v4657
        %v4659 = vmul.f32 %v4654, %v4658
        %4660 = vrot.lane.b32.xlu0 %v3843, 40
        %v4661 = vpop.permute.xlu0 %4660
        %v4664 = vsel %vm2596, %v4659, 0
        %4666 = vmatprep.subr.mxu0 0.0
        %4667 = vmatpush1.msra.mxu0 %v4661
        %4668 = vmatprep.subr.mxu0 0.0
        %4669 = vmatpush1.msra.mxu0 0.0
        %4670 = vmatprep.subr.mxu0 0.0
        %4671 = vmatpush1.msra.mxu0 0.0
        %4672 = vmatprep.subr.mxu0 0.0
        %4673 = vmatpush1.msra.mxu0 0.0
        %4674 = vmatprep.subr.mxu0 0.0
        %4675 = vmatpush1.msra.mxu0 0.0
        %4676 = vmatprep.subr.mxu0 0.0
        %4677 = vmatpush1.msra.mxu0 0.0
        %4678 = vmatprep.subr.mxu0 0.0
        %4679 = vmatpush1.msra.mxu0 0.0
        %4680 = vmatprep.subr.mxu0 0.0
        %4681 = vmatpush1.msra.mxu0 0.0
        %4682 = vmatprep.subr.mxu0 0.0
        %4683 = vmatpush1.msra.mxu0 0.0
        %4684 = vmatprep.subr.mxu0 0.0
        %4685 = vmatpush1.msra.mxu0 0.0
        %4686 = vmatprep.subr.mxu0 0.0
        %4687 = vmatpush1.msra.mxu0 0.0
        %4688 = vmatprep.subr.mxu0 0.0
        %4689 = vmatpush1.msra.mxu0 0.0
        %4690 = vmatprep.subr.mxu0 0.0
        %4691 = vmatpush1.msra.mxu0 0.0
        %4692 = vmatprep.subr.mxu0 0.0
        %4693 = vmatpush1.msra.mxu0 0.0
        %4694 = vmatprep.subr.mxu0 0.0
        %4695 = vmatpush1.msra.mxu0 0.0
        %4696 = vmatprep.subr.mxu0 0.0
        %4697 = vmatpush1.msra.mxu0 0.0
        %4698 = vmatprep.subr.mxu0 0.0
        %4699 = vmatpush1.msra.mxu0 0.0
        %4700 = vmatprep.subr.mxu0 0.0
        %4701 = vmatpush1.msra.mxu0 0.0
        %4702 = vmatprep.subr.mxu0 0.0
        %4703 = vmatpush1.msra.mxu0 0.0
        %4704 = vmatprep.subr.mxu0 0.0
        %4705 = vmatpush1.msra.mxu0 0.0
        %4706 = vmatprep.subr.mxu0 0.0
        %4707 = vmatpush1.msra.mxu0 0.0
        %4708 = vmatprep.subr.mxu0 0.0
        %4709 = vmatpush1.msra.mxu0 0.0
        %4710 = vmatprep.subr.mxu0 0.0
        %4711 = vmatpush1.msra.mxu0 0.0
        %4712 = vmatprep.subr.mxu0 0.0
        %4713 = vmatpush1.msra.mxu0 0.0
        %4714 = vmatprep.subr.mxu0 0.0
        %4715 = vmatpush1.msra.mxu0 0.0
        %4716 = vmatprep.subr.mxu0 0.0
        %4717 = vmatpush1.msra.mxu0 0.0
        %4718 = vmatprep.subr.mxu0 0.0
        %4719 = vmatpush1.msra.mxu0 0.0
        %4720 = vmatprep.subr.mxu0 0.0
        %4721 = vmatpush1.msra.mxu0 0.0
        %4722 = vmatprep.subr.mxu0 0.0
        %4723 = vmatpush1.msra.mxu0 0.0
        %4724 = vmatprep.subr.mxu0 0.0
        %4725 = vmatpush1.msra.mxu0 0.0
        %4726 = vmatprep.subr.mxu0 0.0
        %4727 = vmatpush1.msra.mxu0 0.0
        %4728 = vmatprep.subr.mxu0 0.0
        %4729 = vmatpush1.msra.mxu0 0.0
        %4730 = vmatprep.mubr.f32.mxu0 0.0
        %4731 = vmatmul.mubr.f32.gmra.mrb[0].mxu0 %v4664
        %v4732 = vpop.f32.mrb[0].mxu0
        %v4733 = vadd.f32 0.0, %v4732
        %v4734 = vpop.f32.mrb[0].mxu0
        %4735 = vdwg.mxu0
        %v4737 = vsel %vm2596, %v4733, 0
        %4739 = vmatprep.subr.mxu0 0.0
        %4740 = vmatpush1.msra.mxu0 %v2477
        %4741 = vmatprep.subr.mxu0 0.0
        %4742 = vmatpush1.msra.mxu0 0.0
        %4743 = vmatprep.subr.mxu0 0.0
        %4744 = vmatpush1.msra.mxu0 0.0
        %4745 = vmatprep.subr.mxu0 0.0
        %4746 = vmatpush1.msra.mxu0 0.0
        %4747 = vmatprep.subr.mxu0 0.0
        %4748 = vmatpush1.msra.mxu0 0.0
        %4749 = vmatprep.subr.mxu0 0.0
        %4750 = vmatpush1.msra.mxu0 0.0
        %4751 = vmatprep.subr.mxu0 0.0
        %4752 = vmatpush1.msra.mxu0 0.0
        %4753 = vmatprep.subr.mxu0 0.0
        %4754 = vmatpush1.msra.mxu0 0.0
        %4755 = vmatprep.subr.mxu0 0.0
        %4756 = vmatpush1.msra.mxu0 0.0
        %4757 = vmatprep.subr.mxu0 0.0
        %4758 = vmatpush1.msra.mxu0 0.0
        %4759 = vmatprep.subr.mxu0 0.0
        %4760 = vmatpush1.msra.mxu0 0.0
        %4761 = vmatprep.subr.mxu0 0.0
        %4762 = vmatpush1.msra.mxu0 0.0
        %4763 = vmatprep.subr.mxu0 0.0
        %4764 = vmatpush1.msra.mxu0 0.0
        %4765 = vmatprep.subr.mxu0 0.0
        %4766 = vmatpush1.msra.mxu0 0.0
        %4767 = vmatprep.subr.mxu0 0.0
        %4768 = vmatpush1.msra.mxu0 0.0
        %4769 = vmatprep.subr.mxu0 0.0
        %4770 = vmatpush1.msra.mxu0 0.0
        %4771 = vmatprep.subr.mxu0 0.0
        %4772 = vmatpush1.msra.mxu0 0.0
        %4773 = vmatprep.subr.mxu0 0.0
        %4774 = vmatpush1.msra.mxu0 0.0
        %4775 = vmatprep.subr.mxu0 0.0
        %4776 = vmatpush1.msra.mxu0 0.0
        %4777 = vmatprep.subr.mxu0 0.0
        %4778 = vmatpush1.msra.mxu0 0.0
        %4779 = vmatprep.subr.mxu0 0.0
        %4780 = vmatpush1.msra.mxu0 0.0
        %4781 = vmatprep.subr.mxu0 0.0
        %4782 = vmatpush1.msra.mxu0 0.0
        %4783 = vmatprep.subr.mxu0 0.0
        %4784 = vmatpush1.msra.mxu0 0.0
        %4785 = vmatprep.subr.mxu0 0.0
        %4786 = vmatpush1.msra.mxu0 0.0
        %4787 = vmatprep.subr.mxu0 0.0
        %4788 = vmatpush1.msra.mxu0 0.0
        %4789 = vmatprep.subr.mxu0 0.0
        %4790 = vmatpush1.msra.mxu0 0.0
        %4791 = vmatprep.subr.mxu0 0.0
        %4792 = vmatpush1.msra.mxu0 0.0
        %4793 = vmatprep.subr.mxu0 0.0
        %4794 = vmatpush1.msra.mxu0 0.0
        %4795 = vmatprep.subr.mxu0 0.0
        %4796 = vmatpush1.msra.mxu0 0.0
        %4797 = vmatprep.subr.mxu0 0.0
        %4798 = vmatpush1.msra.mxu0 0.0
        %4799 = vmatprep.subr.mxu0 0.0
        %4800 = vmatpush1.msra.mxu0 0.0
        %4801 = vmatprep.subr.mxu0 0.0
        %4802 = vmatpush1.msra.mxu0 0.0
        %4803 = vmatprep.mubr.f32.mxu0 0.0
        %4804 = vmatmul.mubr.f32.gmra.mrb[0].mxu0 %v4737
        %v4805 = vpop.f32.mrb[0].mxu0
        %v4806 = vadd.f32 0.0, %v4805
        %v4807 = vpop.f32.mrb[0].mxu0
        %4808 = vdwg.mxu0
        %v4809 = vadd.f32 %v4570, %v4806
        %v4810 = vadd.f32 %v2437, %v4809
        %v4811 = vsel %vm2359, %v4810, 0.0
        %4812 = vadd.xlane.f32.xlu0 %v4811
        %v4813 = vpop.xlane.xlu0 %4812
        %v4814 = vmul.f32 %v4813, %v3554
        %v4815 = vsub.f32 %v4810, %v4814
        %v4816 = vmul.f32 %v4815, %v4815
        %v4817 = vsel %vm2359, %v4816, 0.0
        %4818 = vadd.xlane.f32.xlu0 %v4817
        %v4819 = vpop.xlane.xlu0 %4818
        %v4820 = vmul.f32 %v4819, %v3554
        %v4821 = vadd.f32 %v4820, 1e-05
        %v4822 = vrsqrt.pop %v4821
        %v4823 = vmul.f32 %v4815, %v4822
        %v4825 = vlaneseq
        %v4826 = vshrl.u32 %v4825, 7
        %v4827 = vsub.s32 0, %v4826
        %v4828 = vrot.slane %v2481, %v4827
        %v4830 = vmul.f32 %v4823, %v4828
        %v4832 = vlaneseq
        %v4833 = vshrl.u32 %v4832, 7
        %v4834 = vsub.s32 0, %v4833
        %v4835 = vrot.slane %v2483, %v4834
        %v4837 = vadd.f32 %v4830, %v4835
        %v4839 = vlaneseq
        %v4840 = vshrl.u32 %v4839, 7
        %v4841 = vsub.s32 0, %v4840
        %v4842 = vrot.slane %v2490, %v4841
        %v4845 = vsel %vm2359, %v4837, 0
        %4847 = vmatprep.subr.mxu0 0.0
        %4848 = vmatpush1.msra.mxu0 %v2485
        %4849 = vmatprep.subr.mxu0 0.0
        %4850 = vmatpush1.msra.mxu0 %v2486
        %4851 = vmatprep.subr.mxu0 0.0
        %4852 = vmatpush1.msra.mxu0 %v2487
        %4853 = vmatprep.subr.mxu0 0.0
        %4854 = vmatpush1.msra.mxu0 %v2488
        %4855 = vmatprep.subr.mxu0 0.0
        %4856 = vmatpush1.msra.mxu0 0.0
        %4857 = vmatprep.subr.mxu0 0.0
        %4858 = vmatpush1.msra.mxu0 0.0
        %4859 = vmatprep.subr.mxu0 0.0
        %4860 = vmatpush1.msra.mxu0 0.0
        %4861 = vmatprep.subr.mxu0 0.0
        %4862 = vmatpush1.msra.mxu0 0.0
        %4863 = vmatprep.subr.mxu0 0.0
        %4864 = vmatpush1.msra.mxu0 0.0
        %4865 = vmatprep.subr.mxu0 0.0
        %4866 = vmatpush1.msra.mxu0 0.0
        %4867 = vmatprep.subr.mxu0 0.0
        %4868 = vmatpush1.msra.mxu0 0.0
        %4869 = vmatprep.subr.mxu0 0.0
        %4870 = vmatpush1.msra.mxu0 0.0
        %4871 = vmatprep.subr.mxu0 0.0
        %4872 = vmatpush1.msra.mxu0 0.0
        %4873 = vmatprep.subr.mxu0 0.0
        %4874 = vmatpush1.msra.mxu0 0.0
        %4875 = vmatprep.subr.mxu0 0.0
        %4876 = vmatpush1.msra.mxu0 0.0
        %4877 = vmatprep.subr.mxu0 0.0
        %4878 = vmatpush1.msra.mxu0 0.0
        %4879 = vmatprep.subr.mxu0 0.0
        %4880 = vmatpush1.msra.mxu0 0.0
        %4881 = vmatprep.subr.mxu0 0.0
        %4882 = vmatpush1.msra.mxu0 0.0
        %4883 = vmatprep.subr.mxu0 0.0
        %4884 = vmatpush1.msra.mxu0 0.0
        %4885 = vmatprep.subr.mxu0 0.0
        %4886 = vmatpush1.msra.mxu0 0.0
        %4887 = vmatprep.subr.mxu0 0.0
        %4888 = vmatpush1.msra.mxu0 0.0
        %4889 = vmatprep.subr.mxu0 0.0
        %4890 = vmatpush1.msra.mxu0 0.0
        %4891 = vmatprep.subr.mxu0 0.0
        %4892 = vmatpush1.msra.mxu0 0.0
        %4893 = vmatprep.subr.mxu0 0.0
        %4894 = vmatpush1.msra.mxu0 0.0
        %4895 = vmatprep.subr.mxu0 0.0
        %4896 = vmatpush1.msra.mxu0 0.0
        %4897 = vmatprep.subr.mxu0 0.0
        %4898 = vmatpush1.msra.mxu0 0.0
        %4899 = vmatprep.subr.mxu0 0.0
        %4900 = vmatpush1.msra.mxu0 0.0
        %4901 = vmatprep.subr.mxu0 0.0
        %4902 = vmatpush1.msra.mxu0 0.0
        %4903 = vmatprep.subr.mxu0 0.0
        %4904 = vmatpush1.msra.mxu0 0.0
        %4905 = vmatprep.subr.mxu0 0.0
        %4906 = vmatpush1.msra.mxu0 0.0
        %4907 = vmatprep.subr.mxu0 0.0
        %4908 = vmatpush1.msra.mxu0 0.0
        %4909 = vmatprep.subr.mxu0 0.0
        %4910 = vmatpush1.msra.mxu0 0.0
        %4911 = vmatprep.mubr.f32.mxu0 0.0
        %4912 = vmatmul.mubr.f32.gmra.mrb[0].mxu0 %v4845
        %v4913 = vpop.f32.mrb[0].mxu0
        %v4914 = vadd.f32 %v4842, %v4913
        %v4915 = vpop.f32.mrb[0].mxu0
        %4916 = vdwg.mxu0
        %v4917 = vmax.f32 %v4914, 0.0
        %v4919 = vlaneseq
        %v4920 = vshrl.u32 %v4919, 7
        %v4921 = vsub.s32 0, %v4920
        %v4922 = vrot.slane %v2501, %v4921
        %v4925 = vsel %vm3665, %v4917, 0
        %4927 = vmatprep.subr.mxu0 0.0
        %4928 = vmatpush1.msra.mxu0 %v2492
        %4929 = vmatprep.subr.mxu0 0.0
        %4930 = vmatpush1.msra.mxu0 %v2493
        %4931 = vmatprep.subr.mxu0 0.0
        %4932 = vmatpush1.msra.mxu0 %v2494
        %4933 = vmatprep.subr.mxu0 0.0
        %4934 = vmatpush1.msra.mxu0 %v2495
        %4935 = vmatprep.subr.mxu0 0.0
        %4936 = vmatpush1.msra.mxu0 %v2496
        %4937 = vmatprep.subr.mxu0 0.0
        %4938 = vmatpush1.msra.mxu0 %v2497
        %4939 = vmatprep.subr.mxu0 0.0
        %4940 = vmatpush1.msra.mxu0 %v2498
        %4941 = vmatprep.subr.mxu0 0.0
        %4942 = vmatpush1.msra.mxu0 %v2499
        %4943 = vmatprep.subr.mxu0 0.0
        %4944 = vmatpush1.msra.mxu0 0.0
        %4945 = vmatprep.subr.mxu0 0.0
        %4946 = vmatpush1.msra.mxu0 0.0
        %4947 = vmatprep.subr.mxu0 0.0
        %4948 = vmatpush1.msra.mxu0 0.0
        %4949 = vmatprep.subr.mxu0 0.0
        %4950 = vmatpush1.msra.mxu0 0.0
        %4951 = vmatprep.subr.mxu0 0.0
        %4952 = vmatpush1.msra.mxu0 0.0
        %4953 = vmatprep.subr.mxu0 0.0
        %4954 = vmatpush1.msra.mxu0 0.0
        %4955 = vmatprep.subr.mxu0 0.0
        %4956 = vmatpush1.msra.mxu0 0.0
        %4957 = vmatprep.subr.mxu0 0.0
        %4958 = vmatpush1.msra.mxu0 0.0
        %4959 = vmatprep.subr.mxu0 0.0
        %4960 = vmatpush1.msra.mxu0 0.0
        %4961 = vmatprep.subr.mxu0 0.0
        %4962 = vmatpush1.msra.mxu0 0.0
        %4963 = vmatprep.subr.mxu0 0.0
        %4964 = vmatpush1.msra.mxu0 0.0
        %4965 = vmatprep.subr.mxu0 0.0
        %4966 = vmatpush1.msra.mxu0 0.0
        %4967 = vmatprep.subr.mxu0 0.0
        %4968 = vmatpush1.msra.mxu0 0.0
        %4969 = vmatprep.subr.mxu0 0.0
        %4970 = vmatpush1.msra.mxu0 0.0
        %4971 = vmatprep.subr.mxu0 0.0
        %4972 = vmatpush1.msra.mxu0 0.0
        %4973 = vmatprep.subr.mxu0 0.0
        %4974 = vmatpush1.msra.mxu0 0.0
        %4975 = vmatprep.subr.mxu0 0.0
        %4976 = vmatpush1.msra.mxu0 0.0
        %4977 = vmatprep.subr.mxu0 0.0
        %4978 = vmatpush1.msra.mxu0 0.0
        %4979 = vmatprep.subr.mxu0 0.0
        %4980 = vmatpush1.msra.mxu0 0.0
        %4981 = vmatprep.subr.mxu0 0.0
        %4982 = vmatpush1.msra.mxu0 0.0
        %4983 = vmatprep.subr.mxu0 0.0
        %4984 = vmatpush1.msra.mxu0 0.0
        %4985 = vmatprep.subr.mxu0 0.0
        %4986 = vmatpush1.msra.mxu0 0.0
        %4987 = vmatprep.subr.mxu0 0.0
        %4988 = vmatpush1.msra.mxu0 0.0
        %4989 = vmatprep.subr.mxu0 0.0
        %4990 = vmatpush1.msra.mxu0 0.0
        %4991 = vmatprep.mubr.f32.mxu0 0.0
        %4992 = vmatmul.mubr.f32.gmra.mrb[0].mxu0 %v4925
        %v4993 = vpop.f32.mrb[0].mxu0
        %v4994 = vadd.f32 %v4922, %v4993
        %v4995 = vpop.f32.mrb[0].mxu0
        %4996 = vdwg.mxu0
        %v4997 = vadd.f32 %v4837, %v4994
        %v4998 = vsel %vm2359, %v4997, 0.0
        %4999 = vadd.xlane.f32.xlu0 %v4998
        %v5000 = vpop.xlane.xlu0 %4999
        %v5001 = vmul.f32 %v5000, %v3554
        %v5002 = vsub.f32 %v4997, %v5001
        %v5003 = vmul.f32 %v5002, %v5002
        %v5004 = vsel %vm2359, %v5003, 0.0
        %5005 = vadd.xlane.f32.xlu0 %v5004
        %v5006 = vpop.xlane.xlu0 %5005
        %v5007 = vmul.f32 %v5006, %v3554
        %v5008 = vadd.f32 %v5007, 1e-05
        %v5009 = vrsqrt.pop %v5008
        %v5010 = vmul.f32 %v5002, %v5009
        %v5012 = vlaneseq
        %v5013 = vshrl.u32 %v5012, 7
        %v5014 = vsub.s32 0, %v5013
        %v5015 = vrot.slane %v2503, %v5014
        %v5017 = vmul.f32 %v5010, %v5015
        %v5019 = vlaneseq
        %v5020 = vshrl.u32 %v5019, 7
        %v5021 = vsub.s32 0, %v5020
        %v5022 = vrot.slane %v2505, %v5021
        %v5024 = vadd.f32 %v5017, %v5022
        %v5025 = vld [vmem:[#allocation25] sm:$0xff]
        %v5026 = vld [vmem:[#allocation25 + $0x8] sm:$0xff]
        %v5027 = vld [vmem:[#allocation25 + $0x10] sm:$0xff]
        %v5028 = vld [vmem:[#allocation25 + $0x18] sm:$0xff]
        %v5030 = vsel %vm2359, %v5024, 0
        %5032 = vmatprep.subr.mxu0 0.0
        %5033 = vmatpush1.msra.mxu0 %v5025
        %5034 = vmatprep.subr.mxu0 0.0
        %5035 = vmatpush1.msra.mxu0 %v5026
        %5036 = vmatprep.subr.mxu0 0.0
        %5037 = vmatpush1.msra.mxu0 %v5027
        %5038 = vmatprep.subr.mxu0 0.0
        %5039 = vmatpush1.msra.mxu0 %v5028
        %5040 = vmatprep.subr.mxu0 0.0
        %5041 = vmatpush1.msra.mxu0 0.0
        %5042 = vmatprep.subr.mxu0 0.0
        %5043 = vmatpush1.msra.mxu0 0.0
        %5044 = vmatprep.subr.mxu0 0.0
        %5045 = vmatpush1.msra.mxu0 0.0
        %5046 = vmatprep.subr.mxu0 0.0
        %5047 = vmatpush1.msra.mxu0 0.0
        %5048 = vmatprep.subr.mxu0 0.0
        %5049 = vmatpush1.msra.mxu0 0.0
        %5050 = vmatprep.subr.mxu0 0.0
        %5051 = vmatpush1.msra.mxu0 0.0
        %5052 = vmatprep.subr.mxu0 0.0
        %5053 = vmatpush1.msra.mxu0 0.0
        %5054 = vmatprep.subr.mxu0 0.0
        %5055 = vmatpush1.msra.mxu0 0.0
        %5056 = vmatprep.subr.mxu0 0.0
        %5057 = vmatpush1.msra.mxu0 0.0
        %5058 = vmatprep.subr.mxu0 0.0
        %5059 = vmatpush1.msra.mxu0 0.0
        %5060 = vmatprep.subr.mxu0 0.0
        %5061 = vmatpush1.msra.mxu0 0.0
        %5062 = vmatprep.subr.mxu0 0.0
        %5063 = vmatpush1.msra.mxu0 0.0
        %5064 = vmatprep.subr.mxu0 0.0
        %5065 = vmatpush1.msra.mxu0 0.0
        %5066 = vmatprep.subr.mxu0 0.0
        %5067 = vmatpush1.msra.mxu0 0.0
        %5068 = vmatprep.subr.mxu0 0.0
        %5069 = vmatpush1.msra.mxu0 0.0
        %5070 = vmatprep.subr.mxu0 0.0
        %5071 = vmatpush1.msra.mxu0 0.0
        %5072 = vmatprep.subr.mxu0 0.0
        %5073 = vmatpush1.msra.mxu0 0.0
        %5074 = vmatprep.subr.mxu0 0.0
        %5075 = vmatpush1.msra.mxu0 0.0
        %5076 = vmatprep.subr.mxu0 0.0
        %5077 = vmatpush1.msra.mxu0 0.0
        %5078 = vmatprep.subr.mxu0 0.0
        %5079 = vmatpush1.msra.mxu0 0.0
        %5080 = vmatprep.subr.mxu0 0.0
        %5081 = vmatpush1.msra.mxu0 0.0
        %5082 = vmatprep.subr.mxu0 0.0
        %5083 = vmatpush1.msra.mxu0 0.0
        %5084 = vmatprep.subr.mxu0 0.0
        %5085 = vmatpush1.msra.mxu0 0.0
        %5086 = vmatprep.subr.mxu0 0.0
        %5087 = vmatpush1.msra.mxu0 0.0
        %5088 = vmatprep.subr.mxu0 0.0
        %5089 = vmatpush1.msra.mxu0 0.0
        %5090 = vmatprep.subr.mxu0 0.0
        %5091 = vmatpush1.msra.mxu0 0.0
        %5092 = vmatprep.subr.mxu0 0.0
        %5093 = vmatpush1.msra.mxu0 0.0
        %5094 = vmatprep.subr.mxu0 0.0
        %5095 = vmatpush1.msra.mxu0 0.0
        %5096 = vmatprep.mubr.f32.mxu0 0.0
        %5097 = vmatmul.mubr.f32.gmra.mrb[0].mxu0 %v5030
        %v5098 = vpop.f32.mrb[0].mxu0
        %v5099 = vadd.f32 0.0, %v5098
        %v5100 = vpop.f32.mrb[0].mxu0
        %5101 = vdwg.mxu0
        %v5102 = vadd.f32 %v3766, %v5099
        %s5103 = scalar_lea.vmem [#allocation9], 32
        %v5104 = vld [vmem:[%s5103] sm:$0xff]
        %v5105 = vld [vmem:[%s5103 + $0x8] sm:$0xff]
        %v5106 = vld [vmem:[%s5103 + $0x10] sm:$0xff]
        %v5107 = vld [vmem:[%s5103 + $0x18] sm:$0xff]
        %s5108 = scalar_lea.vmem [#allocation10], 1
        %v5109 = vld [vmem:[%s5108] sm:$0x1]
        %s5110 = scalar_lea.vmem [#allocation12], 32
        %v5111 = vld [vmem:[%s5110] sm:$0xff]
        %v5112 = vld [vmem:[%s5110 + $0x8] sm:$0xff]
        %v5113 = vld [vmem:[%s5110 + $0x10] sm:$0xff]
        %v5114 = vld [vmem:[%s5110 + $0x18] sm:$0xff]
        %s5115 = scalar_lea.vmem [#allocation13], 1
        %v5116 = vld [vmem:[%s5115] sm:$0x1]
        %s5117 = scalar_lea.vmem [#allocation15], 1
        %v5118 = vld [vmem:[%s5117] sm:$0x1]
        %s5119 = scalar_lea.vmem [#allocation16], 1
        %v5120 = vld [vmem:[%s5119] sm:$0x1]
        %s5121 = scalar_lea.vmem [#allocation18], 32
        %v5122 = vld [vmem:[%s5121] sm:$0xff]
        %v5123 = vld [vmem:[%s5121 + $0x8] sm:$0xff]
        %v5124 = vld [vmem:[%s5121 + $0x10] sm:$0xff]
        %v5125 = vld [vmem:[%s5121 + $0x18] sm:$0xff]
        %s5126 = scalar_lea.vmem [#allocation19], 1
        %v5127 = vld [vmem:[%s5126] sm:$0x1]
        %s5128 = scalar_lea.vmem %s15, 64
        %v5129 = vld [vmem:[%s5128] sm:$0xff]
        %v5130 = vld [vmem:[%s5128 + $0x8] sm:$0xff]
        %v5131 = vld [vmem:[%s5128 + $0x10] sm:$0xff]
        %v5132 = vld [vmem:[%s5128 + $0x18] sm:$0xff]
        %v5133 = vld [vmem:[%s5128 + $0x20] sm:$0xff]
        %v5134 = vld [vmem:[%s5128 + $0x28] sm:$0xff]
        %v5135 = vld [vmem:[%s5128 + $0x30] sm:$0xff]
        %v5136 = vld [vmem:[%s5128 + $0x38] sm:$0xff]
        %s5137 = scalar_lea.vmem [#allocation21], 1
        %v5138 = vld [vmem:[%s5137] sm:$0x1]
        %s5139 = scalar_lea.vmem [#allocation22], 1
        %v5140 = vld [vmem:[%s5139] sm:$0x1]
        %s5141 = scalar_lea.vmem [#allocation24], 1
        %v5142 = vld [vmem:[%s5141] sm:$0x1]
        %s5143 = scalar_lea.vmem [#allocation9], 96
        %v5144 = vld [vmem:[%s5143] sm:$0xff]
        %v5145 = vld [vmem:[%s5143 + $0x8] sm:$0xff]
        %v5146 = vld [vmem:[%s5143 + $0x10] sm:$0xff]
        %v5147 = vld [vmem:[%s5143 + $0x18] sm:$0xff]
        %s5148 = scalar_lea.vmem [#allocation10], 3
        %v5149 = vld [vmem:[%s5148] sm:$0x1]
        %s5150 = scalar_lea.vmem [#allocation12], 96
        %v5151 = vld [vmem:[%s5150] sm:$0xff]
        %v5152 = vld [vmem:[%s5150 + $0x8] sm:$0xff]
        %v5153 = vld [vmem:[%s5150 + $0x10] sm:$0xff]
        %v5154 = vld [vmem:[%s5150 + $0x18] sm:$0xff]
        %s5155 = scalar_lea.vmem [#allocation13], 3
        %v5156 = vld [vmem:[%s5155] sm:$0x1]
        %s5157 = scalar_lea.vmem [#allocation15], 3
        %v5158 = vld [vmem:[%s5157] sm:$0x1]
        %s5159 = scalar_lea.vmem [#allocation16], 3
        %v5160 = vld [vmem:[%s5159] sm:$0x1]
        %s5161 = scalar_lea.vmem [#allocation18], 96
        %v5162 = vld [vmem:[%s5161] sm:$0xff]
        %v5163 = vld [vmem:[%s5161 + $0x8] sm:$0xff]
        %v5164 = vld [vmem:[%s5161 + $0x10] sm:$0xff]
        %v5165 = vld [vmem:[%s5161 + $0x18] sm:$0xff]
        %s5166 = scalar_lea.vmem [#allocation19], 3
        %v5167 = vld [vmem:[%s5166] sm:$0x1]
        %s5168 = scalar_lea.vmem %s15, 192
        %v5169 = vld [vmem:[%s5168] sm:$0xff]
        %v5170 = vld [vmem:[%s5168 + $0x8] sm:$0xff]
        %v5171 = vld [vmem:[%s5168 + $0x10] sm:$0xff]
        %v5172 = vld [vmem:[%s5168 + $0x18] sm:$0xff]
        %v5173 = vld [vmem:[%s5168 + $0x20] sm:$0xff]
        %v5174 = vld [vmem:[%s5168 + $0x28] sm:$0xff]
        %v5175 = vld [vmem:[%s5168 + $0x30] sm:$0xff]
        %v5176 = vld [vmem:[%s5168 + $0x38] sm:$0xff]
        %s5177 = scalar_lea.vmem [#allocation21], 3
        %v5178 = vld [vmem:[%s5177] sm:$0x1]
        %s5179 = scalar_lea.vmem [#allocation22], 3
        %v5180 = vld [vmem:[%s5179] sm:$0x1]
        %s5181 = scalar_lea.vmem [#allocation24], 3
        %v5182 = vld [vmem:[%s5181] sm:$0x1]
        %v5184 = vlaneseq
        %v5185 = vshrl.u32 %v5184, 7
        %v5186 = vsub.s32 0, %v5185
        %v5187 = vrot.slane %v5109, %v5186
        %v5190 = vsel %vm2359, %v5102, 0
        %5192 = vmatprep.subr.mxu0 0.0
        %5193 = vmatpush1.msra.mxu0 %v5104
        %5194 = vmatprep.subr.mxu0 0.0
        %5195 = vmatpush1.msra.mxu0 %v5105
        %5196 = vmatprep.subr.mxu0 0.0
        %5197 = vmatpush1.msra.mxu0 %v5106
        %5198 = vmatprep.subr.mxu0 0.0
        %5199 = vmatpush1.msra.mxu0 %v5107
        %5200 = vmatprep.subr.mxu0 0.0
        %5201 = vmatpush1.msra.mxu0 0.0
        %5202 = vmatprep.subr.mxu0 0.0
        %5203 = vmatpush1.msra.mxu0 0.0
        %5204 = vmatprep.subr.mxu0 0.0
        %5205 = vmatpush1.msra.mxu0 0.0
        %5206 = vmatprep.subr.mxu0 0.0
        %5207 = vmatpush1.msra.mxu0 0.0
        %5208 = vmatprep.subr.mxu0 0.0
        %5209 = vmatpush1.msra.mxu0 0.0
        %5210 = vmatprep.subr.mxu0 0.0
        %5211 = vmatpush1.msra.mxu0 0.0
        %5212 = vmatprep.subr.mxu0 0.0
        %5213 = vmatpush1.msra.mxu0 0.0
        %5214 = vmatprep.subr.mxu0 0.0
        %5215 = vmatpush1.msra.mxu0 0.0
        %5216 = vmatprep.subr.mxu0 0.0
        %5217 = vmatpush1.msra.mxu0 0.0
        %5218 = vmatprep.subr.mxu0 0.0
        %5219 = vmatpush1.msra.mxu0 0.0
        %5220 = vmatprep.subr.mxu0 0.0
        %5221 = vmatpush1.msra.mxu0 0.0
        %5222 = vmatprep.subr.mxu0 0.0
        %5223 = vmatpush1.msra.mxu0 0.0
        %5224 = vmatprep.subr.mxu0 0.0
        %5225 = vmatpush1.msra.mxu0 0.0
        %5226 = vmatprep.subr.mxu0 0.0
        %5227 = vmatpush1.msra.mxu0 0.0
        %5228 = vmatprep.subr.mxu0 0.0
        %5229 = vmatpush1.msra.mxu0 0.0
        %5230 = vmatprep.subr.mxu0 0.0
        %5231 = vmatpush1.msra.mxu0 0.0
        %5232 = vmatprep.subr.mxu0 0.0
        %5233 = vmatpush1.msra.mxu0 0.0
        %5234 = vmatprep.subr.mxu0 0.0
        %5235 = vmatpush1.msra.mxu0 0.0
        %5236 = vmatprep.subr.mxu0 0.0
        %5237 = vmatpush1.msra.mxu0 0.0
        %5238 = vmatprep.subr.mxu0 0.0
        %5239 = vmatpush1.msra.mxu0 0.0
        %5240 = vmatprep.subr.mxu0 0.0
        %5241 = vmatpush1.msra.mxu0 0.0
        %5242 = vmatprep.subr.mxu0 0.0
        %5243 = vmatpush1.msra.mxu0 0.0
        %5244 = vmatprep.subr.mxu0 0.0
        %5245 = vmatpush1.msra.mxu0 0.0
        %5246 = vmatprep.subr.mxu0 0.0
        %5247 = vmatpush1.msra.mxu0 0.0
        %5248 = vmatprep.subr.mxu0 0.0
        %5249 = vmatpush1.msra.mxu0 0.0
        %5250 = vmatprep.subr.mxu0 0.0
        %5251 = vmatpush1.msra.mxu0 0.0
        %5252 = vmatprep.subr.mxu0 0.0
        %5253 = vmatpush1.msra.mxu0 0.0
        %5254 = vmatprep.subr.mxu0 0.0
        %5255 = vmatpush1.msra.mxu0 0.0
        %5256 = vmatprep.mubr.f32.mxu0 0.0
        %5257 = vmatmul.mubr.f32.gmra.mrb[0].mxu0 %v5190
        %v5258 = vpop.f32.mrb[0].mxu0
        %v5259 = vadd.f32 %v5187, %v5258
        %v5260 = vpop.f32.mrb[0].mxu0
        %5261 = vdwg.mxu0
        %v5263 = vlaneseq
        %v5264 = vshrl.u32 %v5263, 7
        %v5265 = vsub.s32 0, %v5264
        %v5266 = vrot.slane %v5116, %v5265
        %v5268 = vadd.f32 %v5266, 0.0
        %v5269 = vmul.f32 %v5259, 0.35355338
        %5271 = vrot.lane.b32.xlu0 %v5259, 96
        %v5272 = vpop.permute.xlu0 %5271
        %v5274 = vsel %vm2596, %v5269, 0
        %v5276 = vsel %vm2596, %v5272, 0
        %5278 = vmatprep.subr.mxu0 0.0
        %5279 = vmatpush1.xpose.msra.mxu0 %v5276
        %5280 = vmatprep.subr.mxu0 0.0
        %5281 = vmatpush1.xpose.msra.mxu0 0.0
        %5282 = vmatprep.subr.mxu0 0.0
        %5283 = vmatpush1.xpose.msra.mxu0 0.0
        %5284 = vmatprep.subr.mxu0 0.0
        %5285 = vmatpush1.xpose.msra.mxu0 0.0
        %5286 = vmatprep.subr.mxu0 0.0
        %5287 = vmatpush1.xpose.msra.mxu0 0.0
        %5288 = vmatprep.subr.mxu0 0.0
        %5289 = vmatpush1.xpose.msra.mxu0 0.0
        %5290 = vmatprep.subr.mxu0 0.0
        %5291 = vmatpush1.xpose.msra.mxu0 0.0
        %5292 = vmatprep.subr.mxu0 0.0
        %5293 = vmatpush1.xpose.msra.mxu0 0.0
        %5294 = vmatprep.subr.mxu0 0.0
        %5295 = vmatpush1.xpose.msra.mxu0 0.0
        %5296 = vmatprep.subr.mxu0 0.0
        %5297 = vmatpush1.xpose.msra.mxu0 0.0
        %5298 = vmatprep.subr.mxu0 0.0
        %5299 = vmatpush1.xpose.msra.mxu0 0.0
        %5300 = vmatprep.subr.mxu0 0.0
        %5301 = vmatpush1.xpose.msra.mxu0 0.0
        %5302 = vmatprep.subr.mxu0 0.0
        %5303 = vmatpush1.xpose.msra.mxu0 0.0
        %5304 = vmatprep.subr.mxu0 0.0
        %5305 = vmatpush1.xpose.msra.mxu0 0.0
        %5306 = vmatprep.subr.mxu0 0.0
        %5307 = vmatpush1.xpose.msra.mxu0 0.0
        %5308 = vmatprep.subr.mxu0 0.0
        %5309 = vmatpush1.xpose.msra.mxu0 0.0
        %5310 = vmatprep.subr.mxu0 0.0
        %5311 = vmatpush1.xpose.msra.mxu0 0.0
        %5312 = vmatprep.subr.mxu0 0.0
        %5313 = vmatpush1.xpose.msra.mxu0 0.0
        %5314 = vmatprep.subr.mxu0 0.0
        %5315 = vmatpush1.xpose.msra.mxu0 0.0
        %5316 = vmatprep.subr.mxu0 0.0
        %5317 = vmatpush1.xpose.msra.mxu0 0.0
        %5318 = vmatprep.subr.mxu0 0.0
        %5319 = vmatpush1.xpose.msra.mxu0 0.0
        %5320 = vmatprep.subr.mxu0 0.0
        %5321 = vmatpush1.xpose.msra.mxu0 0.0
        %5322 = vmatprep.subr.mxu0 0.0
        %5323 = vmatpush1.xpose.msra.mxu0 0.0
        %5324 = vmatprep.subr.mxu0 0.0
        %5325 = vmatpush1.xpose.msra.mxu0 0.0
        %5326 = vmatprep.subr.mxu0 0.0
        %5327 = vmatpush1.xpose.msra.mxu0 0.0
        %5328 = vmatprep.subr.mxu0 0.0
        %5329 = vmatpush1.xpose.msra.mxu0 0.0
        %5330 = vmatprep.subr.mxu0 0.0
        %5331 = vmatpush1.xpose.msra.mxu0 0.0
        %5332 = vmatprep.subr.mxu0 0.0
        %5333 = vmatpush1.xpose.msra.mxu0 0.0
        %5334 = vmatprep.subr.mxu0 0.0
        %5335 = vmatpush1.xpose.msra.mxu0 0.0
        %5336 = vmatprep.subr.mxu0 0.0
        %5337 = vmatpush1.xpose.msra.mxu0 0.0
        %5338 = vmatprep.subr.mxu0 0.0
        %5339 = vmatpush1.xpose.msra.mxu0 0.0
        %5340 = vmatprep.subr.mxu0 0.0
        %5341 = vmatpush1.xpose.msra.mxu0 0.0
        %5342 = vmatprep.mubr.f32.mxu0 0.0
        %5343 = vmatmul.mubr.f32.gmra.mrb[0].mxu0 %v5274
        %v5344 = vpop.f32.mrb[0].mxu0
        %v5345 = vadd.f32 0.0, %v5344
        %v5346 = vpop.f32.mrb[0].mxu0
        %5347 = vdwg.mxu0
        %v5348 = vsel %vm2596, %v5345, -inf
        %5349 = vmax.xlane.f32.xlu0 %v5348
        %v5350 = vpop.xlane.xlu0 %5349
        %v5351 = vsub.f32 %v5345, %v5350
        %v5352 = vmul.f32 %v5351, 1.442695
        %v5353 = vpow.pop %v5352
        %v5354 = vsel %vm2596, %v5353, 0.0
        %5355 = vadd.xlane.f32.xlu0 %v5354
        %v5356 = vpop.xlane.xlu0 %5355
        %v5357 = vrcp.pop %v5356
        %v5358 = vmul.f32 %v5353, %v5357
        %5359 = vrot.lane.b32.xlu0 %v5259, 64
        %v5360 = vpop.permute.xlu0 %5359
        %v5363 = vsel %vm2596, %v5358, 0
        %5365 = vmatprep.subr.mxu0 0.0
        %5366 = vmatpush1.msra.mxu0 %v5360
        %5367 = vmatprep.subr.mxu0 0.0
        %5368 = vmatpush1.msra.mxu0 0.0
        %5369 = vmatprep.subr.mxu0 0.0
        %5370 = vmatpush1.msra.mxu0 0.0
        %5371 = vmatprep.subr.mxu0 0.0
        %5372 = vmatpush1.msra.mxu0 0.0
        %5373 = vmatprep.subr.mxu0 0.0
        %5374 = vmatpush1.msra.mxu0 0.0
        %5375 = vmatprep.subr.mxu0 0.0
        %5376 = vmatpush1.msra.mxu0 0.0
        %5377 = vmatprep.subr.mxu0 0.0
        %5378 = vmatpush1.msra.mxu0 0.0
        %5379 = vmatprep.subr.mxu0 0.0
        %5380 = vmatpush1.msra.mxu0 0.0
        %5381 = vmatprep.subr.mxu0 0.0
        %5382 = vmatpush1.msra.mxu0 0.0
        %5383 = vmatprep.subr.mxu0 0.0
        %5384 = vmatpush1.msra.mxu0 0.0
        %5385 = vmatprep.subr.mxu0 0.0
        %5386 = vmatpush1.msra.mxu0 0.0
        %5387 = vmatprep.subr.mxu0 0.0
        %5388 = vmatpush1.msra.mxu0 0.0
        %5389 = vmatprep.subr.mxu0 0.0
        %5390 = vmatpush1.msra.mxu0 0.0
        %5391 = vmatprep.subr.mxu0 0.0
        %5392 = vmatpush1.msra.mxu0 0.0
        %5393 = vmatprep.subr.mxu0 0.0
        %5394 = vmatpush1.msra.mxu0 0.0
        %5395 = vmatprep.subr.mxu0 0.0
        %5396 = vmatpush1.msra.mxu0 0.0
        %5397 = vmatprep.subr.mxu0 0.0
        %5398 = vmatpush1.msra.mxu0 0.0
        %5399 = vmatprep.subr.mxu0 0.0
        %5400 = vmatpush1.msra.mxu0 0.0
        %5401 = vmatprep.subr.mxu0 0.0
        %5402 = vmatpush1.msra.mxu0 0.0
        %5403 = vmatprep.subr.mxu0 0.0
        %5404 = vmatpush1.msra.mxu0 0.0
        %5405 = vmatprep.subr.mxu0 0.0
        %5406 = vmatpush1.msra.mxu0 0.0
        %5407 = vmatprep.subr.mxu0 0.0
        %5408 = vmatpush1.msra.mxu0 0.0
        %5409 = vmatprep.subr.mxu0 0.0
        %5410 = vmatpush1.msra.mxu0 0.0
        %5411 = vmatprep.subr.mxu0 0.0
        %5412 = vmatpush1.msra.mxu0 0.0
        %5413 = vmatprep.subr.mxu0 0.0
        %5414 = vmatpush1.msra.mxu0 0.0
        %5415 = vmatprep.subr.mxu0 0.0
        %5416 = vmatpush1.msra.mxu0 0.0
        %5417 = vmatprep.subr.mxu0 0.0
        %5418 = vmatpush1.msra.mxu0 0.0
        %5419 = vmatprep.subr.mxu0 0.0
        %5420 = vmatpush1.msra.mxu0 0.0
        %5421 = vmatprep.subr.mxu0 0.0
        %5422 = vmatpush1.msra.mxu0 0.0
        %5423 = vmatprep.subr.mxu0 0.0
        %5424 = vmatpush1.msra.mxu0 0.0
        %5425 = vmatprep.subr.mxu0 0.0
        %5426 = vmatpush1.msra.mxu0 0.0
        %5427 = vmatprep.subr.mxu0 0.0
        %5428 = vmatpush1.msra.mxu0 0.0
        %5429 = vmatprep.mubr.f32.mxu0 0.0
        %5430 = vmatmul.mubr.f32.gmra.mrb[0].mxu0 %v5363
        %v5431 = vpop.f32.mrb[0].mxu0
        %v5432 = vadd.f32 0.0, %v5431
        %v5433 = vpop.f32.mrb[0].mxu0
        %5434 = vdwg.mxu0
        %v5436 = vsel %vm2596, %v5432, 0
        %5438 = vmatprep.subr.mxu0 0.0
        %5439 = vmatpush1.msra.mxu0 %v5111
        %5440 = vmatprep.subr.mxu0 0.0
        %5441 = vmatpush1.msra.mxu0 0.0
        %5442 = vmatprep.subr.mxu0 0.0
        %5443 = vmatpush1.msra.mxu0 0.0
        %5444 = vmatprep.subr.mxu0 0.0
        %5445 = vmatpush1.msra.mxu0 0.0
        %5446 = vmatprep.subr.mxu0 0.0
        %5447 = vmatpush1.msra.mxu0 0.0
        %5448 = vmatprep.subr.mxu0 0.0
        %5449 = vmatpush1.msra.mxu0 0.0
        %5450 = vmatprep.subr.mxu0 0.0
        %5451 = vmatpush1.msra.mxu0 0.0
        %5452 = vmatprep.subr.mxu0 0.0
        %5453 = vmatpush1.msra.mxu0 0.0
        %5454 = vmatprep.subr.mxu0 0.0
        %5455 = vmatpush1.msra.mxu0 0.0
        %5456 = vmatprep.subr.mxu0 0.0
        %5457 = vmatpush1.msra.mxu0 0.0
        %5458 = vmatprep.subr.mxu0 0.0
        %5459 = vmatpush1.msra.mxu0 0.0
        %5460 = vmatprep.subr.mxu0 0.0
        %5461 = vmatpush1.msra.mxu0 0.0
        %5462 = vmatprep.subr.mxu0 0.0
        %5463 = vmatpush1.msra.mxu0 0.0
        %5464 = vmatprep.subr.mxu0 0.0
        %5465 = vmatpush1.msra.mxu0 0.0
        %5466 = vmatprep.subr.mxu0 0.0
        %5467 = vmatpush1.msra.mxu0 0.0
        %5468 = vmatprep.subr.mxu0 0.0
        %5469 = vmatpush1.msra.mxu0 0.0
        %5470 = vmatprep.subr.mxu0 0.0
        %5471 = vmatpush1.msra.mxu0 0.0
        %5472 = vmatprep.subr.mxu0 0.0
        %5473 = vmatpush1.msra.mxu0 0.0
        %5474 = vmatprep.subr.mxu0 0.0
        %5475 = vmatpush1.msra.mxu0 0.0
        %5476 = vmatprep.subr.mxu0 0.0
        %5477 = vmatpush1.msra.mxu0 0.0
        %5478 = vmatprep.subr.mxu0 0.0
        %5479 = vmatpush1.msra.mxu0 0.0
        %5480 = vmatprep.subr.mxu0 0.0
        %5481 = vmatpush1.msra.mxu0 0.0
        %5482 = vmatprep.subr.mxu0 0.0
        %5483 = vmatpush1.msra.mxu0 0.0
        %5484 = vmatprep.subr.mxu0 0.0
        %5485 = vmatpush1.msra.mxu0 0.0
        %5486 = vmatprep.subr.mxu0 0.0
        %5487 = vmatpush1.msra.mxu0 0.0
        %5488 = vmatprep.subr.mxu0 0.0
        %5489 = vmatpush1.msra.mxu0 0.0
        %5490 = vmatprep.subr.mxu0 0.0
        %5491 = vmatpush1.msra.mxu0 0.0
        %5492 = vmatprep.subr.mxu0 0.0
        %5493 = vmatpush1.msra.mxu0 0.0
        %5494 = vmatprep.subr.mxu0 0.0
        %5495 = vmatpush1.msra.mxu0 0.0
        %5496 = vmatprep.subr.mxu0 0.0
        %5497 = vmatpush1.msra.mxu0 0.0
        %5498 = vmatprep.subr.mxu0 0.0
        %5499 = vmatpush1.msra.mxu0 0.0
        %5500 = vmatprep.subr.mxu0 0.0
        %5501 = vmatpush1.msra.mxu0 0.0
        %5502 = vmatprep.mubr.f32.mxu0 0.0
        %5503 = vmatmul.mubr.f32.gmra.mrb[0].mxu0 %v5436
        %v5504 = vpop.f32.mrb[0].mxu0
        %v5505 = vadd.f32 0.0, %v5504
        %v5506 = vpop.f32.mrb[0].mxu0
        %5507 = vdwg.mxu0
        %v5508 = vadd.f32 %v5268, %v5505
        %5509 = vrot.lane.b32.xlu0 %v5269, 120
        %v5510 = vpop.permute.xlu0 %5509
        %5511 = vrot.lane.b32.xlu0 %v5259, 88
        %v5512 = vpop.permute.xlu0 %5511
        %v5513 = vsel %vm2596, %v5510, 0
        %v5515 = vsel %vm2596, %v5512, 0
        %5517 = vmatprep.subr.mxu0 0.0
        %5518 = vmatpush1.xpose.msra.mxu0 %v5515
        %5519 = vmatprep.subr.mxu0 0.0
        %5520 = vmatpush1.xpose.msra.mxu0 0.0
        %5521 = vmatprep.subr.mxu0 0.0
        %5522 = vmatpush1.xpose.msra.mxu0 0.0
        %5523 = vmatprep.subr.mxu0 0.0
        %5524 = vmatpush1.xpose.msra.mxu0 0.0
        %5525 = vmatprep.subr.mxu0 0.0
        %5526 = vmatpush1.xpose.msra.mxu0 0.0
        %5527 = vmatprep.subr.mxu0 0.0
        %5528 = vmatpush1.xpose.msra.mxu0 0.0
        %5529 = vmatprep.subr.mxu0 0.0
        %5530 = vmatpush1.xpose.msra.mxu0 0.0
        %5531 = vmatprep.subr.mxu0 0.0
        %5532 = vmatpush1.xpose.msra.mxu0 0.0
        %5533 = vmatprep.subr.mxu0 0.0
        %5534 = vmatpush1.xpose.msra.mxu0 0.0
        %5535 = vmatprep.subr.mxu0 0.0
        %5536 = vmatpush1.xpose.msra.mxu0 0.0
        %5537 = vmatprep.subr.mxu0 0.0
        %5538 = vmatpush1.xpose.msra.mxu0 0.0
        %5539 = vmatprep.subr.mxu0 0.0
        %5540 = vmatpush1.xpose.msra.mxu0 0.0
        %5541 = vmatprep.subr.mxu0 0.0
        %5542 = vmatpush1.xpose.msra.mxu0 0.0
        %5543 = vmatprep.subr.mxu0 0.0
        %5544 = vmatpush1.xpose.msra.mxu0 0.0
        %5545 = vmatprep.subr.mxu0 0.0
        %5546 = vmatpush1.xpose.msra.mxu0 0.0
        %5547 = vmatprep.subr.mxu0 0.0
        %5548 = vmatpush1.xpose.msra.mxu0 0.0
        %5549 = vmatprep.subr.mxu0 0.0
        %5550 = vmatpush1.xpose.msra.mxu0 0.0
        %5551 = vmatprep.subr.mxu0 0.0
        %5552 = vmatpush1.xpose.msra.mxu0 0.0
        %5553 = vmatprep.subr.mxu0 0.0
        %5554 = vmatpush1.xpose.msra.mxu0 0.0
        %5555 = vmatprep.subr.mxu0 0.0
        %5556 = vmatpush1.xpose.msra.mxu0 0.0
        %5557 = vmatprep.subr.mxu0 0.0
        %5558 = vmatpush1.xpose.msra.mxu0 0.0
        %5559 = vmatprep.subr.mxu0 0.0
        %5560 = vmatpush1.xpose.msra.mxu0 0.0
        %5561 = vmatprep.subr.mxu0 0.0
        %5562 = vmatpush1.xpose.msra.mxu0 0.0
        %5563 = vmatprep.subr.mxu0 0.0
        %5564 = vmatpush1.xpose.msra.mxu0 0.0
        %5565 = vmatprep.subr.mxu0 0.0
        %5566 = vmatpush1.xpose.msra.mxu0 0.0
        %5567 = vmatprep.subr.mxu0 0.0
        %5568 = vmatpush1.xpose.msra.mxu0 0.0
        %5569 = vmatprep.subr.mxu0 0.0
        %5570 = vmatpush1.xpose.msra.mxu0 0.0
        %5571 = vmatprep.subr.mxu0 0.0
        %5572 = vmatpush1.xpose.msra.mxu0 0.0
        %5573 = vmatprep.subr.mxu0 0.0
        %5574 = vmatpush1.xpose.msra.mxu0 0.0
        %5575 = vmatprep.subr.mxu0 0.0
        %5576 = vmatpush1.xpose.msra.mxu0 0.0
        %5577 = vmatprep.subr.mxu0 0.0
        %5578 = vmatpush1.xpose.msra.mxu0 0.0
        %5579 = vmatprep.subr.mxu0 0.0
        %5580 = vmatpush1.xpose.msra.mxu0 0.0
        %5581 = vmatprep.mubr.f32.mxu0 0.0
        %5582 = vmatmul.mubr.f32.gmra.mrb[0].mxu0 %v5513
        %v5583 = vpop.f32.mrb[0].mxu0
        %v5584 = vadd.f32 0.0, %v5583
        %v5585 = vpop.f32.mrb[0].mxu0
        %5586 = vdwg.mxu0
        %v5587 = vsel %vm2596, %v5584, -inf
        %5588 = vmax.xlane.f32.xlu0 %v5587
        %v5589 = vpop.xlane.xlu0 %5588
        %v5590 = vsub.f32 %v5584, %v5589
        %v5591 = vmul.f32 %v5590, 1.442695
        %v5592 = vpow.pop %v5591
        %v5593 = vsel %vm2596, %v5592, 0.0
        %5594 = vadd.xlane.f32.xlu0 %v5593
        %v5595 = vpop.xlane.xlu0 %5594
        %v5596 = vrcp.pop %v5595
        %v5597 = vmul.f32 %v5592, %v5596
        %5598 = vrot.lane.b32.xlu0 %v5259, 56
        %v5599 = vpop.permute.xlu0 %5598
        %v5602 = vsel %vm2596, %v5597, 0
        %5604 = vmatprep.subr.mxu0 0.0
        %5605 = vmatpush1.msra.mxu0 %v5599
        %5606 = vmatprep.subr.mxu0 0.0
        %5607 = vmatpush1.msra.mxu0 0.0
        %5608 = vmatprep.subr.mxu0 0.0
        %5609 = vmatpush1.msra.mxu0 0.0
        %5610 = vmatprep.subr.mxu0 0.0
        %5611 = vmatpush1.msra.mxu0 0.0
        %5612 = vmatprep.subr.mxu0 0.0
        %5613 = vmatpush1.msra.mxu0 0.0
        %5614 = vmatprep.subr.mxu0 0.0
        %5615 = vmatpush1.msra.mxu0 0.0
        %5616 = vmatprep.subr.mxu0 0.0
        %5617 = vmatpush1.msra.mxu0 0.0
        %5618 = vmatprep.subr.mxu0 0.0
        %5619 = vmatpush1.msra.mxu0 0.0
        %5620 = vmatprep.subr.mxu0 0.0
        %5621 = vmatpush1.msra.mxu0 0.0
        %5622 = vmatprep.subr.mxu0 0.0
        %5623 = vmatpush1.msra.mxu0 0.0
        %5624 = vmatprep.subr.mxu0 0.0
        %5625 = vmatpush1.msra.mxu0 0.0
        %5626 = vmatprep.subr.mxu0 0.0
        %5627 = vmatpush1.msra.mxu0 0.0
        %5628 = vmatprep.subr.mxu0 0.0
        %5629 = vmatpush1.msra.mxu0 0.0
        %5630 = vmatprep.subr.mxu0 0.0
        %5631 = vmatpush1.msra.mxu0 0.0
        %5632 = vmatprep.subr.mxu0 0.0
        %5633 = vmatpush1.msra.mxu0 0.0
        %5634 = vmatprep.subr.mxu0 0.0
        %5635 = vmatpush1.msra.mxu0 0.0
        %5636 = vmatprep.subr.mxu0 0.0
        %5637 = vmatpush1.msra.mxu0 0.0
        %5638 = vmatprep.subr.mxu0 0.0
        %5639 = vmatpush1.msra.mxu0 0.0
        %5640 = vmatprep.subr.mxu0 0.0
        %5641 = vmatpush1.msra.mxu0 0.0
        %5642 = vmatprep.subr.mxu0 0.0
        %5643 = vmatpush1.msra.mxu0 0.0
        %5644 = vmatprep.subr.mxu0 0.0
        %5645 = vmatpush1.msra.mxu0 0.0
        %5646 = vmatprep.subr.mxu0 0.0
        %5647 = vmatpush1.msra.mxu0 0.0
        %5648 = vmatprep.subr.mxu0 0.0
        %5649 = vmatpush1.msra.mxu0 0.0
        %5650 = vmatprep.subr.mxu0 0.0
        %5651 = vmatpush1.msra.mxu0 0.0
        %5652 = vmatprep.subr.mxu0 0.0
        %5653 = vmatpush1.msra.mxu0 0.0
        %5654 = vmatprep.subr.mxu0 0.0
        %5655 = vmatpush1.msra.mxu0 0.0
        %5656 = vmatprep.subr.mxu0 0.0
        %5657 = vmatpush1.msra.mxu0 0.0
        %5658 = vmatprep.subr.mxu0 0.0
        %5659 = vmatpush1.msra.mxu0 0.0
        %5660 = vmatprep.subr.mxu0 0.0
        %5661 = vmatpush1.msra.mxu0 0.0
        %5662 = vmatprep.subr.mxu0 0.0
        %5663 = vmatpush1.msra.mxu0 0.0
        %5664 = vmatprep.subr.mxu0 0.0
        %5665 = vmatpush1.msra.mxu0 0.0
        %5666 = vmatprep.subr.mxu0 0.0
        %5667 = vmatpush1.msra.mxu0 0.0
        %5668 = vmatprep.mubr.f32.mxu0 0.0
        %5669 = vmatmul.mubr.f32.gmra.mrb[0].mxu0 %v5602
        %v5670 = vpop.f32.mrb[0].mxu0
        %v5671 = vadd.f32 0.0, %v5670
        %v5672 = vpop.f32.mrb[0].mxu0
        %5673 = vdwg.mxu0
        %v5675 = vsel %vm2596, %v5671, 0
        %5677 = vmatprep.subr.mxu0 0.0
        %5678 = vmatpush1.msra.mxu0 %v5112
        %5679 = vmatprep.subr.mxu0 0.0
        %5680 = vmatpush1.msra.mxu0 0.0
        %5681 = vmatprep.subr.mxu0 0.0
        %5682 = vmatpush1.msra.mxu0 0.0
        %5683 = vmatprep.subr.mxu0 0.0
        %5684 = vmatpush1.msra.mxu0 0.0
        %5685 = vmatprep.subr.mxu0 0.0
        %5686 = vmatpush1.msra.mxu0 0.0
        %5687 = vmatprep.subr.mxu0 0.0
        %5688 = vmatpush1.msra.mxu0 0.0
        %5689 = vmatprep.subr.mxu0 0.0
        %5690 = vmatpush1.msra.mxu0 0.0
        %5691 = vmatprep.subr.mxu0 0.0
        %5692 = vmatpush1.msra.mxu0 0.0
        %5693 = vmatprep.subr.mxu0 0.0
        %5694 = vmatpush1.msra.mxu0 0.0
        %5695 = vmatprep.subr.mxu0 0.0
        %5696 = vmatpush1.msra.mxu0 0.0
        %5697 = vmatprep.subr.mxu0 0.0
        %5698 = vmatpush1.msra.mxu0 0.0
        %5699 = vmatprep.subr.mxu0 0.0
        %5700 = vmatpush1.msra.mxu0 0.0
        %5701 = vmatprep.subr.mxu0 0.0
        %5702 = vmatpush1.msra.mxu0 0.0
        %5703 = vmatprep.subr.mxu0 0.0
        %5704 = vmatpush1.msra.mxu0 0.0
        %5705 = vmatprep.subr.mxu0 0.0
        %5706 = vmatpush1.msra.mxu0 0.0
        %5707 = vmatprep.subr.mxu0 0.0
        %5708 = vmatpush1.msra.mxu0 0.0
        %5709 = vmatprep.subr.mxu0 0.0
        %5710 = vmatpush1.msra.mxu0 0.0
        %5711 = vmatprep.subr.mxu0 0.0
        %5712 = vmatpush1.msra.mxu0 0.0
        %5713 = vmatprep.subr.mxu0 0.0
        %5714 = vmatpush1.msra.mxu0 0.0
        %5715 = vmatprep.subr.mxu0 0.0
        %5716 = vmatpush1.msra.mxu0 0.0
        %5717 = vmatprep.subr.mxu0 0.0
        %5718 = vmatpush1.msra.mxu0 0.0
        %5719 = vmatprep.subr.mxu0 0.0
        %5720 = vmatpush1.msra.mxu0 0.0
        %5721 = vmatprep.subr.mxu0 0.0
        %5722 = vmatpush1.msra.mxu0 0.0
        %5723 = vmatprep.subr.mxu0 0.0
        %5724 = vmatpush1.msra.mxu0 0.0
        %5725 = vmatprep.subr.mxu0 0.0
        %5726 = vmatpush1.msra.mxu0 0.0
        %5727 = vmatprep.subr.mxu0 0.0
        %5728 = vmatpush1.msra.mxu0 0.0
        %5729 = vmatprep.subr.mxu0 0.0
        %5730 = vmatpush1.msra.mxu0 0.0
        %5731 = vmatprep.subr.mxu0 0.0
        %5732 = vmatpush1.msra.mxu0 0.0
        %5733 = vmatprep.subr.mxu0 0.0
        %5734 = vmatpush1.msra.mxu0 0.0
        %5735 = vmatprep.subr.mxu0 0.0
        %5736 = vmatpush1.msra.mxu0 0.0
        %5737 = vmatprep.subr.mxu0 0.0
        %5738 = vmatpush1.msra.mxu0 0.0
        %5739 = vmatprep.subr.mxu0 0.0
        %5740 = vmatpush1.msra.mxu0 0.0
        %5741 = vmatprep.mubr.f32.mxu0 0.0
        %5742 = vmatmul.mubr.f32.gmra.mrb[0].mxu0 %v5675
        %v5743 = vpop.f32.mrb[0].mxu0
        %v5744 = vadd.f32 0.0, %v5743
        %v5745 = vpop.f32.mrb[0].mxu0
        %5746 = vdwg.mxu0
        %v5747 = vadd.f32 %v5508, %v5744
        %5748 = vrot.lane.b32.xlu0 %v5269, 112
        %v5749 = vpop.permute.xlu0 %5748
        %5750 = vrot.lane.b32.xlu0 %v5259, 80
        %v5751 = vpop.permute.xlu0 %5750
        %v5752 = vsel %vm2596, %v5749, 0
        %v5754 = vsel %vm2596, %v5751, 0
        %5756 = vmatprep.subr.mxu0 0.0
        %5757 = vmatpush1.xpose.msra.mxu0 %v5754
        %5758 = vmatprep.subr.mxu0 0.0
        %5759 = vmatpush1.xpose.msra.mxu0 0.0
        %5760 = vmatprep.subr.mxu0 0.0
        %5761 = vmatpush1.xpose.msra.mxu0 0.0
        %5762 = vmatprep.subr.mxu0 0.0
        %5763 = vmatpush1.xpose.msra.mxu0 0.0
        %5764 = vmatprep.subr.mxu0 0.0
        %5765 = vmatpush1.xpose.msra.mxu0 0.0
        %5766 = vmatprep.subr.mxu0 0.0
        %5767 = vmatpush1.xpose.msra.mxu0 0.0
        %5768 = vmatprep.subr.mxu0 0.0
        %5769 = vmatpush1.xpose.msra.mxu0 0.0
        %5770 = vmatprep.subr.mxu0 0.0
        %5771 = vmatpush1.xpose.msra.mxu0 0.0
        %5772 = vmatprep.subr.mxu0 0.0
        %5773 = vmatpush1.xpose.msra.mxu0 0.0
        %5774 = vmatprep.subr.mxu0 0.0
        %5775 = vmatpush1.xpose.msra.mxu0 0.0
        %5776 = vmatprep.subr.mxu0 0.0
        %5777 = vmatpush1.xpose.msra.mxu0 0.0
        %5778 = vmatprep.subr.mxu0 0.0
        %5779 = vmatpush1.xpose.msra.mxu0 0.0
        %5780 = vmatprep.subr.mxu0 0.0
        %5781 = vmatpush1.xpose.msra.mxu0 0.0
        %5782 = vmatprep.subr.mxu0 0.0
        %5783 = vmatpush1.xpose.msra.mxu0 0.0
        %5784 = vmatprep.subr.mxu0 0.0
        %5785 = vmatpush1.xpose.msra.mxu0 0.0
        %5786 = vmatprep.subr.mxu0 0.0
        %5787 = vmatpush1.xpose.msra.mxu0 0.0
        %5788 = vmatprep.subr.mxu0 0.0
        %5789 = vmatpush1.xpose.msra.mxu0 0.0
        %5790 = vmatprep.subr.mxu0 0.0
        %5791 = vmatpush1.xpose.msra.mxu0 0.0
        %5792 = vmatprep.subr.mxu0 0.0
        %5793 = vmatpush1.xpose.msra.mxu0 0.0
        %5794 = vmatprep.subr.mxu0 0.0
        %5795 = vmatpush1.xpose.msra.mxu0 0.0
        %5796 = vmatprep.subr.mxu0 0.0
        %5797 = vmatpush1.xpose.msra.mxu0 0.0
        %5798 = vmatprep.subr.mxu0 0.0
        %5799 = vmatpush1.xpose.msra.mxu0 0.0
        %5800 = vmatprep.subr.mxu0 0.0
        %5801 = vmatpush1.xpose.msra.mxu0 0.0
        %5802 = vmatprep.subr.mxu0 0.0
        %5803 = vmatpush1.xpose.msra.mxu0 0.0
        %5804 = vmatprep.subr.mxu0 0.0
        %5805 = vmatpush1.xpose.msra.mxu0 0.0
        %5806 = vmatprep.subr.mxu0 0.0
        %5807 = vmatpush1.xpose.msra.mxu0 0.0
        %5808 = vmatprep.subr.mxu0 0.0
        %5809 = vmatpush1.xpose.msra.mxu0 0.0
        %5810 = vmatprep.subr.mxu0 0.0
        %5811 = vmatpush1.xpose.msra.mxu0 0.0
        %5812 = vmatprep.subr.mxu0 0.0
        %5813 = vmatpush1.xpose.msra.mxu0 0.0
        %5814 = vmatprep.subr.mxu0 0.0
        %5815 = vmatpush1.xpose.msra.mxu0 0.0
        %5816 = vmatprep.subr.mxu0 0.0
        %5817 = vmatpush1.xpose.msra.mxu0 0.0
        %5818 = vmatprep.subr.mxu0 0.0
        %5819 = vmatpush1.xpose.msra.mxu0 0.0
        %5820 = vmatprep.mubr.f32.mxu0 0.0
        %5821 = vmatmul.mubr.f32.gmra.mrb[0].mxu0 %v5752
        %v5822 = vpop.f32.mrb[0].mxu0
        %v5823 = vadd.f32 0.0, %v5822
        %v5824 = vpop.f32.mrb[0].mxu0
        %5825 = vdwg.mxu0
        %v5826 = vsel %vm2596, %v5823, -inf
        %5827 = vmax.xlane.f32.xlu0 %v5826
        %v5828 = vpop.xlane.xlu0 %5827
        %v5829 = vsub.f32 %v5823, %v5828
        %v5830 = vmul.f32 %v5829, 1.442695
        %v5831 = vpow.pop %v5830
        %v5832 = vsel %vm2596, %v5831, 0.0
        %5833 = vadd.xlane.f32.xlu0 %v5832
        %v5834 = vpop.xlane.xlu0 %5833
        %v5835 = vrcp.pop %v5834
        %v5836 = vmul.f32 %v5831, %v5835
        %5837 = vrot.lane.b32.xlu0 %v5259, 48
        %v5838 = vpop.permute.xlu0 %5837
        %v5841 = vsel %vm2596, %v5836, 0
        %5843 = vmatprep.subr.mxu0 0.0
        %5844 = vmatpush1.msra.mxu0 %v5838
        %5845 = vmatprep.subr.mxu0 0.0
        %5846 = vmatpush1.msra.mxu0 0.0
        %5847 = vmatprep.subr.mxu0 0.0
        %5848 = vmatpush1.msra.mxu0 0.0
        %5849 = vmatprep.subr.mxu0 0.0
        %5850 = vmatpush1.msra.mxu0 0.0
        %5851 = vmatprep.subr.mxu0 0.0
        %5852 = vmatpush1.msra.mxu0 0.0
        %5853 = vmatprep.subr.mxu0 0.0
        %5854 = vmatpush1.msra.mxu0 0.0
        %5855 = vmatprep.subr.mxu0 0.0
        %5856 = vmatpush1.msra.mxu0 0.0
        %5857 = vmatprep.subr.mxu0 0.0
        %5858 = vmatpush1.msra.mxu0 0.0
        %5859 = vmatprep.subr.mxu0 0.0
        %5860 = vmatpush1.msra.mxu0 0.0
        %5861 = vmatprep.subr.mxu0 0.0
        %5862 = vmatpush1.msra.mxu0 0.0
        %5863 = vmatprep.subr.mxu0 0.0
        %5864 = vmatpush1.msra.mxu0 0.0
        %5865 = vmatprep.subr.mxu0 0.0
        %5866 = vmatpush1.msra.mxu0 0.0
        %5867 = vmatprep.subr.mxu0 0.0
        %5868 = vmatpush1.msra.mxu0 0.0
        %5869 = vmatprep.subr.mxu0 0.0
        %5870 = vmatpush1.msra.mxu0 0.0
        %5871 = vmatprep.subr.mxu0 0.0
        %5872 = vmatpush1.msra.mxu0 0.0
        %5873 = vmatprep.subr.mxu0 0.0
        %5874 = vmatpush1.msra.mxu0 0.0
        %5875 = vmatprep.subr.mxu0 0.0
        %5876 = vmatpush1.msra.mxu0 0.0
        %5877 = vmatprep.subr.mxu0 0.0
        %5878 = vmatpush1.msra.mxu0 0.0
        %5879 = vmatprep.subr.mxu0 0.0
        %5880 = vmatpush1.msra.mxu0 0.0
        %5881 = vmatprep.subr.mxu0 0.0
        %5882 = vmatpush1.msra.mxu0 0.0
        %5883 = vmatprep.subr.mxu0 0.0
        %5884 = vmatpush1.msra.mxu0 0.0
        %5885 = vmatprep.subr.mxu0 0.0
        %5886 = vmatpush1.msra.mxu0 0.0
        %5887 = vmatprep.subr.mxu0 0.0
        %5888 = vmatpush1.msra.mxu0 0.0
        %5889 = vmatprep.subr.mxu0 0.0
        %5890 = vmatpush1.msra.mxu0 0.0
        %5891 = vmatprep.subr.mxu0 0.0
        %5892 = vmatpush1.msra.mxu0 0.0
        %5893 = vmatprep.subr.mxu0 0.0
        %5894 = vmatpush1.msra.mxu0 0.0
        %5895 = vmatprep.subr.mxu0 0.0
        %5896 = vmatpush1.msra.mxu0 0.0
        %5897 = vmatprep.subr.mxu0 0.0
        %5898 = vmatpush1.msra.mxu0 0.0
        %5899 = vmatprep.subr.mxu0 0.0
        %5900 = vmatpush1.msra.mxu0 0.0
        %5901 = vmatprep.subr.mxu0 0.0
        %5902 = vmatpush1.msra.mxu0 0.0
        %5903 = vmatprep.subr.mxu0 0.0
        %5904 = vmatpush1.msra.mxu0 0.0
        %5905 = vmatprep.subr.mxu0 0.0
        %5906 = vmatpush1.msra.mxu0 0.0
        %5907 = vmatprep.mubr.f32.mxu0 0.0
        %5908 = vmatmul.mubr.f32.gmra.mrb[0].mxu0 %v5841
        %v5909 = vpop.f32.mrb[0].mxu0
        %v5910 = vadd.f32 0.0, %v5909
        %v5911 = vpop.f32.mrb[0].mxu0
        %5912 = vdwg.mxu0
        %v5914 = vsel %vm2596, %v5910, 0
        %5916 = vmatprep.subr.mxu0 0.0
        %5917 = vmatpush1.msra.mxu0 %v5113
        %5918 = vmatprep.subr.mxu0 0.0
        %5919 = vmatpush1.msra.mxu0 0.0
        %5920 = vmatprep.subr.mxu0 0.0
        %5921 = vmatpush1.msra.mxu0 0.0
        %5922 = vmatprep.subr.mxu0 0.0
        %5923 = vmatpush1.msra.mxu0 0.0
        %5924 = vmatprep.subr.mxu0 0.0
        %5925 = vmatpush1.msra.mxu0 0.0
        %5926 = vmatprep.subr.mxu0 0.0
        %5927 = vmatpush1.msra.mxu0 0.0
        %5928 = vmatprep.subr.mxu0 0.0
        %5929 = vmatpush1.msra.mxu0 0.0
        %5930 = vmatprep.subr.mxu0 0.0
        %5931 = vmatpush1.msra.mxu0 0.0
        %5932 = vmatprep.subr.mxu0 0.0
        %5933 = vmatpush1.msra.mxu0 0.0
        %5934 = vmatprep.subr.mxu0 0.0
        %5935 = vmatpush1.msra.mxu0 0.0
        %5936 = vmatprep.subr.mxu0 0.0
        %5937 = vmatpush1.msra.mxu0 0.0
        %5938 = vmatprep.subr.mxu0 0.0
        %5939 = vmatpush1.msra.mxu0 0.0
        %5940 = vmatprep.subr.mxu0 0.0
        %5941 = vmatpush1.msra.mxu0 0.0
        %5942 = vmatprep.subr.mxu0 0.0
        %5943 = vmatpush1.msra.mxu0 0.0
        %5944 = vmatprep.subr.mxu0 0.0
        %5945 = vmatpush1.msra.mxu0 0.0
        %5946 = vmatprep.subr.mxu0 0.0
        %5947 = vmatpush1.msra.mxu0 0.0
        %5948 = vmatprep.subr.mxu0 0.0
        %5949 = vmatpush1.msra.mxu0 0.0
        %5950 = vmatprep.subr.mxu0 0.0
        %5951 = vmatpush1.msra.mxu0 0.0
        %5952 = vmatprep.subr.mxu0 0.0
        %5953 = vmatpush1.msra.mxu0 0.0
        %5954 = vmatprep.subr.mxu0 0.0
        %5955 = vmatpush1.msra.mxu0 0.0
        %5956 = vmatprep.subr.mxu0 0.0
        %5957 = vmatpush1.msra.mxu0 0.0
        %5958 = vmatprep.subr.mxu0 0.0
        %5959 = vmatpush1.msra.mxu0 0.0
        %5960 = vmatprep.subr.mxu0 0.0
        %5961 = vmatpush1.msra.mxu0 0.0
        %5962 = vmatprep.subr.mxu0 0.0
        %5963 = vmatpush1.msra.mxu0 0.0
        %5964 = vmatprep.subr.mxu0 0.0
        %5965 = vmatpush1.msra.mxu0 0.0
        %5966 = vmatprep.subr.mxu0 0.0
        %5967 = vmatpush1.msra.mxu0 0.0
        %5968 = vmatprep.subr.mxu0 0.0
        %5969 = vmatpush1.msra.mxu0 0.0
        %5970 = vmatprep.subr.mxu0 0.0
        %5971 = vmatpush1.msra.mxu0 0.0
        %5972 = vmatprep.subr.mxu0 0.0
        %5973 = vmatpush1.msra.mxu0 0.0
        %5974 = vmatprep.subr.mxu0 0.0
        %5975 = vmatpush1.msra.mxu0 0.0
        %5976 = vmatprep.subr.mxu0 0.0
        %5977 = vmatpush1.msra.mxu0 0.0
        %5978 = vmatprep.subr.mxu0 0.0
        %5979 = vmatpush1.msra.mxu0 0.0
        %5980 = vmatprep.mubr.f32.mxu0 0.0
        %5981 = vmatmul.mubr.f32.gmra.mrb[0].mxu0 %v5914
        %v5982 = vpop.f32.mrb[0].mxu0
        %v5983 = vadd.f32 0.0, %v5982
        %v5984 = vpop.f32.mrb[0].mxu0
        %5985 = vdwg.mxu0
        %v5986 = vadd.f32 %v5747, %v5983
        %5987 = vrot.lane.b32.xlu0 %v5269, 104
        %v5988 = vpop.permute.xlu0 %5987
        %5989 = vrot.lane.b32.xlu0 %v5259, 72
        %v5990 = vpop.permute.xlu0 %5989
        %v5991 = vsel %vm2596, %v5988, 0
        %v5993 = vsel %vm2596, %v5990, 0
        %5995 = vmatprep.subr.mxu0 0.0
        %5996 = vmatpush1.xpose.msra.mxu0 %v5993
        %5997 = vmatprep.subr.mxu0 0.0
        %5998 = vmatpush1.xpose.msra.mxu0 0.0
        %5999 = vmatprep.subr.mxu0 0.0
        %6000 = vmatpush1.xpose.msra.mxu0 0.0
        %6001 = vmatprep.subr.mxu0 0.0
        %6002 = vmatpush1.xpose.msra.mxu0 0.0
        %6003 = vmatprep.subr.mxu0 0.0
        %6004 = vmatpush1.xpose.msra.mxu0 0.0
        %6005 = vmatprep.subr.mxu0 0.0
        %6006 = vmatpush1.xpose.msra.mxu0 0.0
        %6007 = vmatprep.subr.mxu0 0.0
        %6008 = vmatpush1.xpose.msra.mxu0 0.0
        %6009 = vmatprep.subr.mxu0 0.0
        %6010 = vmatpush1.xpose.msra.mxu0 0.0
        %6011 = vmatprep.subr.mxu0 0.0
        %6012 = vmatpush1.xpose.msra.mxu0 0.0
        %6013 = vmatprep.subr.mxu0 0.0
        %6014 = vmatpush1.xpose.msra.mxu0 0.0
        %6015 = vmatprep.subr.mxu0 0.0
        %6016 = vmatpush1.xpose.msra.mxu0 0.0
        %6017 = vmatprep.subr.mxu0 0.0
        %6018 = vmatpush1.xpose.msra.mxu0 0.0
        %6019 = vmatprep.subr.mxu0 0.0
        %6020 = vmatpush1.xpose.msra.mxu0 0.0
        %6021 = vmatprep.subr.mxu0 0.0
        %6022 = vmatpush1.xpose.msra.mxu0 0.0
        %6023 = vmatprep.subr.mxu0 0.0
        %6024 = vmatpush1.xpose.msra.mxu0 0.0
        %6025 = vmatprep.subr.mxu0 0.0
        %6026 = vmatpush1.xpose.msra.mxu0 0.0
        %6027 = vmatprep.subr.mxu0 0.0
        %6028 = vmatpush1.xpose.msra.mxu0 0.0
        %6029 = vmatprep.subr.mxu0 0.0
        %6030 = vmatpush1.xpose.msra.mxu0 0.0
        %6031 = vmatprep.subr.mxu0 0.0
        %6032 = vmatpush1.xpose.msra.mxu0 0.0
        %6033 = vmatprep.subr.mxu0 0.0
        %6034 = vmatpush1.xpose.msra.mxu0 0.0
        %6035 = vmatprep.subr.mxu0 0.0
        %6036 = vmatpush1.xpose.msra.mxu0 0.0
        %6037 = vmatprep.subr.mxu0 0.0
        %6038 = vmatpush1.xpose.msra.mxu0 0.0
        %6039 = vmatprep.subr.mxu0 0.0
        %6040 = vmatpush1.xpose.msra.mxu0 0.0
        %6041 = vmatprep.subr.mxu0 0.0
        %6042 = vmatpush1.xpose.msra.mxu0 0.0
        %6043 = vmatprep.subr.mxu0 0.0
        %6044 = vmatpush1.xpose.msra.mxu0 0.0
        %6045 = vmatprep.subr.mxu0 0.0
        %6046 = vmatpush1.xpose.msra.mxu0 0.0
        %6047 = vmatprep.subr.mxu0 0.0
        %6048 = vmatpush1.xpose.msra.mxu0 0.0
        %6049 = vmatprep.subr.mxu0 0.0
        %6050 = vmatpush1.xpose.msra.mxu0 0.0
        %6051 = vmatprep.subr.mxu0 0.0
        %6052 = vmatpush1.xpose.msra.mxu0 0.0
        %6053 = vmatprep.subr.mxu0 0.0
        %6054 = vmatpush1.xpose.msra.mxu0 0.0
        %6055 = vmatprep.subr.mxu0 0.0
        %6056 = vmatpush1.xpose.msra.mxu0 0.0
        %6057 = vmatprep.subr.mxu0 0.0
        %6058 = vmatpush1.xpose.msra.mxu0 0.0
        %6059 = vmatprep.mubr.f32.mxu0 0.0
        %6060 = vmatmul.mubr.f32.gmra.mrb[0].mxu0 %v5991
        %v6061 = vpop.f32.mrb[0].mxu0
        %v6062 = vadd.f32 0.0, %v6061
        %v6063 = vpop.f32.mrb[0].mxu0
        %6064 = vdwg.mxu0
        %v6065 = vsel %vm2596, %v6062, -inf
        %6066 = vmax.xlane.f32.xlu0 %v6065
        %v6067 = vpop.xlane.xlu0 %6066
        %v6068 = vsub.f32 %v6062, %v6067
        %v6069 = vmul.f32 %v6068, 1.442695
        %v6070 = vpow.pop %v6069
        %v6071 = vsel %vm2596, %v6070, 0.0
        %6072 = vadd.xlane.f32.xlu0 %v6071
        %v6073 = vpop.xlane.xlu0 %6072
        %v6074 = vrcp.pop %v6073
        %v6075 = vmul.f32 %v6070, %v6074
        %6076 = vrot.lane.b32.xlu0 %v5259, 40
        %v6077 = vpop.permute.xlu0 %6076
        %v6080 = vsel %vm2596, %v6075, 0
        %6082 = vmatprep.subr.mxu0 0.0
        %6083 = vmatpush1.msra.mxu0 %v6077
        %6084 = vmatprep.subr.mxu0 0.0
        %6085 = vmatpush1.msra.mxu0 0.0
        %6086 = vmatprep.subr.mxu0 0.0
        %6087 = vmatpush1.msra.mxu0 0.0
        %6088 = vmatprep.subr.mxu0 0.0
        %6089 = vmatpush1.msra.mxu0 0.0
        %6090 = vmatprep.subr.mxu0 0.0
        %6091 = vmatpush1.msra.mxu0 0.0
        %6092 = vmatprep.subr.mxu0 0.0
        %6093 = vmatpush1.msra.mxu0 0.0
        %6094 = vmatprep.subr.mxu0 0.0
        %6095 = vmatpush1.msra.mxu0 0.0
        %6096 = vmatprep.subr.mxu0 0.0
        %6097 = vmatpush1.msra.mxu0 0.0
        %6098 = vmatprep.subr.mxu0 0.0
        %6099 = vmatpush1.msra.mxu0 0.0
        %6100 = vmatprep.subr.mxu0 0.0
        %6101 = vmatpush1.msra.mxu0 0.0
        %6102 = vmatprep.subr.mxu0 0.0
        %6103 = vmatpush1.msra.mxu0 0.0
        %6104 = vmatprep.subr.mxu0 0.0
        %6105 = vmatpush1.msra.mxu0 0.0
        %6106 = vmatprep.subr.mxu0 0.0
        %6107 = vmatpush1.msra.mxu0 0.0
        %6108 = vmatprep.subr.mxu0 0.0
        %6109 = vmatpush1.msra.mxu0 0.0
        %6110 = vmatprep.subr.mxu0 0.0
        %6111 = vmatpush1.msra.mxu0 0.0
        %6112 = vmatprep.subr.mxu0 0.0
        %6113 = vmatpush1.msra.mxu0 0.0
        %6114 = vmatprep.subr.mxu0 0.0
        %6115 = vmatpush1.msra.mxu0 0.0
        %6116 = vmatprep.subr.mxu0 0.0
        %6117 = vmatpush1.msra.mxu0 0.0
        %6118 = vmatprep.subr.mxu0 0.0
        %6119 = vmatpush1.msra.mxu0 0.0
        %6120 = vmatprep.subr.mxu0 0.0
        %6121 = vmatpush1.msra.mxu0 0.0
        %6122 = vmatprep.subr.mxu0 0.0
        %6123 = vmatpush1.msra.mxu0 0.0
        %6124 = vmatprep.subr.mxu0 0.0
        %6125 = vmatpush1.msra.mxu0 0.0
        %6126 = vmatprep.subr.mxu0 0.0
        %6127 = vmatpush1.msra.mxu0 0.0
        %6128 = vmatprep.subr.mxu0 0.0
        %6129 = vmatpush1.msra.mxu0 0.0
        %6130 = vmatprep.subr.mxu0 0.0
        %6131 = vmatpush1.msra.mxu0 0.0
        %6132 = vmatprep.subr.mxu0 0.0
        %6133 = vmatpush1.msra.mxu0 0.0
        %6134 = vmatprep.subr.mxu0 0.0
        %6135 = vmatpush1.msra.mxu0 0.0
        %6136 = vmatprep.subr.mxu0 0.0
        %6137 = vmatpush1.msra.mxu0 0.0
        %6138 = vmatprep.subr.mxu0 0.0
        %6139 = vmatpush1.msra.mxu0 0.0
        %6140 = vmatprep.subr.mxu0 0.0
        %6141 = vmatpush1.msra.mxu0 0.0
        %6142 = vmatprep.subr.mxu0 0.0
        %6143 = vmatpush1.msra.mxu0 0.0
        %6144 = vmatprep.subr.mxu0 0.0
        %6145 = vmatpush1.msra.mxu0 0.0
        %6146 = vmatprep.mubr.f32.mxu0 0.0
        %6147 = vmatmul.mubr.f32.gmra.mrb[0].mxu0 %v6080
        %v6148 = vpop.f32.mrb[0].mxu0
        %v6149 = vadd.f32 0.0, %v6148
        %v6150 = vpop.f32.mrb[0].mxu0
        %6151 = vdwg.mxu0
        %v6153 = vsel %vm2596, %v6149, 0
        %6155 = vmatprep.subr.mxu0 0.0
        %6156 = vmatpush1.msra.mxu0 %v5114
        %6157 = vmatprep.subr.mxu0 0.0
        %6158 = vmatpush1.msra.mxu0 0.0
        %6159 = vmatprep.subr.mxu0 0.0
        %6160 = vmatpush1.msra.mxu0 0.0
        %6161 = vmatprep.subr.mxu0 0.0
        %6162 = vmatpush1.msra.mxu0 0.0
        %6163 = vmatprep.subr.mxu0 0.0
        %6164 = vmatpush1.msra.mxu0 0.0
        %6165 = vmatprep.subr.mxu0 0.0
        %6166 = vmatpush1.msra.mxu0 0.0
        %6167 = vmatprep.subr.mxu0 0.0
        %6168 = vmatpush1.msra.mxu0 0.0
        %6169 = vmatprep.subr.mxu0 0.0
        %6170 = vmatpush1.msra.mxu0 0.0
        %6171 = vmatprep.subr.mxu0 0.0
        %6172 = vmatpush1.msra.mxu0 0.0
        %6173 = vmatprep.subr.mxu0 0.0
        %6174 = vmatpush1.msra.mxu0 0.0
        %6175 = vmatprep.subr.mxu0 0.0
        %6176 = vmatpush1.msra.mxu0 0.0
        %6177 = vmatprep.subr.mxu0 0.0
        %6178 = vmatpush1.msra.mxu0 0.0
        %6179 = vmatprep.subr.mxu0 0.0
        %6180 = vmatpush1.msra.mxu0 0.0
        %6181 = vmatprep.subr.mxu0 0.0
        %6182 = vmatpush1.msra.mxu0 0.0
        %6183 = vmatprep.subr.mxu0 0.0
        %6184 = vmatpush1.msra.mxu0 0.0
        %6185 = vmatprep.subr.mxu0 0.0
        %6186 = vmatpush1.msra.mxu0 0.0
        %6187 = vmatprep.subr.mxu0 0.0
        %6188 = vmatpush1.msra.mxu0 0.0
        %6189 = vmatprep.subr.mxu0 0.0
        %6190 = vmatpush1.msra.mxu0 0.0
        %6191 = vmatprep.subr.mxu0 0.0
        %6192 = vmatpush1.msra.mxu0 0.0
        %6193 = vmatprep.subr.mxu0 0.0
        %6194 = vmatpush1.msra.mxu0 0.0
        %6195 = vmatprep.subr.mxu0 0.0
        %6196 = vmatpush1.msra.mxu0 0.0
        %6197 = vmatprep.subr.mxu0 0.0
        %6198 = vmatpush1.msra.mxu0 0.0
        %6199 = vmatprep.subr.mxu0 0.0
        %6200 = vmatpush1.msra.mxu0 0.0
        %6201 = vmatprep.subr.mxu0 0.0
        %6202 = vmatpush1.msra.mxu0 0.0
        %6203 = vmatprep.subr.mxu0 0.0
        %6204 = vmatpush1.msra.mxu0 0.0
        %6205 = vmatprep.subr.mxu0 0.0
        %6206 = vmatpush1.msra.mxu0 0.0
        %6207 = vmatprep.subr.mxu0 0.0
        %6208 = vmatpush1.msra.mxu0 0.0
        %6209 = vmatprep.subr.mxu0 0.0
        %6210 = vmatpush1.msra.mxu0 0.0
        %6211 = vmatprep.subr.mxu0 0.0
        %6212 = vmatpush1.msra.mxu0 0.0
        %6213 = vmatprep.subr.mxu0 0.0
        %6214 = vmatpush1.msra.mxu0 0.0
        %6215 = vmatprep.subr.mxu0 0.0
        %6216 = vmatpush1.msra.mxu0 0.0
        %6217 = vmatprep.subr.mxu0 0.0
        %6218 = vmatpush1.msra.mxu0 0.0
        %6219 = vmatprep.mubr.f32.mxu0 0.0
        %6220 = vmatmul.mubr.f32.gmra.mrb[0].mxu0 %v6153
        %v6221 = vpop.f32.mrb[0].mxu0
        %v6222 = vadd.f32 0.0, %v6221
        %v6223 = vpop.f32.mrb[0].mxu0
        %6224 = vdwg.mxu0
        %v6225 = vadd.f32 %v5986, %v6222
        %v6226 = vadd.f32 %v5102, %v6225
        %v6227 = vsel %vm2359, %v6226, 0.0
        %6228 = vadd.xlane.f32.xlu0 %v6227
        %v6229 = vpop.xlane.xlu0 %6228
        %v6230 = vmul.f32 %v6229, %v3554
        %v6231 = vsub.f32 %v6226, %v6230
        %v6232 = vmul.f32 %v6231, %v6231
        %v6233 = vsel %vm2359, %v6232, 0.0
        %6234 = vadd.xlane.f32.xlu0 %v6233
        %v6235 = vpop.xlane.xlu0 %6234
        %v6236 = vmul.f32 %v6235, %v3554
        %v6237 = vadd.f32 %v6236, 1e-05
        %v6238 = vrsqrt.pop %v6237
        %v6239 = vmul.f32 %v6231, %v6238
        %v6241 = vlaneseq
        %v6242 = vshrl.u32 %v6241, 7
        %v6243 = vsub.s32 0, %v6242
        %v6244 = vrot.slane %v5118, %v6243
        %v6246 = vmul.f32 %v6239, %v6244
        %v6248 = vlaneseq
        %v6249 = vshrl.u32 %v6248, 7
        %v6250 = vsub.s32 0, %v6249
        %v6251 = vrot.slane %v5120, %v6250
        %v6253 = vadd.f32 %v6246, %v6251
        %v6255 = vlaneseq
        %v6256 = vshrl.u32 %v6255, 7
        %v6257 = vsub.s32 0, %v6256
        %v6258 = vrot.slane %v5127, %v6257
        %v6261 = vsel %vm2359, %v6253, 0
        %6263 = vmatprep.subr.mxu0 0.0
        %6264 = vmatpush1.msra.mxu0 %v5122
        %6265 = vmatprep.subr.mxu0 0.0
        %6266 = vmatpush1.msra.mxu0 %v5123
        %6267 = vmatprep.subr.mxu0 0.0
        %6268 = vmatpush1.msra.mxu0 %v5124
        %6269 = vmatprep.subr.mxu0 0.0
        %6270 = vmatpush1.msra.mxu0 %v5125
        %6271 = vmatprep.subr.mxu0 0.0
        %6272 = vmatpush1.msra.mxu0 0.0
        %6273 = vmatprep.subr.mxu0 0.0
        %6274 = vmatpush1.msra.mxu0 0.0
        %6275 = vmatprep.subr.mxu0 0.0
        %6276 = vmatpush1.msra.mxu0 0.0
        %6277 = vmatprep.subr.mxu0 0.0
        %6278 = vmatpush1.msra.mxu0 0.0
        %6279 = vmatprep.subr.mxu0 0.0
        %6280 = vmatpush1.msra.mxu0 0.0
        %6281 = vmatprep.subr.mxu0 0.0
        %6282 = vmatpush1.msra.mxu0 0.0
        %6283 = vmatprep.subr.mxu0 0.0
        %6284 = vmatpush1.msra.mxu0 0.0
        %6285 = vmatprep.subr.mxu0 0.0
        %6286 = vmatpush1.msra.mxu0 0.0
        %6287 = vmatprep.subr.mxu0 0.0
        %6288 = vmatpush1.msra.mxu0 0.0
        %6289 = vmatprep.subr.mxu0 0.0
        %6290 = vmatpush1.msra.mxu0 0.0
        %6291 = vmatprep.subr.mxu0 0.0
        %6292 = vmatpush1.msra.mxu0 0.0
        %6293 = vmatprep.subr.mxu0 0.0
        %6294 = vmatpush1.msra.mxu0 0.0
        %6295 = vmatprep.subr.mxu0 0.0
        %6296 = vmatpush1.msra.mxu0 0.0
        %6297 = vmatprep.subr.mxu0 0.0
        %6298 = vmatpush1.msra.mxu0 0.0
        %6299 = vmatprep.subr.mxu0 0.0
        %6300 = vmatpush1.msra.mxu0 0.0
        %6301 = vmatprep.subr.mxu0 0.0
        %6302 = vmatpush1.msra.mxu0 0.0
        %6303 = vmatprep.subr.mxu0 0.0
        %6304 = vmatpush1.msra.mxu0 0.0
        %6305 = vmatprep.subr.mxu0 0.0
        %6306 = vmatpush1.msra.mxu0 0.0
        %6307 = vmatprep.subr.mxu0 0.0
        %6308 = vmatpush1.msra.mxu0 0.0
        %6309 = vmatprep.subr.mxu0 0.0
        %6310 = vmatpush1.msra.mxu0 0.0
        %6311 = vmatprep.subr.mxu0 0.0
        %6312 = vmatpush1.msra.mxu0 0.0
        %6313 = vmatprep.subr.mxu0 0.0
        %6314 = vmatpush1.msra.mxu0 0.0
        %6315 = vmatprep.subr.mxu0 0.0
        %6316 = vmatpush1.msra.mxu0 0.0
        %6317 = vmatprep.subr.mxu0 0.0
        %6318 = vmatpush1.msra.mxu0 0.0
        %6319 = vmatprep.subr.mxu0 0.0
        %6320 = vmatpush1.msra.mxu0 0.0
        %6321 = vmatprep.subr.mxu0 0.0
        %6322 = vmatpush1.msra.mxu0 0.0
        %6323 = vmatprep.subr.mxu0 0.0
        %6324 = vmatpush1.msra.mxu0 0.0
        %6325 = vmatprep.subr.mxu0 0.0
        %6326 = vmatpush1.msra.mxu0 0.0
        %6327 = vmatprep.mubr.f32.mxu0 0.0
        %6328 = vmatmul.mubr.f32.gmra.mrb[0].mxu0 %v6261
        %v6329 = vpop.f32.mrb[0].mxu0
        %v6330 = vadd.f32 %v6258, %v6329
        %v6331 = vpop.f32.mrb[0].mxu0
        %6332 = vdwg.mxu0
        %v6333 = vmax.f32 %v6330, 0.0
        %v6335 = vlaneseq
        %v6336 = vshrl.u32 %v6335, 7
        %v6337 = vsub.s32 0, %v6336
        %v6338 = vrot.slane %v5138, %v6337
        %v6341 = vsel %vm3665, %v6333, 0
        %6343 = vmatprep.subr.mxu0 0.0
        %6344 = vmatpush1.msra.mxu0 %v5129
        %6345 = vmatprep.subr.mxu0 0.0
        %6346 = vmatpush1.msra.mxu0 %v5130
        %6347 = vmatprep.subr.mxu0 0.0
        %6348 = vmatpush1.msra.mxu0 %v5131
        %6349 = vmatprep.subr.mxu0 0.0
        %6350 = vmatpush1.msra.mxu0 %v5132
        %6351 = vmatprep.subr.mxu0 0.0
        %6352 = vmatpush1.msra.mxu0 %v5133
        %6353 = vmatprep.subr.mxu0 0.0
        %6354 = vmatpush1.msra.mxu0 %v5134
        %6355 = vmatprep.subr.mxu0 0.0
        %6356 = vmatpush1.msra.mxu0 %v5135
        %6357 = vmatprep.subr.mxu0 0.0
        %6358 = vmatpush1.msra.mxu0 %v5136
        %6359 = vmatprep.subr.mxu0 0.0
        %6360 = vmatpush1.msra.mxu0 0.0
        %6361 = vmatprep.subr.mxu0 0.0
        %6362 = vmatpush1.msra.mxu0 0.0
        %6363 = vmatprep.subr.mxu0 0.0
        %6364 = vmatpush1.msra.mxu0 0.0
        %6365 = vmatprep.subr.mxu0 0.0
        %6366 = vmatpush1.msra.mxu0 0.0
        %6367 = vmatprep.subr.mxu0 0.0
        %6368 = vmatpush1.msra.mxu0 0.0
        %6369 = vmatprep.subr.mxu0 0.0
        %6370 = vmatpush1.msra.mxu0 0.0
        %6371 = vmatprep.subr.mxu0 0.0
        %6372 = vmatpush1.msra.mxu0 0.0
        %6373 = vmatprep.subr.mxu0 0.0
        %6374 = vmatpush1.msra.mxu0 0.0
        %6375 = vmatprep.subr.mxu0 0.0
        %6376 = vmatpush1.msra.mxu0 0.0
        %6377 = vmatprep.subr.mxu0 0.0
        %6378 = vmatpush1.msra.mxu0 0.0
        %6379 = vmatprep.subr.mxu0 0.0
        %6380 = vmatpush1.msra.mxu0 0.0
        %6381 = vmatprep.subr.mxu0 0.0
        %6382 = vmatpush1.msra.mxu0 0.0
        %6383 = vmatprep.subr.mxu0 0.0
        %6384 = vmatpush1.msra.mxu0 0.0
        %6385 = vmatprep.subr.mxu0 0.0
        %6386 = vmatpush1.msra.mxu0 0.0
        %6387 = vmatprep.subr.mxu0 0.0
        %6388 = vmatpush1.msra.mxu0 0.0
        %6389 = vmatprep.subr.mxu0 0.0
        %6390 = vmatpush1.msra.mxu0 0.0
        %6391 = vmatprep.subr.mxu0 0.0
        %6392 = vmatpush1.msra.mxu0 0.0
        %6393 = vmatprep.subr.mxu0 0.0
        %6394 = vmatpush1.msra.mxu0 0.0
        %6395 = vmatprep.subr.mxu0 0.0
        %6396 = vmatpush1.msra.mxu0 0.0
        %6397 = vmatprep.subr.mxu0 0.0
        %6398 = vmatpush1.msra.mxu0 0.0
        %6399 = vmatprep.subr.mxu0 0.0
        %6400 = vmatpush1.msra.mxu0 0.0
        %6401 = vmatprep.subr.mxu0 0.0
        %6402 = vmatpush1.msra.mxu0 0.0
        %6403 = vmatprep.subr.mxu0 0.0
        %6404 = vmatpush1.msra.mxu0 0.0
        %6405 = vmatprep.subr.mxu0 0.0
        %6406 = vmatpush1.msra.mxu0 0.0
        %6407 = vmatprep.mubr.f32.mxu0 0.0
        %6408 = vmatmul.mubr.f32.gmra.mrb[0].mxu0 %v6341
        %v6409 = vpop.f32.mrb[0].mxu0
        %v6410 = vadd.f32 %v6338, %v6409
        %v6411 = vpop.f32.mrb[0].mxu0
        %6412 = vdwg.mxu0
        %v6413 = vadd.f32 %v6253, %v6410
        %v6414 = vsel %vm2359, %v6413, 0.0
        %6415 = vadd.xlane.f32.xlu0 %v6414
        %v6416 = vpop.xlane.xlu0 %6415
        %v6417 = vmul.f32 %v6416, %v3554
        %v6418 = vsub.f32 %v6413, %v6417
        %v6419 = vmul.f32 %v6418, %v6418
        %v6420 = vsel %vm2359, %v6419, 0.0
        %6421 = vadd.xlane.f32.xlu0 %v6420
        %v6422 = vpop.xlane.xlu0 %6421
        %v6423 = vmul.f32 %v6422, %v3554
        %v6424 = vadd.f32 %v6423, 1e-05
        %v6425 = vrsqrt.pop %v6424
        %v6426 = vmul.f32 %v6418, %v6425
        %v6428 = vlaneseq
        %v6429 = vshrl.u32 %v6428, 7
        %v6430 = vsub.s32 0, %v6429
        %v6431 = vrot.slane %v5140, %v6430
        %v6433 = vmul.f32 %v6426, %v6431
        %v6435 = vlaneseq
        %v6436 = vshrl.u32 %v6435, 7
        %v6437 = vsub.s32 0, %v6436
        %v6438 = vrot.slane %v5142, %v6437
        %v6440 = vadd.f32 %v6433, %v6438
        %v6442 = vlaneseq
        %v6443 = vshrl.u32 %v6442, 7
        %v6444 = vsub.s32 0, %v6443
        %v6445 = vrot.slane %v5149, %v6444
        %6447 = vmatprep.subr.mxu0 0.0
        %6448 = vmatpush1.msra.mxu0 %v5144
        %6449 = vmatprep.subr.mxu0 0.0
        %6450 = vmatpush1.msra.mxu0 %v5145
        %6451 = vmatprep.subr.mxu0 0.0
        %6452 = vmatpush1.msra.mxu0 %v5146
        %6453 = vmatprep.subr.mxu0 0.0
        %6454 = vmatpush1.msra.mxu0 %v5147
        %6455 = vmatprep.subr.mxu0 0.0
        %6456 = vmatpush1.msra.mxu0 0.0
        %6457 = vmatprep.subr.mxu0 0.0
        %6458 = vmatpush1.msra.mxu0 0.0
        %6459 = vmatprep.subr.mxu0 0.0
        %6460 = vmatpush1.msra.mxu0 0.0
        %6461 = vmatprep.subr.mxu0 0.0
        %6462 = vmatpush1.msra.mxu0 0.0
        %6463 = vmatprep.subr.mxu0 0.0
        %6464 = vmatpush1.msra.mxu0 0.0
        %6465 = vmatprep.subr.mxu0 0.0
        %6466 = vmatpush1.msra.mxu0 0.0
        %6467 = vmatprep.subr.mxu0 0.0
        %6468 = vmatpush1.msra.mxu0 0.0
        %6469 = vmatprep.subr.mxu0 0.0
        %6470 = vmatpush1.msra.mxu0 0.0
        %6471 = vmatprep.subr.mxu0 0.0
        %6472 = vmatpush1.msra.mxu0 0.0
        %6473 = vmatprep.subr.mxu0 0.0
        %6474 = vmatpush1.msra.mxu0 0.0
        %6475 = vmatprep.subr.mxu0 0.0
        %6476 = vmatpush1.msra.mxu0 0.0
        %6477 = vmatprep.subr.mxu0 0.0
        %6478 = vmatpush1.msra.mxu0 0.0
        %6479 = vmatprep.subr.mxu0 0.0
        %6480 = vmatpush1.msra.mxu0 0.0
        %6481 = vmatprep.subr.mxu0 0.0
        %6482 = vmatpush1.msra.mxu0 0.0
        %6483 = vmatprep.subr.mxu0 0.0
        %6484 = vmatpush1.msra.mxu0 0.0
        %6485 = vmatprep.subr.mxu0 0.0
        %6486 = vmatpush1.msra.mxu0 0.0
        %6487 = vmatprep.subr.mxu0 0.0
        %6488 = vmatpush1.msra.mxu0 0.0
        %6489 = vmatprep.subr.mxu0 0.0
        %6490 = vmatpush1.msra.mxu0 0.0
        %6491 = vmatprep.subr.mxu0 0.0
        %6492 = vmatpush1.msra.mxu0 0.0
        %6493 = vmatprep.subr.mxu0 0.0
        %6494 = vmatpush1.msra.mxu0 0.0
        %6495 = vmatprep.subr.mxu0 0.0
        %6496 = vmatpush1.msra.mxu0 0.0
        %6497 = vmatprep.subr.mxu0 0.0
        %6498 = vmatpush1.msra.mxu0 0.0
        %6499 = vmatprep.subr.mxu0 0.0
        %6500 = vmatpush1.msra.mxu0 0.0
        %6501 = vmatprep.subr.mxu0 0.0
        %6502 = vmatpush1.msra.mxu0 0.0
        %6503 = vmatprep.subr.mxu0 0.0
        %6504 = vmatpush1.msra.mxu0 0.0
        %6505 = vmatprep.subr.mxu0 0.0
        %6506 = vmatpush1.msra.mxu0 0.0
        %6507 = vmatprep.subr.mxu0 0.0
        %6508 = vmatpush1.msra.mxu0 0.0
        %6509 = vmatprep.subr.mxu0 0.0
        %6510 = vmatpush1.msra.mxu0 0.0
        %6511 = vmatprep.mubr.f32.mxu0 0.0
        %6512 = vmatmul.mubr.f32.gmra.mrb[0].mxu0 %v5030
        %v6513 = vpop.f32.mrb[0].mxu0
        %v6514 = vadd.f32 %v6445, %v6513
        %v6515 = vpop.f32.mrb[0].mxu0
        %6516 = vdwg.mxu0
        %v6518 = vlaneseq
        %v6519 = vshrl.u32 %v6518, 7
        %v6520 = vsub.s32 0, %v6519
        %v6521 = vrot.slane %v5156, %v6520
        %v6523 = vadd.f32 %v6521, 0.0
        %v6524 = vmul.f32 %v6514, 0.35355338
        %6526 = vrot.lane.b32.xlu0 %v6514, 96
        %v6527 = vpop.permute.xlu0 %6526
        %v6529 = vsel %vm2596, %v6524, 0
        %v6531 = vsel %vm2596, %v6527, 0
        %6533 = vmatprep.subr.mxu0 0.0
        %6534 = vmatpush1.xpose.msra.mxu0 %v6531
        %6535 = vmatprep.subr.mxu0 0.0
        %6536 = vmatpush1.xpose.msra.mxu0 0.0
        %6537 = vmatprep.subr.mxu0 0.0
        %6538 = vmatpush1.xpose.msra.mxu0 0.0
        %6539 = vmatprep.subr.mxu0 0.0
        %6540 = vmatpush1.xpose.msra.mxu0 0.0
        %6541 = vmatprep.subr.mxu0 0.0
        %6542 = vmatpush1.xpose.msra.mxu0 0.0
        %6543 = vmatprep.subr.mxu0 0.0
        %6544 = vmatpush1.xpose.msra.mxu0 0.0
        %6545 = vmatprep.subr.mxu0 0.0
        %6546 = vmatpush1.xpose.msra.mxu0 0.0
        %6547 = vmatprep.subr.mxu0 0.0
        %6548 = vmatpush1.xpose.msra.mxu0 0.0
        %6549 = vmatprep.subr.mxu0 0.0
        %6550 = vmatpush1.xpose.msra.mxu0 0.0
        %6551 = vmatprep.subr.mxu0 0.0
        %6552 = vmatpush1.xpose.msra.mxu0 0.0
        %6553 = vmatprep.subr.mxu0 0.0
        %6554 = vmatpush1.xpose.msra.mxu0 0.0
        %6555 = vmatprep.subr.mxu0 0.0
        %6556 = vmatpush1.xpose.msra.mxu0 0.0
        %6557 = vmatprep.subr.mxu0 0.0
        %6558 = vmatpush1.xpose.msra.mxu0 0.0
        %6559 = vmatprep.subr.mxu0 0.0
        %6560 = vmatpush1.xpose.msra.mxu0 0.0
        %6561 = vmatprep.subr.mxu0 0.0
        %6562 = vmatpush1.xpose.msra.mxu0 0.0
        %6563 = vmatprep.subr.mxu0 0.0
        %6564 = vmatpush1.xpose.msra.mxu0 0.0
        %6565 = vmatprep.subr.mxu0 0.0
        %6566 = vmatpush1.xpose.msra.mxu0 0.0
        %6567 = vmatprep.subr.mxu0 0.0
        %6568 = vmatpush1.xpose.msra.mxu0 0.0
        %6569 = vmatprep.subr.mxu0 0.0
        %6570 = vmatpush1.xpose.msra.mxu0 0.0
        %6571 = vmatprep.subr.mxu0 0.0
        %6572 = vmatpush1.xpose.msra.mxu0 0.0
        %6573 = vmatprep.subr.mxu0 0.0
        %6574 = vmatpush1.xpose.msra.mxu0 0.0
        %6575 = vmatprep.subr.mxu0 0.0
        %6576 = vmatpush1.xpose.msra.mxu0 0.0
        %6577 = vmatprep.subr.mxu0 0.0
        %6578 = vmatpush1.xpose.msra.mxu0 0.0
        %6579 = vmatprep.subr.mxu0 0.0
        %6580 = vmatpush1.xpose.msra.mxu0 0.0
        %6581 = vmatprep.subr.mxu0 0.0
        %6582 = vmatpush1.xpose.msra.mxu0 0.0
        %6583 = vmatprep.subr.mxu0 0.0
        %6584 = vmatpush1.xpose.msra.mxu0 0.0
        %6585 = vmatprep.subr.mxu0 0.0
        %6586 = vmatpush1.xpose.msra.mxu0 0.0
        %6587 = vmatprep.subr.mxu0 0.0
        %6588 = vmatpush1.xpose.msra.mxu0 0.0
        %6589 = vmatprep.subr.mxu0 0.0
        %6590 = vmatpush1.xpose.msra.mxu0 0.0
        %6591 = vmatprep.subr.mxu0 0.0
        %6592 = vmatpush1.xpose.msra.mxu0 0.0
        %6593 = vmatprep.subr.mxu0 0.0
        %6594 = vmatpush1.xpose.msra.mxu0 0.0
        %6595 = vmatprep.subr.mxu0 0.0
        %6596 = vmatpush1.xpose.msra.mxu0 0.0
        %6597 = vmatprep.mubr.f32.mxu0 0.0
        %6598 = vmatmul.mubr.f32.gmra.mrb[0].mxu0 %v6529
        %v6599 = vpop.f32.mrb[0].mxu0
        %v6600 = vadd.f32 0.0, %v6599
        %v6601 = vpop.f32.mrb[0].mxu0
        %6602 = vdwg.mxu0
        %v6603 = vsel %vm2596, %v6600, -inf
        %6604 = vmax.xlane.f32.xlu0 %v6603
        %v6605 = vpop.xlane.xlu0 %6604
        %v6606 = vsub.f32 %v6600, %v6605
        %v6607 = vmul.f32 %v6606, 1.442695
        %v6608 = vpow.pop %v6607
        %v6609 = vsel %vm2596, %v6608, 0.0
        %6610 = vadd.xlane.f32.xlu0 %v6609
        %v6611 = vpop.xlane.xlu0 %6610
        %v6612 = vrcp.pop %v6611
        %v6613 = vmul.f32 %v6608, %v6612
        %6614 = vrot.lane.b32.xlu0 %v6514, 64
        %v6615 = vpop.permute.xlu0 %6614
        %v6618 = vsel %vm2596, %v6613, 0
        %6620 = vmatprep.subr.mxu0 0.0
        %6621 = vmatpush1.msra.mxu0 %v6615
        %6622 = vmatprep.subr.mxu0 0.0
        %6623 = vmatpush1.msra.mxu0 0.0
        %6624 = vmatprep.subr.mxu0 0.0
        %6625 = vmatpush1.msra.mxu0 0.0
        %6626 = vmatprep.subr.mxu0 0.0
        %6627 = vmatpush1.msra.mxu0 0.0
        %6628 = vmatprep.subr.mxu0 0.0
        %6629 = vmatpush1.msra.mxu0 0.0
        %6630 = vmatprep.subr.mxu0 0.0
        %6631 = vmatpush1.msra.mxu0 0.0
        %6632 = vmatprep.subr.mxu0 0.0
        %6633 = vmatpush1.msra.mxu0 0.0
        %6634 = vmatprep.subr.mxu0 0.0
        %6635 = vmatpush1.msra.mxu0 0.0
        %6636 = vmatprep.subr.mxu0 0.0
        %6637 = vmatpush1.msra.mxu0 0.0
        %6638 = vmatprep.subr.mxu0 0.0
        %6639 = vmatpush1.msra.mxu0 0.0
        %6640 = vmatprep.subr.mxu0 0.0
        %6641 = vmatpush1.msra.mxu0 0.0
        %6642 = vmatprep.subr.mxu0 0.0
        %6643 = vmatpush1.msra.mxu0 0.0
        %6644 = vmatprep.subr.mxu0 0.0
        %6645 = vmatpush1.msra.mxu0 0.0
        %6646 = vmatprep.subr.mxu0 0.0
        %6647 = vmatpush1.msra.mxu0 0.0
        %6648 = vmatprep.subr.mxu0 0.0
        %6649 = vmatpush1.msra.mxu0 0.0
        %6650 = vmatprep.subr.mxu0 0.0
        %6651 = vmatpush1.msra.mxu0 0.0
        %6652 = vmatprep.subr.mxu0 0.0
        %6653 = vmatpush1.msra.mxu0 0.0
        %6654 = vmatprep.subr.mxu0 0.0
        %6655 = vmatpush1.msra.mxu0 0.0
        %6656 = vmatprep.subr.mxu0 0.0
        %6657 = vmatpush1.msra.mxu0 0.0
        %6658 = vmatprep.subr.mxu0 0.0
        %6659 = vmatpush1.msra.mxu0 0.0
        %6660 = vmatprep.subr.mxu0 0.0
        %6661 = vmatpush1.msra.mxu0 0.0
        %6662 = vmatprep.subr.mxu0 0.0
        %6663 = vmatpush1.msra.mxu0 0.0
        %6664 = vmatprep.subr.mxu0 0.0
        %6665 = vmatpush1.msra.mxu0 0.0
        %6666 = vmatprep.subr.mxu0 0.0
        %6667 = vmatpush1.msra.mxu0 0.0
        %6668 = vmatprep.subr.mxu0 0.0
        %6669 = vmatpush1.msra.mxu0 0.0
        %6670 = vmatprep.subr.mxu0 0.0
        %6671 = vmatpush1.msra.mxu0 0.0
        %6672 = vmatprep.subr.mxu0 0.0
        %6673 = vmatpush1.msra.mxu0 0.0
        %6674 = vmatprep.subr.mxu0 0.0
        %6675 = vmatpush1.msra.mxu0 0.0
        %6676 = vmatprep.subr.mxu0 0.0
        %6677 = vmatpush1.msra.mxu0 0.0
        %6678 = vmatprep.subr.mxu0 0.0
        %6679 = vmatpush1.msra.mxu0 0.0
        %6680 = vmatprep.subr.mxu0 0.0
        %6681 = vmatpush1.msra.mxu0 0.0
        %6682 = vmatprep.subr.mxu0 0.0
        %6683 = vmatpush1.msra.mxu0 0.0
        %6684 = vmatprep.mubr.f32.mxu0 0.0
        %6685 = vmatmul.mubr.f32.gmra.mrb[0].mxu0 %v6618
        %v6686 = vpop.f32.mrb[0].mxu0
        %v6687 = vadd.f32 0.0, %v6686
        %v6688 = vpop.f32.mrb[0].mxu0
        %6689 = vdwg.mxu0
        %v6691 = vsel %vm2596, %v6687, 0
        %6693 = vmatprep.subr.mxu0 0.0
        %6694 = vmatpush1.msra.mxu0 %v5151
        %6695 = vmatprep.subr.mxu0 0.0
        %6696 = vmatpush1.msra.mxu0 0.0
        %6697 = vmatprep.subr.mxu0 0.0
        %6698 = vmatpush1.msra.mxu0 0.0
        %6699 = vmatprep.subr.mxu0 0.0
        %6700 = vmatpush1.msra.mxu0 0.0
        %6701 = vmatprep.subr.mxu0 0.0
        %6702 = vmatpush1.msra.mxu0 0.0
        %6703 = vmatprep.subr.mxu0 0.0
        %6704 = vmatpush1.msra.mxu0 0.0
        %6705 = vmatprep.subr.mxu0 0.0
        %6706 = vmatpush1.msra.mxu0 0.0
        %6707 = vmatprep.subr.mxu0 0.0
        %6708 = vmatpush1.msra.mxu0 0.0
        %6709 = vmatprep.subr.mxu0 0.0
        %6710 = vmatpush1.msra.mxu0 0.0
        %6711 = vmatprep.subr.mxu0 0.0
        %6712 = vmatpush1.msra.mxu0 0.0
        %6713 = vmatprep.subr.mxu0 0.0
        %6714 = vmatpush1.msra.mxu0 0.0
        %6715 = vmatprep.subr.mxu0 0.0
        %6716 = vmatpush1.msra.mxu0 0.0
        %6717 = vmatprep.subr.mxu0 0.0
        %6718 = vmatpush1.msra.mxu0 0.0
        %6719 = vmatprep.subr.mxu0 0.0
        %6720 = vmatpush1.msra.mxu0 0.0
        %6721 = vmatprep.subr.mxu0 0.0
        %6722 = vmatpush1.msra.mxu0 0.0
        %6723 = vmatprep.subr.mxu0 0.0
        %6724 = vmatpush1.msra.mxu0 0.0
        %6725 = vmatprep.subr.mxu0 0.0
        %6726 = vmatpush1.msra.mxu0 0.0
        %6727 = vmatprep.subr.mxu0 0.0
        %6728 = vmatpush1.msra.mxu0 0.0
        %6729 = vmatprep.subr.mxu0 0.0
        %6730 = vmatpush1.msra.mxu0 0.0
        %6731 = vmatprep.subr.mxu0 0.0
        %6732 = vmatpush1.msra.mxu0 0.0
        %6733 = vmatprep.subr.mxu0 0.0
        %6734 = vmatpush1.msra.mxu0 0.0
        %6735 = vmatprep.subr.mxu0 0.0
        %6736 = vmatpush1.msra.mxu0 0.0
        %6737 = vmatprep.subr.mxu0 0.0
        %6738 = vmatpush1.msra.mxu0 0.0
        %6739 = vmatprep.subr.mxu0 0.0
        %6740 = vmatpush1.msra.mxu0 0.0
        %6741 = vmatprep.subr.mxu0 0.0
        %6742 = vmatpush1.msra.mxu0 0.0
        %6743 = vmatprep.subr.mxu0 0.0
        %6744 = vmatpush1.msra.mxu0 0.0
        %6745 = vmatprep.subr.mxu0 0.0
        %6746 = vmatpush1.msra.mxu0 0.0
        %6747 = vmatprep.subr.mxu0 0.0
        %6748 = vmatpush1.msra.mxu0 0.0
        %6749 = vmatprep.subr.mxu0 0.0
        %6750 = vmatpush1.msra.mxu0 0.0
        %6751 = vmatprep.subr.mxu0 0.0
        %6752 = vmatpush1.msra.mxu0 0.0
        %6753 = vmatprep.subr.mxu0 0.0
        %6754 = vmatpush1.msra.mxu0 0.0
        %6755 = vmatprep.subr.mxu0 0.0
        %6756 = vmatpush1.msra.mxu0 0.0
        %6757 = vmatprep.mubr.f32.mxu0 0.0
        %6758 = vmatmul.mubr.f32.gmra.mrb[0].mxu0 %v6691
        %v6759 = vpop.f32.mrb[0].mxu0
        %v6760 = vadd.f32 0.0, %v6759
        %v6761 = vpop.f32.mrb[0].mxu0
        %6762 = vdwg.mxu0
        %v6763 = vadd.f32 %v6523, %v6760
        %6764 = vrot.lane.b32.xlu0 %v6524, 120
        %v6765 = vpop.permute.xlu0 %6764
        %6766 = vrot.lane.b32.xlu0 %v6514, 88
        %v6767 = vpop.permute.xlu0 %6766
        %v6768 = vsel %vm2596, %v6765, 0
        %v6770 = vsel %vm2596, %v6767, 0
        %6772 = vmatprep.subr.mxu0 0.0
        %6773 = vmatpush1.xpose.msra.mxu0 %v6770
        %6774 = vmatprep.subr.mxu0 0.0
        %6775 = vmatpush1.xpose.msra.mxu0 0.0
        %6776 = vmatprep.subr.mxu0 0.0
        %6777 = vmatpush1.xpose.msra.mxu0 0.0
        %6778 = vmatprep.subr.mxu0 0.0
        %6779 = vmatpush1.xpose.msra.mxu0 0.0
        %6780 = vmatprep.subr.mxu0 0.0
        %6781 = vmatpush1.xpose.msra.mxu0 0.0
        %6782 = vmatprep.subr.mxu0 0.0
        %6783 = vmatpush1.xpose.msra.mxu0 0.0
        %6784 = vmatprep.subr.mxu0 0.0
        %6785 = vmatpush1.xpose.msra.mxu0 0.0
        %6786 = vmatprep.subr.mxu0 0.0
        %6787 = vmatpush1.xpose.msra.mxu0 0.0
        %6788 = vmatprep.subr.mxu0 0.0
        %6789 = vmatpush1.xpose.msra.mxu0 0.0
        %6790 = vmatprep.subr.mxu0 0.0
        %6791 = vmatpush1.xpose.msra.mxu0 0.0
        %6792 = vmatprep.subr.mxu0 0.0
        %6793 = vmatpush1.xpose.msra.mxu0 0.0
        %6794 = vmatprep.subr.mxu0 0.0
        %6795 = vmatpush1.xpose.msra.mxu0 0.0
        %6796 = vmatprep.subr.mxu0 0.0
        %6797 = vmatpush1.xpose.msra.mxu0 0.0
        %6798 = vmatprep.subr.mxu0 0.0
        %6799 = vmatpush1.xpose.msra.mxu0 0.0
        %6800 = vmatprep.subr.mxu0 0.0
        %6801 = vmatpush1.xpose.msra.mxu0 0.0
        %6802 = vmatprep.subr.mxu0 0.0
        %6803 = vmatpush1.xpose.msra.mxu0 0.0
        %6804 = vmatprep.subr.mxu0 0.0
        %6805 = vmatpush1.xpose.msra.mxu0 0.0
        %6806 = vmatprep.subr.mxu0 0.0
        %6807 = vmatpush1.xpose.msra.mxu0 0.0
        %6808 = vmatprep.subr.mxu0 0.0
        %6809 = vmatpush1.xpose.msra.mxu0 0.0
        %6810 = vmatprep.subr.mxu0 0.0
        %6811 = vmatpush1.xpose.msra.mxu0 0.0
        %6812 = vmatprep.subr.mxu0 0.0
        %6813 = vmatpush1.xpose.msra.mxu0 0.0
        %6814 = vmatprep.subr.mxu0 0.0
        %6815 = vmatpush1.xpose.msra.mxu0 0.0
        %6816 = vmatprep.subr.mxu0 0.0
        %6817 = vmatpush1.xpose.msra.mxu0 0.0
        %6818 = vmatprep.subr.mxu0 0.0
        %6819 = vmatpush1.xpose.msra.mxu0 0.0
        %6820 = vmatprep.subr.mxu0 0.0
        %6821 = vmatpush1.xpose.msra.mxu0 0.0
        %6822 = vmatprep.subr.mxu0 0.0
        %6823 = vmatpush1.xpose.msra.mxu0 0.0
        %6824 = vmatprep.subr.mxu0 0.0
        %6825 = vmatpush1.xpose.msra.mxu0 0.0
        %6826 = vmatprep.subr.mxu0 0.0
        %6827 = vmatpush1.xpose.msra.mxu0 0.0
        %6828 = vmatprep.subr.mxu0 0.0
        %6829 = vmatpush1.xpose.msra.mxu0 0.0
        %6830 = vmatprep.subr.mxu0 0.0
        %6831 = vmatpush1.xpose.msra.mxu0 0.0
        %6832 = vmatprep.subr.mxu0 0.0
        %6833 = vmatpush1.xpose.msra.mxu0 0.0
        %6834 = vmatprep.subr.mxu0 0.0
        %6835 = vmatpush1.xpose.msra.mxu0 0.0
        %6836 = vmatprep.mubr.f32.mxu0 0.0
        %6837 = vmatmul.mubr.f32.gmra.mrb[0].mxu0 %v6768
        %v6838 = vpop.f32.mrb[0].mxu0
        %v6839 = vadd.f32 0.0, %v6838
        %v6840 = vpop.f32.mrb[0].mxu0
        %6841 = vdwg.mxu0
        %v6842 = vsel %vm2596, %v6839, -inf
        %6843 = vmax.xlane.f32.xlu0 %v6842
        %v6844 = vpop.xlane.xlu0 %6843
        %v6845 = vsub.f32 %v6839, %v6844
        %v6846 = vmul.f32 %v6845, 1.442695
        %v6847 = vpow.pop %v6846
        %v6848 = vsel %vm2596, %v6847, 0.0
        %6849 = vadd.xlane.f32.xlu0 %v6848
        %v6850 = vpop.xlane.xlu0 %6849
        %v6851 = vrcp.pop %v6850
        %v6852 = vmul.f32 %v6847, %v6851
        %6853 = vrot.lane.b32.xlu0 %v6514, 56
        %v6854 = vpop.permute.xlu0 %6853
        %v6857 = vsel %vm2596, %v6852, 0
        %6859 = vmatprep.subr.mxu0 0.0
        %6860 = vmatpush1.msra.mxu0 %v6854
        %6861 = vmatprep.subr.mxu0 0.0
        %6862 = vmatpush1.msra.mxu0 0.0
        %6863 = vmatprep.subr.mxu0 0.0
        %6864 = vmatpush1.msra.mxu0 0.0
        %6865 = vmatprep.subr.mxu0 0.0
        %6866 = vmatpush1.msra.mxu0 0.0
        %6867 = vmatprep.subr.mxu0 0.0
        %6868 = vmatpush1.msra.mxu0 0.0
        %6869 = vmatprep.subr.mxu0 0.0
        %6870 = vmatpush1.msra.mxu0 0.0
        %6871 = vmatprep.subr.mxu0 0.0
        %6872 = vmatpush1.msra.mxu0 0.0
        %6873 = vmatprep.subr.mxu0 0.0
        %6874 = vmatpush1.msra.mxu0 0.0
        %6875 = vmatprep.subr.mxu0 0.0
        %6876 = vmatpush1.msra.mxu0 0.0
        %6877 = vmatprep.subr.mxu0 0.0
        %6878 = vmatpush1.msra.mxu0 0.0
        %6879 = vmatprep.subr.mxu0 0.0
        %6880 = vmatpush1.msra.mxu0 0.0
        %6881 = vmatprep.subr.mxu0 0.0
        %6882 = vmatpush1.msra.mxu0 0.0
        %6883 = vmatprep.subr.mxu0 0.0
        %6884 = vmatpush1.msra.mxu0 0.0
        %6885 = vmatprep.subr.mxu0 0.0
        %6886 = vmatpush1.msra.mxu0 0.0
        %6887 = vmatprep.subr.mxu0 0.0
        %6888 = vmatpush1.msra.mxu0 0.0
        %6889 = vmatprep.subr.mxu0 0.0
        %6890 = vmatpush1.msra.mxu0 0.0
        %6891 = vmatprep.subr.mxu0 0.0
        %6892 = vmatpush1.msra.mxu0 0.0
        %6893 = vmatprep.subr.mxu0 0.0
        %6894 = vmatpush1.msra.mxu0 0.0
        %6895 = vmatprep.subr.mxu0 0.0
        %6896 = vmatpush1.msra.mxu0 0.0
        %6897 = vmatprep.subr.mxu0 0.0
        %6898 = vmatpush1.msra.mxu0 0.0
        %6899 = vmatprep.subr.mxu0 0.0
        %6900 = vmatpush1.msra.mxu0 0.0
        %6901 = vmatprep.subr.mxu0 0.0
        %6902 = vmatpush1.msra.mxu0 0.0
        %6903 = vmatprep.subr.mxu0 0.0
        %6904 = vmatpush1.msra.mxu0 0.0
        %6905 = vmatprep.subr.mxu0 0.0
        %6906 = vmatpush1.msra.mxu0 0.0
        %6907 = vmatprep.subr.mxu0 0.0
        %6908 = vmatpush1.msra.mxu0 0.0
        %6909 = vmatprep.subr.mxu0 0.0
        %6910 = vmatpush1.msra.mxu0 0.0
        %6911 = vmatprep.subr.mxu0 0.0
        %6912 = vmatpush1.msra.mxu0 0.0
        %6913 = vmatprep.subr.mxu0 0.0
        %6914 = vmatpush1.msra.mxu0 0.0
        %6915 = vmatprep.subr.mxu0 0.0
        %6916 = vmatpush1.msra.mxu0 0.0
        %6917 = vmatprep.subr.mxu0 0.0
        %6918 = vmatpush1.msra.mxu0 0.0
        %6919 = vmatprep.subr.mxu0 0.0
        %6920 = vmatpush1.msra.mxu0 0.0
        %6921 = vmatprep.subr.mxu0 0.0
        %6922 = vmatpush1.msra.mxu0 0.0
        %6923 = vmatprep.mubr.f32.mxu0 0.0
        %6924 = vmatmul.mubr.f32.gmra.mrb[0].mxu0 %v6857
        %v6925 = vpop.f32.mrb[0].mxu0
        %v6926 = vadd.f32 0.0, %v6925
        %v6927 = vpop.f32.mrb[0].mxu0
        %6928 = vdwg.mxu0
        %v6930 = vsel %vm2596, %v6926, 0
        %6932 = vmatprep.subr.mxu0 0.0
        %6933 = vmatpush1.msra.mxu0 %v5152
        %6934 = vmatprep.subr.mxu0 0.0
        %6935 = vmatpush1.msra.mxu0 0.0
        %6936 = vmatprep.subr.mxu0 0.0
        %6937 = vmatpush1.msra.mxu0 0.0
        %6938 = vmatprep.subr.mxu0 0.0
        %6939 = vmatpush1.msra.mxu0 0.0
        %6940 = vmatprep.subr.mxu0 0.0
        %6941 = vmatpush1.msra.mxu0 0.0
        %6942 = vmatprep.subr.mxu0 0.0
        %6943 = vmatpush1.msra.mxu0 0.0
        %6944 = vmatprep.subr.mxu0 0.0
        %6945 = vmatpush1.msra.mxu0 0.0
        %6946 = vmatprep.subr.mxu0 0.0
        %6947 = vmatpush1.msra.mxu0 0.0
        %6948 = vmatprep.subr.mxu0 0.0
        %6949 = vmatpush1.msra.mxu0 0.0
        %6950 = vmatprep.subr.mxu0 0.0
        %6951 = vmatpush1.msra.mxu0 0.0
        %6952 = vmatprep.subr.mxu0 0.0
        %6953 = vmatpush1.msra.mxu0 0.0
        %6954 = vmatprep.subr.mxu0 0.0
        %6955 = vmatpush1.msra.mxu0 0.0
        %6956 = vmatprep.subr.mxu0 0.0
        %6957 = vmatpush1.msra.mxu0 0.0
        %6958 = vmatprep.subr.mxu0 0.0
        %6959 = vmatpush1.msra.mxu0 0.0
        %6960 = vmatprep.subr.mxu0 0.0
        %6961 = vmatpush1.msra.mxu0 0.0
        %6962 = vmatprep.subr.mxu0 0.0
        %6963 = vmatpush1.msra.mxu0 0.0
        %6964 = vmatprep.subr.mxu0 0.0
        %6965 = vmatpush1.msra.mxu0 0.0
        %6966 = vmatprep.subr.mxu0 0.0
        %6967 = vmatpush1.msra.mxu0 0.0
        %6968 = vmatprep.subr.mxu0 0.0
        %6969 = vmatpush1.msra.mxu0 0.0
        %6970 = vmatprep.subr.mxu0 0.0
        %6971 = vmatpush1.msra.mxu0 0.0
        %6972 = vmatprep.subr.mxu0 0.0
        %6973 = vmatpush1.msra.mxu0 0.0
        %6974 = vmatprep.subr.mxu0 0.0
        %6975 = vmatpush1.msra.mxu0 0.0
        %6976 = vmatprep.subr.mxu0 0.0
        %6977 = vmatpush1.msra.mxu0 0.0
        %6978 = vmatprep.subr.mxu0 0.0
        %6979 = vmatpush1.msra.mxu0 0.0
        %6980 = vmatprep.subr.mxu0 0.0
        %6981 = vmatpush1.msra.mxu0 0.0
        %6982 = vmatprep.subr.mxu0 0.0
        %6983 = vmatpush1.msra.mxu0 0.0
        %6984 = vmatprep.subr.mxu0 0.0
        %6985 = vmatpush1.msra.mxu0 0.0
        %6986 = vmatprep.subr.mxu0 0.0
        %6987 = vmatpush1.msra.mxu0 0.0
        %6988 = vmatprep.subr.mxu0 0.0
        %6989 = vmatpush1.msra.mxu0 0.0
        %6990 = vmatprep.subr.mxu0 0.0
        %6991 = vmatpush1.msra.mxu0 0.0
        %6992 = vmatprep.subr.mxu0 0.0
        %6993 = vmatpush1.msra.mxu0 0.0
        %6994 = vmatprep.subr.mxu0 0.0
        %6995 = vmatpush1.msra.mxu0 0.0
        %6996 = vmatprep.mubr.f32.mxu0 0.0
        %6997 = vmatmul.mubr.f32.gmra.mrb[0].mxu0 %v6930
        %v6998 = vpop.f32.mrb[0].mxu0
        %v6999 = vadd.f32 0.0, %v6998
        %v7000 = vpop.f32.mrb[0].mxu0
        %7001 = vdwg.mxu0
        %v7002 = vadd.f32 %v6763, %v6999
        %7003 = vrot.lane.b32.xlu0 %v6524, 112
        %v7004 = vpop.permute.xlu0 %7003
        %7005 = vrot.lane.b32.xlu0 %v6514, 80
        %v7006 = vpop.permute.xlu0 %7005
        %v7007 = vsel %vm2596, %v7004, 0
        %v7009 = vsel %vm2596, %v7006, 0
        %7011 = vmatprep.subr.mxu0 0.0
        %7012 = vmatpush1.xpose.msra.mxu0 %v7009
        %7013 = vmatprep.subr.mxu0 0.0
        %7014 = vmatpush1.xpose.msra.mxu0 0.0
        %7015 = vmatprep.subr.mxu0 0.0
        %7016 = vmatpush1.xpose.msra.mxu0 0.0
        %7017 = vmatprep.subr.mxu0 0.0
        %7018 = vmatpush1.xpose.msra.mxu0 0.0
        %7019 = vmatprep.subr.mxu0 0.0
        %7020 = vmatpush1.xpose.msra.mxu0 0.0
        %7021 = vmatprep.subr.mxu0 0.0
        %7022 = vmatpush1.xpose.msra.mxu0 0.0
        %7023 = vmatprep.subr.mxu0 0.0
        %7024 = vmatpush1.xpose.msra.mxu0 0.0
        %7025 = vmatprep.subr.mxu0 0.0
        %7026 = vmatpush1.xpose.msra.mxu0 0.0
        %7027 = vmatprep.subr.mxu0 0.0
        %7028 = vmatpush1.xpose.msra.mxu0 0.0
        %7029 = vmatprep.subr.mxu0 0.0
        %7030 = vmatpush1.xpose.msra.mxu0 0.0
        %7031 = vmatprep.subr.mxu0 0.0
        %7032 = vmatpush1.xpose.msra.mxu0 0.0
        %7033 = vmatprep.subr.mxu0 0.0
        %7034 = vmatpush1.xpose.msra.mxu0 0.0
        %7035 = vmatprep.subr.mxu0 0.0
        %7036 = vmatpush1.xpose.msra.mxu0 0.0
        %7037 = vmatprep.subr.mxu0 0.0
        %7038 = vmatpush1.xpose.msra.mxu0 0.0
        %7039 = vmatprep.subr.mxu0 0.0
        %7040 = vmatpush1.xpose.msra.mxu0 0.0
        %7041 = vmatprep.subr.mxu0 0.0
        %7042 = vmatpush1.xpose.msra.mxu0 0.0
        %7043 = vmatprep.subr.mxu0 0.0
        %7044 = vmatpush1.xpose.msra.mxu0 0.0
        %7045 = vmatprep.subr.mxu0 0.0
        %7046 = vmatpush1.xpose.msra.mxu0 0.0
        %7047 = vmatprep.subr.mxu0 0.0
        %7048 = vmatpush1.xpose.msra.mxu0 0.0
        %7049 = vmatprep.subr.mxu0 0.0
        %7050 = vmatpush1.xpose.msra.mxu0 0.0
        %7051 = vmatprep.subr.mxu0 0.0
        %7052 = vmatpush1.xpose.msra.mxu0 0.0
        %7053 = vmatprep.subr.mxu0 0.0
        %7054 = vmatpush1.xpose.msra.mxu0 0.0
        %7055 = vmatprep.subr.mxu0 0.0
        %7056 = vmatpush1.xpose.msra.mxu0 0.0
        %7057 = vmatprep.subr.mxu0 0.0
        %7058 = vmatpush1.xpose.msra.mxu0 0.0
        %7059 = vmatprep.subr.mxu0 0.0
        %7060 = vmatpush1.xpose.msra.mxu0 0.0
        %7061 = vmatprep.subr.mxu0 0.0
        %7062 = vmatpush1.xpose.msra.mxu0 0.0
        %7063 = vmatprep.subr.mxu0 0.0
        %7064 = vmatpush1.xpose.msra.mxu0 0.0
        %7065 = vmatprep.subr.mxu0 0.0
        %7066 = vmatpush1.xpose.msra.mxu0 0.0
        %7067 = vmatprep.subr.mxu0 0.0
        %7068 = vmatpush1.xpose.msra.mxu0 0.0
        %7069 = vmatprep.subr.mxu0 0.0
        %7070 = vmatpush1.xpose.msra.mxu0 0.0
        %7071 = vmatprep.subr.mxu0 0.0
        %7072 = vmatpush1.xpose.msra.mxu0 0.0
        %7073 = vmatprep.subr.mxu0 0.0
        %7074 = vmatpush1.xpose.msra.mxu0 0.0
        %7075 = vmatprep.mubr.f32.mxu0 0.0
        %7076 = vmatmul.mubr.f32.gmra.mrb[0].mxu0 %v7007
        %v7077 = vpop.f32.mrb[0].mxu0
        %v7078 = vadd.f32 0.0, %v7077
        %v7079 = vpop.f32.mrb[0].mxu0
        %7080 = vdwg.mxu0
        %v7081 = vsel %vm2596, %v7078, -inf
        %7082 = vmax.xlane.f32.xlu0 %v7081
        %v7083 = vpop.xlane.xlu0 %7082
        %v7084 = vsub.f32 %v7078, %v7083
        %v7085 = vmul.f32 %v7084, 1.442695
        %v7086 = vpow.pop %v7085
        %v7087 = vsel %vm2596, %v7086, 0.0
        %7088 = vadd.xlane.f32.xlu0 %v7087
        %v7089 = vpop.xlane.xlu0 %7088
        %v7090 = vrcp.pop %v7089
        %v7091 = vmul.f32 %v7086, %v7090
        %7092 = vrot.lane.b32.xlu0 %v6514, 48
        %v7093 = vpop.permute.xlu0 %7092
        %v7096 = vsel %vm2596, %v7091, 0
        %7098 = vmatprep.subr.mxu0 0.0
        %7099 = vmatpush1.msra.mxu0 %v7093
        %7100 = vmatprep.subr.mxu0 0.0
        %7101 = vmatpush1.msra.mxu0 0.0
        %7102 = vmatprep.subr.mxu0 0.0
        %7103 = vmatpush1.msra.mxu0 0.0
        %7104 = vmatprep.subr.mxu0 0.0
        %7105 = vmatpush1.msra.mxu0 0.0
        %7106 = vmatprep.subr.mxu0 0.0
        %7107 = vmatpush1.msra.mxu0 0.0
        %7108 = vmatprep.subr.mxu0 0.0
        %7109 = vmatpush1.msra.mxu0 0.0
        %7110 = vmatprep.subr.mxu0 0.0
        %7111 = vmatpush1.msra.mxu0 0.0
        %7112 = vmatprep.subr.mxu0 0.0
        %7113 = vmatpush1.msra.mxu0 0.0
        %7114 = vmatprep.subr.mxu0 0.0
        %7115 = vmatpush1.msra.mxu0 0.0
        %7116 = vmatprep.subr.mxu0 0.0
        %7117 = vmatpush1.msra.mxu0 0.0
        %7118 = vmatprep.subr.mxu0 0.0
        %7119 = vmatpush1.msra.mxu0 0.0
        %7120 = vmatprep.subr.mxu0 0.0
        %7121 = vmatpush1.msra.mxu0 0.0
        %7122 = vmatprep.subr.mxu0 0.0
        %7123 = vmatpush1.msra.mxu0 0.0
        %7124 = vmatprep.subr.mxu0 0.0
        %7125 = vmatpush1.msra.mxu0 0.0
        %7126 = vmatprep.subr.mxu0 0.0
        %7127 = vmatpush1.msra.mxu0 0.0
        %7128 = vmatprep.subr.mxu0 0.0
        %7129 = vmatpush1.msra.mxu0 0.0
        %7130 = vmatprep.subr.mxu0 0.0
        %7131 = vmatpush1.msra.mxu0 0.0
        %7132 = vmatprep.subr.mxu0 0.0
        %7133 = vmatpush1.msra.mxu0 0.0
        %7134 = vmatprep.subr.mxu0 0.0
        %7135 = vmatpush1.msra.mxu0 0.0
        %7136 = vmatprep.subr.mxu0 0.0
        %7137 = vmatpush1.msra.mxu0 0.0
        %7138 = vmatprep.subr.mxu0 0.0
        %7139 = vmatpush1.msra.mxu0 0.0
        %7140 = vmatprep.subr.mxu0 0.0
        %7141 = vmatpush1.msra.mxu0 0.0
        %7142 = vmatprep.subr.mxu0 0.0
        %7143 = vmatpush1.msra.mxu0 0.0
        %7144 = vmatprep.subr.mxu0 0.0
        %7145 = vmatpush1.msra.mxu0 0.0
        %7146 = vmatprep.subr.mxu0 0.0
        %7147 = vmatpush1.msra.mxu0 0.0
        %7148 = vmatprep.subr.mxu0 0.0
        %7149 = vmatpush1.msra.mxu0 0.0
        %7150 = vmatprep.subr.mxu0 0.0
        %7151 = vmatpush1.msra.mxu0 0.0
        %7152 = vmatprep.subr.mxu0 0.0
        %7153 = vmatpush1.msra.mxu0 0.0
        %7154 = vmatprep.subr.mxu0 0.0
        %7155 = vmatpush1.msra.mxu0 0.0
        %7156 = vmatprep.subr.mxu0 0.0
        %7157 = vmatpush1.msra.mxu0 0.0
        %7158 = vmatprep.subr.mxu0 0.0
        %7159 = vmatpush1.msra.mxu0 0.0
        %7160 = vmatprep.subr.mxu0 0.0
        %7161 = vmatpush1.msra.mxu0 0.0
        %7162 = vmatprep.mubr.f32.mxu0 0.0
        %7163 = vmatmul.mubr.f32.gmra.mrb[0].mxu0 %v7096
        %v7164 = vpop.f32.mrb[0].mxu0
        %v7165 = vadd.f32 0.0, %v7164
        %v7166 = vpop.f32.mrb[0].mxu0
        %7167 = vdwg.mxu0
        %v7169 = vsel %vm2596, %v7165, 0
        %7171 = vmatprep.subr.mxu0 0.0
        %7172 = vmatpush1.msra.mxu0 %v5153
        %7173 = vmatprep.subr.mxu0 0.0
        %7174 = vmatpush1.msra.mxu0 0.0
        %7175 = vmatprep.subr.mxu0 0.0
        %7176 = vmatpush1.msra.mxu0 0.0
        %7177 = vmatprep.subr.mxu0 0.0
        %7178 = vmatpush1.msra.mxu0 0.0
        %7179 = vmatprep.subr.mxu0 0.0
        %7180 = vmatpush1.msra.mxu0 0.0
        %7181 = vmatprep.subr.mxu0 0.0
        %7182 = vmatpush1.msra.mxu0 0.0
        %7183 = vmatprep.subr.mxu0 0.0
        %7184 = vmatpush1.msra.mxu0 0.0
        %7185 = vmatprep.subr.mxu0 0.0
        %7186 = vmatpush1.msra.mxu0 0.0
        %7187 = vmatprep.subr.mxu0 0.0
        %7188 = vmatpush1.msra.mxu0 0.0
        %7189 = vmatprep.subr.mxu0 0.0
        %7190 = vmatpush1.msra.mxu0 0.0
        %7191 = vmatprep.subr.mxu0 0.0
        %7192 = vmatpush1.msra.mxu0 0.0
        %7193 = vmatprep.subr.mxu0 0.0
        %7194 = vmatpush1.msra.mxu0 0.0
        %7195 = vmatprep.subr.mxu0 0.0
        %7196 = vmatpush1.msra.mxu0 0.0
        %7197 = vmatprep.subr.mxu0 0.0
        %7198 = vmatpush1.msra.mxu0 0.0
        %7199 = vmatprep.subr.mxu0 0.0
        %7200 = vmatpush1.msra.mxu0 0.0
        %7201 = vmatprep.subr.mxu0 0.0
        %7202 = vmatpush1.msra.mxu0 0.0
        %7203 = vmatprep.subr.mxu0 0.0
        %7204 = vmatpush1.msra.mxu0 0.0
        %7205 = vmatprep.subr.mxu0 0.0
        %7206 = vmatpush1.msra.mxu0 0.0
        %7207 = vmatprep.subr.mxu0 0.0
        %7208 = vmatpush1.msra.mxu0 0.0
        %7209 = vmatprep.subr.mxu0 0.0
        %7210 = vmatpush1.msra.mxu0 0.0
        %7211 = vmatprep.subr.mxu0 0.0
        %7212 = vmatpush1.msra.mxu0 0.0
        %7213 = vmatprep.subr.mxu0 0.0
        %7214 = vmatpush1.msra.mxu0 0.0
        %7215 = vmatprep.subr.mxu0 0.0
        %7216 = vmatpush1.msra.mxu0 0.0
        %7217 = vmatprep.subr.mxu0 0.0
        %7218 = vmatpush1.msra.mxu0 0.0
        %7219 = vmatprep.subr.mxu0 0.0
        %7220 = vmatpush1.msra.mxu0 0.0
        %7221 = vmatprep.subr.mxu0 0.0
        %7222 = vmatpush1.msra.mxu0 0.0
        %7223 = vmatprep.subr.mxu0 0.0
        %7224 = vmatpush1.msra.mxu0 0.0
        %7225 = vmatprep.subr.mxu0 0.0
        %7226 = vmatpush1.msra.mxu0 0.0
        %7227 = vmatprep.subr.mxu0 0.0
        %7228 = vmatpush1.msra.mxu0 0.0
        %7229 = vmatprep.subr.mxu0 0.0
        %7230 = vmatpush1.msra.mxu0 0.0
        %7231 = vmatprep.subr.mxu0 0.0
        %7232 = vmatpush1.msra.mxu0 0.0
        %7233 = vmatprep.subr.mxu0 0.0
        %7234 = vmatpush1.msra.mxu0 0.0
        %7235 = vmatprep.mubr.f32.mxu0 0.0
        %7236 = vmatmul.mubr.f32.gmra.mrb[0].mxu0 %v7169
        %v7237 = vpop.f32.mrb[0].mxu0
        %v7238 = vadd.f32 0.0, %v7237
        %v7239 = vpop.f32.mrb[0].mxu0
        %7240 = vdwg.mxu0
        %v7241 = vadd.f32 %v7002, %v7238
        %7242 = vrot.lane.b32.xlu0 %v6524, 104
        %v7243 = vpop.permute.xlu0 %7242
        %7244 = vrot.lane.b32.xlu0 %v6514, 72
        %v7245 = vpop.permute.xlu0 %7244
        %v7246 = vsel %vm2596, %v7243, 0
        %v7248 = vsel %vm2596, %v7245, 0
        %7250 = vmatprep.subr.mxu0 0.0
        %7251 = vmatpush1.xpose.msra.mxu0 %v7248
        %7252 = vmatprep.subr.mxu0 0.0
        %7253 = vmatpush1.xpose.msra.mxu0 0.0
        %7254 = vmatprep.subr.mxu0 0.0
        %7255 = vmatpush1.xpose.msra.mxu0 0.0
        %7256 = vmatprep.subr.mxu0 0.0
        %7257 = vmatpush1.xpose.msra.mxu0 0.0
        %7258 = vmatprep.subr.mxu0 0.0
        %7259 = vmatpush1.xpose.msra.mxu0 0.0
        %7260 = vmatprep.subr.mxu0 0.0
        %7261 = vmatpush1.xpose.msra.mxu0 0.0
        %7262 = vmatprep.subr.mxu0 0.0
        %7263 = vmatpush1.xpose.msra.mxu0 0.0
        %7264 = vmatprep.subr.mxu0 0.0
        %7265 = vmatpush1.xpose.msra.mxu0 0.0
        %7266 = vmatprep.subr.mxu0 0.0
        %7267 = vmatpush1.xpose.msra.mxu0 0.0
        %7268 = vmatprep.subr.mxu0 0.0
        %7269 = vmatpush1.xpose.msra.mxu0 0.0
        %7270 = vmatprep.subr.mxu0 0.0
        %7271 = vmatpush1.xpose.msra.mxu0 0.0
        %7272 = vmatprep.subr.mxu0 0.0
        %7273 = vmatpush1.xpose.msra.mxu0 0.0
        %7274 = vmatprep.subr.mxu0 0.0
        %7275 = vmatpush1.xpose.msra.mxu0 0.0
        %7276 = vmatprep.subr.mxu0 0.0
        %7277 = vmatpush1.xpose.msra.mxu0 0.0
        %7278 = vmatprep.subr.mxu0 0.0
        %7279 = vmatpush1.xpose.msra.mxu0 0.0
        %7280 = vmatprep.subr.mxu0 0.0
        %7281 = vmatpush1.xpose.msra.mxu0 0.0
        %7282 = vmatprep.subr.mxu0 0.0
        %7283 = vmatpush1.xpose.msra.mxu0 0.0
        %7284 = vmatprep.subr.mxu0 0.0
        %7285 = vmatpush1.xpose.msra.mxu0 0.0
        %7286 = vmatprep.subr.mxu0 0.0
        %7287 = vmatpush1.xpose.msra.mxu0 0.0
        %7288 = vmatprep.subr.mxu0 0.0
        %7289 = vmatpush1.xpose.msra.mxu0 0.0
        %7290 = vmatprep.subr.mxu0 0.0
        %7291 = vmatpush1.xpose.msra.mxu0 0.0
        %7292 = vmatprep.subr.mxu0 0.0
        %7293 = vmatpush1.xpose.msra.mxu0 0.0
        %7294 = vmatprep.subr.mxu0 0.0
        %7295 = vmatpush1.xpose.msra.mxu0 0.0
        %7296 = vmatprep.subr.mxu0 0.0
        %7297 = vmatpush1.xpose.msra.mxu0 0.0
        %7298 = vmatprep.subr.mxu0 0.0
        %7299 = vmatpush1.xpose.msra.mxu0 0.0
        %7300 = vmatprep.subr.mxu0 0.0
        %7301 = vmatpush1.xpose.msra.mxu0 0.0
        %7302 = vmatprep.subr.mxu0 0.0
        %7303 = vmatpush1.xpose.msra.mxu0 0.0
        %7304 = vmatprep.subr.mxu0 0.0
        %7305 = vmatpush1.xpose.msra.mxu0 0.0
        %7306 = vmatprep.subr.mxu0 0.0
        %7307 = vmatpush1.xpose.msra.mxu0 0.0
        %7308 = vmatprep.subr.mxu0 0.0
        %7309 = vmatpush1.xpose.msra.mxu0 0.0
        %7310 = vmatprep.subr.mxu0 0.0
        %7311 = vmatpush1.xpose.msra.mxu0 0.0
        %7312 = vmatprep.subr.mxu0 0.0
        %7313 = vmatpush1.xpose.msra.mxu0 0.0
        %7314 = vmatprep.mubr.f32.mxu0 0.0
        %7315 = vmatmul.mubr.f32.gmra.mrb[0].mxu0 %v7246
        %v7316 = vpop.f32.mrb[0].mxu0
        %v7317 = vadd.f32 0.0, %v7316
        %v7318 = vpop.f32.mrb[0].mxu0
        %7319 = vdwg.mxu0
        %v7320 = vsel %vm2596, %v7317, -inf
        %7321 = vmax.xlane.f32.xlu0 %v7320
        %v7322 = vpop.xlane.xlu0 %7321
        %v7323 = vsub.f32 %v7317, %v7322
        %v7324 = vmul.f32 %v7323, 1.442695
        %v7325 = vpow.pop %v7324
        %v7326 = vsel %vm2596, %v7325, 0.0
        %7327 = vadd.xlane.f32.xlu0 %v7326
        %v7328 = vpop.xlane.xlu0 %7327
        %v7329 = vrcp.pop %v7328
        %v7330 = vmul.f32 %v7325, %v7329
        %7331 = vrot.lane.b32.xlu0 %v6514, 40
        %v7332 = vpop.permute.xlu0 %7331
        %v7335 = vsel %vm2596, %v7330, 0
        %7337 = vmatprep.subr.mxu0 0.0
        %7338 = vmatpush1.msra.mxu0 %v7332
        %7339 = vmatprep.subr.mxu0 0.0
        %7340 = vmatpush1.msra.mxu0 0.0
        %7341 = vmatprep.subr.mxu0 0.0
        %7342 = vmatpush1.msra.mxu0 0.0
        %7343 = vmatprep.subr.mxu0 0.0
        %7344 = vmatpush1.msra.mxu0 0.0
        %7345 = vmatprep.subr.mxu0 0.0
        %7346 = vmatpush1.msra.mxu0 0.0
        %7347 = vmatprep.subr.mxu0 0.0
        %7348 = vmatpush1.msra.mxu0 0.0
        %7349 = vmatprep.subr.mxu0 0.0
        %7350 = vmatpush1.msra.mxu0 0.0
        %7351 = vmatprep.subr.mxu0 0.0
        %7352 = vmatpush1.msra.mxu0 0.0
        %7353 = vmatprep.subr.mxu0 0.0
        %7354 = vmatpush1.msra.mxu0 0.0
        %7355 = vmatprep.subr.mxu0 0.0
        %7356 = vmatpush1.msra.mxu0 0.0
        %7357 = vmatprep.subr.mxu0 0.0
        %7358 = vmatpush1.msra.mxu0 0.0
        %7359 = vmatprep.subr.mxu0 0.0
        %7360 = vmatpush1.msra.mxu0 0.0
        %7361 = vmatprep.subr.mxu0 0.0
        %7362 = vmatpush1.msra.mxu0 0.0
        %7363 = vmatprep.subr.mxu0 0.0
        %7364 = vmatpush1.msra.mxu0 0.0
        %7365 = vmatprep.subr.mxu0 0.0
        %7366 = vmatpush1.msra.mxu0 0.0
        %7367 = vmatprep.subr.mxu0 0.0
        %7368 = vmatpush1.msra.mxu0 0.0
        %7369 = vmatprep.subr.mxu0 0.0
        %7370 = vmatpush1.msra.mxu0 0.0
        %7371 = vmatprep.subr.mxu0 0.0
        %7372 = vmatpush1.msra.mxu0 0.0
        %7373 = vmatprep.subr.mxu0 0.0
        %7374 = vmatpush1.msra.mxu0 0.0
        %7375 = vmatprep.subr.mxu0 0.0
        %7376 = vmatpush1.msra.mxu0 0.0
        %7377 = vmatprep.subr.mxu0 0.0
        %7378 = vmatpush1.msra.mxu0 0.0
        %7379 = vmatprep.subr.mxu0 0.0
        %7380 = vmatpush1.msra.mxu0 0.0
        %7381 = vmatprep.subr.mxu0 0.0
        %7382 = vmatpush1.msra.mxu0 0.0
        %7383 = vmatprep.subr.mxu0 0.0
        %7384 = vmatpush1.msra.mxu0 0.0
        %7385 = vmatprep.subr.mxu0 0.0
        %7386 = vmatpush1.msra.mxu0 0.0
        %7387 = vmatprep.subr.mxu0 0.0
        %7388 = vmatpush1.msra.mxu0 0.0
        %7389 = vmatprep.subr.mxu0 0.0
        %7390 = vmatpush1.msra.mxu0 0.0
        %7391 = vmatprep.subr.mxu0 0.0
        %7392 = vmatpush1.msra.mxu0 0.0
        %7393 = vmatprep.subr.mxu0 0.0
        %7394 = vmatpush1.msra.mxu0 0.0
        %7395 = vmatprep.subr.mxu0 0.0
        %7396 = vmatpush1.msra.mxu0 0.0
        %7397 = vmatprep.subr.mxu0 0.0
        %7398 = vmatpush1.msra.mxu0 0.0
        %7399 = vmatprep.subr.mxu0 0.0
        %7400 = vmatpush1.msra.mxu0 0.0
        %7401 = vmatprep.mubr.f32.mxu0 0.0
        %7402 = vmatmul.mubr.f32.gmra.mrb[0].mxu0 %v7335
        %v7403 = vpop.f32.mrb[0].mxu0
        %v7404 = vadd.f32 0.0, %v7403
        %v7405 = vpop.f32.mrb[0].mxu0
        %7406 = vdwg.mxu0
        %v7408 = vsel %vm2596, %v7404, 0
        %7410 = vmatprep.subr.mxu0 0.0
        %7411 = vmatpush1.msra.mxu0 %v5154
        %7412 = vmatprep.subr.mxu0 0.0
        %7413 = vmatpush1.msra.mxu0 0.0
        %7414 = vmatprep.subr.mxu0 0.0
        %7415 = vmatpush1.msra.mxu0 0.0
        %7416 = vmatprep.subr.mxu0 0.0
        %7417 = vmatpush1.msra.mxu0 0.0
        %7418 = vmatprep.subr.mxu0 0.0
        %7419 = vmatpush1.msra.mxu0 0.0
        %7420 = vmatprep.subr.mxu0 0.0
        %7421 = vmatpush1.msra.mxu0 0.0
        %7422 = vmatprep.subr.mxu0 0.0
        %7423 = vmatpush1.msra.mxu0 0.0
        %7424 = vmatprep.subr.mxu0 0.0
        %7425 = vmatpush1.msra.mxu0 0.0
        %7426 = vmatprep.subr.mxu0 0.0
        %7427 = vmatpush1.msra.mxu0 0.0
        %7428 = vmatprep.subr.mxu0 0.0
        %7429 = vmatpush1.msra.mxu0 0.0
        %7430 = vmatprep.subr.mxu0 0.0
        %7431 = vmatpush1.msra.mxu0 0.0
        %7432 = vmatprep.subr.mxu0 0.0
        %7433 = vmatpush1.msra.mxu0 0.0
        %7434 = vmatprep.subr.mxu0 0.0
        %7435 = vmatpush1.msra.mxu0 0.0
        %7436 = vmatprep.subr.mxu0 0.0
        %7437 = vmatpush1.msra.mxu0 0.0
        %7438 = vmatprep.subr.mxu0 0.0
        %7439 = vmatpush1.msra.mxu0 0.0
        %7440 = vmatprep.subr.mxu0 0.0
        %7441 = vmatpush1.msra.mxu0 0.0
        %7442 = vmatprep.subr.mxu0 0.0
        %7443 = vmatpush1.msra.mxu0 0.0
        %7444 = vmatprep.subr.mxu0 0.0
        %7445 = vmatpush1.msra.mxu0 0.0
        %7446 = vmatprep.subr.mxu0 0.0
        %7447 = vmatpush1.msra.mxu0 0.0
        %7448 = vmatprep.subr.mxu0 0.0
        %7449 = vmatpush1.msra.mxu0 0.0
        %7450 = vmatprep.subr.mxu0 0.0
        %7451 = vmatpush1.msra.mxu0 0.0
        %7452 = vmatprep.subr.mxu0 0.0
        %7453 = vmatpush1.msra.mxu0 0.0
        %7454 = vmatprep.subr.mxu0 0.0
        %7455 = vmatpush1.msra.mxu0 0.0
        %7456 = vmatprep.subr.mxu0 0.0
        %7457 = vmatpush1.msra.mxu0 0.0
        %7458 = vmatprep.subr.mxu0 0.0
        %7459 = vmatpush1.msra.mxu0 0.0
        %7460 = vmatprep.subr.mxu0 0.0
        %7461 = vmatpush1.msra.mxu0 0.0
        %7462 = vmatprep.subr.mxu0 0.0
        %7463 = vmatpush1.msra.mxu0 0.0
        %7464 = vmatprep.subr.mxu0 0.0
        %7465 = vmatpush1.msra.mxu0 0.0
        %7466 = vmatprep.subr.mxu0 0.0
        %7467 = vmatpush1.msra.mxu0 0.0
        %7468 = vmatprep.subr.mxu0 0.0
        %7469 = vmatpush1.msra.mxu0 0.0
        %7470 = vmatprep.subr.mxu0 0.0
        %7471 = vmatpush1.msra.mxu0 0.0
        %7472 = vmatprep.subr.mxu0 0.0
        %7473 = vmatpush1.msra.mxu0 0.0
        %7474 = vmatprep.mubr.f32.mxu0 0.0
        %7475 = vmatmul.mubr.f32.gmra.mrb[0].mxu0 %v7408
        %v7476 = vpop.f32.mrb[0].mxu0
        %v7477 = vadd.f32 0.0, %v7476
        %v7478 = vpop.f32.mrb[0].mxu0
        %7479 = vdwg.mxu0
        %v7480 = vadd.f32 %v7241, %v7477
        %v7481 = vadd.f32 %v5024, %v7480
        %v7482 = vsel %vm2359, %v7481, 0.0
        %7483 = vadd.xlane.f32.xlu0 %v7482
        %v7484 = vpop.xlane.xlu0 %7483
        %v7485 = vmul.f32 %v7484, %v3554
        %v7486 = vsub.f32 %v7481, %v7485
        %v7487 = vmul.f32 %v7486, %v7486
        %v7488 = vsel %vm2359, %v7487, 0.0
        %7489 = vadd.xlane.f32.xlu0 %v7488
        %v7490 = vpop.xlane.xlu0 %7489
        %v7491 = vmul.f32 %v7490, %v3554
        %v7492 = vadd.f32 %v7491, 1e-05
        %v7493 = vrsqrt.pop %v7492
        %v7494 = vmul.f32 %v7486, %v7493
        %v7496 = vlaneseq
        %v7497 = vshrl.u32 %v7496, 7
        %v7498 = vsub.s32 0, %v7497
        %v7499 = vrot.slane %v5158, %v7498
        %v7501 = vmul.f32 %v7494, %v7499
        %v7503 = vlaneseq
        %v7504 = vshrl.u32 %v7503, 7
        %v7505 = vsub.s32 0, %v7504
        %v7506 = vrot.slane %v5160, %v7505
        %v7508 = vadd.f32 %v7501, %v7506
        %v7510 = vlaneseq
        %v7511 = vshrl.u32 %v7510, 7
        %v7512 = vsub.s32 0, %v7511
        %v7513 = vrot.slane %v5167, %v7512
        %v7516 = vsel %vm2359, %v7508, 0
        %7518 = vmatprep.subr.mxu0 0.0
        %7519 = vmatpush1.msra.mxu0 %v5162
        %7520 = vmatprep.subr.mxu0 0.0
        %7521 = vmatpush1.msra.mxu0 %v5163
        %7522 = vmatprep.subr.mxu0 0.0
        %7523 = vmatpush1.msra.mxu0 %v5164
        %7524 = vmatprep.subr.mxu0 0.0
        %7525 = vmatpush1.msra.mxu0 %v5165
        %7526 = vmatprep.subr.mxu0 0.0
        %7527 = vmatpush1.msra.mxu0 0.0
        %7528 = vmatprep.subr.mxu0 0.0
        %7529 = vmatpush1.msra.mxu0 0.0
        %7530 = vmatprep.subr.mxu0 0.0
        %7531 = vmatpush1.msra.mxu0 0.0
        %7532 = vmatprep.subr.mxu0 0.0
        %7533 = vmatpush1.msra.mxu0 0.0
        %7534 = vmatprep.subr.mxu0 0.0
        %7535 = vmatpush1.msra.mxu0 0.0
        %7536 = vmatprep.subr.mxu0 0.0
        %7537 = vmatpush1.msra.mxu0 0.0
        %7538 = vmatprep.subr.mxu0 0.0
        %7539 = vmatpush1.msra.mxu0 0.0
        %7540 = vmatprep.subr.mxu0 0.0
        %7541 = vmatpush1.msra.mxu0 0.0
        %7542 = vmatprep.subr.mxu0 0.0
        %7543 = vmatpush1.msra.mxu0 0.0
        %7544 = vmatprep.subr.mxu0 0.0
        %7545 = vmatpush1.msra.mxu0 0.0
        %7546 = vmatprep.subr.mxu0 0.0
        %7547 = vmatpush1.msra.mxu0 0.0
        %7548 = vmatprep.subr.mxu0 0.0
        %7549 = vmatpush1.msra.mxu0 0.0
        %7550 = vmatprep.subr.mxu0 0.0
        %7551 = vmatpush1.msra.mxu0 0.0
        %7552 = vmatprep.subr.mxu0 0.0
        %7553 = vmatpush1.msra.mxu0 0.0
        %7554 = vmatprep.subr.mxu0 0.0
        %7555 = vmatpush1.msra.mxu0 0.0
        %7556 = vmatprep.subr.mxu0 0.0
        %7557 = vmatpush1.msra.mxu0 0.0
        %7558 = vmatprep.subr.mxu0 0.0
        %7559 = vmatpush1.msra.mxu0 0.0
        %7560 = vmatprep.subr.mxu0 0.0
        %7561 = vmatpush1.msra.mxu0 0.0
        %7562 = vmatprep.subr.mxu0 0.0
        %7563 = vmatpush1.msra.mxu0 0.0
        %7564 = vmatprep.subr.mxu0 0.0
        %7565 = vmatpush1.msra.mxu0 0.0
        %7566 = vmatprep.subr.mxu0 0.0
        %7567 = vmatpush1.msra.mxu0 0.0
        %7568 = vmatprep.subr.mxu0 0.0
        %7569 = vmatpush1.msra.mxu0 0.0
        %7570 = vmatprep.subr.mxu0 0.0
        %7571 = vmatpush1.msra.mxu0 0.0
        %7572 = vmatprep.subr.mxu0 0.0
        %7573 = vmatpush1.msra.mxu0 0.0
        %7574 = vmatprep.subr.mxu0 0.0
        %7575 = vmatpush1.msra.mxu0 0.0
        %7576 = vmatprep.subr.mxu0 0.0
        %7577 = vmatpush1.msra.mxu0 0.0
        %7578 = vmatprep.subr.mxu0 0.0
        %7579 = vmatpush1.msra.mxu0 0.0
        %7580 = vmatprep.subr.mxu0 0.0
        %7581 = vmatpush1.msra.mxu0 0.0
        %7582 = vmatprep.mubr.f32.mxu0 0.0
        %7583 = vmatmul.mubr.f32.gmra.mrb[0].mxu0 %v7516
        %v7584 = vpop.f32.mrb[0].mxu0
        %v7585 = vadd.f32 %v7513, %v7584
        %v7586 = vpop.f32.mrb[0].mxu0
        %7587 = vdwg.mxu0
        %v7588 = vmax.f32 %v7585, 0.0
        %v7590 = vlaneseq
        %v7591 = vshrl.u32 %v7590, 7
        %v7592 = vsub.s32 0, %v7591
        %v7593 = vrot.slane %v5178, %v7592
        %v7596 = vsel %vm3665, %v7588, 0
        %7598 = vmatprep.subr.mxu0 0.0
        %7599 = vmatpush1.msra.mxu0 %v5169
        %7600 = vmatprep.subr.mxu0 0.0
        %7601 = vmatpush1.msra.mxu0 %v5170
        %7602 = vmatprep.subr.mxu0 0.0
        %7603 = vmatpush1.msra.mxu0 %v5171
        %7604 = vmatprep.subr.mxu0 0.0
        %7605 = vmatpush1.msra.mxu0 %v5172
        %7606 = vmatprep.subr.mxu0 0.0
        %7607 = vmatpush1.msra.mxu0 %v5173
        %7608 = vmatprep.subr.mxu0 0.0
        %7609 = vmatpush1.msra.mxu0 %v5174
        %7610 = vmatprep.subr.mxu0 0.0
        %7611 = vmatpush1.msra.mxu0 %v5175
        %7612 = vmatprep.subr.mxu0 0.0
        %7613 = vmatpush1.msra.mxu0 %v5176
        %7614 = vmatprep.subr.mxu0 0.0
        %7615 = vmatpush1.msra.mxu0 0.0
        %7616 = vmatprep.subr.mxu0 0.0
        %7617 = vmatpush1.msra.mxu0 0.0
        %7618 = vmatprep.subr.mxu0 0.0
        %7619 = vmatpush1.msra.mxu0 0.0
        %7620 = vmatprep.subr.mxu0 0.0
        %7621 = vmatpush1.msra.mxu0 0.0
        %7622 = vmatprep.subr.mxu0 0.0
        %7623 = vmatpush1.msra.mxu0 0.0
        %7624 = vmatprep.subr.mxu0 0.0
        %7625 = vmatpush1.msra.mxu0 0.0
        %7626 = vmatprep.subr.mxu0 0.0
        %7627 = vmatpush1.msra.mxu0 0.0
        %7628 = vmatprep.subr.mxu0 0.0
        %7629 = vmatpush1.msra.mxu0 0.0
        %7630 = vmatprep.subr.mxu0 0.0
        %7631 = vmatpush1.msra.mxu0 0.0
        %7632 = vmatprep.subr.mxu0 0.0
        %7633 = vmatpush1.msra.mxu0 0.0
        %7634 = vmatprep.subr.mxu0 0.0
        %7635 = vmatpush1.msra.mxu0 0.0
        %7636 = vmatprep.subr.mxu0 0.0
        %7637 = vmatpush1.msra.mxu0 0.0
        %7638 = vmatprep.subr.mxu0 0.0
        %7639 = vmatpush1.msra.mxu0 0.0
        %7640 = vmatprep.subr.mxu0 0.0
        %7641 = vmatpush1.msra.mxu0 0.0
        %7642 = vmatprep.subr.mxu0 0.0
        %7643 = vmatpush1.msra.mxu0 0.0
        %7644 = vmatprep.subr.mxu0 0.0
        %7645 = vmatpush1.msra.mxu0 0.0
        %7646 = vmatprep.subr.mxu0 0.0
        %7647 = vmatpush1.msra.mxu0 0.0
        %7648 = vmatprep.subr.mxu0 0.0
        %7649 = vmatpush1.msra.mxu0 0.0
        %7650 = vmatprep.subr.mxu0 0.0
        %7651 = vmatpush1.msra.mxu0 0.0
        %7652 = vmatprep.subr.mxu0 0.0
        %7653 = vmatpush1.msra.mxu0 0.0
        %7654 = vmatprep.subr.mxu0 0.0
        %7655 = vmatpush1.msra.mxu0 0.0
        %7656 = vmatprep.subr.mxu0 0.0
        %7657 = vmatpush1.msra.mxu0 0.0
        %7658 = vmatprep.subr.mxu0 0.0
        %7659 = vmatpush1.msra.mxu0 0.0
        %7660 = vmatprep.subr.mxu0 0.0
        %7661 = vmatpush1.msra.mxu0 0.0
        %7662 = vmatprep.mubr.f32.mxu0 0.0
        %7663 = vmatmul.mubr.f32.gmra.mrb[0].mxu0 %v7596
        %v7664 = vpop.f32.mrb[0].mxu0
        %v7665 = vadd.f32 %v7593, %v7664
        %v7666 = vpop.f32.mrb[0].mxu0
        %7667 = vdwg.mxu0
        %v7668 = vadd.f32 %v7508, %v7665
        %v7669 = vsel %vm2359, %v7668, 0.0
        %7670 = vadd.xlane.f32.xlu0 %v7669
        %v7671 = vpop.xlane.xlu0 %7670
        %v7672 = vmul.f32 %v7671, %v3554
        %v7673 = vsub.f32 %v7668, %v7672
        %v7674 = vmul.f32 %v7673, %v7673
        %v7675 = vsel %vm2359, %v7674, 0.0
        %7676 = vadd.xlane.f32.xlu0 %v7675
        %v7677 = vpop.xlane.xlu0 %7676
        %v7678 = vmul.f32 %v7677, %v3554
        %v7679 = vadd.f32 %v7678, 1e-05
        %v7680 = vrsqrt.pop %v7679
        %v7681 = vmul.f32 %v7673, %v7680
        %v7683 = vlaneseq
        %v7684 = vshrl.u32 %v7683, 7
        %v7685 = vsub.s32 0, %v7684
        %v7686 = vrot.slane %v5180, %v7685
        %v7688 = vmul.f32 %v7681, %v7686
        %v7690 = vlaneseq
        %v7691 = vshrl.u32 %v7690, 7
        %v7692 = vsub.s32 0, %v7691
        %v7693 = vrot.slane %v5182, %v7692
        %v7695 = vadd.f32 %v7688, %v7693
        %s7696 = scalar_lea.vmem [#allocation25], 32
        %v7697 = vld [vmem:[%s7696] sm:$0xff]
        %v7698 = vld [vmem:[%s7696 + $0x8] sm:$0xff]
        %v7699 = vld [vmem:[%s7696 + $0x10] sm:$0xff]
        %v7700 = vld [vmem:[%s7696 + $0x18] sm:$0xff]
        %v7702 = vsel %vm2359, %v7695, 0
        %7704 = vmatprep.subr.mxu0 0.0
        %7705 = vmatpush1.msra.mxu0 %v7697
        %7706 = vmatprep.subr.mxu0 0.0
        %7707 = vmatpush1.msra.mxu0 %v7698
        %7708 = vmatprep.subr.mxu0 0.0
        %7709 = vmatpush1.msra.mxu0 %v7699
        %7710 = vmatprep.subr.mxu0 0.0
        %7711 = vmatpush1.msra.mxu0 %v7700
        %7712 = vmatprep.subr.mxu0 0.0
        %7713 = vmatpush1.msra.mxu0 0.0
        %7714 = vmatprep.subr.mxu0 0.0
        %7715 = vmatpush1.msra.mxu0 0.0
        %7716 = vmatprep.subr.mxu0 0.0
        %7717 = vmatpush1.msra.mxu0 0.0
        %7718 = vmatprep.subr.mxu0 0.0
        %7719 = vmatpush1.msra.mxu0 0.0
        %7720 = vmatprep.subr.mxu0 0.0
        %7721 = vmatpush1.msra.mxu0 0.0
        %7722 = vmatprep.subr.mxu0 0.0
        %7723 = vmatpush1.msra.mxu0 0.0
        %7724 = vmatprep.subr.mxu0 0.0
        %7725 = vmatpush1.msra.mxu0 0.0
        %7726 = vmatprep.subr.mxu0 0.0
        %7727 = vmatpush1.msra.mxu0 0.0
        %7728 = vmatprep.subr.mxu0 0.0
        %7729 = vmatpush1.msra.mxu0 0.0
        %7730 = vmatprep.subr.mxu0 0.0
        %7731 = vmatpush1.msra.mxu0 0.0
        %7732 = vmatprep.subr.mxu0 0.0
        %7733 = vmatpush1.msra.mxu0 0.0
        %7734 = vmatprep.subr.mxu0 0.0
        %7735 = vmatpush1.msra.mxu0 0.0
        %7736 = vmatprep.subr.mxu0 0.0
        %7737 = vmatpush1.msra.mxu0 0.0
        %7738 = vmatprep.subr.mxu0 0.0
        %7739 = vmatpush1.msra.mxu0 0.0
        %7740 = vmatprep.subr.mxu0 0.0
        %7741 = vmatpush1.msra.mxu0 0.0
        %7742 = vmatprep.subr.mxu0 0.0
        %7743 = vmatpush1.msra.mxu0 0.0
        %7744 = vmatprep.subr.mxu0 0.0
        %7745 = vmatpush1.msra.mxu0 0.0
        %7746 = vmatprep.subr.mxu0 0.0
        %7747 = vmatpush1.msra.mxu0 0.0
        %7748 = vmatprep.subr.mxu0 0.0
        %7749 = vmatpush1.msra.mxu0 0.0
        %7750 = vmatprep.subr.mxu0 0.0
        %7751 = vmatpush1.msra.mxu0 0.0
        %7752 = vmatprep.subr.mxu0 0.0
        %7753 = vmatpush1.msra.mxu0 0.0
        %7754 = vmatprep.subr.mxu0 0.0
        %7755 = vmatpush1.msra.mxu0 0.0
        %7756 = vmatprep.subr.mxu0 0.0
        %7757 = vmatpush1.msra.mxu0 0.0
        %7758 = vmatprep.subr.mxu0 0.0
        %7759 = vmatpush1.msra.mxu0 0.0
        %7760 = vmatprep.subr.mxu0 0.0
        %7761 = vmatpush1.msra.mxu0 0.0
        %7762 = vmatprep.subr.mxu0 0.0
        %7763 = vmatpush1.msra.mxu0 0.0
        %7764 = vmatprep.subr.mxu0 0.0
        %7765 = vmatpush1.msra.mxu0 0.0
        %7766 = vmatprep.subr.mxu0 0.0
        %7767 = vmatpush1.msra.mxu0 0.0
        %7768 = vmatprep.mubr.f32.mxu0 0.0
        %7769 = vmatmul.mubr.f32.gmra.mrb[0].mxu0 %v7702
        %v7770 = vpop.f32.mrb[0].mxu0
        %v7771 = vadd.f32 0.0, %v7770
        %v7772 = vpop.f32.mrb[0].mxu0
        %7773 = vdwg.mxu0
        %v7774 = vadd.f32 %v6440, %v7771
        %7775 = vst.msk [vmem:[%s873] sm:$0xff] %vm2359, %v7774
        %p7776 = scmp.lt.s32.totalorder %s40, 1
        %s7777 = scalar_select %p7776, %s40, 1
        %s7778 = smul.addr %s7777, 8
        %s7779 = scalar_lea.vmem %s20, %s7778
        // Predicated region
        $region165: #{modified_transformer_encoder.1} parent=99 // pred_check
          %p7780 = pneg %p488
        $region166: #{modified_transformer_encoder.1} parent=99 // pred_check_branch
          %7782 = sbr.rel (%p7780) target = $region168
        $region167: #{modified_transformer_encoder.1} parent=99 // pred_region
          _
        $region168: #{modified_transformer_encoder.1} parent=99 // pred_fallthru
          _
      $region100: #{modified_transformer_encoder.1} parent=5 // pred_fallthru
        _
      %p7783 = scmp.le.s32.totalorder 2, %s35
      // Predicated region
      $region169: #{modified_transformer_encoder.1} parent=5 // pred_check
        %p7784 = pneg %p7783
      $region170: #{modified_transformer_encoder.1} parent=5 // pred_check_branch
        %7786 = sbr.rel (%p7784) target = $region172
      $region171: #{modified_transformer_encoder.1} parent=5 // pred_region
        %s7787 = ssub.s32 %s35, 2
        // Predicated region
        $region173: #{modified_transformer_encoder.1} parent=171 // pred_check
          %p7788 = pneg %p494
        $region174: #{modified_transformer_encoder.1} parent=171 // pred_check_branch
          %7790 = sbr.rel (%p7788) target = $region176
        $region175: #{modified_transformer_encoder.1} parent=171 // pred_region
          %p7791 = scmp.lt.s32.totalorder %s41, 1
          %s7792 = scalar_select %p7791, %s41, 1
          %s7793 = smul.addr %s7792, 8
          %s7794 = scalar_lea.vmem %s20, %s7793
        $region176: #{modified_transformer_encoder.1} parent=171 // pred_fallthru
          _
      $region172: #{modified_transformer_encoder.1} parent=5 // pred_fallthru
        _
    $region6: #{modified_transformer_encoder.1} parent=1 // loop_footer
      %s39 = sadd.s32 1, %s35
    $region7: #{modified_transformer_encoder.1} parent=1 // loop_footer_branch
      %34 = sbr.rel target = $region3
    $region8: #{modified_transformer_encoder.1} parent=1 // loop_exit
      _
    %7795 = vsyncpa [#allocation3], 1
    %s7796 = scalar_lea.sflag [#allocation3], 1
    %7797 = vsyncpa %s7796, 1
    %7798 = vsyncpa [#allocation5], 1
    %7799 = vsyncpa [#allocation8], 1
    %7800 = vsyncpa [#allocation11], 1
    %7801 = vsyncpa [#allocation14], 1
    %7802 = vsyncpa [#allocation17], 1
    %7803 = vsyncpa [#allocation20], 1
    %7804 = vsyncpa [#allocation23], 1
    %7805 = vsyncpa [#allocation26], 1

</llo_original>
